<compile_context>
chip_gen: v5e
topology: v5e:2x2
jax: 0.10.0
libtpu: 0.0.40
codegen_flags: <defaults>
</compile_context>

<pallas_src>
import functools

import jax
import jax.numpy as jnp
from jax.experimental import pallas as pl
from jax.experimental.pallas import tpu as pltpu

# ----- logical dims (PyTorch module) -----
IN, HID, LAT = 784, 400, 20
# ----- lane-padded dims (multiples of 128) -----
IN_P, HID_P, LAT_P = 896, 512, 128
HEAD_P = 2 * LAT_P  # fused mu||logvar slab width


def _vae_kernel(
    x_ref, eps_ref,
    w1_ref, b1_ref,          # (IN_P, HID_P) bf16, (1, HID_P) f32
    wh_ref, bh_ref,          # fused heads: (HID_P, HEAD_P) bf16, (1, HEAD_P) f32
    w3_ref, b3_ref,          # (LAT_P, HID_P) bf16, (1, HID_P) f32
    w4_ref, b4_ref,          # (HID_P, IN_P) bf16, (1, IN_P) f32
    recon_ref, head_ref,     # (TB, IN_P) f32, (TB, HEAD_P) f32
):
    x = x_ref[...]            # (TB, IN_P) f32, padded lanes are zero
    eps = eps_ref[...]        # (TB, LAT_P) f32, padded lanes are zero

    # ----- encode -----
    h1 = jnp.dot(x.astype(jnp.bfloat16), w1_ref[...],
                 preferred_element_type=jnp.float32) + b1_ref[...]
    h1 = jnp.maximum(h1, 0.0)                                   # (TB, HID_P)

    # fused fc21 || fc22: one MXU pass, one lane-dense output slab.
    head = jnp.dot(h1.astype(jnp.bfloat16), wh_ref[...],
                   preferred_element_type=jnp.float32) + bh_ref[...]  # (TB, HEAD_P)
    mu = head[:, 0:LAT_P]                                       # 128-aligned slice
    logvar = head[:, LAT_P:HEAD_P]

    # ----- reparameterize -----
    # Padded lanes: mu = logvar = eps = 0 -> z pad lanes = 0 + 0*exp(0) = 0.
    z = mu + eps * jnp.exp(0.5 * logvar)                        # (TB, LAT_P)

    # ----- decode -----
    h3 = jnp.dot(z.astype(jnp.bfloat16), w3_ref[...],
                 preferred_element_type=jnp.float32) + b3_ref[...]
    h3 = jnp.maximum(h3, 0.0)                                   # (TB, HID_P)
    logits = jnp.dot(h3.astype(jnp.bfloat16), w4_ref[...],
                     preferred_element_type=jnp.float32) + b4_ref[...]

    recon_ref[...] = jax.nn.sigmoid(logits)                     # (TB, IN_P)
    head_ref[...] = head                                        # mu || logvar


@functools.partial(jax.jit, static_argnames=("tb",))
def vae_forward(x, eps, params, tb=128):
    """x: (B, 1, 28, 28) or (B, 784) f32; eps: (B, 20) f32; params: padded dict.

    Returns (recon (B, 784), mu (B, 20), logvar (B, 20)).
    """
    B = x.shape[0]
    assert B % tb == 0, "batch must be a multiple of the batch tile"

    x_flat = x.reshape(B, IN).astype(jnp.float32)                # x.view(-1, 784)
    x_pad = jnp.pad(x_flat, ((0, 0), (0, IN_P - IN)))            # (B, IN_P)
    eps_pad = jnp.pad(eps.astype(jnp.float32), ((0, 0), (0, LAT_P - LAT)))

    args = (
        x_pad, eps_pad,
        params["w1"], params["b1"],
        params["wh"], params["bh"],
        params["w3"], params["b3"],
        params["w4"], params["b4"],
    )

    # Batch-tiled inputs follow the grid; weights/biases stay resident (block 0).
    batch_spec = lambda last: pl.BlockSpec((tb, last), lambda i: (i, 0))
    const_spec = lambda shape: pl.BlockSpec(shape, lambda i: (0, 0))

    in_specs = [
        batch_spec(IN_P),                       # x
        batch_spec(LAT_P),                      # eps
        const_spec((IN_P, HID_P)), const_spec((1, HID_P)),     # w1, b1
        const_spec((HID_P, HEAD_P)), const_spec((1, HEAD_P)),  # wh, bh
        const_spec((LAT_P, HID_P)), const_spec((1, HID_P)),    # w3, b3
        const_spec((HID_P, IN_P)), const_spec((1, IN_P)),      # w4, b4
    ]
    out_specs = (
        batch_spec(IN_P),                       # recon (padded)
        batch_spec(HEAD_P),                     # mu || logvar (padded)
    )
    out_shapes = (
        jax.ShapeDtypeStruct((B, IN_P), jnp.float32),
        jax.ShapeDtypeStruct((B, HEAD_P), jnp.float32),
    )

    weight_bytes = 2 * (IN_P * HID_P + HID_P * HEAD_P + LAT_P * HID_P + HID_P * IN_P)
    bias_bytes = 4 * (2 * HID_P + HEAD_P + IN_P)
    cost = pl.CostEstimate(
        flops=2 * B * (IN_P * HID_P + HID_P * HEAD_P + LAT_P * HID_P + HID_P * IN_P),
        transcendentals=B * (LAT_P + IN_P),
        bytes_accessed=weight_bytes + bias_bytes
        + 4 * B * (IN_P + LAT_P)              # inputs
        + 4 * B * (IN_P + HEAD_P),            # outputs
    )

    recon_pad, head = pl.pallas_call(
        _vae_kernel,
        grid=(B // tb,),
        in_specs=in_specs,
        out_specs=out_specs,
        out_shape=out_shapes,
        compiler_params=pltpu.CompilerParams(
            dimension_semantics=("parallel",)),
        cost_estimate=cost,
    )(*args)

    recon = recon_pad[:, :IN]
    mu = head[:, :LAT]
    logvar = head[:, LAT_P:LAT_P + LAT]
    return recon, mu, logvar


def init_params(key):
    """nn.Linear-style init, stored as (in, out), zero-padded + bf16 weights."""
    ks = jax.random.split(key, 10)

    def linear(kw, kb, fan_in, fan_out):
        bound = 1.0 / jnp.sqrt(fan_in)
        w = jax.random.uniform(kw, (fan_in, fan_out), jnp.float32, -bound, bound)
        b = jax.random.uniform(kb, (fan_out,), jnp.float32, -bound, bound)
        return w, b

    w1, b1 = linear(ks[0], ks[1], IN, HID)
    w21, b21 = linear(ks[2], ks[3], HID, LAT)
    w22, b22 = linear(ks[4], ks[5], HID, LAT)
    w3, b3 = linear(ks[6], ks[7], LAT, HID)
    w4, b4 = linear(ks[8], ks[9], HID, IN)

    # --- zero-pad to lane-aligned shapes ---
    w1p = jnp.zeros((IN_P, HID_P), jnp.float32).at[:IN, :HID].set(w1)
    b1p = jnp.zeros((1, HID_P), jnp.float32).at[0, :HID].set(b1)

    whp = (jnp.zeros((HID_P, HEAD_P), jnp.float32)
           .at[:HID, 0:LAT].set(w21)                 # mu cols
           .at[:HID, LAT_P:LAT_P + LAT].set(w22))    # logvar cols
    bhp = (jnp.zeros((1, HEAD_P), jnp.float32)
           .at[0, 0:LAT].set(b21)
           .at[0, LAT_P:LAT_P + LAT].set(b22))

    w3p = jnp.zeros((LAT_P, HID_P), jnp.float32).at[:LAT, :HID].set(w3)
    b3p = jnp.zeros((1, HID_P), jnp.float32).at[0, :HID].set(b3)

    w4p = jnp.zeros((HID_P, IN_P), jnp.float32).at[:HID, :IN].set(w4)
    b4p = jnp.zeros((1, IN_P), jnp.float32).at[0, :IN].set(b4)

    # weights bf16 (halves HBM DMA, MXU-native); biases stay f32.
    return dict(
        w1=w1p.astype(jnp.bfloat16), b1=b1p,
        wh=whp.astype(jnp.bfloat16), bh=bhp,
        w3=w3p.astype(jnp.bfloat16), b3=b3p,
        w4=w4p.astype(jnp.bfloat16), b4=b4p,
    )


def vae_forward_ref(x, eps, p):
    """Pure-JAX reference (same bf16 weights, f32 math) for correctness check."""
    B = x.shape[0]
    xf = jnp.pad(x.reshape(B, IN).astype(jnp.float32), ((0, 0), (0, IN_P - IN)))
    epsp = jnp.pad(eps.astype(jnp.float32), ((0, 0), (0, LAT_P - LAT)))
    w1 = p["w1"].astype(jnp.float32); wh = p["wh"].astype(jnp.float32)
    w3 = p["w3"].astype(jnp.float32); w4 = p["w4"].astype(jnp.float32)

    h1 = jnp.maximum(xf @ w1 + p["b1"], 0.0)
    head = h1 @ wh + p["bh"]
    mu, logvar = head[:, :LAT_P], head[:, LAT_P:]
    z = mu + epsp * jnp.exp(0.5 * logvar)
    h3 = jnp.maximum(z @ w3 + p["b3"], 0.0)
    recon = jax.nn.sigmoid(h3 @ w4 + p["b4"])[:, :IN]
    return recon, mu[:, :LAT], logvar[:, :LAT]


if __name__ == "__main__":
    key = jax.random.PRNGKey(0)
    k_param, k_x, k_eps = jax.random.split(key, 3)

    B, TB = 256, 128                                    # grid=(2,) over batch
    x = jax.random.normal(k_x, (B, 1, 28, 28), jnp.float32)   # MNIST-shaped input
    eps = jax.random.normal(k_eps, (B, LAT), jnp.float32)     # torch.randn_like(std)
    params = init_params(k_param)

    recon, mu, logvar = vae_forward(x, eps, params, tb=TB)
    jax.block_until_ready((recon, mu, logvar))

    # correctness vs pure-JAX reference (same bf16 weights; kernel additionally
    # rounds activations to bf16 at the MXU inputs -> loose-ish tolerance)
    r_ref, mu_ref, lv_ref = vae_forward_ref(x, eps, params)
    assert recon.shape == (B, IN) and mu.shape == (B, LAT) and logvar.shape == (B, LAT)
    assert jnp.allclose(recon, r_ref, atol=1e-2, rtol=1e-2), "recon mismatch"
    assert jnp.allclose(mu, mu_ref, atol=1e-2, rtol=1e-2), "mu mismatch"
    assert jnp.allclose(logvar, lv_ref, atol=1e-2, rtol=1e-2), "logvar mismatch"

    print("KERNEL_OK")
</pallas_src>

<mosaic_0001>
module attributes {stable_mosaic.version = 11 : i64} {
  func.func @_vae_kernel(%arg0: i32, %arg1: memref<128x896xf32, #tpu.memory_space<vmem>>, %arg2: memref<128x128xf32, #tpu.memory_space<vmem>>, %arg3: memref<896x512xbf16, #tpu.memory_space<vmem>>, %arg4: memref<1x512xf32, #tpu.memory_space<vmem>>, %arg5: memref<512x256xbf16, #tpu.memory_space<vmem>>, %arg6: memref<1x256xf32, #tpu.memory_space<vmem>>, %arg7: memref<128x512xbf16, #tpu.memory_space<vmem>>, %arg8: memref<1x512xf32, #tpu.memory_space<vmem>>, %arg9: memref<512x896xbf16, #tpu.memory_space<vmem>>, %arg10: memref<1x896xf32, #tpu.memory_space<vmem>>, %arg11: memref<128x896xf32, #tpu.memory_space<vmem>>, %arg12: memref<128x256xf32, #tpu.memory_space<vmem>>) attributes {dimension_semantics = [#tpu.dimension_semantics<parallel>], iteration_bounds = array<i64: 2>, scalar_prefetch = 0 : i64, scratch_operands = 0 : i64, tpu.core_type = #tpu.core_type<tc>, window_params = [{transform_indices = @transform_0, window_bounds = array<i64: 128, 896>}, {transform_indices = @transform_1, window_bounds = array<i64: 128, 128>}, {pipeline_mode = #tpu.pipeline_mode<synchronous>, transform_indices = @transform_2, window_bounds = array<i64: 896, 512>}, {pipeline_mode = #tpu.pipeline_mode<synchronous>, transform_indices = @transform_3, window_bounds = array<i64: 1, 512>}, {pipeline_mode = #tpu.pipeline_mode<synchronous>, transform_indices = @transform_4, window_bounds = array<i64: 512, 256>}, {pipeline_mode = #tpu.pipeline_mode<synchronous>, transform_indices = @transform_5, window_bounds = array<i64: 1, 256>}, {pipeline_mode = #tpu.pipeline_mode<synchronous>, transform_indices = @transform_6, window_bounds = array<i64: 128, 512>}, {pipeline_mode = #tpu.pipeline_mode<synchronous>, transform_indices = @transform_7, window_bounds = array<i64: 1, 512>}, {pipeline_mode = #tpu.pipeline_mode<synchronous>, transform_indices = @transform_8, window_bounds = array<i64: 512, 896>}, {pipeline_mode = #tpu.pipeline_mode<synchronous>, transform_indices = @transform_9, window_bounds = array<i64: 1, 896>}, {transform_indices = @transform_10, window_bounds = array<i64: 128, 896>}, {transform_indices = @transform_11, window_bounds = array<i64: 128, 256>}]} {
    %c0 = arith.constant 0 : index
    %c0_0 = arith.constant 0 : index
    %0 = vector.load %arg1[%c0, %c0_0] : memref<128x896xf32, #tpu.memory_space<vmem>>, vector<128x896xf32>
    %c0_1 = arith.constant 0 : index
    %c0_2 = arith.constant 0 : index
    %1 = vector.load %arg2[%c0_1, %c0_2] : memref<128x128xf32, #tpu.memory_space<vmem>>, vector<128x128xf32>
    %2 = arith.truncf %0 : vector<128x896xf32> to vector<128x896xbf16>
    %c0_3 = arith.constant 0 : index
    %c0_4 = arith.constant 0 : index
    %3 = vector.load %arg3[%c0_3, %c0_4] : memref<896x512xbf16, #tpu.memory_space<vmem>>, vector<896x512xbf16>
    %cst = arith.constant dense<0.000000e+00> : vector<128x512xf32>
    %4 = tpu.matmul %2, %3, %cst {dimension_numbers = #tpu.dot_dimension_numbers<[1], [0], [0], [1], [0, 0, 1, 1], [], []>} : vector<128x896xbf16>, vector<896x512xbf16>, vector<128x512xf32> -> vector<128x512xf32>
    %c0_5 = arith.constant 0 : index
    %c0_6 = arith.constant 0 : index
    %5 = vector.load %arg4[%c0_5, %c0_6] : memref<1x512xf32, #tpu.memory_space<vmem>>, vector<1x512xf32>
    %6 = vector.broadcast %5 : vector<1x512xf32> to vector<128x512xf32>
    %7 = arith.addf %4, %6 : vector<128x512xf32>
    %cst_7 = arith.constant 0.000000e+00 : f32
    %8 = vector.broadcast %cst_7 : f32 to vector<128x512xf32>
    %9 = arith.maximumf %7, %8 : vector<128x512xf32>
    %10 = arith.truncf %9 : vector<128x512xf32> to vector<128x512xbf16>
    %c0_8 = arith.constant 0 : index
    %c0_9 = arith.constant 0 : index
    %11 = vector.load %arg5[%c0_8, %c0_9] : memref<512x256xbf16, #tpu.memory_space<vmem>>, vector<512x256xbf16>
    %cst_10 = arith.constant dense<0.000000e+00> : vector<128x256xf32>
    %12 = tpu.matmul %10, %11, %cst_10 {dimension_numbers = #tpu.dot_dimension_numbers<[1], [0], [0], [1], [0, 0, 1, 1], [], []>} : vector<128x512xbf16>, vector<512x256xbf16>, vector<128x256xf32> -> vector<128x256xf32>
    %c0_11 = arith.constant 0 : index
    %c0_12 = arith.constant 0 : index
    %13 = vector.load %arg6[%c0_11, %c0_12] : memref<1x256xf32, #tpu.memory_space<vmem>>, vector<1x256xf32>
    %14 = vector.broadcast %13 : vector<1x256xf32> to vector<128x256xf32>
    %15 = arith.addf %12, %14 : vector<128x256xf32>
    %16 = vector.extract_strided_slice %15 {offsets = [0, 0], sizes = [128, 128], strides = [1, 1]} : vector<128x256xf32> to vector<128x128xf32>
    %17 = vector.extract_strided_slice %15 {offsets = [0, 128], sizes = [128, 128], strides = [1, 1]} : vector<128x256xf32> to vector<128x128xf32>
    %cst_13 = arith.constant 5.000000e-01 : f32
    %18 = vector.broadcast %cst_13 : f32 to vector<128x128xf32>
    %19 = arith.mulf %18, %17 : vector<128x128xf32>
    %20 = math.exp %19 : vector<128x128xf32>
    %21 = arith.mulf %1, %20 : vector<128x128xf32>
    %22 = arith.addf %16, %21 : vector<128x128xf32>
    %23 = arith.truncf %22 : vector<128x128xf32> to vector<128x128xbf16>
    %c0_14 = arith.constant 0 : index
    %c0_15 = arith.constant 0 : index
    %24 = vector.load %arg7[%c0_14, %c0_15] : memref<128x512xbf16, #tpu.memory_space<vmem>>, vector<128x512xbf16>
    %cst_16 = arith.constant dense<0.000000e+00> : vector<128x512xf32>
    %25 = tpu.matmul %23, %24, %cst_16 {dimension_numbers = #tpu.dot_dimension_numbers<[1], [0], [0], [1], [0, 0, 1, 1], [], []>} : vector<128x128xbf16>, vector<128x512xbf16>, vector<128x512xf32> -> vector<128x512xf32>
    %c0_17 = arith.constant 0 : index
    %c0_18 = arith.constant 0 : index
    %26 = vector.load %arg8[%c0_17, %c0_18] : memref<1x512xf32, #tpu.memory_space<vmem>>, vector<1x512xf32>
    %27 = vector.broadcast %26 : vector<1x512xf32> to vector<128x512xf32>
    %28 = arith.addf %25, %27 : vector<128x512xf32>
    %cst_19 = arith.constant 0.000000e+00 : f32
    %29 = vector.broadcast %cst_19 : f32 to vector<128x512xf32>
    %30 = arith.maximumf %28, %29 : vector<128x512xf32>
    %31 = arith.truncf %30 : vector<128x512xf32> to vector<128x512xbf16>
    %c0_20 = arith.constant 0 : index
    %c0_21 = arith.constant 0 : index
    %32 = vector.load %arg9[%c0_20, %c0_21] : memref<512x896xbf16, #tpu.memory_space<vmem>>, vector<512x896xbf16>
    %cst_22 = arith.constant dense<0.000000e+00> : vector<128x896xf32>
    %33 = tpu.matmul %31, %32, %cst_22 {dimension_numbers = #tpu.dot_dimension_numbers<[1], [0], [0], [1], [0, 0, 1, 1], [], []>} : vector<128x512xbf16>, vector<512x896xbf16>, vector<128x896xf32> -> vector<128x896xf32>
    %c0_23 = arith.constant 0 : index
    %c0_24 = arith.constant 0 : index
    %34 = vector.load %arg10[%c0_23, %c0_24] : memref<1x896xf32, #tpu.memory_space<vmem>>, vector<1x896xf32>
    %35 = vector.broadcast %34 : vector<1x896xf32> to vector<128x896xf32>
    %36 = arith.addf %33, %35 : vector<128x896xf32>
    %37 = arith.negf %36 : vector<128x896xf32>
    %38 = math.exp %37 : vector<128x896xf32>
    %cst_25 = arith.constant 1.000000e+00 : f32
    %39 = vector.broadcast %cst_25 : f32 to vector<128x896xf32>
    %40 = arith.addf %39, %38 : vector<128x896xf32>
    %41 = arith.divf %39, %40 : vector<128x896xf32>
    %c0_26 = arith.constant 0 : index
    %c0_27 = arith.constant 0 : index
    %42 = vector.load %arg11[%c0_26, %c0_27] : memref<128x896xf32, #tpu.memory_space<vmem>>, vector<128x896xf32>
    tpu.vector_store %arg11[%c0_26, %c0_27], %41 {strides = array<i32>} : memref<128x896xf32, #tpu.memory_space<vmem>>, vector<128x896xf32>,
    %c0_28 = arith.constant 0 : index
    %c0_29 = arith.constant 0 : index
    %43 = vector.load %arg12[%c0_28, %c0_29] : memref<128x256xf32, #tpu.memory_space<vmem>>, vector<128x256xf32>
    tpu.vector_store %arg12[%c0_28, %c0_29], %15 {strides = array<i32>} : memref<128x256xf32, #tpu.memory_space<vmem>>, vector<128x256xf32>,
    return
  }
  func.func @transform_0(%arg0: i32) -> (i32, i32) {
    %c0_i32 = arith.constant 0 : i32
    %c0_i32_0 = arith.constant 0 : i32
    return %arg0, %c0_i32 : i32, i32
  }
  func.func @transform_1(%arg0: i32) -> (i32, i32) {
    %c0_i32 = arith.constant 0 : i32
    %c0_i32_0 = arith.constant 0 : i32
    return %arg0, %c0_i32 : i32, i32
  }
  func.func @transform_2(%arg0: i32) -> (i32, i32) {
    %c0_i32 = arith.constant 0 : i32
    %c0_i32_0 = arith.constant 0 : i32
    %c0_i32_1 = arith.constant 0 : i32
    return %c0_i32, %c0_i32_0 : i32, i32
  }
  func.func @transform_3(%arg0: i32) -> (i32, i32) {
    %c0_i32 = arith.constant 0 : i32
    %c0_i32_0 = arith.constant 0 : i32
    %c0_i32_1 = arith.constant 0 : i32
    return %c0_i32, %c0_i32_0 : i32, i32
  }
  func.func @transform_4(%arg0: i32) -> (i32, i32) {
    %c0_i32 = arith.constant 0 : i32
    %c0_i32_0 = arith.constant 0 : i32
    %c0_i32_1 = arith.constant 0 : i32
    return %c0_i32, %c0_i32_0 : i32, i32
  }
  func.func @transform_5(%arg0: i32) -> (i32, i32) {
    %c0_i32 = arith.constant 0 : i32
    %c0_i32_0 = arith.constant 0 : i32
    %c0_i32_1 = arith.constant 0 : i32
    return %c0_i32, %c0_i32_0 : i32, i32
  }
  func.func @transform_6(%arg0: i32) -> (i32, i32) {
    %c0_i32 = arith.constant 0 : i32
    %c0_i32_0 = arith.constant 0 : i32
    %c0_i32_1 = arith.constant 0 : i32
    return %c0_i32, %c0_i32_0 : i32, i32
  }
  func.func @transform_7(%arg0: i32) -> (i32, i32) {
    %c0_i32 = arith.constant 0 : i32
    %c0_i32_0 = arith.constant 0 : i32
    %c0_i32_1 = arith.constant 0 : i32
    return %c0_i32, %c0_i32_0 : i32, i32
  }
  func.func @transform_8(%arg0: i32) -> (i32, i32) {
    %c0_i32 = arith.constant 0 : i32
    %c0_i32_0 = arith.constant 0 : i32
    %c0_i32_1 = arith.constant 0 : i32
    return %c0_i32, %c0_i32_0 : i32, i32
  }
  func.func @transform_9(%arg0: i32) -> (i32, i32) {
    %c0_i32 = arith.constant 0 : i32
    %c0_i32_0 = arith.constant 0 : i32
    %c0_i32_1 = arith.constant 0 : i32
    return %c0_i32, %c0_i32_0 : i32, i32
  }
  func.func @transform_10(%arg0: i32) -> (i32, i32) {
    %c0_i32 = arith.constant 0 : i32
    %c0_i32_0 = arith.constant 0 : i32
    return %arg0, %c0_i32 : i32, i32
  }
  func.func @transform_11(%arg0: i32) -> (i32, i32) {
    %c0_i32 = arith.constant 0 : i32
    %c0_i32_0 = arith.constant 0 : i32
    return %arg0, %c0_i32 : i32, i32
  }
}

</mosaic_0001>

<llo_original>
// kernel: vae_forward.1
$region0: #{vae_forward.1}
  #allocation0 [shape = 'u32[]', space=smem, size = 0x4, offset = 0x4, fixed_abs, tag = 'smem constant byte address 0x4 - core index']
  #allocation1 [shape = 'u32[72,128]{1,0:T(1,128)}', space=vmem, size = 0x9000, scoped, tag = 'internal scratch']
  %s0 = inlined_call_operand.vmem [shape: f32[256,896], index: 0, kind: input, shape index: {}]
  %s1 = inlined_call_operand.vmem [shape: f32[256,128], index: 1, kind: input, shape index: {}]
  %s2 = inlined_call_operand.vmem [shape: bf16[896,512], index: 2, kind: input, shape index: {}]
  %s3 = inlined_call_operand.vmem [shape: f32[1,512], index: 3, kind: input, shape index: {}]
  %s4 = inlined_call_operand.vmem [shape: bf16[512,256], index: 4, kind: input, shape index: {}]
  %s5 = inlined_call_operand.vmem [shape: f32[1,256], index: 5, kind: input, shape index: {}]
  %s6 = inlined_call_operand.vmem [shape: bf16[128,512], index: 6, kind: input, shape index: {}]
  %s7 = inlined_call_operand.vmem [shape: f32[1,512], index: 7, kind: input, shape index: {}]
  %s8 = inlined_call_operand.vmem [shape: bf16[512,896], index: 8, kind: input, shape index: {}]
  %s9 = inlined_call_operand.vmem [shape: f32[1,896], index: 9, kind: input, shape index: {}]
  %s10 = inlined_call_operand.vmem [shape: f32[256,896], index: 10, kind: output, shape index: {0}]
  %s11 = inlined_call_operand.vmem [shape: f32[256,256], index: 11, kind: output, shape index: {1}]
  %12 = xla_tuple %s10, %s11
  %s13 = sld [smem:[#allocation0]]
  $region81: #{vae_forward.1} parent=0
    _
  %s15 = ssub.s32 1, %s13
  %s16 = scalar_select 0, %s15, %s13
  loop: start=0, step=1, limit=4
  $region2: #{vae_forward.1} parent=0 // loop_pre_header
    _
  $region3: #{vae_forward.1} parent=0 // loop_header
    %s18 = sphi 0, %s22
    %p19 = scmp.ge.s32.totalorder %s18, 4
    %s28 = sphi 0, %s30
    %s31 = sphi 0, %s28
    %s32 = sphi 0, %s31
    %s48 = sphi 0, %s32
    %s54 = sphi 0, %s56
    %s57 = sphi 0, %s54
    %s58 = sphi 0, %s57
    %s74 = sphi 0, %s58
    %s78 = sphi 0, %s78
    %s80 = sphi 0, %s78
    %s81 = sphi 0, %s80
    %s95 = sphi 0, %s81
    %s99 = sphi 0, %s99
    %s101 = sphi 0, %s99
    %s102 = sphi 0, %s101
    %s116 = sphi 0, %s102
    %s120 = sphi 0, %s120
    %s122 = sphi 0, %s120
    %s123 = sphi 0, %s122
    %s137 = sphi 0, %s123
    %s141 = sphi 0, %s141
    %s143 = sphi 0, %s141
    %s144 = sphi 0, %s143
    %s158 = sphi 0, %s144
    %s162 = sphi 0, %s162
    %s164 = sphi 0, %s162
    %s165 = sphi 0, %s164
    %s179 = sphi 0, %s165
    %s183 = sphi 0, %s183
    %s185 = sphi 0, %s183
    %s186 = sphi 0, %s185
    %s200 = sphi 0, %s186
    %s204 = sphi 0, %s204
    %s206 = sphi 0, %s204
    %s207 = sphi 0, %s206
    %s221 = sphi 0, %s207
    %s225 = sphi 0, %s225
    %s227 = sphi 0, %s225
    %s228 = sphi 0, %s227
    %s242 = sphi 0, %s228
    %s248 = sphi 0, %s250
    %s251 = sphi 0, %s248
    %s252 = sphi 0, %s251
    %s268 = sphi 0, %s252
    %s274 = sphi 0, %s276
    %s277 = sphi 0, %s274
    %s278 = sphi 0, %s277
    %s294 = sphi 0, %s278
  $region4: #{vae_forward.1} parent=0 // loop_header_branch
    %21 = sbr.rel (%p19) target = $region8
  $region5: #{vae_forward.1} parent=0 // loop_body
    %s23 = ssub.s32 %s18, 1
    %s24 = ssub.s32 %s18, 2
    %s25 = sadd.s32 %s18, 1
    %s26 = ssub.s32 %s18, %s25
    %p27 = scmp.eq.s32.totalorder %s26, 0
    %s29 = sadd.s32 %s28, 1
    %s30 = scalar_select %p27, %s28, %s29
    %p33 = pneg %p27
    %p34 = scmp.eq.s32.totalorder %s18, 1
    %p35 = por %p33, %p34
    %p36 = scmp.ne.s32.totalorder %s28, %s31
    %p37 = scmp.eq.s32.totalorder %s18, 0
    %p38 = por %p36, %p37
    %p39 = scmp.ne.s32.totalorder %s28, %s31
    %p40 = scmp.eq.s32.totalorder %s23, 1
    %p41 = por %p39, %p40
    %p42 = scmp.ne.s32.totalorder %s31, %s32
    %p43 = scmp.eq.s32.totalorder %s23, 0
    %p44 = por %p42, %p43
    %p45 = scmp.ne.s32.totalorder %s31, %s32
    %p46 = scmp.eq.s32.totalorder %s24, 1
    %p47 = por %p45, %p46
    %p49 = scmp.ne.s32.totalorder %s32, %s48
    %p50 = scmp.eq.s32.totalorder %s24, 0
    %p51 = por %p49, %p50
    %s52 = ssub.s32 %s18, %s25
    %p53 = scmp.eq.s32.totalorder %s52, 0
    %s55 = sadd.s32 %s54, 1
    %s56 = scalar_select %p53, %s54, %s55
    %p59 = pneg %p53
    %p60 = scmp.eq.s32.totalorder %s18, 1
    %p61 = por %p59, %p60
    %p62 = scmp.ne.s32.totalorder %s54, %s57
    %p63 = scmp.eq.s32.totalorder %s18, 0
    %p64 = por %p62, %p63
    %p65 = scmp.ne.s32.totalorder %s54, %s57
    %p66 = scmp.eq.s32.totalorder %s23, 1
    %p67 = por %p65, %p66
    %p68 = scmp.ne.s32.totalorder %s57, %s58
    %p69 = scmp.eq.s32.totalorder %s23, 0
    %p70 = por %p68, %p69
    %p71 = scmp.ne.s32.totalorder %s57, %s58
    %p72 = scmp.eq.s32.totalorder %s24, 1
    %p73 = por %p71, %p72
    %p75 = scmp.ne.s32.totalorder %s58, %s74
    %p76 = scmp.eq.s32.totalorder %s24, 0
    %p77 = por %p75, %p76
    %s79 = sadd.s32 %s78, 1
    %p82 = scmp.eq.s32.totalorder %s18, 1
    %p83 = scmp.ne.s32.totalorder %s78, %s80
    %p84 = scmp.eq.s32.totalorder %s18, 0
    %p85 = por %p83, %p84
    %p86 = scmp.ne.s32.totalorder %s78, %s80
    %p87 = scmp.eq.s32.totalorder %s23, 1
    %p88 = por %p86, %p87
    %p89 = scmp.ne.s32.totalorder %s80, %s81
    %p90 = scmp.eq.s32.totalorder %s23, 0
    %p91 = por %p89, %p90
    %p92 = scmp.ne.s32.totalorder %s80, %s81
    %p93 = scmp.eq.s32.totalorder %s24, 1
    %p94 = por %p92, %p93
    %p96 = scmp.ne.s32.totalorder %s81, %s95
    %p97 = scmp.eq.s32.totalorder %s24, 0
    %p98 = por %p96, %p97
    %s100 = sadd.s32 %s99, 1
    %p103 = scmp.eq.s32.totalorder %s18, 1
    %p104 = scmp.ne.s32.totalorder %s99, %s101
    %p105 = scmp.eq.s32.totalorder %s18, 0
    %p106 = por %p104, %p105
    %p107 = scmp.ne.s32.totalorder %s99, %s101
    %p108 = scmp.eq.s32.totalorder %s23, 1
    %p109 = por %p107, %p108
    %p110 = scmp.ne.s32.totalorder %s101, %s102
    %p111 = scmp.eq.s32.totalorder %s23, 0
    %p112 = por %p110, %p111
    %p113 = scmp.ne.s32.totalorder %s101, %s102
    %p114 = scmp.eq.s32.totalorder %s24, 1
    %p115 = por %p113, %p114
    %p117 = scmp.ne.s32.totalorder %s102, %s116
    %p118 = scmp.eq.s32.totalorder %s24, 0
    %p119 = por %p117, %p118
    %s121 = sadd.s32 %s120, 1
    %p124 = scmp.eq.s32.totalorder %s18, 1
    %p125 = scmp.ne.s32.totalorder %s120, %s122
    %p126 = scmp.eq.s32.totalorder %s18, 0
    %p127 = por %p125, %p126
    %p128 = scmp.ne.s32.totalorder %s120, %s122
    %p129 = scmp.eq.s32.totalorder %s23, 1
    %p130 = por %p128, %p129
    %p131 = scmp.ne.s32.totalorder %s122, %s123
    %p132 = scmp.eq.s32.totalorder %s23, 0
    %p133 = por %p131, %p132
    %p134 = scmp.ne.s32.totalorder %s122, %s123
    %p135 = scmp.eq.s32.totalorder %s24, 1
    %p136 = por %p134, %p135
    %p138 = scmp.ne.s32.totalorder %s123, %s137
    %p139 = scmp.eq.s32.totalorder %s24, 0
    %p140 = por %p138, %p139
    %s142 = sadd.s32 %s141, 1
    %p145 = scmp.eq.s32.totalorder %s18, 1
    %p146 = scmp.ne.s32.totalorder %s141, %s143
    %p147 = scmp.eq.s32.totalorder %s18, 0
    %p148 = por %p146, %p147
    %p149 = scmp.ne.s32.totalorder %s141, %s143
    %p150 = scmp.eq.s32.totalorder %s23, 1
    %p151 = por %p149, %p150
    %p152 = scmp.ne.s32.totalorder %s143, %s144
    %p153 = scmp.eq.s32.totalorder %s23, 0
    %p154 = por %p152, %p153
    %p155 = scmp.ne.s32.totalorder %s143, %s144
    %p156 = scmp.eq.s32.totalorder %s24, 1
    %p157 = por %p155, %p156
    %p159 = scmp.ne.s32.totalorder %s144, %s158
    %p160 = scmp.eq.s32.totalorder %s24, 0
    %p161 = por %p159, %p160
    %s163 = sadd.s32 %s162, 1
    %p166 = scmp.eq.s32.totalorder %s18, 1
    %p167 = scmp.ne.s32.totalorder %s162, %s164
    %p168 = scmp.eq.s32.totalorder %s18, 0
    %p169 = por %p167, %p168
    %p170 = scmp.ne.s32.totalorder %s162, %s164
    %p171 = scmp.eq.s32.totalorder %s23, 1
    %p172 = por %p170, %p171
    %p173 = scmp.ne.s32.totalorder %s164, %s165
    %p174 = scmp.eq.s32.totalorder %s23, 0
    %p175 = por %p173, %p174
    %p176 = scmp.ne.s32.totalorder %s164, %s165
    %p177 = scmp.eq.s32.totalorder %s24, 1
    %p178 = por %p176, %p177
    %p180 = scmp.ne.s32.totalorder %s165, %s179
    %p181 = scmp.eq.s32.totalorder %s24, 0
    %p182 = por %p180, %p181
    %s184 = sadd.s32 %s183, 1
    %p187 = scmp.eq.s32.totalorder %s18, 1
    %p188 = scmp.ne.s32.totalorder %s183, %s185
    %p189 = scmp.eq.s32.totalorder %s18, 0
    %p190 = por %p188, %p189
    %p191 = scmp.ne.s32.totalorder %s183, %s185
    %p192 = scmp.eq.s32.totalorder %s23, 1
    %p193 = por %p191, %p192
    %p194 = scmp.ne.s32.totalorder %s185, %s186
    %p195 = scmp.eq.s32.totalorder %s23, 0
    %p196 = por %p194, %p195
    %p197 = scmp.ne.s32.totalorder %s185, %s186
    %p198 = scmp.eq.s32.totalorder %s24, 1
    %p199 = por %p197, %p198
    %p201 = scmp.ne.s32.totalorder %s186, %s200
    %p202 = scmp.eq.s32.totalorder %s24, 0
    %p203 = por %p201, %p202
    %s205 = sadd.s32 %s204, 1
    %p208 = scmp.eq.s32.totalorder %s18, 1
    %p209 = scmp.ne.s32.totalorder %s204, %s206
    %p210 = scmp.eq.s32.totalorder %s18, 0
    %p211 = por %p209, %p210
    %p212 = scmp.ne.s32.totalorder %s204, %s206
    %p213 = scmp.eq.s32.totalorder %s23, 1
    %p214 = por %p212, %p213
    %p215 = scmp.ne.s32.totalorder %s206, %s207
    %p216 = scmp.eq.s32.totalorder %s23, 0
    %p217 = por %p215, %p216
    %p218 = scmp.ne.s32.totalorder %s206, %s207
    %p219 = scmp.eq.s32.totalorder %s24, 1
    %p220 = por %p218, %p219
    %p222 = scmp.ne.s32.totalorder %s207, %s221
    %p223 = scmp.eq.s32.totalorder %s24, 0
    %p224 = por %p222, %p223
    %s226 = sadd.s32 %s225, 1
    %p229 = scmp.eq.s32.totalorder %s18, 1
    %p230 = scmp.ne.s32.totalorder %s225, %s227
    %p231 = scmp.eq.s32.totalorder %s18, 0
    %p232 = por %p230, %p231
    %p233 = scmp.ne.s32.totalorder %s225, %s227
    %p234 = scmp.eq.s32.totalorder %s23, 1
    %p235 = por %p233, %p234
    %p236 = scmp.ne.s32.totalorder %s227, %s228
    %p237 = scmp.eq.s32.totalorder %s23, 0
    %p238 = por %p236, %p237
    %p239 = scmp.ne.s32.totalorder %s227, %s228
    %p240 = scmp.eq.s32.totalorder %s24, 1
    %p241 = por %p239, %p240
    %p243 = scmp.ne.s32.totalorder %s228, %s242
    %p244 = scmp.eq.s32.totalorder %s24, 0
    %p245 = por %p243, %p244
    %s246 = ssub.s32 %s18, %s25
    %p247 = scmp.eq.s32.totalorder %s246, 0
    %s249 = sadd.s32 %s248, 1
    %s250 = scalar_select %p247, %s248, %s249
    %p253 = pneg %p247
    %p254 = scmp.eq.s32.totalorder %s18, 1
    %p255 = por %p253, %p254
    %p256 = scmp.ne.s32.totalorder %s248, %s251
    %p257 = scmp.eq.s32.totalorder %s18, 0
    %p258 = por %p256, %p257
    %p259 = scmp.ne.s32.totalorder %s248, %s251
    %p260 = scmp.eq.s32.totalorder %s23, 1
    %p261 = por %p259, %p260
    %p262 = scmp.ne.s32.totalorder %s251, %s252
    %p263 = scmp.eq.s32.totalorder %s23, 0
    %p264 = por %p262, %p263
    %p265 = scmp.ne.s32.totalorder %s251, %s252
    %p266 = scmp.eq.s32.totalorder %s24, 1
    %p267 = por %p265, %p266
    %p269 = scmp.ne.s32.totalorder %s252, %s268
    %p270 = scmp.eq.s32.totalorder %s24, 0
    %p271 = por %p269, %p270
    %s272 = ssub.s32 %s18, %s25
    %p273 = scmp.eq.s32.totalorder %s272, 0
    %s275 = sadd.s32 %s274, 1
    %s276 = scalar_select %p273, %s274, %s275
    %p279 = pneg %p273
    %p280 = scmp.eq.s32.totalorder %s18, 1
    %p281 = por %p279, %p280
    %p282 = scmp.ne.s32.totalorder %s274, %s277
    %p283 = scmp.eq.s32.totalorder %s18, 0
    %p284 = por %p282, %p283
    %p285 = scmp.ne.s32.totalorder %s274, %s277
    %p286 = scmp.eq.s32.totalorder %s23, 1
    %p287 = por %p285, %p286
    %p288 = scmp.ne.s32.totalorder %s277, %s278
    %p289 = scmp.eq.s32.totalorder %s23, 0
    %p290 = por %p288, %p289
    %p291 = scmp.ne.s32.totalorder %s277, %s278
    %p292 = scmp.eq.s32.totalorder %s24, 1
    %p293 = por %p291, %p292
    %p295 = scmp.ne.s32.totalorder %s278, %s294
    %p296 = scmp.eq.s32.totalorder %s24, 0
    %p297 = por %p295, %p296
    %p298 = scmp.le.s32.totalorder 1, %s18
    %p299 = scmp.lt.s32.totalorder %s18, 3
    %p300 = pnand %p298, %p299
    %p301 = pneg %p300
    // Predicated region
    $region9: #{vae_forward.1} parent=5 // pred_check
      _
    $region10: #{vae_forward.1} parent=5 // pred_check_branch
      %303 = sbr.rel (%p300) target = $region12
    $region11: #{vae_forward.1} parent=5 // pred_region
      %s304 = ssub.s32 %s18, 1
      // Predicated region
      $region13: #{vae_forward.1} parent=11 // pred_check
        %p305 = pneg %p91
      $region14: #{vae_forward.1} parent=11 // pred_check_branch
        %307 = sbr.rel (%p305) target = $region16
      $region15: #{vae_forward.1} parent=11 // pred_region
        _
      $region16: #{vae_forward.1} parent=11 // pred_fallthru
        _
      // Predicated region
      $region17: #{vae_forward.1} parent=11 // pred_check
        %p308 = pneg %p112
      $region18: #{vae_forward.1} parent=11 // pred_check_branch
        %310 = sbr.rel (%p308) target = $region20
      $region19: #{vae_forward.1} parent=11 // pred_region
        _
      $region20: #{vae_forward.1} parent=11 // pred_fallthru
        _
      // Predicated region
      $region21: #{vae_forward.1} parent=11 // pred_check
        %p311 = pneg %p133
      $region22: #{vae_forward.1} parent=11 // pred_check_branch
        %313 = sbr.rel (%p311) target = $region24
      $region23: #{vae_forward.1} parent=11 // pred_region
        _
      $region24: #{vae_forward.1} parent=11 // pred_fallthru
        _
      // Predicated region
      $region25: #{vae_forward.1} parent=11 // pred_check
        %p314 = pneg %p154
      $region26: #{vae_forward.1} parent=11 // pred_check_branch
        %316 = sbr.rel (%p314) target = $region28
      $region27: #{vae_forward.1} parent=11 // pred_region
        _
      $region28: #{vae_forward.1} parent=11 // pred_fallthru
        _
      // Predicated region
      $region29: #{vae_forward.1} parent=11 // pred_check
        %p317 = pneg %p175
      $region30: #{vae_forward.1} parent=11 // pred_check_branch
        %319 = sbr.rel (%p317) target = $region32
      $region31: #{vae_forward.1} parent=11 // pred_region
        _
      $region32: #{vae_forward.1} parent=11 // pred_fallthru
        _
      // Predicated region
      $region33: #{vae_forward.1} parent=11 // pred_check
        %p320 = pneg %p196
      $region34: #{vae_forward.1} parent=11 // pred_check_branch
        %322 = sbr.rel (%p320) target = $region36
      $region35: #{vae_forward.1} parent=11 // pred_region
        _
      $region36: #{vae_forward.1} parent=11 // pred_fallthru
        _
      // Predicated region
      $region37: #{vae_forward.1} parent=11 // pred_check
        %p323 = pneg %p217
      $region38: #{vae_forward.1} parent=11 // pred_check_branch
        %325 = sbr.rel (%p323) target = $region40
      $region39: #{vae_forward.1} parent=11 // pred_region
        _
      $region40: #{vae_forward.1} parent=11 // pred_fallthru
        _
      // Predicated region
      $region41: #{vae_forward.1} parent=11 // pred_check
        %p326 = pneg %p238
      $region42: #{vae_forward.1} parent=11 // pred_check_branch
        %328 = sbr.rel (%p326) target = $region44
      $region43: #{vae_forward.1} parent=11 // pred_region
        _
      $region44: #{vae_forward.1} parent=11 // pred_fallthru
        _
    $region12: #{vae_forward.1} parent=5 // pred_fallthru
      _
    %p329 = scmp.lt.s32.totalorder %s18, 2
    // Predicated region
    $region45: #{vae_forward.1} parent=5 // pred_check
      %p330 = pneg %p329
    $region46: #{vae_forward.1} parent=5 // pred_check_branch
      %332 = sbr.rel (%p330) target = $region48
    $region47: #{vae_forward.1} parent=5 // pred_region
      // Predicated region
      $region49: #{vae_forward.1} parent=47 // pred_check
        %p333 = pneg %p38
      $region50: #{vae_forward.1} parent=47 // pred_check_branch
        %335 = sbr.rel (%p333) target = $region52
      $region51: #{vae_forward.1} parent=47 // pred_region
        %s336 = smul.u32 16, %s18
        %p337 = scmp.lt.s32.totalorder %s336, 31
        %s338 = scalar_select %p337, %s336, 31
        %s339 = smul.addr %s338, 7
        %s340 = smul.addr %s339, 8
        %s341 = scalar_lea.vmem %s0, %s340
        %s342 = smul.u32 16, %s18
      $region52: #{vae_forward.1} parent=47 // pred_fallthru
        _
      // Predicated region
      $region53: #{vae_forward.1} parent=47 // pred_check
        %p343 = pneg %p64
      $region54: #{vae_forward.1} parent=47 // pred_check_branch
        %345 = sbr.rel (%p343) target = $region56
      $region55: #{vae_forward.1} parent=47 // pred_region
        %s346 = smul.u32 16, %s18
        %p347 = scmp.lt.s32.totalorder %s346, 31
        %s348 = scalar_select %p347, %s346, 31
        %s349 = smul.addr %s348, 8
        %s350 = scalar_lea.vmem %s1, %s349
        %s351 = smul.u32 16, %s18
      $region56: #{vae_forward.1} parent=47 // pred_fallthru
        _
    $region48: #{vae_forward.1} parent=5 // pred_fallthru
      _
    %p352 = scmp.le.s32.totalorder 1, %s18
    %p353 = scmp.lt.s32.totalorder %s18, 3
    %p354 = pnand %p352, %p353
    %p355 = pneg %p354
    // Predicated region
    $region57: #{vae_forward.1} parent=5 // pred_check
      _
    $region58: #{vae_forward.1} parent=5 // pred_check_branch
      %357 = sbr.rel (%p354) target = $region60
    $region59: #{vae_forward.1} parent=5 // pred_region
      %s358 = ssub.s32 %s18, 1
      %s359 = smul.u32 16, %s23
      %p360 = scmp.lt.s32.totalorder %s359, 31
      %s361 = scalar_select %p360, %s359, 31
      %s362 = smul.addr %s361, 7
      %s363 = smul.addr %s362, 8
      %s364 = scalar_lea.vmem %s0, %s363
      %p365 = pneg %p44
      %p366 = pneg %p41
      %s367 = smul.u32 16, %s23
      %p368 = scmp.lt.s32.totalorder %s367, 31
      %s369 = scalar_select %p368, %s367, 31
      %s370 = smul.addr %s369, 8
      %s371 = scalar_lea.vmem %s1, %s370
      %p372 = pneg %p70
      %p373 = pneg %p67
      %p374 = pneg %p91
      %p375 = pneg %p88
      %p376 = pneg %p112
      %p377 = pneg %p109
      %p378 = pneg %p133
      %p379 = pneg %p130
      %p380 = pneg %p154
      %p381 = pneg %p151
      %p382 = pneg %p175
      %p383 = pneg %p172
      %p384 = pneg %p196
      %p385 = pneg %p193
      %p386 = pneg %p217
      %p387 = pneg %p214
      %p388 = pneg %p238
      %p389 = pneg %p235
      %p390 = pneg %p264
      %p391 = pneg %p261
      %s392 = smul.u32 16, %s23
      %p393 = scmp.lt.s32.totalorder %s392, 31
      %s394 = scalar_select %p393, %s392, 31
      %s395 = smul.addr %s394, 7
      %s396 = smul.addr %s395, 8
      %s397 = scalar_lea.vmem %s10, %s396
      %p398 = pneg %p290
      %p399 = pneg %p287
      %s400 = smul.u32 16, %s23
      %p401 = scmp.lt.s32.totalorder %s400, 31
      %s402 = scalar_select %p401, %s400, 31
      %s403 = smul.addr %s402, 2
      %s404 = smul.addr %s403, 8
      %s405 = scalar_lea.vmem %s11, %s404
      %s406 = smul.u32 16, %s23
      %p407 = scmp.lt.s32.totalorder %s406, 31
      %s408 = scalar_select %p407, %s406, 31
      %s409 = smul.addr %s408, 7
      %s410 = smul.addr %s409, 8
      %s411 = scalar_lea.vmem %s0, %s410
      %s412 = smul.u32 16, %s23
      %s413 = smul.u32 16, %s23
      %p414 = scmp.lt.s32.totalorder %s413, 31
      %s415 = scalar_select %p414, %s413, 31
      %s416 = smul.addr %s415, 8
      %s417 = scalar_lea.vmem %s1, %s416
      %s418 = smul.u32 16, %s23
      %s419 = smul.u32 16, %s23
      %p420 = scmp.lt.s32.totalorder %s419, 31
      %s421 = scalar_select %p420, %s419, 31
      %s422 = smul.addr %s421, 7
      %s423 = smul.addr %s422, 8
      %s424 = scalar_lea.vmem %s10, %s423
      %s425 = smul.u32 16, %s23
      %s426 = smul.u32 16, %s23
      %p427 = scmp.lt.s32.totalorder %s426, 31
      %s428 = scalar_select %p427, %s426, 31
      %s429 = smul.addr %s428, 2
      %s430 = smul.addr %s429, 8
      %s431 = scalar_lea.vmem %s11, %s430
      %s432 = smul.u32 16, %s23
      %v433 = vld [vmem:[%s411] sm:$0xff]
      %v434 = vld [vmem:[%s411 + $0x8] sm:$0xff]
      %v435 = vld [vmem:[%s411 + $0x10] sm:$0xff]
      %v436 = vld [vmem:[%s411 + $0x18] sm:$0xff]
      %v437 = vld [vmem:[%s411 + $0x20] sm:$0xff]
      %v438 = vld [vmem:[%s411 + $0x28] sm:$0xff]
      %v439 = vld [vmem:[%s411 + $0x30] sm:$0xff]
      %v440 = vld [vmem:[%s411 + $0x38] sm:$0xff]
      %v441 = vld [vmem:[%s411 + $0x40] sm:$0xff]
      %v442 = vld [vmem:[%s411 + $0x48] sm:$0xff]
      %v443 = vld [vmem:[%s411 + $0x50] sm:$0xff]
      %v444 = vld [vmem:[%s411 + $0x58] sm:$0xff]
      %v445 = vld [vmem:[%s411 + $0x60] sm:$0xff]
      %v446 = vld [vmem:[%s411 + $0x68] sm:$0xff]
      %v447 = vld [vmem:[%s411 + $0x70] sm:$0xff]
      %v448 = vld [vmem:[%s411 + $0x78] sm:$0xff]
      %v449 = vld [vmem:[%s411 + $0x80] sm:$0xff]
      %v450 = vld [vmem:[%s411 + $0x88] sm:$0xff]
      %v451 = vld [vmem:[%s411 + $0x90] sm:$0xff]
      %v452 = vld [vmem:[%s411 + $0x98] sm:$0xff]
      %v453 = vld [vmem:[%s411 + $0xa0] sm:$0xff]
      %v454 = vld [vmem:[%s411 + $0xa8] sm:$0xff]
      %v455 = vld [vmem:[%s411 + $0xb0] sm:$0xff]
      %v456 = vld [vmem:[%s411 + $0xb8] sm:$0xff]
      %v457 = vld [vmem:[%s411 + $0xc0] sm:$0xff]
      %v458 = vld [vmem:[%s411 + $0xc8] sm:$0xff]
      %v459 = vld [vmem:[%s411 + $0xd0] sm:$0xff]
      %v460 = vld [vmem:[%s411 + $0xd8] sm:$0xff]
      %v461 = vld [vmem:[%s411 + $0xe0] sm:$0xff]
      %v462 = vld [vmem:[%s411 + $0xe8] sm:$0xff]
      %v463 = vld [vmem:[%s411 + $0xf0] sm:$0xff]
      %v464 = vld [vmem:[%s411 + $0xf8] sm:$0xff]
      %v465 = vld [vmem:[%s411 + $0x100] sm:$0xff]
      %v466 = vld [vmem:[%s411 + $0x108] sm:$0xff]
      %v467 = vld [vmem:[%s411 + $0x110] sm:$0xff]
      %v468 = vld [vmem:[%s411 + $0x118] sm:$0xff]
      %v469 = vld [vmem:[%s411 + $0x120] sm:$0xff]
      %v470 = vld [vmem:[%s411 + $0x128] sm:$0xff]
      %v471 = vld [vmem:[%s411 + $0x130] sm:$0xff]
      %v472 = vld [vmem:[%s411 + $0x138] sm:$0xff]
      %v473 = vld [vmem:[%s411 + $0x140] sm:$0xff]
      %v474 = vld [vmem:[%s411 + $0x148] sm:$0xff]
      %v475 = vld [vmem:[%s411 + $0x150] sm:$0xff]
      %v476 = vld [vmem:[%s411 + $0x158] sm:$0xff]
      %v477 = vld [vmem:[%s411 + $0x160] sm:$0xff]
      %v478 = vld [vmem:[%s411 + $0x168] sm:$0xff]
      %v479 = vld [vmem:[%s411 + $0x170] sm:$0xff]
      %v480 = vld [vmem:[%s411 + $0x178] sm:$0xff]
      %v481 = vld [vmem:[%s411 + $0x180] sm:$0xff]
      %v482 = vld [vmem:[%s411 + $0x188] sm:$0xff]
      %v483 = vld [vmem:[%s411 + $0x190] sm:$0xff]
      %v484 = vld [vmem:[%s411 + $0x198] sm:$0xff]
      %v485 = vld [vmem:[%s411 + $0x1a0] sm:$0xff]
      %v486 = vld [vmem:[%s411 + $0x1a8] sm:$0xff]
      %v487 = vld [vmem:[%s411 + $0x1b0] sm:$0xff]
      %v488 = vld [vmem:[%s411 + $0x1b8] sm:$0xff]
      %v489 = vld [vmem:[%s411 + $0x1c0] sm:$0xff]
      %v490 = vld [vmem:[%s411 + $0x1c8] sm:$0xff]
      %v491 = vld [vmem:[%s411 + $0x1d0] sm:$0xff]
      %v492 = vld [vmem:[%s411 + $0x1d8] sm:$0xff]
      %v493 = vld [vmem:[%s411 + $0x1e0] sm:$0xff]
      %v494 = vld [vmem:[%s411 + $0x1e8] sm:$0xff]
      %v495 = vld [vmem:[%s411 + $0x1f0] sm:$0xff]
      %v496 = vld [vmem:[%s411 + $0x1f8] sm:$0xff]
      %v497 = vld [vmem:[%s411 + $0x200] sm:$0xff]
      %v498 = vld [vmem:[%s411 + $0x208] sm:$0xff]
      %v499 = vld [vmem:[%s411 + $0x210] sm:$0xff]
      %v500 = vld [vmem:[%s411 + $0x218] sm:$0xff]
      %v501 = vld [vmem:[%s411 + $0x220] sm:$0xff]
      %v502 = vld [vmem:[%s411 + $0x228] sm:$0xff]
      %v503 = vld [vmem:[%s411 + $0x230] sm:$0xff]
      %v504 = vld [vmem:[%s411 + $0x238] sm:$0xff]
      %v505 = vld [vmem:[%s411 + $0x240] sm:$0xff]
      %v506 = vld [vmem:[%s411 + $0x248] sm:$0xff]
      %v507 = vld [vmem:[%s411 + $0x250] sm:$0xff]
      %v508 = vld [vmem:[%s411 + $0x258] sm:$0xff]
      %v509 = vld [vmem:[%s411 + $0x260] sm:$0xff]
      %v510 = vld [vmem:[%s411 + $0x268] sm:$0xff]
      %v511 = vld [vmem:[%s411 + $0x270] sm:$0xff]
      %v512 = vld [vmem:[%s411 + $0x278] sm:$0xff]
      %v513 = vld [vmem:[%s411 + $0x280] sm:$0xff]
      %v514 = vld [vmem:[%s411 + $0x288] sm:$0xff]
      %v515 = vld [vmem:[%s411 + $0x290] sm:$0xff]
      %v516 = vld [vmem:[%s411 + $0x298] sm:$0xff]
      %v517 = vld [vmem:[%s411 + $0x2a0] sm:$0xff]
      %v518 = vld [vmem:[%s411 + $0x2a8] sm:$0xff]
      %v519 = vld [vmem:[%s411 + $0x2b0] sm:$0xff]
      %v520 = vld [vmem:[%s411 + $0x2b8] sm:$0xff]
      %v521 = vld [vmem:[%s411 + $0x2c0] sm:$0xff]
      %v522 = vld [vmem:[%s411 + $0x2c8] sm:$0xff]
      %v523 = vld [vmem:[%s411 + $0x2d0] sm:$0xff]
      %v524 = vld [vmem:[%s411 + $0x2d8] sm:$0xff]
      %v525 = vld [vmem:[%s411 + $0x2e0] sm:$0xff]
      %v526 = vld [vmem:[%s411 + $0x2e8] sm:$0xff]
      %v527 = vld [vmem:[%s411 + $0x2f0] sm:$0xff]
      %v528 = vld [vmem:[%s411 + $0x2f8] sm:$0xff]
      %v529 = vld [vmem:[%s411 + $0x300] sm:$0xff]
      %v530 = vld [vmem:[%s411 + $0x308] sm:$0xff]
      %v531 = vld [vmem:[%s411 + $0x310] sm:$0xff]
      %v532 = vld [vmem:[%s411 + $0x318] sm:$0xff]
      %v533 = vld [vmem:[%s411 + $0x320] sm:$0xff]
      %v534 = vld [vmem:[%s411 + $0x328] sm:$0xff]
      %v535 = vld [vmem:[%s411 + $0x330] sm:$0xff]
      %v536 = vld [vmem:[%s411 + $0x338] sm:$0xff]
      %v537 = vld [vmem:[%s411 + $0x340] sm:$0xff]
      %v538 = vld [vmem:[%s411 + $0x348] sm:$0xff]
      %v539 = vld [vmem:[%s411 + $0x350] sm:$0xff]
      %v540 = vld [vmem:[%s411 + $0x358] sm:$0xff]
      %v541 = vld [vmem:[%s411 + $0x360] sm:$0xff]
      %v542 = vld [vmem:[%s411 + $0x368] sm:$0xff]
      %v543 = vld [vmem:[%s411 + $0x370] sm:$0xff]
      %v544 = vld [vmem:[%s411 + $0x378] sm:$0xff]
      %v545 = vld [vmem:[%s417] sm:$0xff]
      %v546 = vld [vmem:[%s417 + $0x8] sm:$0xff]
      %v547 = vld [vmem:[%s417 + $0x10] sm:$0xff]
      %v548 = vld [vmem:[%s417 + $0x18] sm:$0xff]
      %v549 = vld [vmem:[%s417 + $0x20] sm:$0xff]
      %v550 = vld [vmem:[%s417 + $0x28] sm:$0xff]
      %v551 = vld [vmem:[%s417 + $0x30] sm:$0xff]
      %v552 = vld [vmem:[%s417 + $0x38] sm:$0xff]
      %v553 = vld [vmem:[%s417 + $0x40] sm:$0xff]
      %v554 = vld [vmem:[%s417 + $0x48] sm:$0xff]
      %v555 = vld [vmem:[%s417 + $0x50] sm:$0xff]
      %v556 = vld [vmem:[%s417 + $0x58] sm:$0xff]
      %v557 = vld [vmem:[%s417 + $0x60] sm:$0xff]
      %v558 = vld [vmem:[%s417 + $0x68] sm:$0xff]
      %v559 = vld [vmem:[%s417 + $0x70] sm:$0xff]
      %v560 = vld [vmem:[%s417 + $0x78] sm:$0xff]
      %v561 = vpack.c.bf16 %v440, %v433
      %v562 = vpack.c.bf16 %v441, %v434
      %v563 = vpack.c.bf16 %v442, %v435
      %v564 = vpack.c.bf16 %v443, %v436
      %v565 = vpack.c.bf16 %v444, %v437
      %v566 = vpack.c.bf16 %v445, %v438
      %v567 = vpack.c.bf16 %v446, %v439
      %v568 = vpack.c.bf16 %v454, %v447
      %v569 = vpack.c.bf16 %v455, %v448
      %v570 = vpack.c.bf16 %v456, %v449
      %v571 = vpack.c.bf16 %v457, %v450
      %v572 = vpack.c.bf16 %v458, %v451
      %v573 = vpack.c.bf16 %v459, %v452
      %v574 = vpack.c.bf16 %v460, %v453
      %v575 = vpack.c.bf16 %v468, %v461
      %v576 = vpack.c.bf16 %v469, %v462
      %v577 = vpack.c.bf16 %v470, %v463
      %v578 = vpack.c.bf16 %v471, %v464
      %v579 = vpack.c.bf16 %v472, %v465
      %v580 = vpack.c.bf16 %v473, %v466
      %v581 = vpack.c.bf16 %v474, %v467
      %v582 = vpack.c.bf16 %v482, %v475
      %v583 = vpack.c.bf16 %v483, %v476
      %v584 = vpack.c.bf16 %v484, %v477
      %v585 = vpack.c.bf16 %v485, %v478
      %v586 = vpack.c.bf16 %v486, %v479
      %v587 = vpack.c.bf16 %v487, %v480
      %v588 = vpack.c.bf16 %v488, %v481
      %v589 = vpack.c.bf16 %v496, %v489
      %v590 = vpack.c.bf16 %v497, %v490
      %v591 = vpack.c.bf16 %v498, %v491
      %v592 = vpack.c.bf16 %v499, %v492
      %v593 = vpack.c.bf16 %v500, %v493
      %v594 = vpack.c.bf16 %v501, %v494
      %v595 = vpack.c.bf16 %v502, %v495
      %v596 = vpack.c.bf16 %v510, %v503
      %v597 = vpack.c.bf16 %v511, %v504
      %v598 = vpack.c.bf16 %v512, %v505
      %v599 = vpack.c.bf16 %v513, %v506
      %v600 = vpack.c.bf16 %v514, %v507
      %v601 = vpack.c.bf16 %v515, %v508
      %v602 = vpack.c.bf16 %v516, %v509
      %v603 = vpack.c.bf16 %v524, %v517
      %v604 = vpack.c.bf16 %v525, %v518
      %v605 = vpack.c.bf16 %v526, %v519
      %v606 = vpack.c.bf16 %v527, %v520
      %v607 = vpack.c.bf16 %v528, %v521
      %v608 = vpack.c.bf16 %v529, %v522
      %v609 = vpack.c.bf16 %v530, %v523
      %v610 = vpack.c.bf16 %v538, %v531
      %v611 = vpack.c.bf16 %v539, %v532
      %v612 = vpack.c.bf16 %v540, %v533
      %v613 = vpack.c.bf16 %v541, %v534
      %v614 = vpack.c.bf16 %v542, %v535
      %v615 = vpack.c.bf16 %v543, %v536
      %v616 = vpack.c.bf16 %v544, %v537
      %v617 = vld [vmem:[%s2] sm:$0xff]
      %v618 = vld [vmem:[%s2 + $0x8] sm:$0xff]
      %v619 = vld [vmem:[%s2 + $0x10] sm:$0xff]
      %v620 = vld [vmem:[%s2 + $0x18] sm:$0xff]
      %v621 = vld [vmem:[%s2 + $0x20] sm:$0xff]
      %v622 = vld [vmem:[%s2 + $0x28] sm:$0xff]
      %v623 = vld [vmem:[%s2 + $0x30] sm:$0xff]
      %v624 = vld [vmem:[%s2 + $0x38] sm:$0xff]
      %v625 = vld [vmem:[%s2 + $0x40] sm:$0xff]
      %v626 = vld [vmem:[%s2 + $0x48] sm:$0xff]
      %v627 = vld [vmem:[%s2 + $0x50] sm:$0xff]
      %v628 = vld [vmem:[%s2 + $0x58] sm:$0xff]
      %v629 = vld [vmem:[%s2 + $0x60] sm:$0xff]
      %v630 = vld [vmem:[%s2 + $0x68] sm:$0xff]
      %v631 = vld [vmem:[%s2 + $0x70] sm:$0xff]
      %v632 = vld [vmem:[%s2 + $0x78] sm:$0xff]
      %v633 = vld [vmem:[%s2 + $0x80] sm:$0xff]
      %v634 = vld [vmem:[%s2 + $0x88] sm:$0xff]
      %v635 = vld [vmem:[%s2 + $0x90] sm:$0xff]
      %v636 = vld [vmem:[%s2 + $0x98] sm:$0xff]
      %v637 = vld [vmem:[%s2 + $0xa0] sm:$0xff]
      %v638 = vld [vmem:[%s2 + $0xa8] sm:$0xff]
      %v639 = vld [vmem:[%s2 + $0xb0] sm:$0xff]
      %v640 = vld [vmem:[%s2 + $0xb8] sm:$0xff]
      %v641 = vld [vmem:[%s2 + $0xc0] sm:$0xff]
      %v642 = vld [vmem:[%s2 + $0xc8] sm:$0xff]
      %v643 = vld [vmem:[%s2 + $0xd0] sm:$0xff]
      %v644 = vld [vmem:[%s2 + $0xd8] sm:$0xff]
      %v645 = vld [vmem:[%s2 + $0xe0] sm:$0xff]
      %v646 = vld [vmem:[%s2 + $0xe8] sm:$0xff]
      %v647 = vld [vmem:[%s2 + $0xf0] sm:$0xff]
      %v648 = vld [vmem:[%s2 + $0xf8] sm:$0xff]
      %v649 = vld [vmem:[%s2 + $0x100] sm:$0xff]
      %v650 = vld [vmem:[%s2 + $0x108] sm:$0xff]
      %v651 = vld [vmem:[%s2 + $0x110] sm:$0xff]
      %v652 = vld [vmem:[%s2 + $0x118] sm:$0xff]
      %v653 = vld [vmem:[%s2 + $0x120] sm:$0xff]
      %v654 = vld [vmem:[%s2 + $0x128] sm:$0xff]
      %v655 = vld [vmem:[%s2 + $0x130] sm:$0xff]
      %v656 = vld [vmem:[%s2 + $0x138] sm:$0xff]
      %v657 = vld [vmem:[%s2 + $0x140] sm:$0xff]
      %v658 = vld [vmem:[%s2 + $0x148] sm:$0xff]
      %v659 = vld [vmem:[%s2 + $0x150] sm:$0xff]
      %v660 = vld [vmem:[%s2 + $0x158] sm:$0xff]
      %v661 = vld [vmem:[%s2 + $0x160] sm:$0xff]
      %v662 = vld [vmem:[%s2 + $0x168] sm:$0xff]
      %v663 = vld [vmem:[%s2 + $0x170] sm:$0xff]
      %v664 = vld [vmem:[%s2 + $0x178] sm:$0xff]
      %v665 = vld [vmem:[%s2 + $0x180] sm:$0xff]
      %v666 = vld [vmem:[%s2 + $0x188] sm:$0xff]
      %v667 = vld [vmem:[%s2 + $0x190] sm:$0xff]
      %v668 = vld [vmem:[%s2 + $0x198] sm:$0xff]
      %v669 = vld [vmem:[%s2 + $0x1a0] sm:$0xff]
      %v670 = vld [vmem:[%s2 + $0x1a8] sm:$0xff]
      %v671 = vld [vmem:[%s2 + $0x1b0] sm:$0xff]
      %v672 = vld [vmem:[%s2 + $0x1b8] sm:$0xff]
      %v673 = vld [vmem:[%s2 + $0x1c0] sm:$0xff]
      %v674 = vld [vmem:[%s2 + $0x1c8] sm:$0xff]
      %v675 = vld [vmem:[%s2 + $0x1d0] sm:$0xff]
      %v676 = vld [vmem:[%s2 + $0x1d8] sm:$0xff]
      %v677 = vld [vmem:[%s2 + $0x1e0] sm:$0xff]
      %v678 = vld [vmem:[%s2 + $0x1e8] sm:$0xff]
      %v679 = vld [vmem:[%s2 + $0x1f0] sm:$0xff]
      %v680 = vld [vmem:[%s2 + $0x1f8] sm:$0xff]
      %v681 = vld [vmem:[%s2 + $0x200] sm:$0xff]
      %v682 = vld [vmem:[%s2 + $0x208] sm:$0xff]
      %v683 = vld [vmem:[%s2 + $0x210] sm:$0xff]
      %v684 = vld [vmem:[%s2 + $0x218] sm:$0xff]
      %v685 = vld [vmem:[%s2 + $0x220] sm:$0xff]
      %v686 = vld [vmem:[%s2 + $0x228] sm:$0xff]
      %v687 = vld [vmem:[%s2 + $0x230] sm:$0xff]
      %v688 = vld [vmem:[%s2 + $0x238] sm:$0xff]
      %v689 = vld [vmem:[%s2 + $0x240] sm:$0xff]
      %v690 = vld [vmem:[%s2 + $0x248] sm:$0xff]
      %v691 = vld [vmem:[%s2 + $0x250] sm:$0xff]
      %v692 = vld [vmem:[%s2 + $0x258] sm:$0xff]
      %v693 = vld [vmem:[%s2 + $0x260] sm:$0xff]
      %v694 = vld [vmem:[%s2 + $0x268] sm:$0xff]
      %v695 = vld [vmem:[%s2 + $0x270] sm:$0xff]
      %v696 = vld [vmem:[%s2 + $0x278] sm:$0xff]
      %v697 = vld [vmem:[%s2 + $0x280] sm:$0xff]
      %v698 = vld [vmem:[%s2 + $0x288] sm:$0xff]
      %v699 = vld [vmem:[%s2 + $0x290] sm:$0xff]
      %v700 = vld [vmem:[%s2 + $0x298] sm:$0xff]
      %v701 = vld [vmem:[%s2 + $0x2a0] sm:$0xff]
      %v702 = vld [vmem:[%s2 + $0x2a8] sm:$0xff]
      %v703 = vld [vmem:[%s2 + $0x2b0] sm:$0xff]
      %v704 = vld [vmem:[%s2 + $0x2b8] sm:$0xff]
      %v705 = vld [vmem:[%s2 + $0x2c0] sm:$0xff]
      %v706 = vld [vmem:[%s2 + $0x2c8] sm:$0xff]
      %v707 = vld [vmem:[%s2 + $0x2d0] sm:$0xff]
      %v708 = vld [vmem:[%s2 + $0x2d8] sm:$0xff]
      %v709 = vld [vmem:[%s2 + $0x2e0] sm:$0xff]
      %v710 = vld [vmem:[%s2 + $0x2e8] sm:$0xff]
      %v711 = vld [vmem:[%s2 + $0x2f0] sm:$0xff]
      %v712 = vld [vmem:[%s2 + $0x2f8] sm:$0xff]
      %v713 = vld [vmem:[%s2 + $0x300] sm:$0xff]
      %v714 = vld [vmem:[%s2 + $0x308] sm:$0xff]
      %v715 = vld [vmem:[%s2 + $0x310] sm:$0xff]
      %v716 = vld [vmem:[%s2 + $0x318] sm:$0xff]
      %v717 = vld [vmem:[%s2 + $0x320] sm:$0xff]
      %v718 = vld [vmem:[%s2 + $0x328] sm:$0xff]
      %v719 = vld [vmem:[%s2 + $0x330] sm:$0xff]
      %v720 = vld [vmem:[%s2 + $0x338] sm:$0xff]
      %v721 = vld [vmem:[%s2 + $0x340] sm:$0xff]
      %v722 = vld [vmem:[%s2 + $0x348] sm:$0xff]
      %v723 = vld [vmem:[%s2 + $0x350] sm:$0xff]
      %v724 = vld [vmem:[%s2 + $0x358] sm:$0xff]
      %v725 = vld [vmem:[%s2 + $0x360] sm:$0xff]
      %v726 = vld [vmem:[%s2 + $0x368] sm:$0xff]
      %v727 = vld [vmem:[%s2 + $0x370] sm:$0xff]
      %v728 = vld [vmem:[%s2 + $0x378] sm:$0xff]
      %v729 = vld [vmem:[%s2 + $0x380] sm:$0xff]
      %v730 = vld [vmem:[%s2 + $0x388] sm:$0xff]
      %v731 = vld [vmem:[%s2 + $0x390] sm:$0xff]
      %v732 = vld [vmem:[%s2 + $0x398] sm:$0xff]
      %v733 = vld [vmem:[%s2 + $0x3a0] sm:$0xff]
      %v734 = vld [vmem:[%s2 + $0x3a8] sm:$0xff]
      %v735 = vld [vmem:[%s2 + $0x3b0] sm:$0xff]
      %v736 = vld [vmem:[%s2 + $0x3b8] sm:$0xff]
      %v737 = vld [vmem:[%s2 + $0x3c0] sm:$0xff]
      %v738 = vld [vmem:[%s2 + $0x3c8] sm:$0xff]
      %v739 = vld [vmem:[%s2 + $0x3d0] sm:$0xff]
      %v740 = vld [vmem:[%s2 + $0x3d8] sm:$0xff]
      %v741 = vld [vmem:[%s2 + $0x3e0] sm:$0xff]
      %v742 = vld [vmem:[%s2 + $0x3e8] sm:$0xff]
      %v743 = vld [vmem:[%s2 + $0x3f0] sm:$0xff]
      %v744 = vld [vmem:[%s2 + $0x3f8] sm:$0xff]
      %v745 = vld [vmem:[%s2 + $0x400] sm:$0xff]
      %v746 = vld [vmem:[%s2 + $0x408] sm:$0xff]
      %v747 = vld [vmem:[%s2 + $0x410] sm:$0xff]
      %v748 = vld [vmem:[%s2 + $0x418] sm:$0xff]
      %v749 = vld [vmem:[%s2 + $0x420] sm:$0xff]
      %v750 = vld [vmem:[%s2 + $0x428] sm:$0xff]
      %v751 = vld [vmem:[%s2 + $0x430] sm:$0xff]
      %v752 = vld [vmem:[%s2 + $0x438] sm:$0xff]
      %v753 = vld [vmem:[%s2 + $0x440] sm:$0xff]
      %v754 = vld [vmem:[%s2 + $0x448] sm:$0xff]
      %v755 = vld [vmem:[%s2 + $0x450] sm:$0xff]
      %v756 = vld [vmem:[%s2 + $0x458] sm:$0xff]
      %v757 = vld [vmem:[%s2 + $0x460] sm:$0xff]
      %v758 = vld [vmem:[%s2 + $0x468] sm:$0xff]
      %v759 = vld [vmem:[%s2 + $0x470] sm:$0xff]
      %v760 = vld [vmem:[%s2 + $0x478] sm:$0xff]
      %v761 = vld [vmem:[%s2 + $0x480] sm:$0xff]
      %v762 = vld [vmem:[%s2 + $0x488] sm:$0xff]
      %v763 = vld [vmem:[%s2 + $0x490] sm:$0xff]
      %v764 = vld [vmem:[%s2 + $0x498] sm:$0xff]
      %v765 = vld [vmem:[%s2 + $0x4a0] sm:$0xff]
      %v766 = vld [vmem:[%s2 + $0x4a8] sm:$0xff]
      %v767 = vld [vmem:[%s2 + $0x4b0] sm:$0xff]
      %v768 = vld [vmem:[%s2 + $0x4b8] sm:$0xff]
      %v769 = vld [vmem:[%s2 + $0x4c0] sm:$0xff]
      %v770 = vld [vmem:[%s2 + $0x4c8] sm:$0xff]
      %v771 = vld [vmem:[%s2 + $0x4d0] sm:$0xff]
      %v772 = vld [vmem:[%s2 + $0x4d8] sm:$0xff]
      %v773 = vld [vmem:[%s2 + $0x4e0] sm:$0xff]
      %v774 = vld [vmem:[%s2 + $0x4e8] sm:$0xff]
      %v775 = vld [vmem:[%s2 + $0x4f0] sm:$0xff]
      %v776 = vld [vmem:[%s2 + $0x4f8] sm:$0xff]
      %v777 = vld [vmem:[%s2 + $0x500] sm:$0xff]
      %v778 = vld [vmem:[%s2 + $0x508] sm:$0xff]
      %v779 = vld [vmem:[%s2 + $0x510] sm:$0xff]
      %v780 = vld [vmem:[%s2 + $0x518] sm:$0xff]
      %v781 = vld [vmem:[%s2 + $0x520] sm:$0xff]
      %v782 = vld [vmem:[%s2 + $0x528] sm:$0xff]
      %v783 = vld [vmem:[%s2 + $0x530] sm:$0xff]
      %v784 = vld [vmem:[%s2 + $0x538] sm:$0xff]
      %v785 = vld [vmem:[%s2 + $0x540] sm:$0xff]
      %v786 = vld [vmem:[%s2 + $0x548] sm:$0xff]
      %v787 = vld [vmem:[%s2 + $0x550] sm:$0xff]
      %v788 = vld [vmem:[%s2 + $0x558] sm:$0xff]
      %v789 = vld [vmem:[%s2 + $0x560] sm:$0xff]
      %v790 = vld [vmem:[%s2 + $0x568] sm:$0xff]
      %v791 = vld [vmem:[%s2 + $0x570] sm:$0xff]
      %v792 = vld [vmem:[%s2 + $0x578] sm:$0xff]
      %v793 = vld [vmem:[%s2 + $0x580] sm:$0xff]
      %v794 = vld [vmem:[%s2 + $0x588] sm:$0xff]
      %v795 = vld [vmem:[%s2 + $0x590] sm:$0xff]
      %v796 = vld [vmem:[%s2 + $0x598] sm:$0xff]
      %v797 = vld [vmem:[%s2 + $0x5a0] sm:$0xff]
      %v798 = vld [vmem:[%s2 + $0x5a8] sm:$0xff]
      %v799 = vld [vmem:[%s2 + $0x5b0] sm:$0xff]
      %v800 = vld [vmem:[%s2 + $0x5b8] sm:$0xff]
      %v801 = vld [vmem:[%s2 + $0x5c0] sm:$0xff]
      %v802 = vld [vmem:[%s2 + $0x5c8] sm:$0xff]
      %v803 = vld [vmem:[%s2 + $0x5d0] sm:$0xff]
      %v804 = vld [vmem:[%s2 + $0x5d8] sm:$0xff]
      %v805 = vld [vmem:[%s2 + $0x5e0] sm:$0xff]
      %v806 = vld [vmem:[%s2 + $0x5e8] sm:$0xff]
      %v807 = vld [vmem:[%s2 + $0x5f0] sm:$0xff]
      %v808 = vld [vmem:[%s2 + $0x5f8] sm:$0xff]
      %v809 = vld [vmem:[%s2 + $0x600] sm:$0xff]
      %v810 = vld [vmem:[%s2 + $0x608] sm:$0xff]
      %v811 = vld [vmem:[%s2 + $0x610] sm:$0xff]
      %v812 = vld [vmem:[%s2 + $0x618] sm:$0xff]
      %v813 = vld [vmem:[%s2 + $0x620] sm:$0xff]
      %v814 = vld [vmem:[%s2 + $0x628] sm:$0xff]
      %v815 = vld [vmem:[%s2 + $0x630] sm:$0xff]
      %v816 = vld [vmem:[%s2 + $0x638] sm:$0xff]
      %v817 = vld [vmem:[%s2 + $0x640] sm:$0xff]
      %v818 = vld [vmem:[%s2 + $0x648] sm:$0xff]
      %v819 = vld [vmem:[%s2 + $0x650] sm:$0xff]
      %v820 = vld [vmem:[%s2 + $0x658] sm:$0xff]
      %v821 = vld [vmem:[%s2 + $0x660] sm:$0xff]
      %v822 = vld [vmem:[%s2 + $0x668] sm:$0xff]
      %v823 = vld [vmem:[%s2 + $0x670] sm:$0xff]
      %v824 = vld [vmem:[%s2 + $0x678] sm:$0xff]
      %v825 = vld [vmem:[%s2 + $0x680] sm:$0xff]
      %v826 = vld [vmem:[%s2 + $0x688] sm:$0xff]
      %v827 = vld [vmem:[%s2 + $0x690] sm:$0xff]
      %v828 = vld [vmem:[%s2 + $0x698] sm:$0xff]
      %v829 = vld [vmem:[%s2 + $0x6a0] sm:$0xff]
      %v830 = vld [vmem:[%s2 + $0x6a8] sm:$0xff]
      %v831 = vld [vmem:[%s2 + $0x6b0] sm:$0xff]
      %v832 = vld [vmem:[%s2 + $0x6b8] sm:$0xff]
      %v833 = vld [vmem:[%s2 + $0x6c0] sm:$0xff]
      %v834 = vld [vmem:[%s2 + $0x6c8] sm:$0xff]
      %v835 = vld [vmem:[%s2 + $0x6d0] sm:$0xff]
      %v836 = vld [vmem:[%s2 + $0x6d8] sm:$0xff]
      %v837 = vld [vmem:[%s2 + $0x6e0] sm:$0xff]
      %v838 = vld [vmem:[%s2 + $0x6e8] sm:$0xff]
      %v839 = vld [vmem:[%s2 + $0x6f0] sm:$0xff]
      %v840 = vld [vmem:[%s2 + $0x6f8] sm:$0xff]
      %v841 = vld [vmem:[%s3] sm:$0xf]
      %v843 = vperm.slane %v841, 0
      %v844 = vperm.slane %v841, 1
      %v845 = vperm.slane %v841, 2
      %v846 = vperm.slane %v841, 3
      %v1075 = vunpack.c.l.b16 %v617
      %v1076 = vunpack.c.h.b16 %v617
      %v1077 = vunpack.c.l.b16 %v618
      %v1078 = vunpack.c.h.b16 %v618
      %v1079 = vunpack.c.l.b16 %v619
      %v1080 = vunpack.c.h.b16 %v619
      %v1081 = vunpack.c.l.b16 %v620
      %v1082 = vunpack.c.h.b16 %v620
      %v1083 = vunpack.c.l.b16 %v621
      %v1084 = vunpack.c.h.b16 %v621
      %v1085 = vunpack.c.l.b16 %v622
      %v1086 = vunpack.c.h.b16 %v622
      %v1087 = vunpack.c.l.b16 %v623
      %v1088 = vunpack.c.h.b16 %v623
      %v1089 = vunpack.c.l.b16 %v624
      %v1090 = vunpack.c.h.b16 %v624
      %v1091 = vunpack.c.l.b16 %v625
      %v1092 = vunpack.c.h.b16 %v625
      %v1093 = vunpack.c.l.b16 %v626
      %v1094 = vunpack.c.h.b16 %v626
      %v1095 = vunpack.c.l.b16 %v627
      %v1096 = vunpack.c.h.b16 %v627
      %v1097 = vunpack.c.l.b16 %v628
      %v1098 = vunpack.c.h.b16 %v628
      %v1099 = vunpack.c.l.b16 %v629
      %v1100 = vunpack.c.h.b16 %v629
      %v1101 = vunpack.c.l.b16 %v630
      %v1102 = vunpack.c.h.b16 %v630
      %v1103 = vunpack.c.l.b16 %v631
      %v1104 = vunpack.c.h.b16 %v631
      %v1105 = vunpack.c.l.b16 %v632
      %v1106 = vunpack.c.h.b16 %v632
      %v1107 = vunpack.c.l.b16 %v633
      %v1108 = vunpack.c.h.b16 %v633
      %v1109 = vunpack.c.l.b16 %v634
      %v1110 = vunpack.c.h.b16 %v634
      %v1111 = vunpack.c.l.b16 %v635
      %v1112 = vunpack.c.h.b16 %v635
      %v1113 = vunpack.c.l.b16 %v636
      %v1114 = vunpack.c.h.b16 %v636
      %v1115 = vunpack.c.l.b16 %v637
      %v1116 = vunpack.c.h.b16 %v637
      %v1117 = vunpack.c.l.b16 %v638
      %v1118 = vunpack.c.h.b16 %v638
      %v1119 = vunpack.c.l.b16 %v639
      %v1120 = vunpack.c.h.b16 %v639
      %v1121 = vunpack.c.l.b16 %v640
      %v1122 = vunpack.c.h.b16 %v640
      %v1123 = vunpack.c.l.b16 %v641
      %v1124 = vunpack.c.h.b16 %v641
      %v1125 = vunpack.c.l.b16 %v642
      %v1126 = vunpack.c.h.b16 %v642
      %v1127 = vunpack.c.l.b16 %v643
      %v1128 = vunpack.c.h.b16 %v643
      %v1129 = vunpack.c.l.b16 %v644
      %v1130 = vunpack.c.h.b16 %v644
      %v1131 = vunpack.c.l.b16 %v645
      %v1132 = vunpack.c.h.b16 %v645
      %v1133 = vunpack.c.l.b16 %v646
      %v1134 = vunpack.c.h.b16 %v646
      %v1135 = vunpack.c.l.b16 %v647
      %v1136 = vunpack.c.h.b16 %v647
      %v1137 = vunpack.c.l.b16 %v648
      %v1138 = vunpack.c.h.b16 %v648
      %v1139 = vunpack.c.l.b16 %v649
      %v1140 = vunpack.c.h.b16 %v649
      %v1141 = vunpack.c.l.b16 %v650
      %v1142 = vunpack.c.h.b16 %v650
      %v1143 = vunpack.c.l.b16 %v651
      %v1144 = vunpack.c.h.b16 %v651
      %v1145 = vunpack.c.l.b16 %v652
      %v1146 = vunpack.c.h.b16 %v652
      %v1147 = vunpack.c.l.b16 %v653
      %v1148 = vunpack.c.h.b16 %v653
      %v1149 = vunpack.c.l.b16 %v654
      %v1150 = vunpack.c.h.b16 %v654
      %v1151 = vunpack.c.l.b16 %v655
      %v1152 = vunpack.c.h.b16 %v655
      %v1153 = vunpack.c.l.b16 %v656
      %v1154 = vunpack.c.h.b16 %v656
      %v1155 = vunpack.c.l.b16 %v657
      %v1156 = vunpack.c.h.b16 %v657
      %v1157 = vunpack.c.l.b16 %v658
      %v1158 = vunpack.c.h.b16 %v658
      %v1159 = vunpack.c.l.b16 %v659
      %v1160 = vunpack.c.h.b16 %v659
      %v1161 = vunpack.c.l.b16 %v660
      %v1162 = vunpack.c.h.b16 %v660
      %v1163 = vunpack.c.l.b16 %v661
      %v1164 = vunpack.c.h.b16 %v661
      %v1165 = vunpack.c.l.b16 %v662
      %v1166 = vunpack.c.h.b16 %v662
      %v1167 = vunpack.c.l.b16 %v663
      %v1168 = vunpack.c.h.b16 %v663
      %v1169 = vunpack.c.l.b16 %v664
      %v1170 = vunpack.c.h.b16 %v664
      %v1171 = vunpack.c.l.b16 %v665
      %v1172 = vunpack.c.h.b16 %v665
      %v1173 = vunpack.c.l.b16 %v666
      %v1174 = vunpack.c.h.b16 %v666
      %v1175 = vunpack.c.l.b16 %v667
      %v1176 = vunpack.c.h.b16 %v667
      %v1177 = vunpack.c.l.b16 %v668
      %v1178 = vunpack.c.h.b16 %v668
      %v1179 = vunpack.c.l.b16 %v669
      %v1180 = vunpack.c.h.b16 %v669
      %v1181 = vunpack.c.l.b16 %v670
      %v1182 = vunpack.c.h.b16 %v670
      %v1183 = vunpack.c.l.b16 %v671
      %v1184 = vunpack.c.h.b16 %v671
      %v1185 = vunpack.c.l.b16 %v672
      %v1186 = vunpack.c.h.b16 %v672
      %v1187 = vunpack.c.l.b16 %v673
      %v1188 = vunpack.c.h.b16 %v673
      %v1189 = vunpack.c.l.b16 %v674
      %v1190 = vunpack.c.h.b16 %v674
      %v1191 = vunpack.c.l.b16 %v675
      %v1192 = vunpack.c.h.b16 %v675
      %v1193 = vunpack.c.l.b16 %v676
      %v1194 = vunpack.c.h.b16 %v676
      %v1195 = vunpack.c.l.b16 %v677
      %v1196 = vunpack.c.h.b16 %v677
      %v1197 = vunpack.c.l.b16 %v678
      %v1198 = vunpack.c.h.b16 %v678
      %v1199 = vunpack.c.l.b16 %v679
      %v1200 = vunpack.c.h.b16 %v679
      %v1201 = vunpack.c.l.b16 %v680
      %v1202 = vunpack.c.h.b16 %v680
      %v1203 = vunpack.c.l.b16 %v681
      %v1204 = vunpack.c.h.b16 %v681
      %v1205 = vunpack.c.l.b16 %v682
      %v1206 = vunpack.c.h.b16 %v682
      %v1207 = vunpack.c.l.b16 %v683
      %v1208 = vunpack.c.h.b16 %v683
      %v1209 = vunpack.c.l.b16 %v684
      %v1210 = vunpack.c.h.b16 %v684
      %v1211 = vunpack.c.l.b16 %v685
      %v1212 = vunpack.c.h.b16 %v685
      %v1213 = vunpack.c.l.b16 %v686
      %v1214 = vunpack.c.h.b16 %v686
      %v1215 = vunpack.c.l.b16 %v687
      %v1216 = vunpack.c.h.b16 %v687
      %v1217 = vunpack.c.l.b16 %v688
      %v1218 = vunpack.c.h.b16 %v688
      %v1219 = vunpack.c.l.b16 %v689
      %v1220 = vunpack.c.h.b16 %v689
      %v1221 = vunpack.c.l.b16 %v690
      %v1222 = vunpack.c.h.b16 %v690
      %v1223 = vunpack.c.l.b16 %v691
      %v1224 = vunpack.c.h.b16 %v691
      %v1225 = vunpack.c.l.b16 %v692
      %v1226 = vunpack.c.h.b16 %v692
      %v1227 = vunpack.c.l.b16 %v693
      %v1228 = vunpack.c.h.b16 %v693
      %v1229 = vunpack.c.l.b16 %v694
      %v1230 = vunpack.c.h.b16 %v694
      %v1231 = vunpack.c.l.b16 %v695
      %v1232 = vunpack.c.h.b16 %v695
      %v1233 = vunpack.c.l.b16 %v696
      %v1234 = vunpack.c.h.b16 %v696
      %v1235 = vunpack.c.l.b16 %v697
      %v1236 = vunpack.c.h.b16 %v697
      %v1237 = vunpack.c.l.b16 %v698
      %v1238 = vunpack.c.h.b16 %v698
      %v1239 = vunpack.c.l.b16 %v699
      %v1240 = vunpack.c.h.b16 %v699
      %v1241 = vunpack.c.l.b16 %v700
      %v1242 = vunpack.c.h.b16 %v700
      %v1243 = vunpack.c.l.b16 %v701
      %v1244 = vunpack.c.h.b16 %v701
      %v1245 = vunpack.c.l.b16 %v702
      %v1246 = vunpack.c.h.b16 %v702
      %v1247 = vunpack.c.l.b16 %v703
      %v1248 = vunpack.c.h.b16 %v703
      %v1249 = vunpack.c.l.b16 %v704
      %v1250 = vunpack.c.h.b16 %v704
      %v1251 = vunpack.c.l.b16 %v705
      %v1252 = vunpack.c.h.b16 %v705
      %v1253 = vunpack.c.l.b16 %v706
      %v1254 = vunpack.c.h.b16 %v706
      %v1255 = vunpack.c.l.b16 %v707
      %v1256 = vunpack.c.h.b16 %v707
      %v1257 = vunpack.c.l.b16 %v708
      %v1258 = vunpack.c.h.b16 %v708
      %v1259 = vunpack.c.l.b16 %v709
      %v1260 = vunpack.c.h.b16 %v709
      %v1261 = vunpack.c.l.b16 %v710
      %v1262 = vunpack.c.h.b16 %v710
      %v1263 = vunpack.c.l.b16 %v711
      %v1264 = vunpack.c.h.b16 %v711
      %v1265 = vunpack.c.l.b16 %v712
      %v1266 = vunpack.c.h.b16 %v712
      %v1267 = vunpack.c.l.b16 %v713
      %v1268 = vunpack.c.h.b16 %v713
      %v1269 = vunpack.c.l.b16 %v714
      %v1270 = vunpack.c.h.b16 %v714
      %v1271 = vunpack.c.l.b16 %v715
      %v1272 = vunpack.c.h.b16 %v715
      %v1273 = vunpack.c.l.b16 %v716
      %v1274 = vunpack.c.h.b16 %v716
      %v1275 = vunpack.c.l.b16 %v717
      %v1276 = vunpack.c.h.b16 %v717
      %v1277 = vunpack.c.l.b16 %v718
      %v1278 = vunpack.c.h.b16 %v718
      %v1279 = vunpack.c.l.b16 %v719
      %v1280 = vunpack.c.h.b16 %v719
      %v1281 = vunpack.c.l.b16 %v720
      %v1282 = vunpack.c.h.b16 %v720
      %v1283 = vunpack.c.l.b16 %v721
      %v1284 = vunpack.c.h.b16 %v721
      %v1285 = vunpack.c.l.b16 %v722
      %v1286 = vunpack.c.h.b16 %v722
      %v1287 = vunpack.c.l.b16 %v723
      %v1288 = vunpack.c.h.b16 %v723
      %v1289 = vunpack.c.l.b16 %v724
      %v1290 = vunpack.c.h.b16 %v724
      %v1291 = vunpack.c.l.b16 %v725
      %v1292 = vunpack.c.h.b16 %v725
      %v1293 = vunpack.c.l.b16 %v726
      %v1294 = vunpack.c.h.b16 %v726
      %v1295 = vunpack.c.l.b16 %v727
      %v1296 = vunpack.c.h.b16 %v727
      %v1297 = vunpack.c.l.b16 %v728
      %v1298 = vunpack.c.h.b16 %v728
      %v1299 = vunpack.c.l.b16 %v729
      %v1300 = vunpack.c.h.b16 %v729
      %v1301 = vunpack.c.l.b16 %v730
      %v1302 = vunpack.c.h.b16 %v730
      %v1303 = vunpack.c.l.b16 %v731
      %v1304 = vunpack.c.h.b16 %v731
      %v1305 = vunpack.c.l.b16 %v732
      %v1306 = vunpack.c.h.b16 %v732
      %v1307 = vunpack.c.l.b16 %v733
      %v1308 = vunpack.c.h.b16 %v733
      %v1309 = vunpack.c.l.b16 %v734
      %v1310 = vunpack.c.h.b16 %v734
      %v1311 = vunpack.c.l.b16 %v735
      %v1312 = vunpack.c.h.b16 %v735
      %v1313 = vunpack.c.l.b16 %v736
      %v1314 = vunpack.c.h.b16 %v736
      %v1315 = vunpack.c.l.b16 %v737
      %v1316 = vunpack.c.h.b16 %v737
      %v1317 = vunpack.c.l.b16 %v738
      %v1318 = vunpack.c.h.b16 %v738
      %v1319 = vunpack.c.l.b16 %v739
      %v1320 = vunpack.c.h.b16 %v739
      %v1321 = vunpack.c.l.b16 %v740
      %v1322 = vunpack.c.h.b16 %v740
      %v1323 = vunpack.c.l.b16 %v741
      %v1324 = vunpack.c.h.b16 %v741
      %v1325 = vunpack.c.l.b16 %v742
      %v1326 = vunpack.c.h.b16 %v742
      %v1327 = vunpack.c.l.b16 %v743
      %v1328 = vunpack.c.h.b16 %v743
      %v1329 = vunpack.c.l.b16 %v744
      %v1330 = vunpack.c.h.b16 %v744
      %v1331 = vunpack.c.l.b16 %v745
      %v1332 = vunpack.c.h.b16 %v745
      %v1333 = vunpack.c.l.b16 %v746
      %v1334 = vunpack.c.h.b16 %v746
      %v1335 = vunpack.c.l.b16 %v747
      %v1336 = vunpack.c.h.b16 %v747
      %v1337 = vunpack.c.l.b16 %v748
      %v1338 = vunpack.c.h.b16 %v748
      %v1339 = vunpack.c.l.b16 %v749
      %v1340 = vunpack.c.h.b16 %v749
      %v1341 = vunpack.c.l.b16 %v750
      %v1342 = vunpack.c.h.b16 %v750
      %v1343 = vunpack.c.l.b16 %v751
      %v1344 = vunpack.c.h.b16 %v751
      %v1345 = vunpack.c.l.b16 %v752
      %v1346 = vunpack.c.h.b16 %v752
      %v1347 = vunpack.c.l.b16 %v753
      %v1348 = vunpack.c.h.b16 %v753
      %v1349 = vunpack.c.l.b16 %v754
      %v1350 = vunpack.c.h.b16 %v754
      %v1351 = vunpack.c.l.b16 %v755
      %v1352 = vunpack.c.h.b16 %v755
      %v1353 = vunpack.c.l.b16 %v756
      %v1354 = vunpack.c.h.b16 %v756
      %v1355 = vunpack.c.l.b16 %v757
      %v1356 = vunpack.c.h.b16 %v757
      %v1357 = vunpack.c.l.b16 %v758
      %v1358 = vunpack.c.h.b16 %v758
      %v1359 = vunpack.c.l.b16 %v759
      %v1360 = vunpack.c.h.b16 %v759
      %v1361 = vunpack.c.l.b16 %v760
      %v1362 = vunpack.c.h.b16 %v760
      %v1363 = vunpack.c.l.b16 %v761
      %v1364 = vunpack.c.h.b16 %v761
      %v1365 = vunpack.c.l.b16 %v762
      %v1366 = vunpack.c.h.b16 %v762
      %v1367 = vunpack.c.l.b16 %v763
      %v1368 = vunpack.c.h.b16 %v763
      %v1369 = vunpack.c.l.b16 %v764
      %v1370 = vunpack.c.h.b16 %v764
      %v1371 = vunpack.c.l.b16 %v765
      %v1372 = vunpack.c.h.b16 %v765
      %v1373 = vunpack.c.l.b16 %v766
      %v1374 = vunpack.c.h.b16 %v766
      %v1375 = vunpack.c.l.b16 %v767
      %v1376 = vunpack.c.h.b16 %v767
      %v1377 = vunpack.c.l.b16 %v768
      %v1378 = vunpack.c.h.b16 %v768
      %v1379 = vunpack.c.l.b16 %v769
      %v1380 = vunpack.c.h.b16 %v769
      %v1381 = vunpack.c.l.b16 %v770
      %v1382 = vunpack.c.h.b16 %v770
      %v1383 = vunpack.c.l.b16 %v771
      %v1384 = vunpack.c.h.b16 %v771
      %v1385 = vunpack.c.l.b16 %v772
      %v1386 = vunpack.c.h.b16 %v772
      %v1387 = vunpack.c.l.b16 %v773
      %v1388 = vunpack.c.h.b16 %v773
      %v1389 = vunpack.c.l.b16 %v774
      %v1390 = vunpack.c.h.b16 %v774
      %v1391 = vunpack.c.l.b16 %v775
      %v1392 = vunpack.c.h.b16 %v775
      %v1393 = vunpack.c.l.b16 %v776
      %v1394 = vunpack.c.h.b16 %v776
      %v1395 = vunpack.c.l.b16 %v777
      %v1396 = vunpack.c.h.b16 %v777
      %v1397 = vunpack.c.l.b16 %v778
      %v1398 = vunpack.c.h.b16 %v778
      %v1399 = vunpack.c.l.b16 %v779
      %v1400 = vunpack.c.h.b16 %v779
      %v1401 = vunpack.c.l.b16 %v780
      %v1402 = vunpack.c.h.b16 %v780
      %v1403 = vunpack.c.l.b16 %v781
      %v1404 = vunpack.c.h.b16 %v781
      %v1405 = vunpack.c.l.b16 %v782
      %v1406 = vunpack.c.h.b16 %v782
      %v1407 = vunpack.c.l.b16 %v783
      %v1408 = vunpack.c.h.b16 %v783
      %v1409 = vunpack.c.l.b16 %v784
      %v1410 = vunpack.c.h.b16 %v784
      %v1411 = vunpack.c.l.b16 %v785
      %v1412 = vunpack.c.h.b16 %v785
      %v1413 = vunpack.c.l.b16 %v786
      %v1414 = vunpack.c.h.b16 %v786
      %v1415 = vunpack.c.l.b16 %v787
      %v1416 = vunpack.c.h.b16 %v787
      %v1417 = vunpack.c.l.b16 %v788
      %v1418 = vunpack.c.h.b16 %v788
      %v1419 = vunpack.c.l.b16 %v789
      %v1420 = vunpack.c.h.b16 %v789
      %v1421 = vunpack.c.l.b16 %v790
      %v1422 = vunpack.c.h.b16 %v790
      %v1423 = vunpack.c.l.b16 %v791
      %v1424 = vunpack.c.h.b16 %v791
      %v1425 = vunpack.c.l.b16 %v792
      %v1426 = vunpack.c.h.b16 %v792
      %v1427 = vunpack.c.l.b16 %v793
      %v1428 = vunpack.c.h.b16 %v793
      %v1429 = vunpack.c.l.b16 %v794
      %v1430 = vunpack.c.h.b16 %v794
      %v1431 = vunpack.c.l.b16 %v795
      %v1432 = vunpack.c.h.b16 %v795
      %v1433 = vunpack.c.l.b16 %v796
      %v1434 = vunpack.c.h.b16 %v796
      %v1435 = vunpack.c.l.b16 %v797
      %v1436 = vunpack.c.h.b16 %v797
      %v1437 = vunpack.c.l.b16 %v798
      %v1438 = vunpack.c.h.b16 %v798
      %v1439 = vunpack.c.l.b16 %v799
      %v1440 = vunpack.c.h.b16 %v799
      %v1441 = vunpack.c.l.b16 %v800
      %v1442 = vunpack.c.h.b16 %v800
      %v1443 = vunpack.c.l.b16 %v801
      %v1444 = vunpack.c.h.b16 %v801
      %v1445 = vunpack.c.l.b16 %v802
      %v1446 = vunpack.c.h.b16 %v802
      %v1447 = vunpack.c.l.b16 %v803
      %v1448 = vunpack.c.h.b16 %v803
      %v1449 = vunpack.c.l.b16 %v804
      %v1450 = vunpack.c.h.b16 %v804
      %v1451 = vunpack.c.l.b16 %v805
      %v1452 = vunpack.c.h.b16 %v805
      %v1453 = vunpack.c.l.b16 %v806
      %v1454 = vunpack.c.h.b16 %v806
      %v1455 = vunpack.c.l.b16 %v807
      %v1456 = vunpack.c.h.b16 %v807
      %v1457 = vunpack.c.l.b16 %v808
      %v1458 = vunpack.c.h.b16 %v808
      %v1459 = vunpack.c.l.b16 %v809
      %v1460 = vunpack.c.h.b16 %v809
      %v1461 = vunpack.c.l.b16 %v810
      %v1462 = vunpack.c.h.b16 %v810
      %v1463 = vunpack.c.l.b16 %v811
      %v1464 = vunpack.c.h.b16 %v811
      %v1465 = vunpack.c.l.b16 %v812
      %v1466 = vunpack.c.h.b16 %v812
      %v1467 = vunpack.c.l.b16 %v813
      %v1468 = vunpack.c.h.b16 %v813
      %v1469 = vunpack.c.l.b16 %v814
      %v1470 = vunpack.c.h.b16 %v814
      %v1471 = vunpack.c.l.b16 %v815
      %v1472 = vunpack.c.h.b16 %v815
      %v1473 = vunpack.c.l.b16 %v816
      %v1474 = vunpack.c.h.b16 %v816
      %v1475 = vunpack.c.l.b16 %v817
      %v1476 = vunpack.c.h.b16 %v817
      %v1477 = vunpack.c.l.b16 %v818
      %v1478 = vunpack.c.h.b16 %v818
      %v1479 = vunpack.c.l.b16 %v819
      %v1480 = vunpack.c.h.b16 %v819
      %v1481 = vunpack.c.l.b16 %v820
      %v1482 = vunpack.c.h.b16 %v820
      %v1483 = vunpack.c.l.b16 %v821
      %v1484 = vunpack.c.h.b16 %v821
      %v1485 = vunpack.c.l.b16 %v822
      %v1486 = vunpack.c.h.b16 %v822
      %v1487 = vunpack.c.l.b16 %v823
      %v1488 = vunpack.c.h.b16 %v823
      %v1489 = vunpack.c.l.b16 %v824
      %v1490 = vunpack.c.h.b16 %v824
      %v1491 = vunpack.c.l.b16 %v825
      %v1492 = vunpack.c.h.b16 %v825
      %v1493 = vunpack.c.l.b16 %v826
      %v1494 = vunpack.c.h.b16 %v826
      %v1495 = vunpack.c.l.b16 %v827
      %v1496 = vunpack.c.h.b16 %v827
      %v1497 = vunpack.c.l.b16 %v828
      %v1498 = vunpack.c.h.b16 %v828
      %v1499 = vunpack.c.l.b16 %v829
      %v1500 = vunpack.c.h.b16 %v829
      %v1501 = vunpack.c.l.b16 %v830
      %v1502 = vunpack.c.h.b16 %v830
      %v1503 = vunpack.c.l.b16 %v831
      %v1504 = vunpack.c.h.b16 %v831
      %v1505 = vunpack.c.l.b16 %v832
      %v1506 = vunpack.c.h.b16 %v832
      %v1507 = vunpack.c.l.b16 %v833
      %v1508 = vunpack.c.h.b16 %v833
      %v1509 = vunpack.c.l.b16 %v834
      %v1510 = vunpack.c.h.b16 %v834
      %v1511 = vunpack.c.l.b16 %v835
      %v1512 = vunpack.c.h.b16 %v835
      %v1513 = vunpack.c.l.b16 %v836
      %v1514 = vunpack.c.h.b16 %v836
      %v1515 = vunpack.c.l.b16 %v837
      %v1516 = vunpack.c.h.b16 %v837
      %v1517 = vunpack.c.l.b16 %v838
      %v1518 = vunpack.c.h.b16 %v838
      %v1519 = vunpack.c.l.b16 %v839
      %v1520 = vunpack.c.h.b16 %v839
      %v1521 = vunpack.c.l.b16 %v840
      %v1522 = vunpack.c.h.b16 %v840
      %v1523 = vpack.c.b16 %v1079, %v1075
      %v1524 = vpack.c.b16 %v1080, %v1076
      %v1525 = vpack.c.b16 %v1081, %v1077
      %v1526 = vpack.c.b16 %v1082, %v1078
      %v1527 = vpack.c.b16 %v1087, %v1083
      %v1528 = vpack.c.b16 %v1088, %v1084
      %v1529 = vpack.c.b16 %v1089, %v1085
      %v1530 = vpack.c.b16 %v1090, %v1086
      %v1531 = vpack.c.b16 %v1095, %v1091
      %v1532 = vpack.c.b16 %v1096, %v1092
      %v1533 = vpack.c.b16 %v1097, %v1093
      %v1534 = vpack.c.b16 %v1098, %v1094
      %v1535 = vpack.c.b16 %v1103, %v1099
      %v1536 = vpack.c.b16 %v1104, %v1100
      %v1537 = vpack.c.b16 %v1105, %v1101
      %v1538 = vpack.c.b16 %v1106, %v1102
      %v1539 = vpack.c.b16 %v1111, %v1107
      %v1540 = vpack.c.b16 %v1112, %v1108
      %v1541 = vpack.c.b16 %v1113, %v1109
      %v1542 = vpack.c.b16 %v1114, %v1110
      %v1543 = vpack.c.b16 %v1119, %v1115
      %v1544 = vpack.c.b16 %v1120, %v1116
      %v1545 = vpack.c.b16 %v1121, %v1117
      %v1546 = vpack.c.b16 %v1122, %v1118
      %v1547 = vpack.c.b16 %v1127, %v1123
      %v1548 = vpack.c.b16 %v1128, %v1124
      %v1549 = vpack.c.b16 %v1129, %v1125
      %v1550 = vpack.c.b16 %v1130, %v1126
      %v1551 = vpack.c.b16 %v1135, %v1131
      %v1552 = vpack.c.b16 %v1136, %v1132
      %v1553 = vpack.c.b16 %v1137, %v1133
      %v1554 = vpack.c.b16 %v1138, %v1134
      %v1555 = vpack.c.b16 %v1143, %v1139
      %v1556 = vpack.c.b16 %v1144, %v1140
      %v1557 = vpack.c.b16 %v1145, %v1141
      %v1558 = vpack.c.b16 %v1146, %v1142
      %v1559 = vpack.c.b16 %v1151, %v1147
      %v1560 = vpack.c.b16 %v1152, %v1148
      %v1561 = vpack.c.b16 %v1153, %v1149
      %v1562 = vpack.c.b16 %v1154, %v1150
      %v1563 = vpack.c.b16 %v1159, %v1155
      %v1564 = vpack.c.b16 %v1160, %v1156
      %v1565 = vpack.c.b16 %v1161, %v1157
      %v1566 = vpack.c.b16 %v1162, %v1158
      %v1567 = vpack.c.b16 %v1167, %v1163
      %v1568 = vpack.c.b16 %v1168, %v1164
      %v1569 = vpack.c.b16 %v1169, %v1165
      %v1570 = vpack.c.b16 %v1170, %v1166
      %v1571 = vpack.c.b16 %v1175, %v1171
      %v1572 = vpack.c.b16 %v1176, %v1172
      %v1573 = vpack.c.b16 %v1177, %v1173
      %v1574 = vpack.c.b16 %v1178, %v1174
      %v1575 = vpack.c.b16 %v1183, %v1179
      %v1576 = vpack.c.b16 %v1184, %v1180
      %v1577 = vpack.c.b16 %v1185, %v1181
      %v1578 = vpack.c.b16 %v1186, %v1182
      %v1579 = vpack.c.b16 %v1191, %v1187
      %v1580 = vpack.c.b16 %v1192, %v1188
      %v1581 = vpack.c.b16 %v1193, %v1189
      %v1582 = vpack.c.b16 %v1194, %v1190
      %v1583 = vpack.c.b16 %v1199, %v1195
      %v1584 = vpack.c.b16 %v1200, %v1196
      %v1585 = vpack.c.b16 %v1201, %v1197
      %v1586 = vpack.c.b16 %v1202, %v1198
      %v1587 = vpack.c.b16 %v1207, %v1203
      %v1588 = vpack.c.b16 %v1208, %v1204
      %v1589 = vpack.c.b16 %v1209, %v1205
      %v1590 = vpack.c.b16 %v1210, %v1206
      %v1591 = vpack.c.b16 %v1215, %v1211
      %v1592 = vpack.c.b16 %v1216, %v1212
      %v1593 = vpack.c.b16 %v1217, %v1213
      %v1594 = vpack.c.b16 %v1218, %v1214
      %v1595 = vpack.c.b16 %v1223, %v1219
      %v1596 = vpack.c.b16 %v1224, %v1220
      %v1597 = vpack.c.b16 %v1225, %v1221
      %v1598 = vpack.c.b16 %v1226, %v1222
      %v1599 = vpack.c.b16 %v1231, %v1227
      %v1600 = vpack.c.b16 %v1232, %v1228
      %v1601 = vpack.c.b16 %v1233, %v1229
      %v1602 = vpack.c.b16 %v1234, %v1230
      %v1603 = vpack.c.b16 %v1239, %v1235
      %v1604 = vpack.c.b16 %v1240, %v1236
      %v1605 = vpack.c.b16 %v1241, %v1237
      %v1606 = vpack.c.b16 %v1242, %v1238
      %v1607 = vpack.c.b16 %v1247, %v1243
      %v1608 = vpack.c.b16 %v1248, %v1244
      %v1609 = vpack.c.b16 %v1249, %v1245
      %v1610 = vpack.c.b16 %v1250, %v1246
      %v1611 = vpack.c.b16 %v1255, %v1251
      %v1612 = vpack.c.b16 %v1256, %v1252
      %v1613 = vpack.c.b16 %v1257, %v1253
      %v1614 = vpack.c.b16 %v1258, %v1254
      %v1615 = vpack.c.b16 %v1263, %v1259
      %v1616 = vpack.c.b16 %v1264, %v1260
      %v1617 = vpack.c.b16 %v1265, %v1261
      %v1618 = vpack.c.b16 %v1266, %v1262
      %v1619 = vpack.c.b16 %v1271, %v1267
      %v1620 = vpack.c.b16 %v1272, %v1268
      %v1621 = vpack.c.b16 %v1273, %v1269
      %v1622 = vpack.c.b16 %v1274, %v1270
      %v1623 = vpack.c.b16 %v1279, %v1275
      %v1624 = vpack.c.b16 %v1280, %v1276
      %v1625 = vpack.c.b16 %v1281, %v1277
      %v1626 = vpack.c.b16 %v1282, %v1278
      %v1627 = vpack.c.b16 %v1287, %v1283
      %v1628 = vpack.c.b16 %v1288, %v1284
      %v1629 = vpack.c.b16 %v1289, %v1285
      %v1630 = vpack.c.b16 %v1290, %v1286
      %v1631 = vpack.c.b16 %v1295, %v1291
      %v1632 = vpack.c.b16 %v1296, %v1292
      %v1633 = vpack.c.b16 %v1297, %v1293
      %v1634 = vpack.c.b16 %v1298, %v1294
      %v1635 = vpack.c.b16 %v1303, %v1299
      %v1636 = vpack.c.b16 %v1304, %v1300
      %v1637 = vpack.c.b16 %v1305, %v1301
      %v1638 = vpack.c.b16 %v1306, %v1302
      %v1639 = vpack.c.b16 %v1311, %v1307
      %v1640 = vpack.c.b16 %v1312, %v1308
      %v1641 = vpack.c.b16 %v1313, %v1309
      %v1642 = vpack.c.b16 %v1314, %v1310
      %v1643 = vpack.c.b16 %v1319, %v1315
      %v1644 = vpack.c.b16 %v1320, %v1316
      %v1645 = vpack.c.b16 %v1321, %v1317
      %v1646 = vpack.c.b16 %v1322, %v1318
      %v1647 = vpack.c.b16 %v1327, %v1323
      %v1648 = vpack.c.b16 %v1328, %v1324
      %v1649 = vpack.c.b16 %v1329, %v1325
      %v1650 = vpack.c.b16 %v1330, %v1326
      %v1651 = vpack.c.b16 %v1335, %v1331
      %v1652 = vpack.c.b16 %v1336, %v1332
      %v1653 = vpack.c.b16 %v1337, %v1333
      %v1654 = vpack.c.b16 %v1338, %v1334
      %v1655 = vpack.c.b16 %v1343, %v1339
      %v1656 = vpack.c.b16 %v1344, %v1340
      %v1657 = vpack.c.b16 %v1345, %v1341
      %v1658 = vpack.c.b16 %v1346, %v1342
      %v1659 = vpack.c.b16 %v1351, %v1347
      %v1660 = vpack.c.b16 %v1352, %v1348
      %v1661 = vpack.c.b16 %v1353, %v1349
      %v1662 = vpack.c.b16 %v1354, %v1350
      %v1663 = vpack.c.b16 %v1359, %v1355
      %v1664 = vpack.c.b16 %v1360, %v1356
      %v1665 = vpack.c.b16 %v1361, %v1357
      %v1666 = vpack.c.b16 %v1362, %v1358
      %v1667 = vpack.c.b16 %v1367, %v1363
      %v1668 = vpack.c.b16 %v1368, %v1364
      %v1669 = vpack.c.b16 %v1369, %v1365
      %v1670 = vpack.c.b16 %v1370, %v1366
      %v1671 = vpack.c.b16 %v1375, %v1371
      %v1672 = vpack.c.b16 %v1376, %v1372
      %v1673 = vpack.c.b16 %v1377, %v1373
      %v1674 = vpack.c.b16 %v1378, %v1374
      %v1675 = vpack.c.b16 %v1383, %v1379
      %v1676 = vpack.c.b16 %v1384, %v1380
      %v1677 = vpack.c.b16 %v1385, %v1381
      %v1678 = vpack.c.b16 %v1386, %v1382
      %v1679 = vpack.c.b16 %v1391, %v1387
      %v1680 = vpack.c.b16 %v1392, %v1388
      %v1681 = vpack.c.b16 %v1393, %v1389
      %v1682 = vpack.c.b16 %v1394, %v1390
      %v1683 = vpack.c.b16 %v1399, %v1395
      %v1684 = vpack.c.b16 %v1400, %v1396
      %v1685 = vpack.c.b16 %v1401, %v1397
      %v1686 = vpack.c.b16 %v1402, %v1398
      %v1687 = vpack.c.b16 %v1407, %v1403
      %v1688 = vpack.c.b16 %v1408, %v1404
      %v1689 = vpack.c.b16 %v1409, %v1405
      %v1690 = vpack.c.b16 %v1410, %v1406
      %v1691 = vpack.c.b16 %v1415, %v1411
      %v1692 = vpack.c.b16 %v1416, %v1412
      %v1693 = vpack.c.b16 %v1417, %v1413
      %v1694 = vpack.c.b16 %v1418, %v1414
      %v1695 = vpack.c.b16 %v1423, %v1419
      %v1696 = vpack.c.b16 %v1424, %v1420
      %v1697 = vpack.c.b16 %v1425, %v1421
      %v1698 = vpack.c.b16 %v1426, %v1422
      %v1699 = vpack.c.b16 %v1431, %v1427
      %v1700 = vpack.c.b16 %v1432, %v1428
      %v1701 = vpack.c.b16 %v1433, %v1429
      %v1702 = vpack.c.b16 %v1434, %v1430
      %v1703 = vpack.c.b16 %v1439, %v1435
      %v1704 = vpack.c.b16 %v1440, %v1436
      %v1705 = vpack.c.b16 %v1441, %v1437
      %v1706 = vpack.c.b16 %v1442, %v1438
      %v1707 = vpack.c.b16 %v1447, %v1443
      %v1708 = vpack.c.b16 %v1448, %v1444
      %v1709 = vpack.c.b16 %v1449, %v1445
      %v1710 = vpack.c.b16 %v1450, %v1446
      %v1711 = vpack.c.b16 %v1455, %v1451
      %v1712 = vpack.c.b16 %v1456, %v1452
      %v1713 = vpack.c.b16 %v1457, %v1453
      %v1714 = vpack.c.b16 %v1458, %v1454
      %v1715 = vpack.c.b16 %v1463, %v1459
      %v1716 = vpack.c.b16 %v1464, %v1460
      %v1717 = vpack.c.b16 %v1465, %v1461
      %v1718 = vpack.c.b16 %v1466, %v1462
      %v1719 = vpack.c.b16 %v1471, %v1467
      %v1720 = vpack.c.b16 %v1472, %v1468
      %v1721 = vpack.c.b16 %v1473, %v1469
      %v1722 = vpack.c.b16 %v1474, %v1470
      %v1723 = vpack.c.b16 %v1479, %v1475
      %v1724 = vpack.c.b16 %v1480, %v1476
      %v1725 = vpack.c.b16 %v1481, %v1477
      %v1726 = vpack.c.b16 %v1482, %v1478
      %v1727 = vpack.c.b16 %v1487, %v1483
      %v1728 = vpack.c.b16 %v1488, %v1484
      %v1729 = vpack.c.b16 %v1489, %v1485
      %v1730 = vpack.c.b16 %v1490, %v1486
      %v1731 = vpack.c.b16 %v1495, %v1491
      %v1732 = vpack.c.b16 %v1496, %v1492
      %v1733 = vpack.c.b16 %v1497, %v1493
      %v1734 = vpack.c.b16 %v1498, %v1494
      %v1735 = vpack.c.b16 %v1503, %v1499
      %v1736 = vpack.c.b16 %v1504, %v1500
      %v1737 = vpack.c.b16 %v1505, %v1501
      %v1738 = vpack.c.b16 %v1506, %v1502
      %v1739 = vpack.c.b16 %v1511, %v1507
      %v1740 = vpack.c.b16 %v1512, %v1508
      %v1741 = vpack.c.b16 %v1513, %v1509
      %v1742 = vpack.c.b16 %v1514, %v1510
      %v1743 = vpack.c.b16 %v1519, %v1515
      %v1744 = vpack.c.b16 %v1520, %v1516
      %v1745 = vpack.c.b16 %v1521, %v1517
      %v1746 = vpack.c.b16 %v1522, %v1518
      %1971 = vmatpush.bf16.msra.mxu0 %v1551
      %1972 = vmatpush.bf16.msra.mxu0 %v1547
      %1973 = vmatpush.bf16.msra.mxu0 %v1543
      %1974 = vmatpush.bf16.msra.mxu0 %v1539
      %1975 = vmatpush.bf16.msra.mxu0 %v1535
      %1976 = vmatpush.bf16.msra.mxu0 %v1531
      %1977 = vmatpush.bf16.msra.mxu0 %v1527
      %1978 = vmatpush.bf16.msra.mxu0 %v1523
      %1979 = vmatmul.bf16.gmra.mxu0 %v561
      %v1980 = vpop.f32.mrf.mxu0
      %v1981 = vadd.f32 %v843, %v1980
      %v1982 = vpop.f32.mrf.mxu0
      %v1983 = vadd.f32 %v843, %v1982
      %1984 = vmatmul.bf16.gmra.mxu0 %v568
      %v1985 = vpop.f32.mrf.mxu0
      %v1986 = vadd.f32 %v843, %v1985
      %v1987 = vpop.f32.mrf.mxu0
      %v1988 = vadd.f32 %v843, %v1987
      %1989 = vmatmul.bf16.gmra.mxu0 %v575
      %v1990 = vpop.f32.mrf.mxu0
      %v1991 = vadd.f32 %v843, %v1990
      %v1992 = vpop.f32.mrf.mxu0
      %v1993 = vadd.f32 %v843, %v1992
      %1994 = vmatmul.bf16.gmra.mxu0 %v582
      %v1995 = vpop.f32.mrf.mxu0
      %v1996 = vadd.f32 %v843, %v1995
      %v1997 = vpop.f32.mrf.mxu0
      %v1998 = vadd.f32 %v843, %v1997
      %1999 = vmatmul.bf16.gmra.mxu0 %v589
      %v2000 = vpop.f32.mrf.mxu0
      %v2001 = vadd.f32 %v843, %v2000
      %v2002 = vpop.f32.mrf.mxu0
      %v2003 = vadd.f32 %v843, %v2002
      %2004 = vmatmul.bf16.gmra.mxu0 %v596
      %v2005 = vpop.f32.mrf.mxu0
      %v2006 = vadd.f32 %v843, %v2005
      %v2007 = vpop.f32.mrf.mxu0
      %v2008 = vadd.f32 %v843, %v2007
      %2009 = vmatmul.bf16.gmra.mxu0 %v603
      %v2010 = vpop.f32.mrf.mxu0
      %v2011 = vadd.f32 %v843, %v2010
      %v2012 = vpop.f32.mrf.mxu0
      %v2013 = vadd.f32 %v843, %v2012
      %2014 = vmatmul.bf16.gmra.mxu0 %v610
      %v2015 = vpop.f32.mrf.mxu0
      %v2016 = vadd.f32 %v843, %v2015
      %v2017 = vpop.f32.mrf.mxu0
      %v2018 = vadd.f32 %v843, %v2017
      %2019 = vdwg.mxu0
      %2020 = vmatpush.bf16.msra.mxu0 %v1583
      %2021 = vmatpush.bf16.msra.mxu0 %v1579
      %2022 = vmatpush.bf16.msra.mxu0 %v1575
      %2023 = vmatpush.bf16.msra.mxu0 %v1571
      %2024 = vmatpush.bf16.msra.mxu0 %v1567
      %2025 = vmatpush.bf16.msra.mxu0 %v1563
      %2026 = vmatpush.bf16.msra.mxu0 %v1559
      %2027 = vmatpush.bf16.msra.mxu0 %v1555
      %2028 = vmatmul.bf16.gmra.mxu0 %v562
      %v2029 = vpop.f32.mrf.mxu0
      %v2030 = vadd.f32 %v1981, %v2029
      %v2031 = vpop.f32.mrf.mxu0
      %v2032 = vadd.f32 %v1983, %v2031
      %2033 = vmatmul.bf16.gmra.mxu0 %v569
      %v2034 = vpop.f32.mrf.mxu0
      %v2035 = vadd.f32 %v1986, %v2034
      %v2036 = vpop.f32.mrf.mxu0
      %v2037 = vadd.f32 %v1988, %v2036
      %2038 = vmatmul.bf16.gmra.mxu0 %v576
      %v2039 = vpop.f32.mrf.mxu0
      %v2040 = vadd.f32 %v1991, %v2039
      %v2041 = vpop.f32.mrf.mxu0
      %v2042 = vadd.f32 %v1993, %v2041
      %2043 = vmatmul.bf16.gmra.mxu0 %v583
      %v2044 = vpop.f32.mrf.mxu0
      %v2045 = vadd.f32 %v1996, %v2044
      %v2046 = vpop.f32.mrf.mxu0
      %v2047 = vadd.f32 %v1998, %v2046
      %2048 = vmatmul.bf16.gmra.mxu0 %v590
      %v2049 = vpop.f32.mrf.mxu0
      %v2050 = vadd.f32 %v2001, %v2049
      %v2051 = vpop.f32.mrf.mxu0
      %v2052 = vadd.f32 %v2003, %v2051
      %2053 = vmatmul.bf16.gmra.mxu0 %v597
      %v2054 = vpop.f32.mrf.mxu0
      %v2055 = vadd.f32 %v2006, %v2054
      %v2056 = vpop.f32.mrf.mxu0
      %v2057 = vadd.f32 %v2008, %v2056
      %2058 = vmatmul.bf16.gmra.mxu0 %v604
      %v2059 = vpop.f32.mrf.mxu0
      %v2060 = vadd.f32 %v2011, %v2059
      %v2061 = vpop.f32.mrf.mxu0
      %v2062 = vadd.f32 %v2013, %v2061
      %2063 = vmatmul.bf16.gmra.mxu0 %v611
      %v2064 = vpop.f32.mrf.mxu0
      %v2065 = vadd.f32 %v2016, %v2064
      %v2066 = vpop.f32.mrf.mxu0
      %v2067 = vadd.f32 %v2018, %v2066
      %2068 = vdwg.mxu0
      %2069 = vmatpush.bf16.msra.mxu0 %v1615
      %2070 = vmatpush.bf16.msra.mxu0 %v1611
      %2071 = vmatpush.bf16.msra.mxu0 %v1607
      %2072 = vmatpush.bf16.msra.mxu0 %v1603
      %2073 = vmatpush.bf16.msra.mxu0 %v1599
      %2074 = vmatpush.bf16.msra.mxu0 %v1595
      %2075 = vmatpush.bf16.msra.mxu0 %v1591
      %2076 = vmatpush.bf16.msra.mxu0 %v1587
      %2077 = vmatmul.bf16.gmra.mxu0 %v563
      %v2078 = vpop.f32.mrf.mxu0
      %v2079 = vadd.f32 %v2030, %v2078
      %v2080 = vpop.f32.mrf.mxu0
      %v2081 = vadd.f32 %v2032, %v2080
      %2082 = vmatmul.bf16.gmra.mxu0 %v570
      %v2083 = vpop.f32.mrf.mxu0
      %v2084 = vadd.f32 %v2035, %v2083
      %v2085 = vpop.f32.mrf.mxu0
      %v2086 = vadd.f32 %v2037, %v2085
      %2087 = vmatmul.bf16.gmra.mxu0 %v577
      %v2088 = vpop.f32.mrf.mxu0
      %v2089 = vadd.f32 %v2040, %v2088
      %v2090 = vpop.f32.mrf.mxu0
      %v2091 = vadd.f32 %v2042, %v2090
      %2092 = vmatmul.bf16.gmra.mxu0 %v584
      %v2093 = vpop.f32.mrf.mxu0
      %v2094 = vadd.f32 %v2045, %v2093
      %v2095 = vpop.f32.mrf.mxu0
      %v2096 = vadd.f32 %v2047, %v2095
      %2097 = vmatmul.bf16.gmra.mxu0 %v591
      %v2098 = vpop.f32.mrf.mxu0
      %v2099 = vadd.f32 %v2050, %v2098
      %v2100 = vpop.f32.mrf.mxu0
      %v2101 = vadd.f32 %v2052, %v2100
      %2102 = vmatmul.bf16.gmra.mxu0 %v598
      %v2103 = vpop.f32.mrf.mxu0
      %v2104 = vadd.f32 %v2055, %v2103
      %v2105 = vpop.f32.mrf.mxu0
      %v2106 = vadd.f32 %v2057, %v2105
      %2107 = vmatmul.bf16.gmra.mxu0 %v605
      %v2108 = vpop.f32.mrf.mxu0
      %v2109 = vadd.f32 %v2060, %v2108
      %v2110 = vpop.f32.mrf.mxu0
      %v2111 = vadd.f32 %v2062, %v2110
      %2112 = vmatmul.bf16.gmra.mxu0 %v612
      %v2113 = vpop.f32.mrf.mxu0
      %v2114 = vadd.f32 %v2065, %v2113
      %v2115 = vpop.f32.mrf.mxu0
      %v2116 = vadd.f32 %v2067, %v2115
      %2117 = vdwg.mxu0
      %2118 = vmatpush.bf16.msra.mxu0 %v1647
      %2119 = vmatpush.bf16.msra.mxu0 %v1643
      %2120 = vmatpush.bf16.msra.mxu0 %v1639
      %2121 = vmatpush.bf16.msra.mxu0 %v1635
      %2122 = vmatpush.bf16.msra.mxu0 %v1631
      %2123 = vmatpush.bf16.msra.mxu0 %v1627
      %2124 = vmatpush.bf16.msra.mxu0 %v1623
      %2125 = vmatpush.bf16.msra.mxu0 %v1619
      %2126 = vmatmul.bf16.gmra.mxu0 %v564
      %v2127 = vpop.f32.mrf.mxu0
      %v2128 = vadd.f32 %v2079, %v2127
      %v2129 = vpop.f32.mrf.mxu0
      %v2130 = vadd.f32 %v2081, %v2129
      %2131 = vmatmul.bf16.gmra.mxu0 %v571
      %v2132 = vpop.f32.mrf.mxu0
      %v2133 = vadd.f32 %v2084, %v2132
      %v2134 = vpop.f32.mrf.mxu0
      %v2135 = vadd.f32 %v2086, %v2134
      %2136 = vmatmul.bf16.gmra.mxu0 %v578
      %v2137 = vpop.f32.mrf.mxu0
      %v2138 = vadd.f32 %v2089, %v2137
      %v2139 = vpop.f32.mrf.mxu0
      %v2140 = vadd.f32 %v2091, %v2139
      %2141 = vmatmul.bf16.gmra.mxu0 %v585
      %v2142 = vpop.f32.mrf.mxu0
      %v2143 = vadd.f32 %v2094, %v2142
      %v2144 = vpop.f32.mrf.mxu0
      %v2145 = vadd.f32 %v2096, %v2144
      %2146 = vmatmul.bf16.gmra.mxu0 %v592
      %v2147 = vpop.f32.mrf.mxu0
      %v2148 = vadd.f32 %v2099, %v2147
      %v2149 = vpop.f32.mrf.mxu0
      %v2150 = vadd.f32 %v2101, %v2149
      %2151 = vmatmul.bf16.gmra.mxu0 %v599
      %v2152 = vpop.f32.mrf.mxu0
      %v2153 = vadd.f32 %v2104, %v2152
      %v2154 = vpop.f32.mrf.mxu0
      %v2155 = vadd.f32 %v2106, %v2154
      %2156 = vmatmul.bf16.gmra.mxu0 %v606
      %v2157 = vpop.f32.mrf.mxu0
      %v2158 = vadd.f32 %v2109, %v2157
      %v2159 = vpop.f32.mrf.mxu0
      %v2160 = vadd.f32 %v2111, %v2159
      %2161 = vmatmul.bf16.gmra.mxu0 %v613
      %v2162 = vpop.f32.mrf.mxu0
      %v2163 = vadd.f32 %v2114, %v2162
      %v2164 = vpop.f32.mrf.mxu0
      %v2165 = vadd.f32 %v2116, %v2164
      %2166 = vdwg.mxu0
      %2167 = vmatpush.bf16.msra.mxu0 %v1679
      %2168 = vmatpush.bf16.msra.mxu0 %v1675
      %2169 = vmatpush.bf16.msra.mxu0 %v1671
      %2170 = vmatpush.bf16.msra.mxu0 %v1667
      %2171 = vmatpush.bf16.msra.mxu0 %v1663
      %2172 = vmatpush.bf16.msra.mxu0 %v1659
      %2173 = vmatpush.bf16.msra.mxu0 %v1655
      %2174 = vmatpush.bf16.msra.mxu0 %v1651
      %2175 = vmatmul.bf16.gmra.mxu0 %v565
      %v2176 = vpop.f32.mrf.mxu0
      %v2177 = vadd.f32 %v2128, %v2176
      %v2178 = vpop.f32.mrf.mxu0
      %v2179 = vadd.f32 %v2130, %v2178
      %2180 = vmatmul.bf16.gmra.mxu0 %v572
      %v2181 = vpop.f32.mrf.mxu0
      %v2182 = vadd.f32 %v2133, %v2181
      %v2183 = vpop.f32.mrf.mxu0
      %v2184 = vadd.f32 %v2135, %v2183
      %2185 = vmatmul.bf16.gmra.mxu0 %v579
      %v2186 = vpop.f32.mrf.mxu0
      %v2187 = vadd.f32 %v2138, %v2186
      %v2188 = vpop.f32.mrf.mxu0
      %v2189 = vadd.f32 %v2140, %v2188
      %2190 = vmatmul.bf16.gmra.mxu0 %v586
      %v2191 = vpop.f32.mrf.mxu0
      %v2192 = vadd.f32 %v2143, %v2191
      %v2193 = vpop.f32.mrf.mxu0
      %v2194 = vadd.f32 %v2145, %v2193
      %2195 = vmatmul.bf16.gmra.mxu0 %v593
      %v2196 = vpop.f32.mrf.mxu0
      %v2197 = vadd.f32 %v2148, %v2196
      %v2198 = vpop.f32.mrf.mxu0
      %v2199 = vadd.f32 %v2150, %v2198
      %2200 = vmatmul.bf16.gmra.mxu0 %v600
      %v2201 = vpop.f32.mrf.mxu0
      %v2202 = vadd.f32 %v2153, %v2201
      %v2203 = vpop.f32.mrf.mxu0
      %v2204 = vadd.f32 %v2155, %v2203
      %2205 = vmatmul.bf16.gmra.mxu0 %v607
      %v2206 = vpop.f32.mrf.mxu0
      %v2207 = vadd.f32 %v2158, %v2206
      %v2208 = vpop.f32.mrf.mxu0
      %v2209 = vadd.f32 %v2160, %v2208
      %2210 = vmatmul.bf16.gmra.mxu0 %v614
      %v2211 = vpop.f32.mrf.mxu0
      %v2212 = vadd.f32 %v2163, %v2211
      %v2213 = vpop.f32.mrf.mxu0
      %v2214 = vadd.f32 %v2165, %v2213
      %2215 = vdwg.mxu0
      %2216 = vmatpush.bf16.msra.mxu0 %v1711
      %2217 = vmatpush.bf16.msra.mxu0 %v1707
      %2218 = vmatpush.bf16.msra.mxu0 %v1703
      %2219 = vmatpush.bf16.msra.mxu0 %v1699
      %2220 = vmatpush.bf16.msra.mxu0 %v1695
      %2221 = vmatpush.bf16.msra.mxu0 %v1691
      %2222 = vmatpush.bf16.msra.mxu0 %v1687
      %2223 = vmatpush.bf16.msra.mxu0 %v1683
      %2224 = vmatmul.bf16.gmra.mxu0 %v566
      %v2225 = vpop.f32.mrf.mxu0
      %v2226 = vadd.f32 %v2177, %v2225
      %v2227 = vpop.f32.mrf.mxu0
      %v2228 = vadd.f32 %v2179, %v2227
      %2229 = vmatmul.bf16.gmra.mxu0 %v573
      %v2230 = vpop.f32.mrf.mxu0
      %v2231 = vadd.f32 %v2182, %v2230
      %v2232 = vpop.f32.mrf.mxu0
      %v2233 = vadd.f32 %v2184, %v2232
      %2234 = vmatmul.bf16.gmra.mxu0 %v580
      %v2235 = vpop.f32.mrf.mxu0
      %v2236 = vadd.f32 %v2187, %v2235
      %v2237 = vpop.f32.mrf.mxu0
      %v2238 = vadd.f32 %v2189, %v2237
      %2239 = vmatmul.bf16.gmra.mxu0 %v587
      %v2240 = vpop.f32.mrf.mxu0
      %v2241 = vadd.f32 %v2192, %v2240
      %v2242 = vpop.f32.mrf.mxu0
      %v2243 = vadd.f32 %v2194, %v2242
      %2244 = vmatmul.bf16.gmra.mxu0 %v594
      %v2245 = vpop.f32.mrf.mxu0
      %v2246 = vadd.f32 %v2197, %v2245
      %v2247 = vpop.f32.mrf.mxu0
      %v2248 = vadd.f32 %v2199, %v2247
      %2249 = vmatmul.bf16.gmra.mxu0 %v601
      %v2250 = vpop.f32.mrf.mxu0
      %v2251 = vadd.f32 %v2202, %v2250
      %v2252 = vpop.f32.mrf.mxu0
      %v2253 = vadd.f32 %v2204, %v2252
      %2254 = vmatmul.bf16.gmra.mxu0 %v608
      %v2255 = vpop.f32.mrf.mxu0
      %v2256 = vadd.f32 %v2207, %v2255
      %v2257 = vpop.f32.mrf.mxu0
      %v2258 = vadd.f32 %v2209, %v2257
      %2259 = vmatmul.bf16.gmra.mxu0 %v615
      %v2260 = vpop.f32.mrf.mxu0
      %v2261 = vadd.f32 %v2212, %v2260
      %v2262 = vpop.f32.mrf.mxu0
      %v2263 = vadd.f32 %v2214, %v2262
      %2264 = vdwg.mxu0
      %2265 = vmatpush.bf16.msra.mxu0 %v1743
      %2266 = vmatpush.bf16.msra.mxu0 %v1739
      %2267 = vmatpush.bf16.msra.mxu0 %v1735
      %2268 = vmatpush.bf16.msra.mxu0 %v1731
      %2269 = vmatpush.bf16.msra.mxu0 %v1727
      %2270 = vmatpush.bf16.msra.mxu0 %v1723
      %2271 = vmatpush.bf16.msra.mxu0 %v1719
      %2272 = vmatpush.bf16.msra.mxu0 %v1715
      %2273 = vmatmul.bf16.gmra.mxu0 %v567
      %v2274 = vpop.f32.mrf.mxu0
      %v2275 = vadd.f32 %v2226, %v2274
      %v2276 = vpop.f32.mrf.mxu0
      %v2277 = vadd.f32 %v2228, %v2276
      %2278 = vmatmul.bf16.gmra.mxu0 %v574
      %v2279 = vpop.f32.mrf.mxu0
      %v2280 = vadd.f32 %v2231, %v2279
      %v2281 = vpop.f32.mrf.mxu0
      %v2282 = vadd.f32 %v2233, %v2281
      %2283 = vmatmul.bf16.gmra.mxu0 %v581
      %v2284 = vpop.f32.mrf.mxu0
      %v2285 = vadd.f32 %v2236, %v2284
      %v2286 = vpop.f32.mrf.mxu0
      %v2287 = vadd.f32 %v2238, %v2286
      %2288 = vmatmul.bf16.gmra.mxu0 %v588
      %v2289 = vpop.f32.mrf.mxu0
      %v2290 = vadd.f32 %v2241, %v2289
      %v2291 = vpop.f32.mrf.mxu0
      %v2292 = vadd.f32 %v2243, %v2291
      %2293 = vmatmul.bf16.gmra.mxu0 %v595
      %v2294 = vpop.f32.mrf.mxu0
      %v2295 = vadd.f32 %v2246, %v2294
      %v2296 = vpop.f32.mrf.mxu0
      %v2297 = vadd.f32 %v2248, %v2296
      %2298 = vmatmul.bf16.gmra.mxu0 %v602
      %v2299 = vpop.f32.mrf.mxu0
      %v2300 = vadd.f32 %v2251, %v2299
      %v2301 = vpop.f32.mrf.mxu0
      %v2302 = vadd.f32 %v2253, %v2301
      %2303 = vmatmul.bf16.gmra.mxu0 %v609
      %v2304 = vpop.f32.mrf.mxu0
      %v2305 = vadd.f32 %v2256, %v2304
      %v2306 = vpop.f32.mrf.mxu0
      %v2307 = vadd.f32 %v2258, %v2306
      %2308 = vmatmul.bf16.gmra.mxu0 %v616
      %v2309 = vpop.f32.mrf.mxu0
      %v2310 = vadd.f32 %v2261, %v2309
      %v2311 = vpop.f32.mrf.mxu0
      %v2312 = vadd.f32 %v2263, %v2311
      %2313 = vdwg.mxu0
      %2314 = vmatpush.bf16.msra.mxu0 %v1552
      %2315 = vmatpush.bf16.msra.mxu0 %v1548
      %2316 = vmatpush.bf16.msra.mxu0 %v1544
      %2317 = vmatpush.bf16.msra.mxu0 %v1540
      %2318 = vmatpush.bf16.msra.mxu0 %v1536
      %2319 = vmatpush.bf16.msra.mxu0 %v1532
      %2320 = vmatpush.bf16.msra.mxu0 %v1528
      %2321 = vmatpush.bf16.msra.mxu0 %v1524
      %2322 = vmatmul.bf16.gmra.mxu0 %v561
      %v2323 = vpop.f32.mrf.mxu0
      %v2324 = vadd.f32 %v844, %v2323
      %v2325 = vpop.f32.mrf.mxu0
      %v2326 = vadd.f32 %v844, %v2325
      %2327 = vmatmul.bf16.gmra.mxu0 %v568
      %v2328 = vpop.f32.mrf.mxu0
      %v2329 = vadd.f32 %v844, %v2328
      %v2330 = vpop.f32.mrf.mxu0
      %v2331 = vadd.f32 %v844, %v2330
      %2332 = vmatmul.bf16.gmra.mxu0 %v575
      %v2333 = vpop.f32.mrf.mxu0
      %v2334 = vadd.f32 %v844, %v2333
      %v2335 = vpop.f32.mrf.mxu0
      %v2336 = vadd.f32 %v844, %v2335
      %2337 = vmatmul.bf16.gmra.mxu0 %v582
      %v2338 = vpop.f32.mrf.mxu0
      %v2339 = vadd.f32 %v844, %v2338
      %v2340 = vpop.f32.mrf.mxu0
      %v2341 = vadd.f32 %v844, %v2340
      %2342 = vmatmul.bf16.gmra.mxu0 %v589
      %v2343 = vpop.f32.mrf.mxu0
      %v2344 = vadd.f32 %v844, %v2343
      %v2345 = vpop.f32.mrf.mxu0
      %v2346 = vadd.f32 %v844, %v2345
      %2347 = vmatmul.bf16.gmra.mxu0 %v596
      %v2348 = vpop.f32.mrf.mxu0
      %v2349 = vadd.f32 %v844, %v2348
      %v2350 = vpop.f32.mrf.mxu0
      %v2351 = vadd.f32 %v844, %v2350
      %2352 = vmatmul.bf16.gmra.mxu0 %v603
      %v2353 = vpop.f32.mrf.mxu0
      %v2354 = vadd.f32 %v844, %v2353
      %v2355 = vpop.f32.mrf.mxu0
      %v2356 = vadd.f32 %v844, %v2355
      %2357 = vmatmul.bf16.gmra.mxu0 %v610
      %v2358 = vpop.f32.mrf.mxu0
      %v2359 = vadd.f32 %v844, %v2358
      %v2360 = vpop.f32.mrf.mxu0
      %v2361 = vadd.f32 %v844, %v2360
      %2362 = vdwg.mxu0
      %2363 = vmatpush.bf16.msra.mxu0 %v1584
      %2364 = vmatpush.bf16.msra.mxu0 %v1580
      %2365 = vmatpush.bf16.msra.mxu0 %v1576
      %2366 = vmatpush.bf16.msra.mxu0 %v1572
      %2367 = vmatpush.bf16.msra.mxu0 %v1568
      %2368 = vmatpush.bf16.msra.mxu0 %v1564
      %2369 = vmatpush.bf16.msra.mxu0 %v1560
      %2370 = vmatpush.bf16.msra.mxu0 %v1556
      %2371 = vmatmul.bf16.gmra.mxu0 %v562
      %v2372 = vpop.f32.mrf.mxu0
      %v2373 = vadd.f32 %v2324, %v2372
      %v2374 = vpop.f32.mrf.mxu0
      %v2375 = vadd.f32 %v2326, %v2374
      %2376 = vmatmul.bf16.gmra.mxu0 %v569
      %v2377 = vpop.f32.mrf.mxu0
      %v2378 = vadd.f32 %v2329, %v2377
      %v2379 = vpop.f32.mrf.mxu0
      %v2380 = vadd.f32 %v2331, %v2379
      %2381 = vmatmul.bf16.gmra.mxu0 %v576
      %v2382 = vpop.f32.mrf.mxu0
      %v2383 = vadd.f32 %v2334, %v2382
      %v2384 = vpop.f32.mrf.mxu0
      %v2385 = vadd.f32 %v2336, %v2384
      %2386 = vmatmul.bf16.gmra.mxu0 %v583
      %v2387 = vpop.f32.mrf.mxu0
      %v2388 = vadd.f32 %v2339, %v2387
      %v2389 = vpop.f32.mrf.mxu0
      %v2390 = vadd.f32 %v2341, %v2389
      %2391 = vmatmul.bf16.gmra.mxu0 %v590
      %v2392 = vpop.f32.mrf.mxu0
      %v2393 = vadd.f32 %v2344, %v2392
      %v2394 = vpop.f32.mrf.mxu0
      %v2395 = vadd.f32 %v2346, %v2394
      %2396 = vmatmul.bf16.gmra.mxu0 %v597
      %v2397 = vpop.f32.mrf.mxu0
      %v2398 = vadd.f32 %v2349, %v2397
      %v2399 = vpop.f32.mrf.mxu0
      %v2400 = vadd.f32 %v2351, %v2399
      %2401 = vmatmul.bf16.gmra.mxu0 %v604
      %v2402 = vpop.f32.mrf.mxu0
      %v2403 = vadd.f32 %v2354, %v2402
      %v2404 = vpop.f32.mrf.mxu0
      %v2405 = vadd.f32 %v2356, %v2404
      %2406 = vmatmul.bf16.gmra.mxu0 %v611
      %v2407 = vpop.f32.mrf.mxu0
      %v2408 = vadd.f32 %v2359, %v2407
      %v2409 = vpop.f32.mrf.mxu0
      %v2410 = vadd.f32 %v2361, %v2409
      %2411 = vdwg.mxu0
      %2412 = vmatpush.bf16.msra.mxu0 %v1616
      %2413 = vmatpush.bf16.msra.mxu0 %v1612
      %2414 = vmatpush.bf16.msra.mxu0 %v1608
      %2415 = vmatpush.bf16.msra.mxu0 %v1604
      %2416 = vmatpush.bf16.msra.mxu0 %v1600
      %2417 = vmatpush.bf16.msra.mxu0 %v1596
      %2418 = vmatpush.bf16.msra.mxu0 %v1592
      %2419 = vmatpush.bf16.msra.mxu0 %v1588
      %2420 = vmatmul.bf16.gmra.mxu0 %v563
      %v2421 = vpop.f32.mrf.mxu0
      %v2422 = vadd.f32 %v2373, %v2421
      %v2423 = vpop.f32.mrf.mxu0
      %v2424 = vadd.f32 %v2375, %v2423
      %2425 = vmatmul.bf16.gmra.mxu0 %v570
      %v2426 = vpop.f32.mrf.mxu0
      %v2427 = vadd.f32 %v2378, %v2426
      %v2428 = vpop.f32.mrf.mxu0
      %v2429 = vadd.f32 %v2380, %v2428
      %2430 = vmatmul.bf16.gmra.mxu0 %v577
      %v2431 = vpop.f32.mrf.mxu0
      %v2432 = vadd.f32 %v2383, %v2431
      %v2433 = vpop.f32.mrf.mxu0
      %v2434 = vadd.f32 %v2385, %v2433
      %2435 = vmatmul.bf16.gmra.mxu0 %v584
      %v2436 = vpop.f32.mrf.mxu0
      %v2437 = vadd.f32 %v2388, %v2436
      %v2438 = vpop.f32.mrf.mxu0
      %v2439 = vadd.f32 %v2390, %v2438
      %2440 = vmatmul.bf16.gmra.mxu0 %v591
      %v2441 = vpop.f32.mrf.mxu0
      %v2442 = vadd.f32 %v2393, %v2441
      %v2443 = vpop.f32.mrf.mxu0
      %v2444 = vadd.f32 %v2395, %v2443
      %2445 = vmatmul.bf16.gmra.mxu0 %v598
      %v2446 = vpop.f32.mrf.mxu0
      %v2447 = vadd.f32 %v2398, %v2446
      %v2448 = vpop.f32.mrf.mxu0
      %v2449 = vadd.f32 %v2400, %v2448
      %2450 = vmatmul.bf16.gmra.mxu0 %v605
      %v2451 = vpop.f32.mrf.mxu0
      %v2452 = vadd.f32 %v2403, %v2451
      %v2453 = vpop.f32.mrf.mxu0
      %v2454 = vadd.f32 %v2405, %v2453
      %2455 = vmatmul.bf16.gmra.mxu0 %v612
      %v2456 = vpop.f32.mrf.mxu0
      %v2457 = vadd.f32 %v2408, %v2456
      %v2458 = vpop.f32.mrf.mxu0
      %v2459 = vadd.f32 %v2410, %v2458
      %2460 = vdwg.mxu0
      %2461 = vmatpush.bf16.msra.mxu0 %v1648
      %2462 = vmatpush.bf16.msra.mxu0 %v1644
      %2463 = vmatpush.bf16.msra.mxu0 %v1640
      %2464 = vmatpush.bf16.msra.mxu0 %v1636
      %2465 = vmatpush.bf16.msra.mxu0 %v1632
      %2466 = vmatpush.bf16.msra.mxu0 %v1628
      %2467 = vmatpush.bf16.msra.mxu0 %v1624
      %2468 = vmatpush.bf16.msra.mxu0 %v1620
      %2469 = vmatmul.bf16.gmra.mxu0 %v564
      %v2470 = vpop.f32.mrf.mxu0
      %v2471 = vadd.f32 %v2422, %v2470
      %v2472 = vpop.f32.mrf.mxu0
      %v2473 = vadd.f32 %v2424, %v2472
      %2474 = vmatmul.bf16.gmra.mxu0 %v571
      %v2475 = vpop.f32.mrf.mxu0
      %v2476 = vadd.f32 %v2427, %v2475
      %v2477 = vpop.f32.mrf.mxu0
      %v2478 = vadd.f32 %v2429, %v2477
      %2479 = vmatmul.bf16.gmra.mxu0 %v578
      %v2480 = vpop.f32.mrf.mxu0
      %v2481 = vadd.f32 %v2432, %v2480
      %v2482 = vpop.f32.mrf.mxu0
      %v2483 = vadd.f32 %v2434, %v2482
      %2484 = vmatmul.bf16.gmra.mxu0 %v585
      %v2485 = vpop.f32.mrf.mxu0
      %v2486 = vadd.f32 %v2437, %v2485
      %v2487 = vpop.f32.mrf.mxu0
      %v2488 = vadd.f32 %v2439, %v2487
      %2489 = vmatmul.bf16.gmra.mxu0 %v592
      %v2490 = vpop.f32.mrf.mxu0
      %v2491 = vadd.f32 %v2442, %v2490
      %v2492 = vpop.f32.mrf.mxu0
      %v2493 = vadd.f32 %v2444, %v2492
      %2494 = vmatmul.bf16.gmra.mxu0 %v599
      %v2495 = vpop.f32.mrf.mxu0
      %v2496 = vadd.f32 %v2447, %v2495
      %v2497 = vpop.f32.mrf.mxu0
      %v2498 = vadd.f32 %v2449, %v2497
      %2499 = vmatmul.bf16.gmra.mxu0 %v606
      %v2500 = vpop.f32.mrf.mxu0
      %v2501 = vadd.f32 %v2452, %v2500
      %v2502 = vpop.f32.mrf.mxu0
      %v2503 = vadd.f32 %v2454, %v2502
      %2504 = vmatmul.bf16.gmra.mxu0 %v613
      %v2505 = vpop.f32.mrf.mxu0
      %v2506 = vadd.f32 %v2457, %v2505
      %v2507 = vpop.f32.mrf.mxu0
      %v2508 = vadd.f32 %v2459, %v2507
      %2509 = vdwg.mxu0
      %2510 = vmatpush.bf16.msra.mxu0 %v1680
      %2511 = vmatpush.bf16.msra.mxu0 %v1676
      %2512 = vmatpush.bf16.msra.mxu0 %v1672
      %2513 = vmatpush.bf16.msra.mxu0 %v1668
      %2514 = vmatpush.bf16.msra.mxu0 %v1664
      %2515 = vmatpush.bf16.msra.mxu0 %v1660
      %2516 = vmatpush.bf16.msra.mxu0 %v1656
      %2517 = vmatpush.bf16.msra.mxu0 %v1652
      %2518 = vmatmul.bf16.gmra.mxu0 %v565
      %v2519 = vpop.f32.mrf.mxu0
      %v2520 = vadd.f32 %v2471, %v2519
      %v2521 = vpop.f32.mrf.mxu0
      %v2522 = vadd.f32 %v2473, %v2521
      %2523 = vmatmul.bf16.gmra.mxu0 %v572
      %v2524 = vpop.f32.mrf.mxu0
      %v2525 = vadd.f32 %v2476, %v2524
      %v2526 = vpop.f32.mrf.mxu0
      %v2527 = vadd.f32 %v2478, %v2526
      %2528 = vmatmul.bf16.gmra.mxu0 %v579
      %v2529 = vpop.f32.mrf.mxu0
      %v2530 = vadd.f32 %v2481, %v2529
      %v2531 = vpop.f32.mrf.mxu0
      %v2532 = vadd.f32 %v2483, %v2531
      %2533 = vmatmul.bf16.gmra.mxu0 %v586
      %v2534 = vpop.f32.mrf.mxu0
      %v2535 = vadd.f32 %v2486, %v2534
      %v2536 = vpop.f32.mrf.mxu0
      %v2537 = vadd.f32 %v2488, %v2536
      %2538 = vmatmul.bf16.gmra.mxu0 %v593
      %v2539 = vpop.f32.mrf.mxu0
      %v2540 = vadd.f32 %v2491, %v2539
      %v2541 = vpop.f32.mrf.mxu0
      %v2542 = vadd.f32 %v2493, %v2541
      %2543 = vmatmul.bf16.gmra.mxu0 %v600
      %v2544 = vpop.f32.mrf.mxu0
      %v2545 = vadd.f32 %v2496, %v2544
      %v2546 = vpop.f32.mrf.mxu0
      %v2547 = vadd.f32 %v2498, %v2546
      %2548 = vmatmul.bf16.gmra.mxu0 %v607
      %v2549 = vpop.f32.mrf.mxu0
      %v2550 = vadd.f32 %v2501, %v2549
      %v2551 = vpop.f32.mrf.mxu0
      %v2552 = vadd.f32 %v2503, %v2551
      %2553 = vmatmul.bf16.gmra.mxu0 %v614
      %v2554 = vpop.f32.mrf.mxu0
      %v2555 = vadd.f32 %v2506, %v2554
      %v2556 = vpop.f32.mrf.mxu0
      %v2557 = vadd.f32 %v2508, %v2556
      %2558 = vdwg.mxu0
      %2559 = vmatpush.bf16.msra.mxu0 %v1712
      %2560 = vmatpush.bf16.msra.mxu0 %v1708
      %2561 = vmatpush.bf16.msra.mxu0 %v1704
      %2562 = vmatpush.bf16.msra.mxu0 %v1700
      %2563 = vmatpush.bf16.msra.mxu0 %v1696
      %2564 = vmatpush.bf16.msra.mxu0 %v1692
      %2565 = vmatpush.bf16.msra.mxu0 %v1688
      %2566 = vmatpush.bf16.msra.mxu0 %v1684
      %2567 = vmatmul.bf16.gmra.mxu0 %v566
      %v2568 = vpop.f32.mrf.mxu0
      %v2569 = vadd.f32 %v2520, %v2568
      %v2570 = vpop.f32.mrf.mxu0
      %v2571 = vadd.f32 %v2522, %v2570
      %2572 = vmatmul.bf16.gmra.mxu0 %v573
      %v2573 = vpop.f32.mrf.mxu0
      %v2574 = vadd.f32 %v2525, %v2573
      %v2575 = vpop.f32.mrf.mxu0
      %v2576 = vadd.f32 %v2527, %v2575
      %2577 = vmatmul.bf16.gmra.mxu0 %v580
      %v2578 = vpop.f32.mrf.mxu0
      %v2579 = vadd.f32 %v2530, %v2578
      %v2580 = vpop.f32.mrf.mxu0
      %v2581 = vadd.f32 %v2532, %v2580
      %2582 = vmatmul.bf16.gmra.mxu0 %v587
      %v2583 = vpop.f32.mrf.mxu0
      %v2584 = vadd.f32 %v2535, %v2583
      %v2585 = vpop.f32.mrf.mxu0
      %v2586 = vadd.f32 %v2537, %v2585
      %2587 = vmatmul.bf16.gmra.mxu0 %v594
      %v2588 = vpop.f32.mrf.mxu0
      %v2589 = vadd.f32 %v2540, %v2588
      %v2590 = vpop.f32.mrf.mxu0
      %v2591 = vadd.f32 %v2542, %v2590
      %2592 = vmatmul.bf16.gmra.mxu0 %v601
      %v2593 = vpop.f32.mrf.mxu0
      %v2594 = vadd.f32 %v2545, %v2593
      %v2595 = vpop.f32.mrf.mxu0
      %v2596 = vadd.f32 %v2547, %v2595
      %2597 = vmatmul.bf16.gmra.mxu0 %v608
      %v2598 = vpop.f32.mrf.mxu0
      %v2599 = vadd.f32 %v2550, %v2598
      %v2600 = vpop.f32.mrf.mxu0
      %v2601 = vadd.f32 %v2552, %v2600
      %2602 = vmatmul.bf16.gmra.mxu0 %v615
      %v2603 = vpop.f32.mrf.mxu0
      %v2604 = vadd.f32 %v2555, %v2603
      %v2605 = vpop.f32.mrf.mxu0
      %v2606 = vadd.f32 %v2557, %v2605
      %2607 = vdwg.mxu0
      %2608 = vmatpush.bf16.msra.mxu0 %v1744
      %2609 = vmatpush.bf16.msra.mxu0 %v1740
      %2610 = vmatpush.bf16.msra.mxu0 %v1736
      %2611 = vmatpush.bf16.msra.mxu0 %v1732
      %2612 = vmatpush.bf16.msra.mxu0 %v1728
      %2613 = vmatpush.bf16.msra.mxu0 %v1724
      %2614 = vmatpush.bf16.msra.mxu0 %v1720
      %2615 = vmatpush.bf16.msra.mxu0 %v1716
      %2616 = vmatmul.bf16.gmra.mxu0 %v567
      %v2617 = vpop.f32.mrf.mxu0
      %v2618 = vadd.f32 %v2569, %v2617
      %v2619 = vpop.f32.mrf.mxu0
      %v2620 = vadd.f32 %v2571, %v2619
      %2621 = vmatmul.bf16.gmra.mxu0 %v574
      %v2622 = vpop.f32.mrf.mxu0
      %v2623 = vadd.f32 %v2574, %v2622
      %v2624 = vpop.f32.mrf.mxu0
      %v2625 = vadd.f32 %v2576, %v2624
      %2626 = vmatmul.bf16.gmra.mxu0 %v581
      %v2627 = vpop.f32.mrf.mxu0
      %v2628 = vadd.f32 %v2579, %v2627
      %v2629 = vpop.f32.mrf.mxu0
      %v2630 = vadd.f32 %v2581, %v2629
      %2631 = vmatmul.bf16.gmra.mxu0 %v588
      %v2632 = vpop.f32.mrf.mxu0
      %v2633 = vadd.f32 %v2584, %v2632
      %v2634 = vpop.f32.mrf.mxu0
      %v2635 = vadd.f32 %v2586, %v2634
      %2636 = vmatmul.bf16.gmra.mxu0 %v595
      %v2637 = vpop.f32.mrf.mxu0
      %v2638 = vadd.f32 %v2589, %v2637
      %v2639 = vpop.f32.mrf.mxu0
      %v2640 = vadd.f32 %v2591, %v2639
      %2641 = vmatmul.bf16.gmra.mxu0 %v602
      %v2642 = vpop.f32.mrf.mxu0
      %v2643 = vadd.f32 %v2594, %v2642
      %v2644 = vpop.f32.mrf.mxu0
      %v2645 = vadd.f32 %v2596, %v2644
      %2646 = vmatmul.bf16.gmra.mxu0 %v609
      %v2647 = vpop.f32.mrf.mxu0
      %v2648 = vadd.f32 %v2599, %v2647
      %v2649 = vpop.f32.mrf.mxu0
      %v2650 = vadd.f32 %v2601, %v2649
      %2651 = vmatmul.bf16.gmra.mxu0 %v616
      %v2652 = vpop.f32.mrf.mxu0
      %v2653 = vadd.f32 %v2604, %v2652
      %v2654 = vpop.f32.mrf.mxu0
      %v2655 = vadd.f32 %v2606, %v2654
      %2656 = vdwg.mxu0
      %2657 = vmatpush.bf16.msra.mxu0 %v1553
      %2658 = vmatpush.bf16.msra.mxu0 %v1549
      %2659 = vmatpush.bf16.msra.mxu0 %v1545
      %2660 = vmatpush.bf16.msra.mxu0 %v1541
      %2661 = vmatpush.bf16.msra.mxu0 %v1537
      %2662 = vmatpush.bf16.msra.mxu0 %v1533
      %2663 = vmatpush.bf16.msra.mxu0 %v1529
      %2664 = vmatpush.bf16.msra.mxu0 %v1525
      %2665 = vmatmul.bf16.gmra.mxu0 %v561
      %v2666 = vpop.f32.mrf.mxu0
      %v2667 = vadd.f32 %v845, %v2666
      %v2668 = vpop.f32.mrf.mxu0
      %v2669 = vadd.f32 %v845, %v2668
      %2670 = vmatmul.bf16.gmra.mxu0 %v568
      %v2671 = vpop.f32.mrf.mxu0
      %v2672 = vadd.f32 %v845, %v2671
      %v2673 = vpop.f32.mrf.mxu0
      %v2674 = vadd.f32 %v845, %v2673
      %2675 = vmatmul.bf16.gmra.mxu0 %v575
      %v2676 = vpop.f32.mrf.mxu0
      %v2677 = vadd.f32 %v845, %v2676
      %v2678 = vpop.f32.mrf.mxu0
      %v2679 = vadd.f32 %v845, %v2678
      %2680 = vmatmul.bf16.gmra.mxu0 %v582
      %v2681 = vpop.f32.mrf.mxu0
      %v2682 = vadd.f32 %v845, %v2681
      %v2683 = vpop.f32.mrf.mxu0
      %v2684 = vadd.f32 %v845, %v2683
      %2685 = vmatmul.bf16.gmra.mxu0 %v589
      %v2686 = vpop.f32.mrf.mxu0
      %v2687 = vadd.f32 %v845, %v2686
      %v2688 = vpop.f32.mrf.mxu0
      %v2689 = vadd.f32 %v845, %v2688
      %2690 = vmatmul.bf16.gmra.mxu0 %v596
      %v2691 = vpop.f32.mrf.mxu0
      %v2692 = vadd.f32 %v845, %v2691
      %v2693 = vpop.f32.mrf.mxu0
      %v2694 = vadd.f32 %v845, %v2693
      %2695 = vmatmul.bf16.gmra.mxu0 %v603
      %v2696 = vpop.f32.mrf.mxu0
      %v2697 = vadd.f32 %v845, %v2696
      %v2698 = vpop.f32.mrf.mxu0
      %v2699 = vadd.f32 %v845, %v2698
      %2700 = vmatmul.bf16.gmra.mxu0 %v610
      %v2701 = vpop.f32.mrf.mxu0
      %v2702 = vadd.f32 %v845, %v2701
      %v2703 = vpop.f32.mrf.mxu0
      %v2704 = vadd.f32 %v845, %v2703
      %2705 = vdwg.mxu0
      %2706 = vmatpush.bf16.msra.mxu0 %v1585
      %2707 = vmatpush.bf16.msra.mxu0 %v1581
      %2708 = vmatpush.bf16.msra.mxu0 %v1577
      %2709 = vmatpush.bf16.msra.mxu0 %v1573
      %2710 = vmatpush.bf16.msra.mxu0 %v1569
      %2711 = vmatpush.bf16.msra.mxu0 %v1565
      %2712 = vmatpush.bf16.msra.mxu0 %v1561
      %2713 = vmatpush.bf16.msra.mxu0 %v1557
      %2714 = vmatmul.bf16.gmra.mxu0 %v562
      %v2715 = vpop.f32.mrf.mxu0
      %v2716 = vadd.f32 %v2667, %v2715
      %v2717 = vpop.f32.mrf.mxu0
      %v2718 = vadd.f32 %v2669, %v2717
      %2719 = vmatmul.bf16.gmra.mxu0 %v569
      %v2720 = vpop.f32.mrf.mxu0
      %v2721 = vadd.f32 %v2672, %v2720
      %v2722 = vpop.f32.mrf.mxu0
      %v2723 = vadd.f32 %v2674, %v2722
      %2724 = vmatmul.bf16.gmra.mxu0 %v576
      %v2725 = vpop.f32.mrf.mxu0
      %v2726 = vadd.f32 %v2677, %v2725
      %v2727 = vpop.f32.mrf.mxu0
      %v2728 = vadd.f32 %v2679, %v2727
      %2729 = vmatmul.bf16.gmra.mxu0 %v583
      %v2730 = vpop.f32.mrf.mxu0
      %v2731 = vadd.f32 %v2682, %v2730
      %v2732 = vpop.f32.mrf.mxu0
      %v2733 = vadd.f32 %v2684, %v2732
      %2734 = vmatmul.bf16.gmra.mxu0 %v590
      %v2735 = vpop.f32.mrf.mxu0
      %v2736 = vadd.f32 %v2687, %v2735
      %v2737 = vpop.f32.mrf.mxu0
      %v2738 = vadd.f32 %v2689, %v2737
      %2739 = vmatmul.bf16.gmra.mxu0 %v597
      %v2740 = vpop.f32.mrf.mxu0
      %v2741 = vadd.f32 %v2692, %v2740
      %v2742 = vpop.f32.mrf.mxu0
      %v2743 = vadd.f32 %v2694, %v2742
      %2744 = vmatmul.bf16.gmra.mxu0 %v604
      %v2745 = vpop.f32.mrf.mxu0
      %v2746 = vadd.f32 %v2697, %v2745
      %v2747 = vpop.f32.mrf.mxu0
      %v2748 = vadd.f32 %v2699, %v2747
      %2749 = vmatmul.bf16.gmra.mxu0 %v611
      %v2750 = vpop.f32.mrf.mxu0
      %v2751 = vadd.f32 %v2702, %v2750
      %v2752 = vpop.f32.mrf.mxu0
      %v2753 = vadd.f32 %v2704, %v2752
      %2754 = vdwg.mxu0
      %2755 = vmatpush.bf16.msra.mxu0 %v1617
      %2756 = vmatpush.bf16.msra.mxu0 %v1613
      %2757 = vmatpush.bf16.msra.mxu0 %v1609
      %2758 = vmatpush.bf16.msra.mxu0 %v1605
      %2759 = vmatpush.bf16.msra.mxu0 %v1601
      %2760 = vmatpush.bf16.msra.mxu0 %v1597
      %2761 = vmatpush.bf16.msra.mxu0 %v1593
      %2762 = vmatpush.bf16.msra.mxu0 %v1589
      %2763 = vmatmul.bf16.gmra.mxu0 %v563
      %v2764 = vpop.f32.mrf.mxu0
      %v2765 = vadd.f32 %v2716, %v2764
      %v2766 = vpop.f32.mrf.mxu0
      %v2767 = vadd.f32 %v2718, %v2766
      %2768 = vmatmul.bf16.gmra.mxu0 %v570
      %v2769 = vpop.f32.mrf.mxu0
      %v2770 = vadd.f32 %v2721, %v2769
      %v2771 = vpop.f32.mrf.mxu0
      %v2772 = vadd.f32 %v2723, %v2771
      %2773 = vmatmul.bf16.gmra.mxu0 %v577
      %v2774 = vpop.f32.mrf.mxu0
      %v2775 = vadd.f32 %v2726, %v2774
      %v2776 = vpop.f32.mrf.mxu0
      %v2777 = vadd.f32 %v2728, %v2776
      %2778 = vmatmul.bf16.gmra.mxu0 %v584
      %v2779 = vpop.f32.mrf.mxu0
      %v2780 = vadd.f32 %v2731, %v2779
      %v2781 = vpop.f32.mrf.mxu0
      %v2782 = vadd.f32 %v2733, %v2781
      %2783 = vmatmul.bf16.gmra.mxu0 %v591
      %v2784 = vpop.f32.mrf.mxu0
      %v2785 = vadd.f32 %v2736, %v2784
      %v2786 = vpop.f32.mrf.mxu0
      %v2787 = vadd.f32 %v2738, %v2786
      %2788 = vmatmul.bf16.gmra.mxu0 %v598
      %v2789 = vpop.f32.mrf.mxu0
      %v2790 = vadd.f32 %v2741, %v2789
      %v2791 = vpop.f32.mrf.mxu0
      %v2792 = vadd.f32 %v2743, %v2791
      %2793 = vmatmul.bf16.gmra.mxu0 %v605
      %v2794 = vpop.f32.mrf.mxu0
      %v2795 = vadd.f32 %v2746, %v2794
      %v2796 = vpop.f32.mrf.mxu0
      %v2797 = vadd.f32 %v2748, %v2796
      %2798 = vmatmul.bf16.gmra.mxu0 %v612
      %v2799 = vpop.f32.mrf.mxu0
      %v2800 = vadd.f32 %v2751, %v2799
      %v2801 = vpop.f32.mrf.mxu0
      %v2802 = vadd.f32 %v2753, %v2801
      %2803 = vdwg.mxu0
      %2804 = vmatpush.bf16.msra.mxu0 %v1649
      %2805 = vmatpush.bf16.msra.mxu0 %v1645
      %2806 = vmatpush.bf16.msra.mxu0 %v1641
      %2807 = vmatpush.bf16.msra.mxu0 %v1637
      %2808 = vmatpush.bf16.msra.mxu0 %v1633
      %2809 = vmatpush.bf16.msra.mxu0 %v1629
      %2810 = vmatpush.bf16.msra.mxu0 %v1625
      %2811 = vmatpush.bf16.msra.mxu0 %v1621
      %2812 = vmatmul.bf16.gmra.mxu0 %v564
      %v2813 = vpop.f32.mrf.mxu0
      %v2814 = vadd.f32 %v2765, %v2813
      %v2815 = vpop.f32.mrf.mxu0
      %v2816 = vadd.f32 %v2767, %v2815
      %2817 = vmatmul.bf16.gmra.mxu0 %v571
      %v2818 = vpop.f32.mrf.mxu0
      %v2819 = vadd.f32 %v2770, %v2818
      %v2820 = vpop.f32.mrf.mxu0
      %v2821 = vadd.f32 %v2772, %v2820
      %2822 = vmatmul.bf16.gmra.mxu0 %v578
      %v2823 = vpop.f32.mrf.mxu0
      %v2824 = vadd.f32 %v2775, %v2823
      %v2825 = vpop.f32.mrf.mxu0
      %v2826 = vadd.f32 %v2777, %v2825
      %2827 = vmatmul.bf16.gmra.mxu0 %v585
      %v2828 = vpop.f32.mrf.mxu0
      %v2829 = vadd.f32 %v2780, %v2828
      %v2830 = vpop.f32.mrf.mxu0
      %v2831 = vadd.f32 %v2782, %v2830
      %2832 = vmatmul.bf16.gmra.mxu0 %v592
      %v2833 = vpop.f32.mrf.mxu0
      %v2834 = vadd.f32 %v2785, %v2833
      %v2835 = vpop.f32.mrf.mxu0
      %v2836 = vadd.f32 %v2787, %v2835
      %2837 = vmatmul.bf16.gmra.mxu0 %v599
      %v2838 = vpop.f32.mrf.mxu0
      %v2839 = vadd.f32 %v2790, %v2838
      %v2840 = vpop.f32.mrf.mxu0
      %v2841 = vadd.f32 %v2792, %v2840
      %2842 = vmatmul.bf16.gmra.mxu0 %v606
      %v2843 = vpop.f32.mrf.mxu0
      %v2844 = vadd.f32 %v2795, %v2843
      %v2845 = vpop.f32.mrf.mxu0
      %v2846 = vadd.f32 %v2797, %v2845
      %2847 = vmatmul.bf16.gmra.mxu0 %v613
      %v2848 = vpop.f32.mrf.mxu0
      %v2849 = vadd.f32 %v2800, %v2848
      %v2850 = vpop.f32.mrf.mxu0
      %v2851 = vadd.f32 %v2802, %v2850
      %2852 = vdwg.mxu0
      %2853 = vmatpush.bf16.msra.mxu0 %v1681
      %2854 = vmatpush.bf16.msra.mxu0 %v1677
      %2855 = vmatpush.bf16.msra.mxu0 %v1673
      %2856 = vmatpush.bf16.msra.mxu0 %v1669
      %2857 = vmatpush.bf16.msra.mxu0 %v1665
      %2858 = vmatpush.bf16.msra.mxu0 %v1661
      %2859 = vmatpush.bf16.msra.mxu0 %v1657
      %2860 = vmatpush.bf16.msra.mxu0 %v1653
      %2861 = vmatmul.bf16.gmra.mxu0 %v565
      %v2862 = vpop.f32.mrf.mxu0
      %v2863 = vadd.f32 %v2814, %v2862
      %v2864 = vpop.f32.mrf.mxu0
      %v2865 = vadd.f32 %v2816, %v2864
      %2866 = vmatmul.bf16.gmra.mxu0 %v572
      %v2867 = vpop.f32.mrf.mxu0
      %v2868 = vadd.f32 %v2819, %v2867
      %v2869 = vpop.f32.mrf.mxu0
      %v2870 = vadd.f32 %v2821, %v2869
      %2871 = vmatmul.bf16.gmra.mxu0 %v579
      %v2872 = vpop.f32.mrf.mxu0
      %v2873 = vadd.f32 %v2824, %v2872
      %v2874 = vpop.f32.mrf.mxu0
      %v2875 = vadd.f32 %v2826, %v2874
      %2876 = vmatmul.bf16.gmra.mxu0 %v586
      %v2877 = vpop.f32.mrf.mxu0
      %v2878 = vadd.f32 %v2829, %v2877
      %v2879 = vpop.f32.mrf.mxu0
      %v2880 = vadd.f32 %v2831, %v2879
      %2881 = vmatmul.bf16.gmra.mxu0 %v593
      %v2882 = vpop.f32.mrf.mxu0
      %v2883 = vadd.f32 %v2834, %v2882
      %v2884 = vpop.f32.mrf.mxu0
      %v2885 = vadd.f32 %v2836, %v2884
      %2886 = vmatmul.bf16.gmra.mxu0 %v600
      %v2887 = vpop.f32.mrf.mxu0
      %v2888 = vadd.f32 %v2839, %v2887
      %v2889 = vpop.f32.mrf.mxu0
      %v2890 = vadd.f32 %v2841, %v2889
      %2891 = vmatmul.bf16.gmra.mxu0 %v607
      %v2892 = vpop.f32.mrf.mxu0
      %v2893 = vadd.f32 %v2844, %v2892
      %v2894 = vpop.f32.mrf.mxu0
      %v2895 = vadd.f32 %v2846, %v2894
      %2896 = vmatmul.bf16.gmra.mxu0 %v614
      %v2897 = vpop.f32.mrf.mxu0
      %v2898 = vadd.f32 %v2849, %v2897
      %v2899 = vpop.f32.mrf.mxu0
      %v2900 = vadd.f32 %v2851, %v2899
      %2901 = vdwg.mxu0
      %2902 = vmatpush.bf16.msra.mxu0 %v1713
      %2903 = vmatpush.bf16.msra.mxu0 %v1709
      %2904 = vmatpush.bf16.msra.mxu0 %v1705
      %2905 = vmatpush.bf16.msra.mxu0 %v1701
      %2906 = vmatpush.bf16.msra.mxu0 %v1697
      %2907 = vmatpush.bf16.msra.mxu0 %v1693
      %2908 = vmatpush.bf16.msra.mxu0 %v1689
      %2909 = vmatpush.bf16.msra.mxu0 %v1685
      %2910 = vmatmul.bf16.gmra.mxu0 %v566
      %v2911 = vpop.f32.mrf.mxu0
      %v2912 = vadd.f32 %v2863, %v2911
      %v2913 = vpop.f32.mrf.mxu0
      %v2914 = vadd.f32 %v2865, %v2913
      %2915 = vmatmul.bf16.gmra.mxu0 %v573
      %v2916 = vpop.f32.mrf.mxu0
      %v2917 = vadd.f32 %v2868, %v2916
      %v2918 = vpop.f32.mrf.mxu0
      %v2919 = vadd.f32 %v2870, %v2918
      %2920 = vmatmul.bf16.gmra.mxu0 %v580
      %v2921 = vpop.f32.mrf.mxu0
      %v2922 = vadd.f32 %v2873, %v2921
      %v2923 = vpop.f32.mrf.mxu0
      %v2924 = vadd.f32 %v2875, %v2923
      %2925 = vmatmul.bf16.gmra.mxu0 %v587
      %v2926 = vpop.f32.mrf.mxu0
      %v2927 = vadd.f32 %v2878, %v2926
      %v2928 = vpop.f32.mrf.mxu0
      %v2929 = vadd.f32 %v2880, %v2928
      %2930 = vmatmul.bf16.gmra.mxu0 %v594
      %v2931 = vpop.f32.mrf.mxu0
      %v2932 = vadd.f32 %v2883, %v2931
      %v2933 = vpop.f32.mrf.mxu0
      %v2934 = vadd.f32 %v2885, %v2933
      %2935 = vmatmul.bf16.gmra.mxu0 %v601
      %v2936 = vpop.f32.mrf.mxu0
      %v2937 = vadd.f32 %v2888, %v2936
      %v2938 = vpop.f32.mrf.mxu0
      %v2939 = vadd.f32 %v2890, %v2938
      %2940 = vmatmul.bf16.gmra.mxu0 %v608
      %v2941 = vpop.f32.mrf.mxu0
      %v2942 = vadd.f32 %v2893, %v2941
      %v2943 = vpop.f32.mrf.mxu0
      %v2944 = vadd.f32 %v2895, %v2943
      %2945 = vmatmul.bf16.gmra.mxu0 %v615
      %v2946 = vpop.f32.mrf.mxu0
      %v2947 = vadd.f32 %v2898, %v2946
      %v2948 = vpop.f32.mrf.mxu0
      %v2949 = vadd.f32 %v2900, %v2948
      %2950 = vdwg.mxu0
      %2951 = vmatpush.bf16.msra.mxu0 %v1745
      %2952 = vmatpush.bf16.msra.mxu0 %v1741
      %2953 = vmatpush.bf16.msra.mxu0 %v1737
      %2954 = vmatpush.bf16.msra.mxu0 %v1733
      %2955 = vmatpush.bf16.msra.mxu0 %v1729
      %2956 = vmatpush.bf16.msra.mxu0 %v1725
      %2957 = vmatpush.bf16.msra.mxu0 %v1721
      %2958 = vmatpush.bf16.msra.mxu0 %v1717
      %2959 = vmatmul.bf16.gmra.mxu0 %v567
      %v2960 = vpop.f32.mrf.mxu0
      %v2961 = vadd.f32 %v2912, %v2960
      %v2962 = vpop.f32.mrf.mxu0
      %v2963 = vadd.f32 %v2914, %v2962
      %2964 = vmatmul.bf16.gmra.mxu0 %v574
      %v2965 = vpop.f32.mrf.mxu0
      %v2966 = vadd.f32 %v2917, %v2965
      %v2967 = vpop.f32.mrf.mxu0
      %v2968 = vadd.f32 %v2919, %v2967
      %2969 = vmatmul.bf16.gmra.mxu0 %v581
      %v2970 = vpop.f32.mrf.mxu0
      %v2971 = vadd.f32 %v2922, %v2970
      %v2972 = vpop.f32.mrf.mxu0
      %v2973 = vadd.f32 %v2924, %v2972
      %2974 = vmatmul.bf16.gmra.mxu0 %v588
      %v2975 = vpop.f32.mrf.mxu0
      %v2976 = vadd.f32 %v2927, %v2975
      %v2977 = vpop.f32.mrf.mxu0
      %v2978 = vadd.f32 %v2929, %v2977
      %2979 = vmatmul.bf16.gmra.mxu0 %v595
      %v2980 = vpop.f32.mrf.mxu0
      %v2981 = vadd.f32 %v2932, %v2980
      %v2982 = vpop.f32.mrf.mxu0
      %v2983 = vadd.f32 %v2934, %v2982
      %2984 = vmatmul.bf16.gmra.mxu0 %v602
      %v2985 = vpop.f32.mrf.mxu0
      %v2986 = vadd.f32 %v2937, %v2985
      %v2987 = vpop.f32.mrf.mxu0
      %v2988 = vadd.f32 %v2939, %v2987
      %2989 = vmatmul.bf16.gmra.mxu0 %v609
      %v2990 = vpop.f32.mrf.mxu0
      %v2991 = vadd.f32 %v2942, %v2990
      %v2992 = vpop.f32.mrf.mxu0
      %v2993 = vadd.f32 %v2944, %v2992
      %2994 = vmatmul.bf16.gmra.mxu0 %v616
      %v2995 = vpop.f32.mrf.mxu0
      %v2996 = vadd.f32 %v2947, %v2995
      %v2997 = vpop.f32.mrf.mxu0
      %v2998 = vadd.f32 %v2949, %v2997
      %2999 = vdwg.mxu0
      %3000 = vmatpush.bf16.msra.mxu0 %v1554
      %3001 = vmatpush.bf16.msra.mxu0 %v1550
      %3002 = vmatpush.bf16.msra.mxu0 %v1546
      %3003 = vmatpush.bf16.msra.mxu0 %v1542
      %3004 = vmatpush.bf16.msra.mxu0 %v1538
      %3005 = vmatpush.bf16.msra.mxu0 %v1534
      %3006 = vmatpush.bf16.msra.mxu0 %v1530
      %3007 = vmatpush.bf16.msra.mxu0 %v1526
      %3008 = vmatmul.bf16.gmra.mxu0 %v561
      %v3009 = vpop.f32.mrf.mxu0
      %v3010 = vadd.f32 %v846, %v3009
      %v3011 = vpop.f32.mrf.mxu0
      %v3012 = vadd.f32 %v846, %v3011
      %3013 = vmatmul.bf16.gmra.mxu0 %v568
      %v3014 = vpop.f32.mrf.mxu0
      %v3015 = vadd.f32 %v846, %v3014
      %v3016 = vpop.f32.mrf.mxu0
      %v3017 = vadd.f32 %v846, %v3016
      %3018 = vmatmul.bf16.gmra.mxu0 %v575
      %v3019 = vpop.f32.mrf.mxu0
      %v3020 = vadd.f32 %v846, %v3019
      %v3021 = vpop.f32.mrf.mxu0
      %v3022 = vadd.f32 %v846, %v3021
      %3023 = vmatmul.bf16.gmra.mxu0 %v582
      %v3024 = vpop.f32.mrf.mxu0
      %v3025 = vadd.f32 %v846, %v3024
      %v3026 = vpop.f32.mrf.mxu0
      %v3027 = vadd.f32 %v846, %v3026
      %3028 = vmatmul.bf16.gmra.mxu0 %v589
      %v3029 = vpop.f32.mrf.mxu0
      %v3030 = vadd.f32 %v846, %v3029
      %v3031 = vpop.f32.mrf.mxu0
      %v3032 = vadd.f32 %v846, %v3031
      %3033 = vmatmul.bf16.gmra.mxu0 %v596
      %v3034 = vpop.f32.mrf.mxu0
      %v3035 = vadd.f32 %v846, %v3034
      %v3036 = vpop.f32.mrf.mxu0
      %v3037 = vadd.f32 %v846, %v3036
      %3038 = vmatmul.bf16.gmra.mxu0 %v603
      %v3039 = vpop.f32.mrf.mxu0
      %v3040 = vadd.f32 %v846, %v3039
      %v3041 = vpop.f32.mrf.mxu0
      %v3042 = vadd.f32 %v846, %v3041
      %3043 = vmatmul.bf16.gmra.mxu0 %v610
      %v3044 = vpop.f32.mrf.mxu0
      %v3045 = vadd.f32 %v846, %v3044
      %v3046 = vpop.f32.mrf.mxu0
      %v3047 = vadd.f32 %v846, %v3046
      %3048 = vdwg.mxu0
      %3049 = vmatpush.bf16.msra.mxu0 %v1586
      %3050 = vmatpush.bf16.msra.mxu0 %v1582
      %3051 = vmatpush.bf16.msra.mxu0 %v1578
      %3052 = vmatpush.bf16.msra.mxu0 %v1574
      %3053 = vmatpush.bf16.msra.mxu0 %v1570
      %3054 = vmatpush.bf16.msra.mxu0 %v1566
      %3055 = vmatpush.bf16.msra.mxu0 %v1562
      %3056 = vmatpush.bf16.msra.mxu0 %v1558
      %3057 = vmatmul.bf16.gmra.mxu0 %v562
      %v3058 = vpop.f32.mrf.mxu0
      %v3059 = vadd.f32 %v3010, %v3058
      %v3060 = vpop.f32.mrf.mxu0
      %v3061 = vadd.f32 %v3012, %v3060
      %3062 = vmatmul.bf16.gmra.mxu0 %v569
      %v3063 = vpop.f32.mrf.mxu0
      %v3064 = vadd.f32 %v3015, %v3063
      %v3065 = vpop.f32.mrf.mxu0
      %v3066 = vadd.f32 %v3017, %v3065
      %3067 = vmatmul.bf16.gmra.mxu0 %v576
      %v3068 = vpop.f32.mrf.mxu0
      %v3069 = vadd.f32 %v3020, %v3068
      %v3070 = vpop.f32.mrf.mxu0
      %v3071 = vadd.f32 %v3022, %v3070
      %3072 = vmatmul.bf16.gmra.mxu0 %v583
      %v3073 = vpop.f32.mrf.mxu0
      %v3074 = vadd.f32 %v3025, %v3073
      %v3075 = vpop.f32.mrf.mxu0
      %v3076 = vadd.f32 %v3027, %v3075
      %3077 = vmatmul.bf16.gmra.mxu0 %v590
      %v3078 = vpop.f32.mrf.mxu0
      %v3079 = vadd.f32 %v3030, %v3078
      %v3080 = vpop.f32.mrf.mxu0
      %v3081 = vadd.f32 %v3032, %v3080
      %3082 = vmatmul.bf16.gmra.mxu0 %v597
      %v3083 = vpop.f32.mrf.mxu0
      %v3084 = vadd.f32 %v3035, %v3083
      %v3085 = vpop.f32.mrf.mxu0
      %v3086 = vadd.f32 %v3037, %v3085
      %3087 = vmatmul.bf16.gmra.mxu0 %v604
      %v3088 = vpop.f32.mrf.mxu0
      %v3089 = vadd.f32 %v3040, %v3088
      %v3090 = vpop.f32.mrf.mxu0
      %v3091 = vadd.f32 %v3042, %v3090
      %3092 = vmatmul.bf16.gmra.mxu0 %v611
      %v3093 = vpop.f32.mrf.mxu0
      %v3094 = vadd.f32 %v3045, %v3093
      %v3095 = vpop.f32.mrf.mxu0
      %v3096 = vadd.f32 %v3047, %v3095
      %3097 = vdwg.mxu0
      %3098 = vmatpush.bf16.msra.mxu0 %v1618
      %3099 = vmatpush.bf16.msra.mxu0 %v1614
      %3100 = vmatpush.bf16.msra.mxu0 %v1610
      %3101 = vmatpush.bf16.msra.mxu0 %v1606
      %3102 = vmatpush.bf16.msra.mxu0 %v1602
      %3103 = vmatpush.bf16.msra.mxu0 %v1598
      %3104 = vmatpush.bf16.msra.mxu0 %v1594
      %3105 = vmatpush.bf16.msra.mxu0 %v1590
      %3106 = vmatmul.bf16.gmra.mxu0 %v563
      %v3107 = vpop.f32.mrf.mxu0
      %v3108 = vadd.f32 %v3059, %v3107
      %v3109 = vpop.f32.mrf.mxu0
      %v3110 = vadd.f32 %v3061, %v3109
      %3111 = vmatmul.bf16.gmra.mxu0 %v570
      %v3112 = vpop.f32.mrf.mxu0
      %v3113 = vadd.f32 %v3064, %v3112
      %v3114 = vpop.f32.mrf.mxu0
      %v3115 = vadd.f32 %v3066, %v3114
      %3116 = vmatmul.bf16.gmra.mxu0 %v577
      %v3117 = vpop.f32.mrf.mxu0
      %v3118 = vadd.f32 %v3069, %v3117
      %v3119 = vpop.f32.mrf.mxu0
      %v3120 = vadd.f32 %v3071, %v3119
      %3121 = vmatmul.bf16.gmra.mxu0 %v584
      %v3122 = vpop.f32.mrf.mxu0
      %v3123 = vadd.f32 %v3074, %v3122
      %v3124 = vpop.f32.mrf.mxu0
      %v3125 = vadd.f32 %v3076, %v3124
      %3126 = vmatmul.bf16.gmra.mxu0 %v591
      %v3127 = vpop.f32.mrf.mxu0
      %v3128 = vadd.f32 %v3079, %v3127
      %v3129 = vpop.f32.mrf.mxu0
      %v3130 = vadd.f32 %v3081, %v3129
      %3131 = vmatmul.bf16.gmra.mxu0 %v598
      %v3132 = vpop.f32.mrf.mxu0
      %v3133 = vadd.f32 %v3084, %v3132
      %v3134 = vpop.f32.mrf.mxu0
      %v3135 = vadd.f32 %v3086, %v3134
      %3136 = vmatmul.bf16.gmra.mxu0 %v605
      %v3137 = vpop.f32.mrf.mxu0
      %v3138 = vadd.f32 %v3089, %v3137
      %v3139 = vpop.f32.mrf.mxu0
      %v3140 = vadd.f32 %v3091, %v3139
      %3141 = vmatmul.bf16.gmra.mxu0 %v612
      %v3142 = vpop.f32.mrf.mxu0
      %v3143 = vadd.f32 %v3094, %v3142
      %v3144 = vpop.f32.mrf.mxu0
      %v3145 = vadd.f32 %v3096, %v3144
      %3146 = vdwg.mxu0
      %3147 = vmatpush.bf16.msra.mxu0 %v1650
      %3148 = vmatpush.bf16.msra.mxu0 %v1646
      %3149 = vmatpush.bf16.msra.mxu0 %v1642
      %3150 = vmatpush.bf16.msra.mxu0 %v1638
      %3151 = vmatpush.bf16.msra.mxu0 %v1634
      %3152 = vmatpush.bf16.msra.mxu0 %v1630
      %3153 = vmatpush.bf16.msra.mxu0 %v1626
      %3154 = vmatpush.bf16.msra.mxu0 %v1622
      %3155 = vmatmul.bf16.gmra.mxu0 %v564
      %v3156 = vpop.f32.mrf.mxu0
      %v3157 = vadd.f32 %v3108, %v3156
      %v3158 = vpop.f32.mrf.mxu0
      %v3159 = vadd.f32 %v3110, %v3158
      %3160 = vmatmul.bf16.gmra.mxu0 %v571
      %v3161 = vpop.f32.mrf.mxu0
      %v3162 = vadd.f32 %v3113, %v3161
      %v3163 = vpop.f32.mrf.mxu0
      %v3164 = vadd.f32 %v3115, %v3163
      %3165 = vmatmul.bf16.gmra.mxu0 %v578
      %v3166 = vpop.f32.mrf.mxu0
      %v3167 = vadd.f32 %v3118, %v3166
      %v3168 = vpop.f32.mrf.mxu0
      %v3169 = vadd.f32 %v3120, %v3168
      %3170 = vmatmul.bf16.gmra.mxu0 %v585
      %v3171 = vpop.f32.mrf.mxu0
      %v3172 = vadd.f32 %v3123, %v3171
      %v3173 = vpop.f32.mrf.mxu0
      %v3174 = vadd.f32 %v3125, %v3173
      %3175 = vmatmul.bf16.gmra.mxu0 %v592
      %v3176 = vpop.f32.mrf.mxu0
      %v3177 = vadd.f32 %v3128, %v3176
      %v3178 = vpop.f32.mrf.mxu0
      %v3179 = vadd.f32 %v3130, %v3178
      %3180 = vmatmul.bf16.gmra.mxu0 %v599
      %v3181 = vpop.f32.mrf.mxu0
      %v3182 = vadd.f32 %v3133, %v3181
      %v3183 = vpop.f32.mrf.mxu0
      %v3184 = vadd.f32 %v3135, %v3183
      %3185 = vmatmul.bf16.gmra.mxu0 %v606
      %v3186 = vpop.f32.mrf.mxu0
      %v3187 = vadd.f32 %v3138, %v3186
      %v3188 = vpop.f32.mrf.mxu0
      %v3189 = vadd.f32 %v3140, %v3188
      %3190 = vmatmul.bf16.gmra.mxu0 %v613
      %v3191 = vpop.f32.mrf.mxu0
      %v3192 = vadd.f32 %v3143, %v3191
      %v3193 = vpop.f32.mrf.mxu0
      %v3194 = vadd.f32 %v3145, %v3193
      %3195 = vdwg.mxu0
      %3196 = vmatpush.bf16.msra.mxu0 %v1682
      %3197 = vmatpush.bf16.msra.mxu0 %v1678
      %3198 = vmatpush.bf16.msra.mxu0 %v1674
      %3199 = vmatpush.bf16.msra.mxu0 %v1670
      %3200 = vmatpush.bf16.msra.mxu0 %v1666
      %3201 = vmatpush.bf16.msra.mxu0 %v1662
      %3202 = vmatpush.bf16.msra.mxu0 %v1658
      %3203 = vmatpush.bf16.msra.mxu0 %v1654
      %3204 = vmatmul.bf16.gmra.mxu0 %v565
      %v3205 = vpop.f32.mrf.mxu0
      %v3206 = vadd.f32 %v3157, %v3205
      %v3207 = vpop.f32.mrf.mxu0
      %v3208 = vadd.f32 %v3159, %v3207
      %3209 = vmatmul.bf16.gmra.mxu0 %v572
      %v3210 = vpop.f32.mrf.mxu0
      %v3211 = vadd.f32 %v3162, %v3210
      %v3212 = vpop.f32.mrf.mxu0
      %v3213 = vadd.f32 %v3164, %v3212
      %3214 = vmatmul.bf16.gmra.mxu0 %v579
      %v3215 = vpop.f32.mrf.mxu0
      %v3216 = vadd.f32 %v3167, %v3215
      %v3217 = vpop.f32.mrf.mxu0
      %v3218 = vadd.f32 %v3169, %v3217
      %3219 = vmatmul.bf16.gmra.mxu0 %v586
      %v3220 = vpop.f32.mrf.mxu0
      %v3221 = vadd.f32 %v3172, %v3220
      %v3222 = vpop.f32.mrf.mxu0
      %v3223 = vadd.f32 %v3174, %v3222
      %3224 = vmatmul.bf16.gmra.mxu0 %v593
      %v3225 = vpop.f32.mrf.mxu0
      %v3226 = vadd.f32 %v3177, %v3225
      %v3227 = vpop.f32.mrf.mxu0
      %v3228 = vadd.f32 %v3179, %v3227
      %3229 = vmatmul.bf16.gmra.mxu0 %v600
      %v3230 = vpop.f32.mrf.mxu0
      %v3231 = vadd.f32 %v3182, %v3230
      %v3232 = vpop.f32.mrf.mxu0
      %v3233 = vadd.f32 %v3184, %v3232
      %3234 = vmatmul.bf16.gmra.mxu0 %v607
      %v3235 = vpop.f32.mrf.mxu0
      %v3236 = vadd.f32 %v3187, %v3235
      %v3237 = vpop.f32.mrf.mxu0
      %v3238 = vadd.f32 %v3189, %v3237
      %3239 = vmatmul.bf16.gmra.mxu0 %v614
      %v3240 = vpop.f32.mrf.mxu0
      %v3241 = vadd.f32 %v3192, %v3240
      %v3242 = vpop.f32.mrf.mxu0
      %v3243 = vadd.f32 %v3194, %v3242
      %3244 = vdwg.mxu0
      %3245 = vmatpush.bf16.msra.mxu0 %v1714
      %3246 = vmatpush.bf16.msra.mxu0 %v1710
      %3247 = vmatpush.bf16.msra.mxu0 %v1706
      %3248 = vmatpush.bf16.msra.mxu0 %v1702
      %3249 = vmatpush.bf16.msra.mxu0 %v1698
      %3250 = vmatpush.bf16.msra.mxu0 %v1694
      %3251 = vmatpush.bf16.msra.mxu0 %v1690
      %3252 = vmatpush.bf16.msra.mxu0 %v1686
      %3253 = vmatmul.bf16.gmra.mxu0 %v566
      %v3254 = vpop.f32.mrf.mxu0
      %v3255 = vadd.f32 %v3206, %v3254
      %v3256 = vpop.f32.mrf.mxu0
      %v3257 = vadd.f32 %v3208, %v3256
      %3258 = vmatmul.bf16.gmra.mxu0 %v573
      %v3259 = vpop.f32.mrf.mxu0
      %v3260 = vadd.f32 %v3211, %v3259
      %v3261 = vpop.f32.mrf.mxu0
      %v3262 = vadd.f32 %v3213, %v3261
      %3263 = vmatmul.bf16.gmra.mxu0 %v580
      %v3264 = vpop.f32.mrf.mxu0
      %v3265 = vadd.f32 %v3216, %v3264
      %v3266 = vpop.f32.mrf.mxu0
      %v3267 = vadd.f32 %v3218, %v3266
      %3268 = vmatmul.bf16.gmra.mxu0 %v587
      %v3269 = vpop.f32.mrf.mxu0
      %v3270 = vadd.f32 %v3221, %v3269
      %v3271 = vpop.f32.mrf.mxu0
      %v3272 = vadd.f32 %v3223, %v3271
      %3273 = vmatmul.bf16.gmra.mxu0 %v594
      %v3274 = vpop.f32.mrf.mxu0
      %v3275 = vadd.f32 %v3226, %v3274
      %v3276 = vpop.f32.mrf.mxu0
      %v3277 = vadd.f32 %v3228, %v3276
      %3278 = vmatmul.bf16.gmra.mxu0 %v601
      %v3279 = vpop.f32.mrf.mxu0
      %v3280 = vadd.f32 %v3231, %v3279
      %v3281 = vpop.f32.mrf.mxu0
      %v3282 = vadd.f32 %v3233, %v3281
      %3283 = vmatmul.bf16.gmra.mxu0 %v608
      %v3284 = vpop.f32.mrf.mxu0
      %v3285 = vadd.f32 %v3236, %v3284
      %v3286 = vpop.f32.mrf.mxu0
      %v3287 = vadd.f32 %v3238, %v3286
      %3288 = vmatmul.bf16.gmra.mxu0 %v615
      %v3289 = vpop.f32.mrf.mxu0
      %v3290 = vadd.f32 %v3241, %v3289
      %v3291 = vpop.f32.mrf.mxu0
      %v3292 = vadd.f32 %v3243, %v3291
      %3293 = vdwg.mxu0
      %3294 = vmatpush.bf16.msra.mxu0 %v1746
      %3295 = vmatpush.bf16.msra.mxu0 %v1742
      %3296 = vmatpush.bf16.msra.mxu0 %v1738
      %3297 = vmatpush.bf16.msra.mxu0 %v1734
      %3298 = vmatpush.bf16.msra.mxu0 %v1730
      %3299 = vmatpush.bf16.msra.mxu0 %v1726
      %3300 = vmatpush.bf16.msra.mxu0 %v1722
      %3301 = vmatpush.bf16.msra.mxu0 %v1718
      %3302 = vmatmul.bf16.gmra.mxu0 %v567
      %v3303 = vpop.f32.mrf.mxu0
      %v3304 = vadd.f32 %v3255, %v3303
      %v3305 = vpop.f32.mrf.mxu0
      %v3306 = vadd.f32 %v3257, %v3305
      %3307 = vmatmul.bf16.gmra.mxu0 %v574
      %v3308 = vpop.f32.mrf.mxu0
      %v3309 = vadd.f32 %v3260, %v3308
      %v3310 = vpop.f32.mrf.mxu0
      %v3311 = vadd.f32 %v3262, %v3310
      %3312 = vmatmul.bf16.gmra.mxu0 %v581
      %v3313 = vpop.f32.mrf.mxu0
      %v3314 = vadd.f32 %v3265, %v3313
      %v3315 = vpop.f32.mrf.mxu0
      %v3316 = vadd.f32 %v3267, %v3315
      %3317 = vmatmul.bf16.gmra.mxu0 %v588
      %v3318 = vpop.f32.mrf.mxu0
      %v3319 = vadd.f32 %v3270, %v3318
      %v3320 = vpop.f32.mrf.mxu0
      %v3321 = vadd.f32 %v3272, %v3320
      %3322 = vmatmul.bf16.gmra.mxu0 %v595
      %v3323 = vpop.f32.mrf.mxu0
      %v3324 = vadd.f32 %v3275, %v3323
      %v3325 = vpop.f32.mrf.mxu0
      %v3326 = vadd.f32 %v3277, %v3325
      %3327 = vmatmul.bf16.gmra.mxu0 %v602
      %v3328 = vpop.f32.mrf.mxu0
      %v3329 = vadd.f32 %v3280, %v3328
      %v3330 = vpop.f32.mrf.mxu0
      %v3331 = vadd.f32 %v3282, %v3330
      %3332 = vmatmul.bf16.gmra.mxu0 %v609
      %v3333 = vpop.f32.mrf.mxu0
      %v3334 = vadd.f32 %v3285, %v3333
      %v3335 = vpop.f32.mrf.mxu0
      %v3336 = vadd.f32 %v3287, %v3335
      %3337 = vmatmul.bf16.gmra.mxu0 %v616
      %v3338 = vpop.f32.mrf.mxu0
      %v3339 = vadd.f32 %v3290, %v3338
      %v3340 = vpop.f32.mrf.mxu0
      %v3341 = vadd.f32 %v3292, %v3340
      %3342 = vdwg.mxu0
      %v3343 = vmax.f32 %v2275, 0.0
      %v3344 = vmax.f32 %v2618, 0.0
      %v3345 = vmax.f32 %v2961, 0.0
      %v3346 = vmax.f32 %v3304, 0.0
      %v3347 = vmax.f32 %v2277, 0.0
      %v3348 = vmax.f32 %v2620, 0.0
      %v3349 = vmax.f32 %v2963, 0.0
      %v3350 = vmax.f32 %v3306, 0.0
      %v3351 = vmax.f32 %v2280, 0.0
      %v3352 = vmax.f32 %v2623, 0.0
      %v3353 = vmax.f32 %v2966, 0.0
      %v3354 = vmax.f32 %v3309, 0.0
      %v3355 = vmax.f32 %v2282, 0.0
      %v3356 = vmax.f32 %v2625, 0.0
      %v3357 = vmax.f32 %v2968, 0.0
      %v3358 = vmax.f32 %v3311, 0.0
      %v3359 = vmax.f32 %v2285, 0.0
      %v3360 = vmax.f32 %v2628, 0.0
      %v3361 = vmax.f32 %v2971, 0.0
      %v3362 = vmax.f32 %v3314, 0.0
      %v3363 = vmax.f32 %v2287, 0.0
      %v3364 = vmax.f32 %v2630, 0.0
      %v3365 = vmax.f32 %v2973, 0.0
      %v3366 = vmax.f32 %v3316, 0.0
      %v3367 = vmax.f32 %v2290, 0.0
      %v3368 = vmax.f32 %v2633, 0.0
      %v3369 = vmax.f32 %v2976, 0.0
      %v3370 = vmax.f32 %v3319, 0.0
      %v3371 = vmax.f32 %v2292, 0.0
      %v3372 = vmax.f32 %v2635, 0.0
      %v3373 = vmax.f32 %v2978, 0.0
      %v3374 = vmax.f32 %v3321, 0.0
      %v3375 = vmax.f32 %v2295, 0.0
      %v3376 = vmax.f32 %v2638, 0.0
      %v3377 = vmax.f32 %v2981, 0.0
      %v3378 = vmax.f32 %v3324, 0.0
      %v3379 = vmax.f32 %v2297, 0.0
      %v3380 = vmax.f32 %v2640, 0.0
      %v3381 = vmax.f32 %v2983, 0.0
      %v3382 = vmax.f32 %v3326, 0.0
      %v3383 = vmax.f32 %v2300, 0.0
      %v3384 = vmax.f32 %v2643, 0.0
      %v3385 = vmax.f32 %v2986, 0.0
      %v3386 = vmax.f32 %v3329, 0.0
      %v3387 = vmax.f32 %v2302, 0.0
      %v3388 = vmax.f32 %v2645, 0.0
      %v3389 = vmax.f32 %v2988, 0.0
      %v3390 = vmax.f32 %v3331, 0.0
      %v3391 = vmax.f32 %v2305, 0.0
      %v3392 = vmax.f32 %v2648, 0.0
      %v3393 = vmax.f32 %v2991, 0.0
      %v3394 = vmax.f32 %v3334, 0.0
      %v3395 = vmax.f32 %v2307, 0.0
      %v3396 = vmax.f32 %v2650, 0.0
      %v3397 = vmax.f32 %v2993, 0.0
      %v3398 = vmax.f32 %v3336, 0.0
      %v3399 = vmax.f32 %v2310, 0.0
      %v3400 = vmax.f32 %v2653, 0.0
      %v3401 = vmax.f32 %v2996, 0.0
      %v3402 = vmax.f32 %v3339, 0.0
      %v3403 = vmax.f32 %v2312, 0.0
      %v3404 = vmax.f32 %v2655, 0.0
      %v3405 = vmax.f32 %v2998, 0.0
      %v3406 = vmax.f32 %v3341, 0.0
      %v3407 = vpack.c.bf16 %v3347, %v3343
      %v3408 = vpack.c.bf16 %v3348, %v3344
      %v3409 = vpack.c.bf16 %v3349, %v3345
      %v3410 = vpack.c.bf16 %v3350, %v3346
      %v3411 = vpack.c.bf16 %v3355, %v3351
      %v3412 = vpack.c.bf16 %v3356, %v3352
      %v3413 = vpack.c.bf16 %v3357, %v3353
      %v3414 = vpack.c.bf16 %v3358, %v3354
      %v3415 = vpack.c.bf16 %v3363, %v3359
      %v3416 = vpack.c.bf16 %v3364, %v3360
      %v3417 = vpack.c.bf16 %v3365, %v3361
      %v3418 = vpack.c.bf16 %v3366, %v3362
      %v3419 = vpack.c.bf16 %v3371, %v3367
      %v3420 = vpack.c.bf16 %v3372, %v3368
      %v3421 = vpack.c.bf16 %v3373, %v3369
      %v3422 = vpack.c.bf16 %v3374, %v3370
      %v3423 = vpack.c.bf16 %v3379, %v3375
      %v3424 = vpack.c.bf16 %v3380, %v3376
      %v3425 = vpack.c.bf16 %v3381, %v3377
      %v3426 = vpack.c.bf16 %v3382, %v3378
      %v3427 = vpack.c.bf16 %v3387, %v3383
      %v3428 = vpack.c.bf16 %v3388, %v3384
      %v3429 = vpack.c.bf16 %v3389, %v3385
      %v3430 = vpack.c.bf16 %v3390, %v3386
      %v3431 = vpack.c.bf16 %v3395, %v3391
      %v3432 = vpack.c.bf16 %v3396, %v3392
      %v3433 = vpack.c.bf16 %v3397, %v3393
      %v3434 = vpack.c.bf16 %v3398, %v3394
      %v3435 = vpack.c.bf16 %v3403, %v3399
      %v3436 = vpack.c.bf16 %v3404, %v3400
      %v3437 = vpack.c.bf16 %v3405, %v3401
      %v3438 = vpack.c.bf16 %v3406, %v3402
      %v3439 = vld [vmem:[%s4] sm:$0xff]
      %v3440 = vld [vmem:[%s4 + $0x8] sm:$0xff]
      %v3441 = vld [vmem:[%s4 + $0x10] sm:$0xff]
      %v3442 = vld [vmem:[%s4 + $0x18] sm:$0xff]
      %v3443 = vld [vmem:[%s4 + $0x20] sm:$0xff]
      %v3444 = vld [vmem:[%s4 + $0x28] sm:$0xff]
      %v3445 = vld [vmem:[%s4 + $0x30] sm:$0xff]
      %v3446 = vld [vmem:[%s4 + $0x38] sm:$0xff]
      %v3447 = vld [vmem:[%s4 + $0x40] sm:$0xff]
      %v3448 = vld [vmem:[%s4 + $0x48] sm:$0xff]
      %v3449 = vld [vmem:[%s4 + $0x50] sm:$0xff]
      %v3450 = vld [vmem:[%s4 + $0x58] sm:$0xff]
      %v3451 = vld [vmem:[%s4 + $0x60] sm:$0xff]
      %v3452 = vld [vmem:[%s4 + $0x68] sm:$0xff]
      %v3453 = vld [vmem:[%s4 + $0x70] sm:$0xff]
      %v3454 = vld [vmem:[%s4 + $0x78] sm:$0xff]
      %v3455 = vld [vmem:[%s4 + $0x80] sm:$0xff]
      %v3456 = vld [vmem:[%s4 + $0x88] sm:$0xff]
      %v3457 = vld [vmem:[%s4 + $0x90] sm:$0xff]
      %v3458 = vld [vmem:[%s4 + $0x98] sm:$0xff]
      %v3459 = vld [vmem:[%s4 + $0xa0] sm:$0xff]
      %v3460 = vld [vmem:[%s4 + $0xa8] sm:$0xff]
      %v3461 = vld [vmem:[%s4 + $0xb0] sm:$0xff]
      %v3462 = vld [vmem:[%s4 + $0xb8] sm:$0xff]
      %v3463 = vld [vmem:[%s4 + $0xc0] sm:$0xff]
      %v3464 = vld [vmem:[%s4 + $0xc8] sm:$0xff]
      %v3465 = vld [vmem:[%s4 + $0xd0] sm:$0xff]
      %v3466 = vld [vmem:[%s4 + $0xd8] sm:$0xff]
      %v3467 = vld [vmem:[%s4 + $0xe0] sm:$0xff]
      %v3468 = vld [vmem:[%s4 + $0xe8] sm:$0xff]
      %v3469 = vld [vmem:[%s4 + $0xf0] sm:$0xff]
      %v3470 = vld [vmem:[%s4 + $0xf8] sm:$0xff]
      %v3471 = vld [vmem:[%s4 + $0x100] sm:$0xff]
      %v3472 = vld [vmem:[%s4 + $0x108] sm:$0xff]
      %v3473 = vld [vmem:[%s4 + $0x110] sm:$0xff]
      %v3474 = vld [vmem:[%s4 + $0x118] sm:$0xff]
      %v3475 = vld [vmem:[%s4 + $0x120] sm:$0xff]
      %v3476 = vld [vmem:[%s4 + $0x128] sm:$0xff]
      %v3477 = vld [vmem:[%s4 + $0x130] sm:$0xff]
      %v3478 = vld [vmem:[%s4 + $0x138] sm:$0xff]
      %v3479 = vld [vmem:[%s4 + $0x140] sm:$0xff]
      %v3480 = vld [vmem:[%s4 + $0x148] sm:$0xff]
      %v3481 = vld [vmem:[%s4 + $0x150] sm:$0xff]
      %v3482 = vld [vmem:[%s4 + $0x158] sm:$0xff]
      %v3483 = vld [vmem:[%s4 + $0x160] sm:$0xff]
      %v3484 = vld [vmem:[%s4 + $0x168] sm:$0xff]
      %v3485 = vld [vmem:[%s4 + $0x170] sm:$0xff]
      %v3486 = vld [vmem:[%s4 + $0x178] sm:$0xff]
      %v3487 = vld [vmem:[%s4 + $0x180] sm:$0xff]
      %v3488 = vld [vmem:[%s4 + $0x188] sm:$0xff]
      %v3489 = vld [vmem:[%s4 + $0x190] sm:$0xff]
      %v3490 = vld [vmem:[%s4 + $0x198] sm:$0xff]
      %v3491 = vld [vmem:[%s4 + $0x1a0] sm:$0xff]
      %v3492 = vld [vmem:[%s4 + $0x1a8] sm:$0xff]
      %v3493 = vld [vmem:[%s4 + $0x1b0] sm:$0xff]
      %v3494 = vld [vmem:[%s4 + $0x1b8] sm:$0xff]
      %v3495 = vld [vmem:[%s4 + $0x1c0] sm:$0xff]
      %v3496 = vld [vmem:[%s4 + $0x1c8] sm:$0xff]
      %v3497 = vld [vmem:[%s4 + $0x1d0] sm:$0xff]
      %v3498 = vld [vmem:[%s4 + $0x1d8] sm:$0xff]
      %v3499 = vld [vmem:[%s4 + $0x1e0] sm:$0xff]
      %v3500 = vld [vmem:[%s4 + $0x1e8] sm:$0xff]
      %v3501 = vld [vmem:[%s4 + $0x1f0] sm:$0xff]
      %v3502 = vld [vmem:[%s4 + $0x1f8] sm:$0xff]
      %v3503 = vld [vmem:[%s5] sm:$0x3]
      %v3505 = vperm.slane %v3503, 0
      %v3506 = vperm.slane %v3503, 1
      %v3573 = vunpack.c.l.b16 %v3439
      %v3574 = vunpack.c.h.b16 %v3439
      %v3575 = vunpack.c.l.b16 %v3440
      %v3576 = vunpack.c.h.b16 %v3440
      %v3577 = vunpack.c.l.b16 %v3441
      %v3578 = vunpack.c.h.b16 %v3441
      %v3579 = vunpack.c.l.b16 %v3442
      %v3580 = vunpack.c.h.b16 %v3442
      %v3581 = vunpack.c.l.b16 %v3443
      %v3582 = vunpack.c.h.b16 %v3443
      %v3583 = vunpack.c.l.b16 %v3444
      %v3584 = vunpack.c.h.b16 %v3444
      %v3585 = vunpack.c.l.b16 %v3445
      %v3586 = vunpack.c.h.b16 %v3445
      %v3587 = vunpack.c.l.b16 %v3446
      %v3588 = vunpack.c.h.b16 %v3446
      %v3589 = vunpack.c.l.b16 %v3447
      %v3590 = vunpack.c.h.b16 %v3447
      %v3591 = vunpack.c.l.b16 %v3448
      %v3592 = vunpack.c.h.b16 %v3448
      %v3593 = vunpack.c.l.b16 %v3449
      %v3594 = vunpack.c.h.b16 %v3449
      %v3595 = vunpack.c.l.b16 %v3450
      %v3596 = vunpack.c.h.b16 %v3450
      %v3597 = vunpack.c.l.b16 %v3451
      %v3598 = vunpack.c.h.b16 %v3451
      %v3599 = vunpack.c.l.b16 %v3452
      %v3600 = vunpack.c.h.b16 %v3452
      %v3601 = vunpack.c.l.b16 %v3453
      %v3602 = vunpack.c.h.b16 %v3453
      %v3603 = vunpack.c.l.b16 %v3454
      %v3604 = vunpack.c.h.b16 %v3454
      %v3605 = vunpack.c.l.b16 %v3455
      %v3606 = vunpack.c.h.b16 %v3455
      %v3607 = vunpack.c.l.b16 %v3456
      %v3608 = vunpack.c.h.b16 %v3456
      %v3609 = vunpack.c.l.b16 %v3457
      %v3610 = vunpack.c.h.b16 %v3457
      %v3611 = vunpack.c.l.b16 %v3458
      %v3612 = vunpack.c.h.b16 %v3458
      %v3613 = vunpack.c.l.b16 %v3459
      %v3614 = vunpack.c.h.b16 %v3459
      %v3615 = vunpack.c.l.b16 %v3460
      %v3616 = vunpack.c.h.b16 %v3460
      %v3617 = vunpack.c.l.b16 %v3461
      %v3618 = vunpack.c.h.b16 %v3461
      %v3619 = vunpack.c.l.b16 %v3462
      %v3620 = vunpack.c.h.b16 %v3462
      %v3621 = vunpack.c.l.b16 %v3463
      %v3622 = vunpack.c.h.b16 %v3463
      %v3623 = vunpack.c.l.b16 %v3464
      %v3624 = vunpack.c.h.b16 %v3464
      %v3625 = vunpack.c.l.b16 %v3465
      %v3626 = vunpack.c.h.b16 %v3465
      %v3627 = vunpack.c.l.b16 %v3466
      %v3628 = vunpack.c.h.b16 %v3466
      %v3629 = vunpack.c.l.b16 %v3467
      %v3630 = vunpack.c.h.b16 %v3467
      %v3631 = vunpack.c.l.b16 %v3468
      %v3632 = vunpack.c.h.b16 %v3468
      %v3633 = vunpack.c.l.b16 %v3469
      %v3634 = vunpack.c.h.b16 %v3469
      %v3635 = vunpack.c.l.b16 %v3470
      %v3636 = vunpack.c.h.b16 %v3470
      %v3637 = vunpack.c.l.b16 %v3471
      %v3638 = vunpack.c.h.b16 %v3471
      %v3639 = vunpack.c.l.b16 %v3472
      %v3640 = vunpack.c.h.b16 %v3472
      %v3641 = vunpack.c.l.b16 %v3473
      %v3642 = vunpack.c.h.b16 %v3473
      %v3643 = vunpack.c.l.b16 %v3474
      %v3644 = vunpack.c.h.b16 %v3474
      %v3645 = vunpack.c.l.b16 %v3475
      %v3646 = vunpack.c.h.b16 %v3475
      %v3647 = vunpack.c.l.b16 %v3476
      %v3648 = vunpack.c.h.b16 %v3476
      %v3649 = vunpack.c.l.b16 %v3477
      %v3650 = vunpack.c.h.b16 %v3477
      %v3651 = vunpack.c.l.b16 %v3478
      %v3652 = vunpack.c.h.b16 %v3478
      %v3653 = vunpack.c.l.b16 %v3479
      %v3654 = vunpack.c.h.b16 %v3479
      %v3655 = vunpack.c.l.b16 %v3480
      %v3656 = vunpack.c.h.b16 %v3480
      %v3657 = vunpack.c.l.b16 %v3481
      %v3658 = vunpack.c.h.b16 %v3481
      %v3659 = vunpack.c.l.b16 %v3482
      %v3660 = vunpack.c.h.b16 %v3482
      %v3661 = vunpack.c.l.b16 %v3483
      %v3662 = vunpack.c.h.b16 %v3483
      %v3663 = vunpack.c.l.b16 %v3484
      %v3664 = vunpack.c.h.b16 %v3484
      %v3665 = vunpack.c.l.b16 %v3485
      %v3666 = vunpack.c.h.b16 %v3485
      %v3667 = vunpack.c.l.b16 %v3486
      %v3668 = vunpack.c.h.b16 %v3486
      %v3669 = vunpack.c.l.b16 %v3487
      %v3670 = vunpack.c.h.b16 %v3487
      %v3671 = vunpack.c.l.b16 %v3488
      %v3672 = vunpack.c.h.b16 %v3488
      %v3673 = vunpack.c.l.b16 %v3489
      %v3674 = vunpack.c.h.b16 %v3489
      %v3675 = vunpack.c.l.b16 %v3490
      %v3676 = vunpack.c.h.b16 %v3490
      %v3677 = vunpack.c.l.b16 %v3491
      %v3678 = vunpack.c.h.b16 %v3491
      %v3679 = vunpack.c.l.b16 %v3492
      %v3680 = vunpack.c.h.b16 %v3492
      %v3681 = vunpack.c.l.b16 %v3493
      %v3682 = vunpack.c.h.b16 %v3493
      %v3683 = vunpack.c.l.b16 %v3494
      %v3684 = vunpack.c.h.b16 %v3494
      %v3685 = vunpack.c.l.b16 %v3495
      %v3686 = vunpack.c.h.b16 %v3495
      %v3687 = vunpack.c.l.b16 %v3496
      %v3688 = vunpack.c.h.b16 %v3496
      %v3689 = vunpack.c.l.b16 %v3497
      %v3690 = vunpack.c.h.b16 %v3497
      %v3691 = vunpack.c.l.b16 %v3498
      %v3692 = vunpack.c.h.b16 %v3498
      %v3693 = vunpack.c.l.b16 %v3499
      %v3694 = vunpack.c.h.b16 %v3499
      %v3695 = vunpack.c.l.b16 %v3500
      %v3696 = vunpack.c.h.b16 %v3500
      %v3697 = vunpack.c.l.b16 %v3501
      %v3698 = vunpack.c.h.b16 %v3501
      %v3699 = vunpack.c.l.b16 %v3502
      %v3700 = vunpack.c.h.b16 %v3502
      %v3701 = vpack.c.b16 %v3575, %v3573
      %v3702 = vpack.c.b16 %v3576, %v3574
      %v3703 = vpack.c.b16 %v3579, %v3577
      %v3704 = vpack.c.b16 %v3580, %v3578
      %v3705 = vpack.c.b16 %v3583, %v3581
      %v3706 = vpack.c.b16 %v3584, %v3582
      %v3707 = vpack.c.b16 %v3587, %v3585
      %v3708 = vpack.c.b16 %v3588, %v3586
      %v3709 = vpack.c.b16 %v3591, %v3589
      %v3710 = vpack.c.b16 %v3592, %v3590
      %v3711 = vpack.c.b16 %v3595, %v3593
      %v3712 = vpack.c.b16 %v3596, %v3594
      %v3713 = vpack.c.b16 %v3599, %v3597
      %v3714 = vpack.c.b16 %v3600, %v3598
      %v3715 = vpack.c.b16 %v3603, %v3601
      %v3716 = vpack.c.b16 %v3604, %v3602
      %v3717 = vpack.c.b16 %v3607, %v3605
      %v3718 = vpack.c.b16 %v3608, %v3606
      %v3719 = vpack.c.b16 %v3611, %v3609
      %v3720 = vpack.c.b16 %v3612, %v3610
      %v3721 = vpack.c.b16 %v3615, %v3613
      %v3722 = vpack.c.b16 %v3616, %v3614
      %v3723 = vpack.c.b16 %v3619, %v3617
      %v3724 = vpack.c.b16 %v3620, %v3618
      %v3725 = vpack.c.b16 %v3623, %v3621
      %v3726 = vpack.c.b16 %v3624, %v3622
      %v3727 = vpack.c.b16 %v3627, %v3625
      %v3728 = vpack.c.b16 %v3628, %v3626
      %v3729 = vpack.c.b16 %v3631, %v3629
      %v3730 = vpack.c.b16 %v3632, %v3630
      %v3731 = vpack.c.b16 %v3635, %v3633
      %v3732 = vpack.c.b16 %v3636, %v3634
      %v3733 = vpack.c.b16 %v3639, %v3637
      %v3734 = vpack.c.b16 %v3640, %v3638
      %v3735 = vpack.c.b16 %v3643, %v3641
      %v3736 = vpack.c.b16 %v3644, %v3642
      %v3737 = vpack.c.b16 %v3647, %v3645
      %v3738 = vpack.c.b16 %v3648, %v3646
      %v3739 = vpack.c.b16 %v3651, %v3649
      %v3740 = vpack.c.b16 %v3652, %v3650
      %v3741 = vpack.c.b16 %v3655, %v3653
      %v3742 = vpack.c.b16 %v3656, %v3654
      %v3743 = vpack.c.b16 %v3659, %v3657
      %v3744 = vpack.c.b16 %v3660, %v3658
      %v3745 = vpack.c.b16 %v3663, %v3661
      %v3746 = vpack.c.b16 %v3664, %v3662
      %v3747 = vpack.c.b16 %v3667, %v3665
      %v3748 = vpack.c.b16 %v3668, %v3666
      %v3749 = vpack.c.b16 %v3671, %v3669
      %v3750 = vpack.c.b16 %v3672, %v3670
      %v3751 = vpack.c.b16 %v3675, %v3673
      %v3752 = vpack.c.b16 %v3676, %v3674
      %v3753 = vpack.c.b16 %v3679, %v3677
      %v3754 = vpack.c.b16 %v3680, %v3678
      %v3755 = vpack.c.b16 %v3683, %v3681
      %v3756 = vpack.c.b16 %v3684, %v3682
      %v3757 = vpack.c.b16 %v3687, %v3685
      %v3758 = vpack.c.b16 %v3688, %v3686
      %v3759 = vpack.c.b16 %v3691, %v3689
      %v3760 = vpack.c.b16 %v3692, %v3690
      %v3761 = vpack.c.b16 %v3695, %v3693
      %v3762 = vpack.c.b16 %v3696, %v3694
      %v3763 = vpack.c.b16 %v3699, %v3697
      %v3764 = vpack.c.b16 %v3700, %v3698
      %3829 = vmatpush.bf16.msra.mxu0 %v3715
      %3830 = vmatpush.bf16.msra.mxu0 %v3713
      %3831 = vmatpush.bf16.msra.mxu0 %v3711
      %3832 = vmatpush.bf16.msra.mxu0 %v3709
      %3833 = vmatpush.bf16.msra.mxu0 %v3707
      %3834 = vmatpush.bf16.msra.mxu0 %v3705
      %3835 = vmatpush.bf16.msra.mxu0 %v3703
      %3836 = vmatpush.bf16.msra.mxu0 %v3701
      %3837 = vmatmul.bf16.gmra.mxu0 %v3407
      %v3838 = vpop.f32.mrf.mxu0
      %v3839 = vadd.f32 %v3505, %v3838
      %v3840 = vpop.f32.mrf.mxu0
      %v3841 = vadd.f32 %v3505, %v3840
      %3842 = vmatmul.bf16.gmra.mxu0 %v3411
      %v3843 = vpop.f32.mrf.mxu0
      %v3844 = vadd.f32 %v3505, %v3843
      %v3845 = vpop.f32.mrf.mxu0
      %v3846 = vadd.f32 %v3505, %v3845
      %3847 = vmatmul.bf16.gmra.mxu0 %v3415
      %v3848 = vpop.f32.mrf.mxu0
      %v3849 = vadd.f32 %v3505, %v3848
      %v3850 = vpop.f32.mrf.mxu0
      %v3851 = vadd.f32 %v3505, %v3850
      %3852 = vmatmul.bf16.gmra.mxu0 %v3419
      %v3853 = vpop.f32.mrf.mxu0
      %v3854 = vadd.f32 %v3505, %v3853
      %v3855 = vpop.f32.mrf.mxu0
      %v3856 = vadd.f32 %v3505, %v3855
      %3857 = vmatmul.bf16.gmra.mxu0 %v3423
      %v3858 = vpop.f32.mrf.mxu0
      %v3859 = vadd.f32 %v3505, %v3858
      %v3860 = vpop.f32.mrf.mxu0
      %v3861 = vadd.f32 %v3505, %v3860
      %3862 = vmatmul.bf16.gmra.mxu0 %v3427
      %v3863 = vpop.f32.mrf.mxu0
      %v3864 = vadd.f32 %v3505, %v3863
      %v3865 = vpop.f32.mrf.mxu0
      %v3866 = vadd.f32 %v3505, %v3865
      %3867 = vmatmul.bf16.gmra.mxu0 %v3431
      %v3868 = vpop.f32.mrf.mxu0
      %v3869 = vadd.f32 %v3505, %v3868
      %v3870 = vpop.f32.mrf.mxu0
      %v3871 = vadd.f32 %v3505, %v3870
      %3872 = vmatmul.bf16.gmra.mxu0 %v3435
      %v3873 = vpop.f32.mrf.mxu0
      %v3874 = vadd.f32 %v3505, %v3873
      %v3875 = vpop.f32.mrf.mxu0
      %v3876 = vadd.f32 %v3505, %v3875
      %3877 = vdwg.mxu0
      %3878 = vmatpush.bf16.msra.mxu0 %v3731
      %3879 = vmatpush.bf16.msra.mxu0 %v3729
      %3880 = vmatpush.bf16.msra.mxu0 %v3727
      %3881 = vmatpush.bf16.msra.mxu0 %v3725
      %3882 = vmatpush.bf16.msra.mxu0 %v3723
      %3883 = vmatpush.bf16.msra.mxu0 %v3721
      %3884 = vmatpush.bf16.msra.mxu0 %v3719
      %3885 = vmatpush.bf16.msra.mxu0 %v3717
      %3886 = vmatmul.bf16.gmra.mxu0 %v3408
      %v3887 = vpop.f32.mrf.mxu0
      %v3888 = vadd.f32 %v3839, %v3887
      %v3889 = vpop.f32.mrf.mxu0
      %v3890 = vadd.f32 %v3841, %v3889
      %3891 = vmatmul.bf16.gmra.mxu0 %v3412
      %v3892 = vpop.f32.mrf.mxu0
      %v3893 = vadd.f32 %v3844, %v3892
      %v3894 = vpop.f32.mrf.mxu0
      %v3895 = vadd.f32 %v3846, %v3894
      %3896 = vmatmul.bf16.gmra.mxu0 %v3416
      %v3897 = vpop.f32.mrf.mxu0
      %v3898 = vadd.f32 %v3849, %v3897
      %v3899 = vpop.f32.mrf.mxu0
      %v3900 = vadd.f32 %v3851, %v3899
      %3901 = vmatmul.bf16.gmra.mxu0 %v3420
      %v3902 = vpop.f32.mrf.mxu0
      %v3903 = vadd.f32 %v3854, %v3902
      %v3904 = vpop.f32.mrf.mxu0
      %v3905 = vadd.f32 %v3856, %v3904
      %3906 = vmatmul.bf16.gmra.mxu0 %v3424
      %v3907 = vpop.f32.mrf.mxu0
      %v3908 = vadd.f32 %v3859, %v3907
      %v3909 = vpop.f32.mrf.mxu0
      %v3910 = vadd.f32 %v3861, %v3909
      %3911 = vmatmul.bf16.gmra.mxu0 %v3428
      %v3912 = vpop.f32.mrf.mxu0
      %v3913 = vadd.f32 %v3864, %v3912
      %v3914 = vpop.f32.mrf.mxu0
      %v3915 = vadd.f32 %v3866, %v3914
      %3916 = vmatmul.bf16.gmra.mxu0 %v3432
      %v3917 = vpop.f32.mrf.mxu0
      %v3918 = vadd.f32 %v3869, %v3917
      %v3919 = vpop.f32.mrf.mxu0
      %v3920 = vadd.f32 %v3871, %v3919
      %3921 = vmatmul.bf16.gmra.mxu0 %v3436
      %v3922 = vpop.f32.mrf.mxu0
      %v3923 = vadd.f32 %v3874, %v3922
      %v3924 = vpop.f32.mrf.mxu0
      %v3925 = vadd.f32 %v3876, %v3924
      %3926 = vdwg.mxu0
      %3927 = vmatpush.bf16.msra.mxu0 %v3747
      %3928 = vmatpush.bf16.msra.mxu0 %v3745
      %3929 = vmatpush.bf16.msra.mxu0 %v3743
      %3930 = vmatpush.bf16.msra.mxu0 %v3741
      %3931 = vmatpush.bf16.msra.mxu0 %v3739
      %3932 = vmatpush.bf16.msra.mxu0 %v3737
      %3933 = vmatpush.bf16.msra.mxu0 %v3735
      %3934 = vmatpush.bf16.msra.mxu0 %v3733
      %3935 = vmatmul.bf16.gmra.mxu0 %v3409
      %v3936 = vpop.f32.mrf.mxu0
      %v3937 = vadd.f32 %v3888, %v3936
      %v3938 = vpop.f32.mrf.mxu0
      %v3939 = vadd.f32 %v3890, %v3938
      %3940 = vmatmul.bf16.gmra.mxu0 %v3413
      %v3941 = vpop.f32.mrf.mxu0
      %v3942 = vadd.f32 %v3893, %v3941
      %v3943 = vpop.f32.mrf.mxu0
      %v3944 = vadd.f32 %v3895, %v3943
      %3945 = vmatmul.bf16.gmra.mxu0 %v3417
      %v3946 = vpop.f32.mrf.mxu0
      %v3947 = vadd.f32 %v3898, %v3946
      %v3948 = vpop.f32.mrf.mxu0
      %v3949 = vadd.f32 %v3900, %v3948
      %3950 = vmatmul.bf16.gmra.mxu0 %v3421
      %v3951 = vpop.f32.mrf.mxu0
      %v3952 = vadd.f32 %v3903, %v3951
      %v3953 = vpop.f32.mrf.mxu0
      %v3954 = vadd.f32 %v3905, %v3953
      %3955 = vmatmul.bf16.gmra.mxu0 %v3425
      %v3956 = vpop.f32.mrf.mxu0
      %v3957 = vadd.f32 %v3908, %v3956
      %v3958 = vpop.f32.mrf.mxu0
      %v3959 = vadd.f32 %v3910, %v3958
      %3960 = vmatmul.bf16.gmra.mxu0 %v3429
      %v3961 = vpop.f32.mrf.mxu0
      %v3962 = vadd.f32 %v3913, %v3961
      %v3963 = vpop.f32.mrf.mxu0
      %v3964 = vadd.f32 %v3915, %v3963
      %3965 = vmatmul.bf16.gmra.mxu0 %v3433
      %v3966 = vpop.f32.mrf.mxu0
      %v3967 = vadd.f32 %v3918, %v3966
      %v3968 = vpop.f32.mrf.mxu0
      %v3969 = vadd.f32 %v3920, %v3968
      %3970 = vmatmul.bf16.gmra.mxu0 %v3437
      %v3971 = vpop.f32.mrf.mxu0
      %v3972 = vadd.f32 %v3923, %v3971
      %v3973 = vpop.f32.mrf.mxu0
      %v3974 = vadd.f32 %v3925, %v3973
      %3975 = vdwg.mxu0
      %3976 = vmatpush.bf16.msra.mxu0 %v3763
      %3977 = vmatpush.bf16.msra.mxu0 %v3761
      %3978 = vmatpush.bf16.msra.mxu0 %v3759
      %3979 = vmatpush.bf16.msra.mxu0 %v3757
      %3980 = vmatpush.bf16.msra.mxu0 %v3755
      %3981 = vmatpush.bf16.msra.mxu0 %v3753
      %3982 = vmatpush.bf16.msra.mxu0 %v3751
      %3983 = vmatpush.bf16.msra.mxu0 %v3749
      %3984 = vmatmul.bf16.gmra.mxu0 %v3410
      %v3985 = vpop.f32.mrf.mxu0
      %v3986 = vadd.f32 %v3937, %v3985
      %v3987 = vpop.f32.mrf.mxu0
      %v3988 = vadd.f32 %v3939, %v3987
      %3989 = vmatmul.bf16.gmra.mxu0 %v3414
      %v3990 = vpop.f32.mrf.mxu0
      %v3991 = vadd.f32 %v3942, %v3990
      %v3992 = vpop.f32.mrf.mxu0
      %v3993 = vadd.f32 %v3944, %v3992
      %3994 = vmatmul.bf16.gmra.mxu0 %v3418
      %v3995 = vpop.f32.mrf.mxu0
      %v3996 = vadd.f32 %v3947, %v3995
      %v3997 = vpop.f32.mrf.mxu0
      %v3998 = vadd.f32 %v3949, %v3997
      %3999 = vmatmul.bf16.gmra.mxu0 %v3422
      %v4000 = vpop.f32.mrf.mxu0
      %v4001 = vadd.f32 %v3952, %v4000
      %v4002 = vpop.f32.mrf.mxu0
      %v4003 = vadd.f32 %v3954, %v4002
      %4004 = vmatmul.bf16.gmra.mxu0 %v3426
      %v4005 = vpop.f32.mrf.mxu0
      %v4006 = vadd.f32 %v3957, %v4005
      %v4007 = vpop.f32.mrf.mxu0
      %v4008 = vadd.f32 %v3959, %v4007
      %4009 = vmatmul.bf16.gmra.mxu0 %v3430
      %v4010 = vpop.f32.mrf.mxu0
      %v4011 = vadd.f32 %v3962, %v4010
      %v4012 = vpop.f32.mrf.mxu0
      %v4013 = vadd.f32 %v3964, %v4012
      %4014 = vmatmul.bf16.gmra.mxu0 %v3434
      %v4015 = vpop.f32.mrf.mxu0
      %v4016 = vadd.f32 %v3967, %v4015
      %v4017 = vpop.f32.mrf.mxu0
      %v4018 = vadd.f32 %v3969, %v4017
      %4019 = vmatmul.bf16.gmra.mxu0 %v3438
      %v4020 = vpop.f32.mrf.mxu0
      %v4021 = vadd.f32 %v3972, %v4020
      %v4022 = vpop.f32.mrf.mxu0
      %v4023 = vadd.f32 %v3974, %v4022
      %4024 = vdwg.mxu0
      %4025 = vmatpush.bf16.msra.mxu0 %v3716
      %4026 = vmatpush.bf16.msra.mxu0 %v3714
      %4027 = vmatpush.bf16.msra.mxu0 %v3712
      %4028 = vmatpush.bf16.msra.mxu0 %v3710
      %4029 = vmatpush.bf16.msra.mxu0 %v3708
      %4030 = vmatpush.bf16.msra.mxu0 %v3706
      %4031 = vmatpush.bf16.msra.mxu0 %v3704
      %4032 = vmatpush.bf16.msra.mxu0 %v3702
      %4033 = vmatmul.bf16.gmra.mxu0 %v3407
      %v4034 = vpop.f32.mrf.mxu0
      %v4035 = vadd.f32 %v3506, %v4034
      %v4036 = vpop.f32.mrf.mxu0
      %v4037 = vadd.f32 %v3506, %v4036
      %4038 = vmatmul.bf16.gmra.mxu0 %v3411
      %v4039 = vpop.f32.mrf.mxu0
      %v4040 = vadd.f32 %v3506, %v4039
      %v4041 = vpop.f32.mrf.mxu0
      %v4042 = vadd.f32 %v3506, %v4041
      %4043 = vmatmul.bf16.gmra.mxu0 %v3415
      %v4044 = vpop.f32.mrf.mxu0
      %v4045 = vadd.f32 %v3506, %v4044
      %v4046 = vpop.f32.mrf.mxu0
      %v4047 = vadd.f32 %v3506, %v4046
      %4048 = vmatmul.bf16.gmra.mxu0 %v3419
      %v4049 = vpop.f32.mrf.mxu0
      %v4050 = vadd.f32 %v3506, %v4049
      %v4051 = vpop.f32.mrf.mxu0
      %v4052 = vadd.f32 %v3506, %v4051
      %4053 = vmatmul.bf16.gmra.mxu0 %v3423
      %v4054 = vpop.f32.mrf.mxu0
      %v4055 = vadd.f32 %v3506, %v4054
      %v4056 = vpop.f32.mrf.mxu0
      %v4057 = vadd.f32 %v3506, %v4056
      %4058 = vmatmul.bf16.gmra.mxu0 %v3427
      %v4059 = vpop.f32.mrf.mxu0
      %v4060 = vadd.f32 %v3506, %v4059
      %v4061 = vpop.f32.mrf.mxu0
      %v4062 = vadd.f32 %v3506, %v4061
      %4063 = vmatmul.bf16.gmra.mxu0 %v3431
      %v4064 = vpop.f32.mrf.mxu0
      %v4065 = vadd.f32 %v3506, %v4064
      %v4066 = vpop.f32.mrf.mxu0
      %v4067 = vadd.f32 %v3506, %v4066
      %4068 = vmatmul.bf16.gmra.mxu0 %v3435
      %v4069 = vpop.f32.mrf.mxu0
      %v4070 = vadd.f32 %v3506, %v4069
      %v4071 = vpop.f32.mrf.mxu0
      %v4072 = vadd.f32 %v3506, %v4071
      %4073 = vdwg.mxu0
      %4074 = vmatpush.bf16.msra.mxu0 %v3732
      %4075 = vmatpush.bf16.msra.mxu0 %v3730
      %4076 = vmatpush.bf16.msra.mxu0 %v3728
      %4077 = vmatpush.bf16.msra.mxu0 %v3726
      %4078 = vmatpush.bf16.msra.mxu0 %v3724
      %4079 = vmatpush.bf16.msra.mxu0 %v3722
      %4080 = vmatpush.bf16.msra.mxu0 %v3720
      %4081 = vmatpush.bf16.msra.mxu0 %v3718
      %4082 = vmatmul.bf16.gmra.mxu0 %v3408
      %v4083 = vpop.f32.mrf.mxu0
      %v4084 = vadd.f32 %v4035, %v4083
      %v4085 = vpop.f32.mrf.mxu0
      %v4086 = vadd.f32 %v4037, %v4085
      %4087 = vmatmul.bf16.gmra.mxu0 %v3412
      %v4088 = vpop.f32.mrf.mxu0
      %v4089 = vadd.f32 %v4040, %v4088
      %v4090 = vpop.f32.mrf.mxu0
      %v4091 = vadd.f32 %v4042, %v4090
      %4092 = vmatmul.bf16.gmra.mxu0 %v3416
      %v4093 = vpop.f32.mrf.mxu0
      %v4094 = vadd.f32 %v4045, %v4093
      %v4095 = vpop.f32.mrf.mxu0
      %v4096 = vadd.f32 %v4047, %v4095
      %4097 = vmatmul.bf16.gmra.mxu0 %v3420
      %v4098 = vpop.f32.mrf.mxu0
      %v4099 = vadd.f32 %v4050, %v4098
      %v4100 = vpop.f32.mrf.mxu0
      %v4101 = vadd.f32 %v4052, %v4100
      %4102 = vmatmul.bf16.gmra.mxu0 %v3424
      %v4103 = vpop.f32.mrf.mxu0
      %v4104 = vadd.f32 %v4055, %v4103
      %v4105 = vpop.f32.mrf.mxu0
      %v4106 = vadd.f32 %v4057, %v4105
      %4107 = vmatmul.bf16.gmra.mxu0 %v3428
      %v4108 = vpop.f32.mrf.mxu0
      %v4109 = vadd.f32 %v4060, %v4108
      %v4110 = vpop.f32.mrf.mxu0
      %v4111 = vadd.f32 %v4062, %v4110
      %4112 = vmatmul.bf16.gmra.mxu0 %v3432
      %v4113 = vpop.f32.mrf.mxu0
      %v4114 = vadd.f32 %v4065, %v4113
      %v4115 = vpop.f32.mrf.mxu0
      %v4116 = vadd.f32 %v4067, %v4115
      %4117 = vmatmul.bf16.gmra.mxu0 %v3436
      %v4118 = vpop.f32.mrf.mxu0
      %v4119 = vadd.f32 %v4070, %v4118
      %v4120 = vpop.f32.mrf.mxu0
      %v4121 = vadd.f32 %v4072, %v4120
      %4122 = vdwg.mxu0
      %4123 = vmatpush.bf16.msra.mxu0 %v3748
      %4124 = vmatpush.bf16.msra.mxu0 %v3746
      %4125 = vmatpush.bf16.msra.mxu0 %v3744
      %4126 = vmatpush.bf16.msra.mxu0 %v3742
      %4127 = vmatpush.bf16.msra.mxu0 %v3740
      %4128 = vmatpush.bf16.msra.mxu0 %v3738
      %4129 = vmatpush.bf16.msra.mxu0 %v3736
      %4130 = vmatpush.bf16.msra.mxu0 %v3734
      %4131 = vmatmul.bf16.gmra.mxu0 %v3409
      %v4132 = vpop.f32.mrf.mxu0
      %v4133 = vadd.f32 %v4084, %v4132
      %v4134 = vpop.f32.mrf.mxu0
      %v4135 = vadd.f32 %v4086, %v4134
      %4136 = vmatmul.bf16.gmra.mxu0 %v3413
      %v4137 = vpop.f32.mrf.mxu0
      %v4138 = vadd.f32 %v4089, %v4137
      %v4139 = vpop.f32.mrf.mxu0
      %v4140 = vadd.f32 %v4091, %v4139
      %4141 = vmatmul.bf16.gmra.mxu0 %v3417
      %v4142 = vpop.f32.mrf.mxu0
      %v4143 = vadd.f32 %v4094, %v4142
      %v4144 = vpop.f32.mrf.mxu0
      %v4145 = vadd.f32 %v4096, %v4144
      %4146 = vmatmul.bf16.gmra.mxu0 %v3421
      %v4147 = vpop.f32.mrf.mxu0
      %v4148 = vadd.f32 %v4099, %v4147
      %v4149 = vpop.f32.mrf.mxu0
      %v4150 = vadd.f32 %v4101, %v4149
      %4151 = vmatmul.bf16.gmra.mxu0 %v3425
      %v4152 = vpop.f32.mrf.mxu0
      %v4153 = vadd.f32 %v4104, %v4152
      %v4154 = vpop.f32.mrf.mxu0
      %v4155 = vadd.f32 %v4106, %v4154
      %4156 = vmatmul.bf16.gmra.mxu0 %v3429
      %v4157 = vpop.f32.mrf.mxu0
      %v4158 = vadd.f32 %v4109, %v4157
      %v4159 = vpop.f32.mrf.mxu0
      %v4160 = vadd.f32 %v4111, %v4159
      %4161 = vmatmul.bf16.gmra.mxu0 %v3433
      %v4162 = vpop.f32.mrf.mxu0
      %v4163 = vadd.f32 %v4114, %v4162
      %v4164 = vpop.f32.mrf.mxu0
      %v4165 = vadd.f32 %v4116, %v4164
      %4166 = vmatmul.bf16.gmra.mxu0 %v3437
      %v4167 = vpop.f32.mrf.mxu0
      %v4168 = vadd.f32 %v4119, %v4167
      %v4169 = vpop.f32.mrf.mxu0
      %v4170 = vadd.f32 %v4121, %v4169
      %4171 = vdwg.mxu0
      %4172 = vmatpush.bf16.msra.mxu0 %v3764
      %4173 = vmatpush.bf16.msra.mxu0 %v3762
      %4174 = vmatpush.bf16.msra.mxu0 %v3760
      %4175 = vmatpush.bf16.msra.mxu0 %v3758
      %4176 = vmatpush.bf16.msra.mxu0 %v3756
      %4177 = vmatpush.bf16.msra.mxu0 %v3754
      %4178 = vmatpush.bf16.msra.mxu0 %v3752
      %4179 = vmatpush.bf16.msra.mxu0 %v3750
      %4180 = vmatmul.bf16.gmra.mxu0 %v3410
      %v4181 = vpop.f32.mrf.mxu0
      %v4182 = vadd.f32 %v4133, %v4181
      %v4183 = vpop.f32.mrf.mxu0
      %v4184 = vadd.f32 %v4135, %v4183
      %4185 = vmatmul.bf16.gmra.mxu0 %v3414
      %v4186 = vpop.f32.mrf.mxu0
      %v4187 = vadd.f32 %v4138, %v4186
      %v4188 = vpop.f32.mrf.mxu0
      %v4189 = vadd.f32 %v4140, %v4188
      %4190 = vmatmul.bf16.gmra.mxu0 %v3418
      %v4191 = vpop.f32.mrf.mxu0
      %v4192 = vadd.f32 %v4143, %v4191
      %v4193 = vpop.f32.mrf.mxu0
      %v4194 = vadd.f32 %v4145, %v4193
      %4195 = vmatmul.bf16.gmra.mxu0 %v3422
      %v4196 = vpop.f32.mrf.mxu0
      %v4197 = vadd.f32 %v4148, %v4196
      %v4198 = vpop.f32.mrf.mxu0
      %v4199 = vadd.f32 %v4150, %v4198
      %4200 = vmatmul.bf16.gmra.mxu0 %v3426
      %v4201 = vpop.f32.mrf.mxu0
      %v4202 = vadd.f32 %v4153, %v4201
      %v4203 = vpop.f32.mrf.mxu0
      %v4204 = vadd.f32 %v4155, %v4203
      %4205 = vmatmul.bf16.gmra.mxu0 %v3430
      %v4206 = vpop.f32.mrf.mxu0
      %v4207 = vadd.f32 %v4158, %v4206
      %v4208 = vpop.f32.mrf.mxu0
      %v4209 = vadd.f32 %v4160, %v4208
      %4210 = vmatmul.bf16.gmra.mxu0 %v3434
      %v4211 = vpop.f32.mrf.mxu0
      %v4212 = vadd.f32 %v4163, %v4211
      %v4213 = vpop.f32.mrf.mxu0
      %v4214 = vadd.f32 %v4165, %v4213
      %4215 = vmatmul.bf16.gmra.mxu0 %v3438
      %v4216 = vpop.f32.mrf.mxu0
      %v4217 = vadd.f32 %v4168, %v4216
      %v4218 = vpop.f32.mrf.mxu0
      %v4219 = vadd.f32 %v4170, %v4218
      %4220 = vdwg.mxu0
      %v4221 = vmul.f32 %v4182, 0.5
      %v4222 = vmul.f32 %v4184, 0.5
      %v4223 = vmul.f32 %v4187, 0.5
      %v4224 = vmul.f32 %v4189, 0.5
      %v4225 = vmul.f32 %v4192, 0.5
      %v4226 = vmul.f32 %v4194, 0.5
      %v4227 = vmul.f32 %v4197, 0.5
      %v4228 = vmul.f32 %v4199, 0.5
      %v4229 = vmul.f32 %v4202, 0.5
      %v4230 = vmul.f32 %v4204, 0.5
      %v4231 = vmul.f32 %v4207, 0.5
      %v4232 = vmul.f32 %v4209, 0.5
      %v4233 = vmul.f32 %v4212, 0.5
      %v4234 = vmul.f32 %v4214, 0.5
      %v4235 = vmul.f32 %v4217, 0.5
      %v4236 = vmul.f32 %v4219, 0.5
      %v4237 = vmul.f32 %v4221, 1.442695
      %v4238 = vpow.pop %v4237
      %v4239 = vmul.f32 %v4222, 1.442695
      %v4240 = vpow.pop %v4239
      %v4241 = vmul.f32 %v4223, 1.442695
      %v4242 = vpow.pop %v4241
      %v4243 = vmul.f32 %v4224, 1.442695
      %v4244 = vpow.pop %v4243
      %v4245 = vmul.f32 %v4225, 1.442695
      %v4246 = vpow.pop %v4245
      %v4247 = vmul.f32 %v4226, 1.442695
      %v4248 = vpow.pop %v4247
      %v4249 = vmul.f32 %v4227, 1.442695
      %v4250 = vpow.pop %v4249
      %v4251 = vmul.f32 %v4228, 1.442695
      %v4252 = vpow.pop %v4251
      %v4253 = vmul.f32 %v4229, 1.442695
      %v4254 = vpow.pop %v4253
      %v4255 = vmul.f32 %v4230, 1.442695
      %v4256 = vpow.pop %v4255
      %v4257 = vmul.f32 %v4231, 1.442695
      %v4258 = vpow.pop %v4257
      %v4259 = vmul.f32 %v4232, 1.442695
      %v4260 = vpow.pop %v4259
      %v4261 = vmul.f32 %v4233, 1.442695
      %v4262 = vpow.pop %v4261
      %v4263 = vmul.f32 %v4234, 1.442695
      %v4264 = vpow.pop %v4263
      %v4265 = vmul.f32 %v4235, 1.442695
      %v4266 = vpow.pop %v4265
      %v4267 = vmul.f32 %v4236, 1.442695
      %v4268 = vpow.pop %v4267
      %v4269 = vmul.f32 %v545, %v4238
      %v4270 = vmul.f32 %v546, %v4240
      %v4271 = vmul.f32 %v547, %v4242
      %v4272 = vmul.f32 %v548, %v4244
      %v4273 = vmul.f32 %v549, %v4246
      %v4274 = vmul.f32 %v550, %v4248
      %v4275 = vmul.f32 %v551, %v4250
      %v4276 = vmul.f32 %v552, %v4252
      %v4277 = vmul.f32 %v553, %v4254
      %v4278 = vmul.f32 %v554, %v4256
      %v4279 = vmul.f32 %v555, %v4258
      %v4280 = vmul.f32 %v556, %v4260
      %v4281 = vmul.f32 %v557, %v4262
      %v4282 = vmul.f32 %v558, %v4264
      %v4283 = vmul.f32 %v559, %v4266
      %v4284 = vmul.f32 %v560, %v4268
      %v4285 = vadd.f32 %v3986, %v4269
      %v4286 = vadd.f32 %v3988, %v4270
      %v4287 = vadd.f32 %v3991, %v4271
      %v4288 = vadd.f32 %v3993, %v4272
      %v4289 = vadd.f32 %v3996, %v4273
      %v4290 = vadd.f32 %v3998, %v4274
      %v4291 = vadd.f32 %v4001, %v4275
      %v4292 = vadd.f32 %v4003, %v4276
      %v4293 = vadd.f32 %v4006, %v4277
      %v4294 = vadd.f32 %v4008, %v4278
      %v4295 = vadd.f32 %v4011, %v4279
      %v4296 = vadd.f32 %v4013, %v4280
      %v4297 = vadd.f32 %v4016, %v4281
      %v4298 = vadd.f32 %v4018, %v4282
      %v4299 = vadd.f32 %v4021, %v4283
      %v4300 = vadd.f32 %v4023, %v4284
      %v4301 = vpack.c.bf16 %v4286, %v4285
      %v4302 = vpack.c.bf16 %v4288, %v4287
      %v4303 = vpack.c.bf16 %v4290, %v4289
      %v4304 = vpack.c.bf16 %v4292, %v4291
      %v4305 = vpack.c.bf16 %v4294, %v4293
      %v4306 = vpack.c.bf16 %v4296, %v4295
      %v4307 = vpack.c.bf16 %v4298, %v4297
      %v4308 = vpack.c.bf16 %v4300, %v4299
      %v4309 = vld [vmem:[%s6] sm:$0xff]
      %v4310 = vld [vmem:[%s6 + $0x8] sm:$0xff]
      %v4311 = vld [vmem:[%s6 + $0x10] sm:$0xff]
      %v4312 = vld [vmem:[%s6 + $0x18] sm:$0xff]
      %v4313 = vld [vmem:[%s6 + $0x20] sm:$0xff]
      %v4314 = vld [vmem:[%s6 + $0x28] sm:$0xff]
      %v4315 = vld [vmem:[%s6 + $0x30] sm:$0xff]
      %v4316 = vld [vmem:[%s6 + $0x38] sm:$0xff]
      %v4317 = vld [vmem:[%s6 + $0x40] sm:$0xff]
      %v4318 = vld [vmem:[%s6 + $0x48] sm:$0xff]
      %v4319 = vld [vmem:[%s6 + $0x50] sm:$0xff]
      %v4320 = vld [vmem:[%s6 + $0x58] sm:$0xff]
      %v4321 = vld [vmem:[%s6 + $0x60] sm:$0xff]
      %v4322 = vld [vmem:[%s6 + $0x68] sm:$0xff]
      %v4323 = vld [vmem:[%s6 + $0x70] sm:$0xff]
      %v4324 = vld [vmem:[%s6 + $0x78] sm:$0xff]
      %v4325 = vld [vmem:[%s6 + $0x80] sm:$0xff]
      %v4326 = vld [vmem:[%s6 + $0x88] sm:$0xff]
      %v4327 = vld [vmem:[%s6 + $0x90] sm:$0xff]
      %v4328 = vld [vmem:[%s6 + $0x98] sm:$0xff]
      %v4329 = vld [vmem:[%s6 + $0xa0] sm:$0xff]
      %v4330 = vld [vmem:[%s6 + $0xa8] sm:$0xff]
      %v4331 = vld [vmem:[%s6 + $0xb0] sm:$0xff]
      %v4332 = vld [vmem:[%s6 + $0xb8] sm:$0xff]
      %v4333 = vld [vmem:[%s6 + $0xc0] sm:$0xff]
      %v4334 = vld [vmem:[%s6 + $0xc8] sm:$0xff]
      %v4335 = vld [vmem:[%s6 + $0xd0] sm:$0xff]
      %v4336 = vld [vmem:[%s6 + $0xd8] sm:$0xff]
      %v4337 = vld [vmem:[%s6 + $0xe0] sm:$0xff]
      %v4338 = vld [vmem:[%s6 + $0xe8] sm:$0xff]
      %v4339 = vld [vmem:[%s6 + $0xf0] sm:$0xff]
      %v4340 = vld [vmem:[%s6 + $0xf8] sm:$0xff]
      %v4341 = vld [vmem:[%s7] sm:$0xf]
      %v4343 = vperm.slane %v4341, 0
      %v4344 = vperm.slane %v4341, 1
      %v4345 = vperm.slane %v4341, 2
      %v4346 = vperm.slane %v4341, 3
      %v4383 = vunpack.c.l.b16 %v4309
      %v4384 = vunpack.c.h.b16 %v4309
      %v4385 = vunpack.c.l.b16 %v4310
      %v4386 = vunpack.c.h.b16 %v4310
      %v4387 = vunpack.c.l.b16 %v4311
      %v4388 = vunpack.c.h.b16 %v4311
      %v4389 = vunpack.c.l.b16 %v4312
      %v4390 = vunpack.c.h.b16 %v4312
      %v4391 = vunpack.c.l.b16 %v4313
      %v4392 = vunpack.c.h.b16 %v4313
      %v4393 = vunpack.c.l.b16 %v4314
      %v4394 = vunpack.c.h.b16 %v4314
      %v4395 = vunpack.c.l.b16 %v4315
      %v4396 = vunpack.c.h.b16 %v4315
      %v4397 = vunpack.c.l.b16 %v4316
      %v4398 = vunpack.c.h.b16 %v4316
      %v4399 = vunpack.c.l.b16 %v4317
      %v4400 = vunpack.c.h.b16 %v4317
      %v4401 = vunpack.c.l.b16 %v4318
      %v4402 = vunpack.c.h.b16 %v4318
      %v4403 = vunpack.c.l.b16 %v4319
      %v4404 = vunpack.c.h.b16 %v4319
      %v4405 = vunpack.c.l.b16 %v4320
      %v4406 = vunpack.c.h.b16 %v4320
      %v4407 = vunpack.c.l.b16 %v4321
      %v4408 = vunpack.c.h.b16 %v4321
      %v4409 = vunpack.c.l.b16 %v4322
      %v4410 = vunpack.c.h.b16 %v4322
      %v4411 = vunpack.c.l.b16 %v4323
      %v4412 = vunpack.c.h.b16 %v4323
      %v4413 = vunpack.c.l.b16 %v4324
      %v4414 = vunpack.c.h.b16 %v4324
      %v4415 = vunpack.c.l.b16 %v4325
      %v4416 = vunpack.c.h.b16 %v4325
      %v4417 = vunpack.c.l.b16 %v4326
      %v4418 = vunpack.c.h.b16 %v4326
      %v4419 = vunpack.c.l.b16 %v4327
      %v4420 = vunpack.c.h.b16 %v4327
      %v4421 = vunpack.c.l.b16 %v4328
      %v4422 = vunpack.c.h.b16 %v4328
      %v4423 = vunpack.c.l.b16 %v4329
      %v4424 = vunpack.c.h.b16 %v4329
      %v4425 = vunpack.c.l.b16 %v4330
      %v4426 = vunpack.c.h.b16 %v4330
      %v4427 = vunpack.c.l.b16 %v4331
      %v4428 = vunpack.c.h.b16 %v4331
      %v4429 = vunpack.c.l.b16 %v4332
      %v4430 = vunpack.c.h.b16 %v4332
      %v4431 = vunpack.c.l.b16 %v4333
      %v4432 = vunpack.c.h.b16 %v4333
      %v4433 = vunpack.c.l.b16 %v4334
      %v4434 = vunpack.c.h.b16 %v4334
      %v4435 = vunpack.c.l.b16 %v4335
      %v4436 = vunpack.c.h.b16 %v4335
      %v4437 = vunpack.c.l.b16 %v4336
      %v4438 = vunpack.c.h.b16 %v4336
      %v4439 = vunpack.c.l.b16 %v4337
      %v4440 = vunpack.c.h.b16 %v4337
      %v4441 = vunpack.c.l.b16 %v4338
      %v4442 = vunpack.c.h.b16 %v4338
      %v4443 = vunpack.c.l.b16 %v4339
      %v4444 = vunpack.c.h.b16 %v4339
      %v4445 = vunpack.c.l.b16 %v4340
      %v4446 = vunpack.c.h.b16 %v4340
      %v4447 = vpack.c.b16 %v4387, %v4383
      %v4448 = vpack.c.b16 %v4388, %v4384
      %v4449 = vpack.c.b16 %v4389, %v4385
      %v4450 = vpack.c.b16 %v4390, %v4386
      %v4451 = vpack.c.b16 %v4395, %v4391
      %v4452 = vpack.c.b16 %v4396, %v4392
      %v4453 = vpack.c.b16 %v4397, %v4393
      %v4454 = vpack.c.b16 %v4398, %v4394
      %v4455 = vpack.c.b16 %v4403, %v4399
      %v4456 = vpack.c.b16 %v4404, %v4400
      %v4457 = vpack.c.b16 %v4405, %v4401
      %v4458 = vpack.c.b16 %v4406, %v4402
      %v4459 = vpack.c.b16 %v4411, %v4407
      %v4460 = vpack.c.b16 %v4412, %v4408
      %v4461 = vpack.c.b16 %v4413, %v4409
      %v4462 = vpack.c.b16 %v4414, %v4410
      %v4463 = vpack.c.b16 %v4419, %v4415
      %v4464 = vpack.c.b16 %v4420, %v4416
      %v4465 = vpack.c.b16 %v4421, %v4417
      %v4466 = vpack.c.b16 %v4422, %v4418
      %v4467 = vpack.c.b16 %v4427, %v4423
      %v4468 = vpack.c.b16 %v4428, %v4424
      %v4469 = vpack.c.b16 %v4429, %v4425
      %v4470 = vpack.c.b16 %v4430, %v4426
      %v4471 = vpack.c.b16 %v4435, %v4431
      %v4472 = vpack.c.b16 %v4436, %v4432
      %v4473 = vpack.c.b16 %v4437, %v4433
      %v4474 = vpack.c.b16 %v4438, %v4434
      %v4475 = vpack.c.b16 %v4443, %v4439
      %v4476 = vpack.c.b16 %v4444, %v4440
      %v4477 = vpack.c.b16 %v4445, %v4441
      %v4478 = vpack.c.b16 %v4446, %v4442
      %4511 = vmatpush.bf16.msra.mxu0 %v4475
      %4512 = vmatpush.bf16.msra.mxu0 %v4471
      %4513 = vmatpush.bf16.msra.mxu0 %v4467
      %4514 = vmatpush.bf16.msra.mxu0 %v4463
      %4515 = vmatpush.bf16.msra.mxu0 %v4459
      %4516 = vmatpush.bf16.msra.mxu0 %v4455
      %4517 = vmatpush.bf16.msra.mxu0 %v4451
      %4518 = vmatpush.bf16.msra.mxu0 %v4447
      %4519 = vmatmul.bf16.gmra.mxu0 %v4301
      %v4520 = vpop.f32.mrf.mxu0
      %v4521 = vadd.f32 %v4343, %v4520
      %v4522 = vpop.f32.mrf.mxu0
      %v4523 = vadd.f32 %v4343, %v4522
      %4524 = vmatmul.bf16.gmra.mxu0 %v4302
      %v4525 = vpop.f32.mrf.mxu0
      %v4526 = vadd.f32 %v4343, %v4525
      %v4527 = vpop.f32.mrf.mxu0
      %v4528 = vadd.f32 %v4343, %v4527
      %4529 = vmatmul.bf16.gmra.mxu0 %v4303
      %v4530 = vpop.f32.mrf.mxu0
      %v4531 = vadd.f32 %v4343, %v4530
      %v4532 = vpop.f32.mrf.mxu0
      %v4533 = vadd.f32 %v4343, %v4532
      %4534 = vmatmul.bf16.gmra.mxu0 %v4304
      %v4535 = vpop.f32.mrf.mxu0
      %v4536 = vadd.f32 %v4343, %v4535
      %v4537 = vpop.f32.mrf.mxu0
      %v4538 = vadd.f32 %v4343, %v4537
      %4539 = vmatmul.bf16.gmra.mxu0 %v4305
      %v4540 = vpop.f32.mrf.mxu0
      %v4541 = vadd.f32 %v4343, %v4540
      %v4542 = vpop.f32.mrf.mxu0
      %v4543 = vadd.f32 %v4343, %v4542
      %4544 = vmatmul.bf16.gmra.mxu0 %v4306
      %v4545 = vpop.f32.mrf.mxu0
      %v4546 = vadd.f32 %v4343, %v4545
      %v4547 = vpop.f32.mrf.mxu0
      %v4548 = vadd.f32 %v4343, %v4547
      %4549 = vmatmul.bf16.gmra.mxu0 %v4307
      %v4550 = vpop.f32.mrf.mxu0
      %v4551 = vadd.f32 %v4343, %v4550
      %v4552 = vpop.f32.mrf.mxu0
      %v4553 = vadd.f32 %v4343, %v4552
      %4554 = vmatmul.bf16.gmra.mxu0 %v4308
      %v4555 = vpop.f32.mrf.mxu0
      %v4556 = vadd.f32 %v4343, %v4555
      %v4557 = vpop.f32.mrf.mxu0
      %v4558 = vadd.f32 %v4343, %v4557
      %4559 = vdwg.mxu0
      %4560 = vmatpush.bf16.msra.mxu0 %v4476
      %4561 = vmatpush.bf16.msra.mxu0 %v4472
      %4562 = vmatpush.bf16.msra.mxu0 %v4468
      %4563 = vmatpush.bf16.msra.mxu0 %v4464
      %4564 = vmatpush.bf16.msra.mxu0 %v4460
      %4565 = vmatpush.bf16.msra.mxu0 %v4456
      %4566 = vmatpush.bf16.msra.mxu0 %v4452
      %4567 = vmatpush.bf16.msra.mxu0 %v4448
      %4568 = vmatmul.bf16.gmra.mxu0 %v4301
      %v4569 = vpop.f32.mrf.mxu0
      %v4570 = vadd.f32 %v4344, %v4569
      %v4571 = vpop.f32.mrf.mxu0
      %v4572 = vadd.f32 %v4344, %v4571
      %4573 = vmatmul.bf16.gmra.mxu0 %v4302
      %v4574 = vpop.f32.mrf.mxu0
      %v4575 = vadd.f32 %v4344, %v4574
      %v4576 = vpop.f32.mrf.mxu0
      %v4577 = vadd.f32 %v4344, %v4576
      %4578 = vmatmul.bf16.gmra.mxu0 %v4303
      %v4579 = vpop.f32.mrf.mxu0
      %v4580 = vadd.f32 %v4344, %v4579
      %v4581 = vpop.f32.mrf.mxu0
      %v4582 = vadd.f32 %v4344, %v4581
      %4583 = vmatmul.bf16.gmra.mxu0 %v4304
      %v4584 = vpop.f32.mrf.mxu0
      %v4585 = vadd.f32 %v4344, %v4584
      %v4586 = vpop.f32.mrf.mxu0
      %v4587 = vadd.f32 %v4344, %v4586
      %4588 = vmatmul.bf16.gmra.mxu0 %v4305
      %v4589 = vpop.f32.mrf.mxu0
      %v4590 = vadd.f32 %v4344, %v4589
      %v4591 = vpop.f32.mrf.mxu0
      %v4592 = vadd.f32 %v4344, %v4591
      %4593 = vmatmul.bf16.gmra.mxu0 %v4306
      %v4594 = vpop.f32.mrf.mxu0
      %v4595 = vadd.f32 %v4344, %v4594
      %v4596 = vpop.f32.mrf.mxu0
      %v4597 = vadd.f32 %v4344, %v4596
      %4598 = vmatmul.bf16.gmra.mxu0 %v4307
      %v4599 = vpop.f32.mrf.mxu0
      %v4600 = vadd.f32 %v4344, %v4599
      %v4601 = vpop.f32.mrf.mxu0
      %v4602 = vadd.f32 %v4344, %v4601
      %4603 = vmatmul.bf16.gmra.mxu0 %v4308
      %v4604 = vpop.f32.mrf.mxu0
      %v4605 = vadd.f32 %v4344, %v4604
      %v4606 = vpop.f32.mrf.mxu0
      %v4607 = vadd.f32 %v4344, %v4606
      %4608 = vdwg.mxu0
      %4609 = vmatpush.bf16.msra.mxu0 %v4477
      %4610 = vmatpush.bf16.msra.mxu0 %v4473
      %4611 = vmatpush.bf16.msra.mxu0 %v4469
      %4612 = vmatpush.bf16.msra.mxu0 %v4465
      %4613 = vmatpush.bf16.msra.mxu0 %v4461
      %4614 = vmatpush.bf16.msra.mxu0 %v4457
      %4615 = vmatpush.bf16.msra.mxu0 %v4453
      %4616 = vmatpush.bf16.msra.mxu0 %v4449
      %4617 = vmatmul.bf16.gmra.mxu0 %v4301
      %v4618 = vpop.f32.mrf.mxu0
      %v4619 = vadd.f32 %v4345, %v4618
      %v4620 = vpop.f32.mrf.mxu0
      %v4621 = vadd.f32 %v4345, %v4620
      %4622 = vmatmul.bf16.gmra.mxu0 %v4302
      %v4623 = vpop.f32.mrf.mxu0
      %v4624 = vadd.f32 %v4345, %v4623
      %v4625 = vpop.f32.mrf.mxu0
      %v4626 = vadd.f32 %v4345, %v4625
      %4627 = vmatmul.bf16.gmra.mxu0 %v4303
      %v4628 = vpop.f32.mrf.mxu0
      %v4629 = vadd.f32 %v4345, %v4628
      %v4630 = vpop.f32.mrf.mxu0
      %v4631 = vadd.f32 %v4345, %v4630
      %4632 = vmatmul.bf16.gmra.mxu0 %v4304
      %v4633 = vpop.f32.mrf.mxu0
      %v4634 = vadd.f32 %v4345, %v4633
      %v4635 = vpop.f32.mrf.mxu0
      %v4636 = vadd.f32 %v4345, %v4635
      %4637 = vmatmul.bf16.gmra.mxu0 %v4305
      %v4638 = vpop.f32.mrf.mxu0
      %v4639 = vadd.f32 %v4345, %v4638
      %v4640 = vpop.f32.mrf.mxu0
      %v4641 = vadd.f32 %v4345, %v4640
      %4642 = vmatmul.bf16.gmra.mxu0 %v4306
      %v4643 = vpop.f32.mrf.mxu0
      %v4644 = vadd.f32 %v4345, %v4643
      %v4645 = vpop.f32.mrf.mxu0
      %v4646 = vadd.f32 %v4345, %v4645
      %4647 = vmatmul.bf16.gmra.mxu0 %v4307
      %v4648 = vpop.f32.mrf.mxu0
      %v4649 = vadd.f32 %v4345, %v4648
      %v4650 = vpop.f32.mrf.mxu0
      %v4651 = vadd.f32 %v4345, %v4650
      %4652 = vmatmul.bf16.gmra.mxu0 %v4308
      %v4653 = vpop.f32.mrf.mxu0
      %v4654 = vadd.f32 %v4345, %v4653
      %v4655 = vpop.f32.mrf.mxu0
      %v4656 = vadd.f32 %v4345, %v4655
      %4657 = vdwg.mxu0
      %4658 = vmatpush.bf16.msra.mxu0 %v4478
      %4659 = vmatpush.bf16.msra.mxu0 %v4474
      %4660 = vmatpush.bf16.msra.mxu0 %v4470
      %4661 = vmatpush.bf16.msra.mxu0 %v4466
      %4662 = vmatpush.bf16.msra.mxu0 %v4462
      %4663 = vmatpush.bf16.msra.mxu0 %v4458
      %4664 = vmatpush.bf16.msra.mxu0 %v4454
      %4665 = vmatpush.bf16.msra.mxu0 %v4450
      %4666 = vmatmul.bf16.gmra.mxu0 %v4301
      %v4667 = vpop.f32.mrf.mxu0
      %v4668 = vadd.f32 %v4346, %v4667
      %v4669 = vpop.f32.mrf.mxu0
      %v4670 = vadd.f32 %v4346, %v4669
      %4671 = vmatmul.bf16.gmra.mxu0 %v4302
      %v4672 = vpop.f32.mrf.mxu0
      %v4673 = vadd.f32 %v4346, %v4672
      %v4674 = vpop.f32.mrf.mxu0
      %v4675 = vadd.f32 %v4346, %v4674
      %4676 = vmatmul.bf16.gmra.mxu0 %v4303
      %v4677 = vpop.f32.mrf.mxu0
      %v4678 = vadd.f32 %v4346, %v4677
      %v4679 = vpop.f32.mrf.mxu0
      %v4680 = vadd.f32 %v4346, %v4679
      %4681 = vmatmul.bf16.gmra.mxu0 %v4304
      %v4682 = vpop.f32.mrf.mxu0
      %v4683 = vadd.f32 %v4346, %v4682
      %v4684 = vpop.f32.mrf.mxu0
      %v4685 = vadd.f32 %v4346, %v4684
      %4686 = vmatmul.bf16.gmra.mxu0 %v4305
      %v4687 = vpop.f32.mrf.mxu0
      %v4688 = vadd.f32 %v4346, %v4687
      %v4689 = vpop.f32.mrf.mxu0
      %v4690 = vadd.f32 %v4346, %v4689
      %4691 = vmatmul.bf16.gmra.mxu0 %v4306
      %v4692 = vpop.f32.mrf.mxu0
      %v4693 = vadd.f32 %v4346, %v4692
      %v4694 = vpop.f32.mrf.mxu0
      %v4695 = vadd.f32 %v4346, %v4694
      %4696 = vmatmul.bf16.gmra.mxu0 %v4307
      %v4697 = vpop.f32.mrf.mxu0
      %v4698 = vadd.f32 %v4346, %v4697
      %v4699 = vpop.f32.mrf.mxu0
      %v4700 = vadd.f32 %v4346, %v4699
      %4701 = vmatmul.bf16.gmra.mxu0 %v4308
      %v4702 = vpop.f32.mrf.mxu0
      %v4703 = vadd.f32 %v4346, %v4702
      %v4704 = vpop.f32.mrf.mxu0
      %v4705 = vadd.f32 %v4346, %v4704
      %4706 = vdwg.mxu0
      %v4707 = vmax.f32 %v4521, 0.0
      %v4708 = vmax.f32 %v4570, 0.0
      %v4709 = vmax.f32 %v4619, 0.0
      %v4710 = vmax.f32 %v4668, 0.0
      %v4711 = vmax.f32 %v4523, 0.0
      %v4712 = vmax.f32 %v4572, 0.0
      %v4713 = vmax.f32 %v4621, 0.0
      %v4714 = vmax.f32 %v4670, 0.0
      %v4715 = vmax.f32 %v4526, 0.0
      %v4716 = vmax.f32 %v4575, 0.0
      %v4717 = vmax.f32 %v4624, 0.0
      %v4718 = vmax.f32 %v4673, 0.0
      %v4719 = vmax.f32 %v4528, 0.0
      %v4720 = vmax.f32 %v4577, 0.0
      %v4721 = vmax.f32 %v4626, 0.0
      %v4722 = vmax.f32 %v4675, 0.0
      %v4723 = vmax.f32 %v4531, 0.0
      %v4724 = vmax.f32 %v4580, 0.0
      %v4725 = vmax.f32 %v4629, 0.0
      %v4726 = vmax.f32 %v4678, 0.0
      %v4727 = vmax.f32 %v4533, 0.0
      %v4728 = vmax.f32 %v4582, 0.0
      %v4729 = vmax.f32 %v4631, 0.0
      %v4730 = vmax.f32 %v4680, 0.0
      %v4731 = vmax.f32 %v4536, 0.0
      %v4732 = vmax.f32 %v4585, 0.0
      %v4733 = vmax.f32 %v4634, 0.0
      %v4734 = vmax.f32 %v4683, 0.0
      %v4735 = vmax.f32 %v4538, 0.0
      %v4736 = vmax.f32 %v4587, 0.0
      %v4737 = vmax.f32 %v4636, 0.0
      %v4738 = vmax.f32 %v4685, 0.0
      %v4739 = vmax.f32 %v4541, 0.0
      %v4740 = vmax.f32 %v4590, 0.0
      %v4741 = vmax.f32 %v4639, 0.0
      %v4742 = vmax.f32 %v4688, 0.0
      %v4743 = vmax.f32 %v4543, 0.0
      %v4744 = vmax.f32 %v4592, 0.0
      %v4745 = vmax.f32 %v4641, 0.0
      %v4746 = vmax.f32 %v4690, 0.0
      %v4747 = vmax.f32 %v4546, 0.0
      %v4748 = vmax.f32 %v4595, 0.0
      %v4749 = vmax.f32 %v4644, 0.0
      %v4750 = vmax.f32 %v4693, 0.0
      %v4751 = vmax.f32 %v4548, 0.0
      %v4752 = vmax.f32 %v4597, 0.0
      %v4753 = vmax.f32 %v4646, 0.0
      %v4754 = vmax.f32 %v4695, 0.0
      %v4755 = vmax.f32 %v4551, 0.0
      %v4756 = vmax.f32 %v4600, 0.0
      %v4757 = vmax.f32 %v4649, 0.0
      %v4758 = vmax.f32 %v4698, 0.0
      %v4759 = vmax.f32 %v4553, 0.0
      %v4760 = vmax.f32 %v4602, 0.0
      %v4761 = vmax.f32 %v4651, 0.0
      %v4762 = vmax.f32 %v4700, 0.0
      %v4763 = vmax.f32 %v4556, 0.0
      %v4764 = vmax.f32 %v4605, 0.0
      %v4765 = vmax.f32 %v4654, 0.0
      %v4766 = vmax.f32 %v4703, 0.0
      %v4767 = vmax.f32 %v4558, 0.0
      %v4768 = vmax.f32 %v4607, 0.0
      %v4769 = vmax.f32 %v4656, 0.0
      %v4770 = vmax.f32 %v4705, 0.0
      %v4771 = vpack.c.bf16 %v4711, %v4707
      %v4772 = vpack.c.bf16 %v4712, %v4708
      %v4773 = vpack.c.bf16 %v4713, %v4709
      %v4774 = vpack.c.bf16 %v4714, %v4710
      %v4775 = vpack.c.bf16 %v4719, %v4715
      %v4776 = vpack.c.bf16 %v4720, %v4716
      %v4777 = vpack.c.bf16 %v4721, %v4717
      %v4778 = vpack.c.bf16 %v4722, %v4718
      %v4779 = vpack.c.bf16 %v4727, %v4723
      %v4780 = vpack.c.bf16 %v4728, %v4724
      %v4781 = vpack.c.bf16 %v4729, %v4725
      %v4782 = vpack.c.bf16 %v4730, %v4726
      %v4783 = vpack.c.bf16 %v4735, %v4731
      %v4784 = vpack.c.bf16 %v4736, %v4732
      %v4785 = vpack.c.bf16 %v4737, %v4733
      %v4786 = vpack.c.bf16 %v4738, %v4734
      %v4787 = vpack.c.bf16 %v4743, %v4739
      %v4788 = vpack.c.bf16 %v4744, %v4740
      %v4789 = vpack.c.bf16 %v4745, %v4741
      %v4790 = vpack.c.bf16 %v4746, %v4742
      %v4791 = vpack.c.bf16 %v4751, %v4747
      %v4792 = vpack.c.bf16 %v4752, %v4748
      %v4793 = vpack.c.bf16 %v4753, %v4749
      %v4794 = vpack.c.bf16 %v4754, %v4750
      %v4795 = vpack.c.bf16 %v4759, %v4755
      %v4796 = vpack.c.bf16 %v4760, %v4756
      %v4797 = vpack.c.bf16 %v4761, %v4757
      %v4798 = vpack.c.bf16 %v4762, %v4758
      %v4799 = vpack.c.bf16 %v4767, %v4763
      %v4800 = vpack.c.bf16 %v4768, %v4764
      %v4801 = vpack.c.bf16 %v4769, %v4765
      %v4802 = vpack.c.bf16 %v4770, %v4766
      %v4803 = vld [vmem:[%s8] sm:$0xff]
      %v4804 = vld [vmem:[%s8 + $0x8] sm:$0xff]
      %v4805 = vld [vmem:[%s8 + $0x10] sm:$0xff]
      %v4806 = vld [vmem:[%s8 + $0x18] sm:$0xf]
      %v4807 = vld [vmem:[%s8 + $0x1c] sm:$0xff]
      %v4808 = vld [vmem:[%s8 + $0x24] sm:$0xff]
      %v4809 = vld [vmem:[%s8 + $0x2c] sm:$0xff]
      %v4810 = vld [vmem:[%s8 + $0x34] sm:$0xf]
      %v4811 = vld [vmem:[%s8 + $0x38] sm:$0xff]
      %v4812 = vld [vmem:[%s8 + $0x40] sm:$0xff]
      %v4813 = vld [vmem:[%s8 + $0x48] sm:$0xff]
      %v4814 = vld [vmem:[%s8 + $0x50] sm:$0xf]
      %v4815 = vld [vmem:[%s8 + $0x54] sm:$0xff]
      %v4816 = vld [vmem:[%s8 + $0x5c] sm:$0xff]
      %v4817 = vld [vmem:[%s8 + $0x64] sm:$0xff]
      %v4818 = vld [vmem:[%s8 + $0x6c] sm:$0xf]
      %v4819 = vld [vmem:[%s8 + $0x70] sm:$0xff]
      %v4820 = vld [vmem:[%s8 + $0x78] sm:$0xff]
      %v4821 = vld [vmem:[%s8 + $0x80] sm:$0xff]
      %v4822 = vld [vmem:[%s8 + $0x88] sm:$0xf]
      %v4823 = vld [vmem:[%s8 + $0x8c] sm:$0xff]
      %v4824 = vld [vmem:[%s8 + $0x94] sm:$0xff]
      %v4825 = vld [vmem:[%s8 + $0x9c] sm:$0xff]
      %v4826 = vld [vmem:[%s8 + $0xa4] sm:$0xf]
      %v4827 = vld [vmem:[%s8 + $0xa8] sm:$0xff]
      %v4828 = vld [vmem:[%s8 + $0xb0] sm:$0xff]
      %v4829 = vld [vmem:[%s8 + $0xb8] sm:$0xff]
      %v4830 = vld [vmem:[%s8 + $0xc0] sm:$0xf]
      %v4831 = vld [vmem:[%s8 + $0xc4] sm:$0xff]
      %v4832 = vld [vmem:[%s8 + $0xcc] sm:$0xff]
      %v4833 = vld [vmem:[%s8 + $0xd4] sm:$0xff]
      %v4834 = vld [vmem:[%s8 + $0xdc] sm:$0xf]
      %v4835 = vld [vmem:[%s8 + $0xe0] sm:$0xff]
      %v4836 = vld [vmem:[%s8 + $0xe8] sm:$0xff]
      %v4837 = vld [vmem:[%s8 + $0xf0] sm:$0xff]
      %v4838 = vld [vmem:[%s8 + $0xf8] sm:$0xf]
      %v4839 = vld [vmem:[%s8 + $0xfc] sm:$0xff]
      %v4840 = vld [vmem:[%s8 + $0x104] sm:$0xff]
      %v4841 = vld [vmem:[%s8 + $0x10c] sm:$0xff]
      %v4842 = vld [vmem:[%s8 + $0x114] sm:$0xf]
      %v4843 = vld [vmem:[%s8 + $0x118] sm:$0xff]
      %v4844 = vld [vmem:[%s8 + $0x120] sm:$0xff]
      %v4845 = vld [vmem:[%s8 + $0x128] sm:$0xff]
      %v4846 = vld [vmem:[%s8 + $0x130] sm:$0xf]
      %v4847 = vld [vmem:[%s8 + $0x134] sm:$0xff]
      %v4848 = vld [vmem:[%s8 + $0x13c] sm:$0xff]
      %v4849 = vld [vmem:[%s8 + $0x144] sm:$0xff]
      %v4850 = vld [vmem:[%s8 + $0x14c] sm:$0xf]
      %v4851 = vld [vmem:[%s8 + $0x150] sm:$0xff]
      %v4852 = vld [vmem:[%s8 + $0x158] sm:$0xff]
      %v4853 = vld [vmem:[%s8 + $0x160] sm:$0xff]
      %v4854 = vld [vmem:[%s8 + $0x168] sm:$0xf]
      %v4855 = vld [vmem:[%s8 + $0x16c] sm:$0xff]
      %v4856 = vld [vmem:[%s8 + $0x174] sm:$0xff]
      %v4857 = vld [vmem:[%s8 + $0x17c] sm:$0xff]
      %v4858 = vld [vmem:[%s8 + $0x184] sm:$0xf]
      %v4859 = vld [vmem:[%s8 + $0x188] sm:$0xff]
      %v4860 = vld [vmem:[%s8 + $0x190] sm:$0xff]
      %v4861 = vld [vmem:[%s8 + $0x198] sm:$0xff]
      %v4862 = vld [vmem:[%s8 + $0x1a0] sm:$0xf]
      %v4863 = vld [vmem:[%s8 + $0x1a4] sm:$0xff]
      %v4864 = vld [vmem:[%s8 + $0x1ac] sm:$0xff]
      %v4865 = vld [vmem:[%s8 + $0x1b4] sm:$0xff]
      %v4866 = vld [vmem:[%s8 + $0x1bc] sm:$0xf]
      %v4867 = vld [vmem:[%s8 + $0x1c0] sm:$0xff]
      %v4868 = vld [vmem:[%s8 + $0x1c8] sm:$0xff]
      %v4869 = vld [vmem:[%s8 + $0x1d0] sm:$0xff]
      %v4870 = vld [vmem:[%s8 + $0x1d8] sm:$0xf]
      %v4871 = vld [vmem:[%s8 + $0x1dc] sm:$0xff]
      %v4872 = vld [vmem:[%s8 + $0x1e4] sm:$0xff]
      %v4873 = vld [vmem:[%s8 + $0x1ec] sm:$0xff]
      %v4874 = vld [vmem:[%s8 + $0x1f4] sm:$0xf]
      %v4875 = vld [vmem:[%s8 + $0x1f8] sm:$0xff]
      %v4876 = vld [vmem:[%s8 + $0x200] sm:$0xff]
      %v4877 = vld [vmem:[%s8 + $0x208] sm:$0xff]
      %v4878 = vld [vmem:[%s8 + $0x210] sm:$0xf]
      %v4879 = vld [vmem:[%s8 + $0x214] sm:$0xff]
      %v4880 = vld [vmem:[%s8 + $0x21c] sm:$0xff]
      %v4881 = vld [vmem:[%s8 + $0x224] sm:$0xff]
      %v4882 = vld [vmem:[%s8 + $0x22c] sm:$0xf]
      %v4883 = vld [vmem:[%s8 + $0x230] sm:$0xff]
      %v4884 = vld [vmem:[%s8 + $0x238] sm:$0xff]
      %v4885 = vld [vmem:[%s8 + $0x240] sm:$0xff]
      %v4886 = vld [vmem:[%s8 + $0x248] sm:$0xf]
      %v4887 = vld [vmem:[%s8 + $0x24c] sm:$0xff]
      %v4888 = vld [vmem:[%s8 + $0x254] sm:$0xff]
      %v4889 = vld [vmem:[%s8 + $0x25c] sm:$0xff]
      %v4890 = vld [vmem:[%s8 + $0x264] sm:$0xf]
      %v4891 = vld [vmem:[%s8 + $0x268] sm:$0xff]
      %v4892 = vld [vmem:[%s8 + $0x270] sm:$0xff]
      %v4893 = vld [vmem:[%s8 + $0x278] sm:$0xff]
      %v4894 = vld [vmem:[%s8 + $0x280] sm:$0xf]
      %v4895 = vld [vmem:[%s8 + $0x284] sm:$0xff]
      %v4896 = vld [vmem:[%s8 + $0x28c] sm:$0xff]
      %v4897 = vld [vmem:[%s8 + $0x294] sm:$0xff]
      %v4898 = vld [vmem:[%s8 + $0x29c] sm:$0xf]
      %v4899 = vld [vmem:[%s8 + $0x2a0] sm:$0xff]
      %v4900 = vld [vmem:[%s8 + $0x2a8] sm:$0xff]
      %v4901 = vld [vmem:[%s8 + $0x2b0] sm:$0xff]
      %v4902 = vld [vmem:[%s8 + $0x2b8] sm:$0xf]
      %v4903 = vld [vmem:[%s8 + $0x2bc] sm:$0xff]
      %v4904 = vld [vmem:[%s8 + $0x2c4] sm:$0xff]
      %v4905 = vld [vmem:[%s8 + $0x2cc] sm:$0xff]
      %v4906 = vld [vmem:[%s8 + $0x2d4] sm:$0xf]
      %v4907 = vld [vmem:[%s8 + $0x2d8] sm:$0xff]
      %v4908 = vld [vmem:[%s8 + $0x2e0] sm:$0xff]
      %v4909 = vld [vmem:[%s8 + $0x2e8] sm:$0xff]
      %v4910 = vld [vmem:[%s8 + $0x2f0] sm:$0xf]
      %v4911 = vld [vmem:[%s8 + $0x2f4] sm:$0xff]
      %v4912 = vld [vmem:[%s8 + $0x2fc] sm:$0xff]
      %v4913 = vld [vmem:[%s8 + $0x304] sm:$0xff]
      %v4914 = vld [vmem:[%s8 + $0x30c] sm:$0xf]
      %v4915 = vld [vmem:[%s8 + $0x310] sm:$0xff]
      %v4916 = vld [vmem:[%s8 + $0x318] sm:$0xff]
      %v4917 = vld [vmem:[%s8 + $0x320] sm:$0xff]
      %v4918 = vld [vmem:[%s8 + $0x328] sm:$0xf]
      %v4919 = vld [vmem:[%s8 + $0x32c] sm:$0xff]
      %v4920 = vld [vmem:[%s8 + $0x334] sm:$0xff]
      %v4921 = vld [vmem:[%s8 + $0x33c] sm:$0xff]
      %v4922 = vld [vmem:[%s8 + $0x344] sm:$0xf]
      %v4923 = vld [vmem:[%s8 + $0x348] sm:$0xff]
      %v4924 = vld [vmem:[%s8 + $0x350] sm:$0xff]
      %v4925 = vld [vmem:[%s8 + $0x358] sm:$0xff]
      %v4926 = vld [vmem:[%s8 + $0x360] sm:$0xf]
      %v4927 = vld [vmem:[%s8 + $0x364] sm:$0xff]
      %v4928 = vld [vmem:[%s8 + $0x36c] sm:$0xff]
      %v4929 = vld [vmem:[%s8 + $0x374] sm:$0xff]
      %v4930 = vld [vmem:[%s8 + $0x37c] sm:$0xf]
      %v4931 = vld [vmem:[%s8 + $0x380] sm:$0xff]
      %v4932 = vld [vmem:[%s8 + $0x388] sm:$0xff]
      %v4933 = vld [vmem:[%s8 + $0x390] sm:$0xff]
      %v4934 = vld [vmem:[%s8 + $0x398] sm:$0xf]
      %v4935 = vld [vmem:[%s8 + $0x39c] sm:$0xff]
      %v4936 = vld [vmem:[%s8 + $0x3a4] sm:$0xff]
      %v4937 = vld [vmem:[%s8 + $0x3ac] sm:$0xff]
      %v4938 = vld [vmem:[%s8 + $0x3b4] sm:$0xf]
      %v4939 = vld [vmem:[%s8 + $0x3b8] sm:$0xff]
      %v4940 = vld [vmem:[%s8 + $0x3c0] sm:$0xff]
      %v4941 = vld [vmem:[%s8 + $0x3c8] sm:$0xff]
      %v4942 = vld [vmem:[%s8 + $0x3d0] sm:$0xf]
      %v4943 = vld [vmem:[%s8 + $0x3d4] sm:$0xff]
      %v4944 = vld [vmem:[%s8 + $0x3dc] sm:$0xff]
      %v4945 = vld [vmem:[%s8 + $0x3e4] sm:$0xff]
      %v4946 = vld [vmem:[%s8 + $0x3ec] sm:$0xf]
      %v4947 = vld [vmem:[%s8 + $0x3f0] sm:$0xff]
      %v4948 = vld [vmem:[%s8 + $0x3f8] sm:$0xff]
      %v4949 = vld [vmem:[%s8 + $0x400] sm:$0xff]
      %v4950 = vld [vmem:[%s8 + $0x408] sm:$0xf]
      %v4951 = vld [vmem:[%s8 + $0x40c] sm:$0xff]
      %v4952 = vld [vmem:[%s8 + $0x414] sm:$0xff]
      %v4953 = vld [vmem:[%s8 + $0x41c] sm:$0xff]
      %v4954 = vld [vmem:[%s8 + $0x424] sm:$0xf]
      %v4955 = vld [vmem:[%s8 + $0x428] sm:$0xff]
      %v4956 = vld [vmem:[%s8 + $0x430] sm:$0xff]
      %v4957 = vld [vmem:[%s8 + $0x438] sm:$0xff]
      %v4958 = vld [vmem:[%s8 + $0x440] sm:$0xf]
      %v4959 = vld [vmem:[%s8 + $0x444] sm:$0xff]
      %v4960 = vld [vmem:[%s8 + $0x44c] sm:$0xff]
      %v4961 = vld [vmem:[%s8 + $0x454] sm:$0xff]
      %v4962 = vld [vmem:[%s8 + $0x45c] sm:$0xf]
      %v4963 = vld [vmem:[%s8 + $0x460] sm:$0xff]
      %v4964 = vld [vmem:[%s8 + $0x468] sm:$0xff]
      %v4965 = vld [vmem:[%s8 + $0x470] sm:$0xff]
      %v4966 = vld [vmem:[%s8 + $0x478] sm:$0xf]
      %v4967 = vld [vmem:[%s8 + $0x47c] sm:$0xff]
      %v4968 = vld [vmem:[%s8 + $0x484] sm:$0xff]
      %v4969 = vld [vmem:[%s8 + $0x48c] sm:$0xff]
      %v4970 = vld [vmem:[%s8 + $0x494] sm:$0xf]
      %v4971 = vld [vmem:[%s8 + $0x498] sm:$0xff]
      %v4972 = vld [vmem:[%s8 + $0x4a0] sm:$0xff]
      %v4973 = vld [vmem:[%s8 + $0x4a8] sm:$0xff]
      %v4974 = vld [vmem:[%s8 + $0x4b0] sm:$0xf]
      %v4975 = vld [vmem:[%s8 + $0x4b4] sm:$0xff]
      %v4976 = vld [vmem:[%s8 + $0x4bc] sm:$0xff]
      %v4977 = vld [vmem:[%s8 + $0x4c4] sm:$0xff]
      %v4978 = vld [vmem:[%s8 + $0x4cc] sm:$0xf]
      %v4979 = vld [vmem:[%s8 + $0x4d0] sm:$0xff]
      %v4980 = vld [vmem:[%s8 + $0x4d8] sm:$0xff]
      %v4981 = vld [vmem:[%s8 + $0x4e0] sm:$0xff]
      %v4982 = vld [vmem:[%s8 + $0x4e8] sm:$0xf]
      %v4983 = vld [vmem:[%s8 + $0x4ec] sm:$0xff]
      %v4984 = vld [vmem:[%s8 + $0x4f4] sm:$0xff]
      %v4985 = vld [vmem:[%s8 + $0x4fc] sm:$0xff]
      %v4986 = vld [vmem:[%s8 + $0x504] sm:$0xf]
      %v4987 = vld [vmem:[%s8 + $0x508] sm:$0xff]
      %v4988 = vld [vmem:[%s8 + $0x510] sm:$0xff]
      %v4989 = vld [vmem:[%s8 + $0x518] sm:$0xff]
      %v4990 = vld [vmem:[%s8 + $0x520] sm:$0xf]
      %v4991 = vld [vmem:[%s8 + $0x524] sm:$0xff]
      %v4992 = vld [vmem:[%s8 + $0x52c] sm:$0xff]
      %v4993 = vld [vmem:[%s8 + $0x534] sm:$0xff]
      %v4994 = vld [vmem:[%s8 + $0x53c] sm:$0xf]
      %v4995 = vld [vmem:[%s8 + $0x540] sm:$0xff]
      %v4996 = vld [vmem:[%s8 + $0x548] sm:$0xff]
      %v4997 = vld [vmem:[%s8 + $0x550] sm:$0xff]
      %v4998 = vld [vmem:[%s8 + $0x558] sm:$0xf]
      %v4999 = vld [vmem:[%s8 + $0x55c] sm:$0xff]
      %v5000 = vld [vmem:[%s8 + $0x564] sm:$0xff]
      %v5001 = vld [vmem:[%s8 + $0x56c] sm:$0xff]
      %v5002 = vld [vmem:[%s8 + $0x574] sm:$0xf]
      %v5003 = vld [vmem:[%s8 + $0x578] sm:$0xff]
      %v5004 = vld [vmem:[%s8 + $0x580] sm:$0xff]
      %v5005 = vld [vmem:[%s8 + $0x588] sm:$0xff]
      %v5006 = vld [vmem:[%s8 + $0x590] sm:$0xf]
      %v5007 = vld [vmem:[%s8 + $0x594] sm:$0xff]
      %v5008 = vld [vmem:[%s8 + $0x59c] sm:$0xff]
      %v5009 = vld [vmem:[%s8 + $0x5a4] sm:$0xff]
      %v5010 = vld [vmem:[%s8 + $0x5ac] sm:$0xf]
      %v5011 = vld [vmem:[%s8 + $0x5b0] sm:$0xff]
      %v5012 = vld [vmem:[%s8 + $0x5b8] sm:$0xff]
      %v5013 = vld [vmem:[%s8 + $0x5c0] sm:$0xff]
      %v5014 = vld [vmem:[%s8 + $0x5c8] sm:$0xf]
      %v5015 = vld [vmem:[%s8 + $0x5cc] sm:$0xff]
      %v5016 = vld [vmem:[%s8 + $0x5d4] sm:$0xff]
      %v5017 = vld [vmem:[%s8 + $0x5dc] sm:$0xff]
      %v5018 = vld [vmem:[%s8 + $0x5e4] sm:$0xf]
      %v5019 = vld [vmem:[%s8 + $0x5e8] sm:$0xff]
      %v5020 = vld [vmem:[%s8 + $0x5f0] sm:$0xff]
      %v5021 = vld [vmem:[%s8 + $0x5f8] sm:$0xff]
      %v5022 = vld [vmem:[%s8 + $0x600] sm:$0xf]
      %v5023 = vld [vmem:[%s8 + $0x604] sm:$0xff]
      %v5024 = vld [vmem:[%s8 + $0x60c] sm:$0xff]
      %v5025 = vld [vmem:[%s8 + $0x614] sm:$0xff]
      %v5026 = vld [vmem:[%s8 + $0x61c] sm:$0xf]
      %v5027 = vld [vmem:[%s8 + $0x620] sm:$0xff]
      %v5028 = vld [vmem:[%s8 + $0x628] sm:$0xff]
      %v5029 = vld [vmem:[%s8 + $0x630] sm:$0xff]
      %v5030 = vld [vmem:[%s8 + $0x638] sm:$0xf]
      %v5031 = vld [vmem:[%s8 + $0x63c] sm:$0xff]
      %v5032 = vld [vmem:[%s8 + $0x644] sm:$0xff]
      %v5033 = vld [vmem:[%s8 + $0x64c] sm:$0xff]
      %v5034 = vld [vmem:[%s8 + $0x654] sm:$0xf]
      %v5035 = vld [vmem:[%s8 + $0x658] sm:$0xff]
      %v5036 = vld [vmem:[%s8 + $0x660] sm:$0xff]
      %v5037 = vld [vmem:[%s8 + $0x668] sm:$0xff]
      %v5038 = vld [vmem:[%s8 + $0x670] sm:$0xf]
      %v5039 = vld [vmem:[%s8 + $0x674] sm:$0xff]
      %v5040 = vld [vmem:[%s8 + $0x67c] sm:$0xff]
      %v5041 = vld [vmem:[%s8 + $0x684] sm:$0xff]
      %v5042 = vld [vmem:[%s8 + $0x68c] sm:$0xf]
      %v5043 = vld [vmem:[%s8 + $0x690] sm:$0xff]
      %v5044 = vld [vmem:[%s8 + $0x698] sm:$0xff]
      %v5045 = vld [vmem:[%s8 + $0x6a0] sm:$0xff]
      %v5046 = vld [vmem:[%s8 + $0x6a8] sm:$0xf]
      %v5047 = vld [vmem:[%s8 + $0x6ac] sm:$0xff]
      %v5048 = vld [vmem:[%s8 + $0x6b4] sm:$0xff]
      %v5049 = vld [vmem:[%s8 + $0x6bc] sm:$0xff]
      %v5050 = vld [vmem:[%s8 + $0x6c4] sm:$0xf]
      %v5051 = vld [vmem:[%s8 + $0x6c8] sm:$0xff]
      %v5052 = vld [vmem:[%s8 + $0x6d0] sm:$0xff]
      %v5053 = vld [vmem:[%s8 + $0x6d8] sm:$0xff]
      %v5054 = vld [vmem:[%s8 + $0x6e0] sm:$0xf]
      %v5055 = vld [vmem:[%s8 + $0x6e4] sm:$0xff]
      %v5056 = vld [vmem:[%s8 + $0x6ec] sm:$0xff]
      %v5057 = vld [vmem:[%s8 + $0x6f4] sm:$0xff]
      %v5058 = vld [vmem:[%s8 + $0x6fc] sm:$0xf]
      %v5059 = vld [vmem:[%s9] sm:$0xff]
      %v5061 = vperm.slane %v5059, 0
      %v5062 = vperm.slane %v5059, 1
      %v5063 = vperm.slane %v5059, 2
      %v5064 = vperm.slane %v5059, 3
      %v5065 = vperm.slane %v5059, 4
      %v5066 = vperm.slane %v5059, 5
      %v5067 = vperm.slane %v5059, 6
      %v5331 = vunpack.c.l.b16 %v4803
      %v5332 = vunpack.c.h.b16 %v4803
      %v5333 = vunpack.c.l.b16 %v4804
      %v5334 = vunpack.c.h.b16 %v4804
      %v5335 = vunpack.c.l.b16 %v4805
      %v5336 = vunpack.c.h.b16 %v4805
      %v5337 = vunpack.c.l.b16 %v4806
      %v5338 = vunpack.c.l.b16 %v4807
      %v5339 = vunpack.c.h.b16 %v4807
      %v5340 = vunpack.c.l.b16 %v4808
      %v5341 = vunpack.c.h.b16 %v4808
      %v5342 = vunpack.c.l.b16 %v4809
      %v5343 = vunpack.c.h.b16 %v4809
      %v5344 = vunpack.c.l.b16 %v4810
      %v5345 = vunpack.c.l.b16 %v4811
      %v5346 = vunpack.c.h.b16 %v4811
      %v5347 = vunpack.c.l.b16 %v4812
      %v5348 = vunpack.c.h.b16 %v4812
      %v5349 = vunpack.c.l.b16 %v4813
      %v5350 = vunpack.c.h.b16 %v4813
      %v5351 = vunpack.c.l.b16 %v4814
      %v5352 = vunpack.c.l.b16 %v4815
      %v5353 = vunpack.c.h.b16 %v4815
      %v5354 = vunpack.c.l.b16 %v4816
      %v5355 = vunpack.c.h.b16 %v4816
      %v5356 = vunpack.c.l.b16 %v4817
      %v5357 = vunpack.c.h.b16 %v4817
      %v5358 = vunpack.c.l.b16 %v4818
      %v5359 = vunpack.c.l.b16 %v4819
      %v5360 = vunpack.c.h.b16 %v4819
      %v5361 = vunpack.c.l.b16 %v4820
      %v5362 = vunpack.c.h.b16 %v4820
      %v5363 = vunpack.c.l.b16 %v4821
      %v5364 = vunpack.c.h.b16 %v4821
      %v5365 = vunpack.c.l.b16 %v4822
      %v5366 = vunpack.c.l.b16 %v4823
      %v5367 = vunpack.c.h.b16 %v4823
      %v5368 = vunpack.c.l.b16 %v4824
      %v5369 = vunpack.c.h.b16 %v4824
      %v5370 = vunpack.c.l.b16 %v4825
      %v5371 = vunpack.c.h.b16 %v4825
      %v5372 = vunpack.c.l.b16 %v4826
      %v5373 = vunpack.c.l.b16 %v4827
      %v5374 = vunpack.c.h.b16 %v4827
      %v5375 = vunpack.c.l.b16 %v4828
      %v5376 = vunpack.c.h.b16 %v4828
      %v5377 = vunpack.c.l.b16 %v4829
      %v5378 = vunpack.c.h.b16 %v4829
      %v5379 = vunpack.c.l.b16 %v4830
      %v5380 = vunpack.c.l.b16 %v4831
      %v5381 = vunpack.c.h.b16 %v4831
      %v5382 = vunpack.c.l.b16 %v4832
      %v5383 = vunpack.c.h.b16 %v4832
      %v5384 = vunpack.c.l.b16 %v4833
      %v5385 = vunpack.c.h.b16 %v4833
      %v5386 = vunpack.c.l.b16 %v4834
      %v5387 = vunpack.c.l.b16 %v4835
      %v5388 = vunpack.c.h.b16 %v4835
      %v5389 = vunpack.c.l.b16 %v4836
      %v5390 = vunpack.c.h.b16 %v4836
      %v5391 = vunpack.c.l.b16 %v4837
      %v5392 = vunpack.c.h.b16 %v4837
      %v5393 = vunpack.c.l.b16 %v4838
      %v5394 = vunpack.c.l.b16 %v4839
      %v5395 = vunpack.c.h.b16 %v4839
      %v5396 = vunpack.c.l.b16 %v4840
      %v5397 = vunpack.c.h.b16 %v4840
      %v5398 = vunpack.c.l.b16 %v4841
      %v5399 = vunpack.c.h.b16 %v4841
      %v5400 = vunpack.c.l.b16 %v4842
      %v5401 = vunpack.c.l.b16 %v4843
      %v5402 = vunpack.c.h.b16 %v4843
      %v5403 = vunpack.c.l.b16 %v4844
      %v5404 = vunpack.c.h.b16 %v4844
      %v5405 = vunpack.c.l.b16 %v4845
      %v5406 = vunpack.c.h.b16 %v4845
      %v5407 = vunpack.c.l.b16 %v4846
      %v5408 = vunpack.c.l.b16 %v4847
      %v5409 = vunpack.c.h.b16 %v4847
      %v5410 = vunpack.c.l.b16 %v4848
      %v5411 = vunpack.c.h.b16 %v4848
      %v5412 = vunpack.c.l.b16 %v4849
      %v5413 = vunpack.c.h.b16 %v4849
      %v5414 = vunpack.c.l.b16 %v4850
      %v5415 = vunpack.c.l.b16 %v4851
      %v5416 = vunpack.c.h.b16 %v4851
      %v5417 = vunpack.c.l.b16 %v4852
      %v5418 = vunpack.c.h.b16 %v4852
      %v5419 = vunpack.c.l.b16 %v4853
      %v5420 = vunpack.c.h.b16 %v4853
      %v5421 = vunpack.c.l.b16 %v4854
      %v5422 = vunpack.c.l.b16 %v4855
      %v5423 = vunpack.c.h.b16 %v4855
      %v5424 = vunpack.c.l.b16 %v4856
      %v5425 = vunpack.c.h.b16 %v4856
      %v5426 = vunpack.c.l.b16 %v4857
      %v5427 = vunpack.c.h.b16 %v4857
      %v5428 = vunpack.c.l.b16 %v4858
      %v5429 = vunpack.c.l.b16 %v4859
      %v5430 = vunpack.c.h.b16 %v4859
      %v5431 = vunpack.c.l.b16 %v4860
      %v5432 = vunpack.c.h.b16 %v4860
      %v5433 = vunpack.c.l.b16 %v4861
      %v5434 = vunpack.c.h.b16 %v4861
      %v5435 = vunpack.c.l.b16 %v4862
      %v5436 = vunpack.c.l.b16 %v4863
      %v5437 = vunpack.c.h.b16 %v4863
      %v5438 = vunpack.c.l.b16 %v4864
      %v5439 = vunpack.c.h.b16 %v4864
      %v5440 = vunpack.c.l.b16 %v4865
      %v5441 = vunpack.c.h.b16 %v4865
      %v5442 = vunpack.c.l.b16 %v4866
      %v5443 = vunpack.c.l.b16 %v4867
      %v5444 = vunpack.c.h.b16 %v4867
      %v5445 = vunpack.c.l.b16 %v4868
      %v5446 = vunpack.c.h.b16 %v4868
      %v5447 = vunpack.c.l.b16 %v4869
      %v5448 = vunpack.c.h.b16 %v4869
      %v5449 = vunpack.c.l.b16 %v4870
      %v5450 = vunpack.c.l.b16 %v4871
      %v5451 = vunpack.c.h.b16 %v4871
      %v5452 = vunpack.c.l.b16 %v4872
      %v5453 = vunpack.c.h.b16 %v4872
      %v5454 = vunpack.c.l.b16 %v4873
      %v5455 = vunpack.c.h.b16 %v4873
      %v5456 = vunpack.c.l.b16 %v4874
      %v5457 = vunpack.c.l.b16 %v4875
      %v5458 = vunpack.c.h.b16 %v4875
      %v5459 = vunpack.c.l.b16 %v4876
      %v5460 = vunpack.c.h.b16 %v4876
      %v5461 = vunpack.c.l.b16 %v4877
      %v5462 = vunpack.c.h.b16 %v4877
      %v5463 = vunpack.c.l.b16 %v4878
      %v5464 = vunpack.c.l.b16 %v4879
      %v5465 = vunpack.c.h.b16 %v4879
      %v5466 = vunpack.c.l.b16 %v4880
      %v5467 = vunpack.c.h.b16 %v4880
      %v5468 = vunpack.c.l.b16 %v4881
      %v5469 = vunpack.c.h.b16 %v4881
      %v5470 = vunpack.c.l.b16 %v4882
      %v5471 = vunpack.c.l.b16 %v4883
      %v5472 = vunpack.c.h.b16 %v4883
      %v5473 = vunpack.c.l.b16 %v4884
      %v5474 = vunpack.c.h.b16 %v4884
      %v5475 = vunpack.c.l.b16 %v4885
      %v5476 = vunpack.c.h.b16 %v4885
      %v5477 = vunpack.c.l.b16 %v4886
      %v5478 = vunpack.c.l.b16 %v4887
      %v5479 = vunpack.c.h.b16 %v4887
      %v5480 = vunpack.c.l.b16 %v4888
      %v5481 = vunpack.c.h.b16 %v4888
      %v5482 = vunpack.c.l.b16 %v4889
      %v5483 = vunpack.c.h.b16 %v4889
      %v5484 = vunpack.c.l.b16 %v4890
      %v5485 = vunpack.c.l.b16 %v4891
      %v5486 = vunpack.c.h.b16 %v4891
      %v5487 = vunpack.c.l.b16 %v4892
      %v5488 = vunpack.c.h.b16 %v4892
      %v5489 = vunpack.c.l.b16 %v4893
      %v5490 = vunpack.c.h.b16 %v4893
      %v5491 = vunpack.c.l.b16 %v4894
      %v5492 = vunpack.c.l.b16 %v4895
      %v5493 = vunpack.c.h.b16 %v4895
      %v5494 = vunpack.c.l.b16 %v4896
      %v5495 = vunpack.c.h.b16 %v4896
      %v5496 = vunpack.c.l.b16 %v4897
      %v5497 = vunpack.c.h.b16 %v4897
      %v5498 = vunpack.c.l.b16 %v4898
      %v5499 = vunpack.c.l.b16 %v4899
      %v5500 = vunpack.c.h.b16 %v4899
      %v5501 = vunpack.c.l.b16 %v4900
      %v5502 = vunpack.c.h.b16 %v4900
      %v5503 = vunpack.c.l.b16 %v4901
      %v5504 = vunpack.c.h.b16 %v4901
      %v5505 = vunpack.c.l.b16 %v4902
      %v5506 = vunpack.c.l.b16 %v4903
      %v5507 = vunpack.c.h.b16 %v4903
      %v5508 = vunpack.c.l.b16 %v4904
      %v5509 = vunpack.c.h.b16 %v4904
      %v5510 = vunpack.c.l.b16 %v4905
      %v5511 = vunpack.c.h.b16 %v4905
      %v5512 = vunpack.c.l.b16 %v4906
      %v5513 = vunpack.c.l.b16 %v4907
      %v5514 = vunpack.c.h.b16 %v4907
      %v5515 = vunpack.c.l.b16 %v4908
      %v5516 = vunpack.c.h.b16 %v4908
      %v5517 = vunpack.c.l.b16 %v4909
      %v5518 = vunpack.c.h.b16 %v4909
      %v5519 = vunpack.c.l.b16 %v4910
      %v5520 = vunpack.c.l.b16 %v4911
      %v5521 = vunpack.c.h.b16 %v4911
      %v5522 = vunpack.c.l.b16 %v4912
      %v5523 = vunpack.c.h.b16 %v4912
      %v5524 = vunpack.c.l.b16 %v4913
      %v5525 = vunpack.c.h.b16 %v4913
      %v5526 = vunpack.c.l.b16 %v4914
      %v5527 = vunpack.c.l.b16 %v4915
      %v5528 = vunpack.c.h.b16 %v4915
      %v5529 = vunpack.c.l.b16 %v4916
      %v5530 = vunpack.c.h.b16 %v4916
      %v5531 = vunpack.c.l.b16 %v4917
      %v5532 = vunpack.c.h.b16 %v4917
      %v5533 = vunpack.c.l.b16 %v4918
      %v5534 = vunpack.c.l.b16 %v4919
      %v5535 = vunpack.c.h.b16 %v4919
      %v5536 = vunpack.c.l.b16 %v4920
      %v5537 = vunpack.c.h.b16 %v4920
      %v5538 = vunpack.c.l.b16 %v4921
      %v5539 = vunpack.c.h.b16 %v4921
      %v5540 = vunpack.c.l.b16 %v4922
      %v5541 = vunpack.c.l.b16 %v4923
      %v5542 = vunpack.c.h.b16 %v4923
      %v5543 = vunpack.c.l.b16 %v4924
      %v5544 = vunpack.c.h.b16 %v4924
      %v5545 = vunpack.c.l.b16 %v4925
      %v5546 = vunpack.c.h.b16 %v4925
      %v5547 = vunpack.c.l.b16 %v4926
      %v5548 = vunpack.c.l.b16 %v4927
      %v5549 = vunpack.c.h.b16 %v4927
      %v5550 = vunpack.c.l.b16 %v4928
      %v5551 = vunpack.c.h.b16 %v4928
      %v5552 = vunpack.c.l.b16 %v4929
      %v5553 = vunpack.c.h.b16 %v4929
      %v5554 = vunpack.c.l.b16 %v4930
      %v5555 = vunpack.c.l.b16 %v4931
      %v5556 = vunpack.c.h.b16 %v4931
      %v5557 = vunpack.c.l.b16 %v4932
      %v5558 = vunpack.c.h.b16 %v4932
      %v5559 = vunpack.c.l.b16 %v4933
      %v5560 = vunpack.c.h.b16 %v4933
      %v5561 = vunpack.c.l.b16 %v4934
      %v5562 = vunpack.c.l.b16 %v4935
      %v5563 = vunpack.c.h.b16 %v4935
      %v5564 = vunpack.c.l.b16 %v4936
      %v5565 = vunpack.c.h.b16 %v4936
      %v5566 = vunpack.c.l.b16 %v4937
      %v5567 = vunpack.c.h.b16 %v4937
      %v5568 = vunpack.c.l.b16 %v4938
      %v5569 = vunpack.c.l.b16 %v4939
      %v5570 = vunpack.c.h.b16 %v4939
      %v5571 = vunpack.c.l.b16 %v4940
      %v5572 = vunpack.c.h.b16 %v4940
      %v5573 = vunpack.c.l.b16 %v4941
      %v5574 = vunpack.c.h.b16 %v4941
      %v5575 = vunpack.c.l.b16 %v4942
      %v5576 = vunpack.c.l.b16 %v4943
      %v5577 = vunpack.c.h.b16 %v4943
      %v5578 = vunpack.c.l.b16 %v4944
      %v5579 = vunpack.c.h.b16 %v4944
      %v5580 = vunpack.c.l.b16 %v4945
      %v5581 = vunpack.c.h.b16 %v4945
      %v5582 = vunpack.c.l.b16 %v4946
      %v5583 = vunpack.c.l.b16 %v4947
      %v5584 = vunpack.c.h.b16 %v4947
      %v5585 = vunpack.c.l.b16 %v4948
      %v5586 = vunpack.c.h.b16 %v4948
      %v5587 = vunpack.c.l.b16 %v4949
      %v5588 = vunpack.c.h.b16 %v4949
      %v5589 = vunpack.c.l.b16 %v4950
      %v5590 = vunpack.c.l.b16 %v4951
      %v5591 = vunpack.c.h.b16 %v4951
      %v5592 = vunpack.c.l.b16 %v4952
      %v5593 = vunpack.c.h.b16 %v4952
      %v5594 = vunpack.c.l.b16 %v4953
      %v5595 = vunpack.c.h.b16 %v4953
      %v5596 = vunpack.c.l.b16 %v4954
      %v5597 = vunpack.c.l.b16 %v4955
      %v5598 = vunpack.c.h.b16 %v4955
      %v5599 = vunpack.c.l.b16 %v4956
      %v5600 = vunpack.c.h.b16 %v4956
      %v5601 = vunpack.c.l.b16 %v4957
      %v5602 = vunpack.c.h.b16 %v4957
      %v5603 = vunpack.c.l.b16 %v4958
      %v5604 = vunpack.c.l.b16 %v4959
      %v5605 = vunpack.c.h.b16 %v4959
      %v5606 = vunpack.c.l.b16 %v4960
      %v5607 = vunpack.c.h.b16 %v4960
      %v5608 = vunpack.c.l.b16 %v4961
      %v5609 = vunpack.c.h.b16 %v4961
      %v5610 = vunpack.c.l.b16 %v4962
      %v5611 = vunpack.c.l.b16 %v4963
      %v5612 = vunpack.c.h.b16 %v4963
      %v5613 = vunpack.c.l.b16 %v4964
      %v5614 = vunpack.c.h.b16 %v4964
      %v5615 = vunpack.c.l.b16 %v4965
      %v5616 = vunpack.c.h.b16 %v4965
      %v5617 = vunpack.c.l.b16 %v4966
      %v5618 = vunpack.c.l.b16 %v4967
      %v5619 = vunpack.c.h.b16 %v4967
      %v5620 = vunpack.c.l.b16 %v4968
      %v5621 = vunpack.c.h.b16 %v4968
      %v5622 = vunpack.c.l.b16 %v4969
      %v5623 = vunpack.c.h.b16 %v4969
      %v5624 = vunpack.c.l.b16 %v4970
      %v5625 = vunpack.c.l.b16 %v4971
      %v5626 = vunpack.c.h.b16 %v4971
      %v5627 = vunpack.c.l.b16 %v4972
      %v5628 = vunpack.c.h.b16 %v4972
      %v5629 = vunpack.c.l.b16 %v4973
      %v5630 = vunpack.c.h.b16 %v4973
      %v5631 = vunpack.c.l.b16 %v4974
      %v5632 = vunpack.c.l.b16 %v4975
      %v5633 = vunpack.c.h.b16 %v4975
      %v5634 = vunpack.c.l.b16 %v4976
      %v5635 = vunpack.c.h.b16 %v4976
      %v5636 = vunpack.c.l.b16 %v4977
      %v5637 = vunpack.c.h.b16 %v4977
      %v5638 = vunpack.c.l.b16 %v4978
      %v5639 = vunpack.c.l.b16 %v4979
      %v5640 = vunpack.c.h.b16 %v4979
      %v5641 = vunpack.c.l.b16 %v4980
      %v5642 = vunpack.c.h.b16 %v4980
      %v5643 = vunpack.c.l.b16 %v4981
      %v5644 = vunpack.c.h.b16 %v4981
      %v5645 = vunpack.c.l.b16 %v4982
      %v5646 = vunpack.c.l.b16 %v4983
      %v5647 = vunpack.c.h.b16 %v4983
      %v5648 = vunpack.c.l.b16 %v4984
      %v5649 = vunpack.c.h.b16 %v4984
      %v5650 = vunpack.c.l.b16 %v4985
      %v5651 = vunpack.c.h.b16 %v4985
      %v5652 = vunpack.c.l.b16 %v4986
      %v5653 = vunpack.c.l.b16 %v4987
      %v5654 = vunpack.c.h.b16 %v4987
      %v5655 = vunpack.c.l.b16 %v4988
      %v5656 = vunpack.c.h.b16 %v4988
      %v5657 = vunpack.c.l.b16 %v4989
      %v5658 = vunpack.c.h.b16 %v4989
      %v5659 = vunpack.c.l.b16 %v4990
      %v5660 = vunpack.c.l.b16 %v4991
      %v5661 = vunpack.c.h.b16 %v4991
      %v5662 = vunpack.c.l.b16 %v4992
      %v5663 = vunpack.c.h.b16 %v4992
      %v5664 = vunpack.c.l.b16 %v4993
      %v5665 = vunpack.c.h.b16 %v4993
      %v5666 = vunpack.c.l.b16 %v4994
      %v5667 = vunpack.c.l.b16 %v4995
      %v5668 = vunpack.c.h.b16 %v4995
      %v5669 = vunpack.c.l.b16 %v4996
      %v5670 = vunpack.c.h.b16 %v4996
      %v5671 = vunpack.c.l.b16 %v4997
      %v5672 = vunpack.c.h.b16 %v4997
      %v5673 = vunpack.c.l.b16 %v4998
      %v5674 = vunpack.c.l.b16 %v4999
      %v5675 = vunpack.c.h.b16 %v4999
      %v5676 = vunpack.c.l.b16 %v5000
      %v5677 = vunpack.c.h.b16 %v5000
      %v5678 = vunpack.c.l.b16 %v5001
      %v5679 = vunpack.c.h.b16 %v5001
      %v5680 = vunpack.c.l.b16 %v5002
      %v5681 = vunpack.c.l.b16 %v5003
      %v5682 = vunpack.c.h.b16 %v5003
      %v5683 = vunpack.c.l.b16 %v5004
      %v5684 = vunpack.c.h.b16 %v5004
      %v5685 = vunpack.c.l.b16 %v5005
      %v5686 = vunpack.c.h.b16 %v5005
      %v5687 = vunpack.c.l.b16 %v5006
      %v5688 = vunpack.c.l.b16 %v5007
      %v5689 = vunpack.c.h.b16 %v5007
      %v5690 = vunpack.c.l.b16 %v5008
      %v5691 = vunpack.c.h.b16 %v5008
      %v5692 = vunpack.c.l.b16 %v5009
      %v5693 = vunpack.c.h.b16 %v5009
      %v5694 = vunpack.c.l.b16 %v5010
      %v5695 = vunpack.c.l.b16 %v5011
      %v5696 = vunpack.c.h.b16 %v5011
      %v5697 = vunpack.c.l.b16 %v5012
      %v5698 = vunpack.c.h.b16 %v5012
      %v5699 = vunpack.c.l.b16 %v5013
      %v5700 = vunpack.c.h.b16 %v5013
      %v5701 = vunpack.c.l.b16 %v5014
      %v5702 = vunpack.c.l.b16 %v5015
      %v5703 = vunpack.c.h.b16 %v5015
      %v5704 = vunpack.c.l.b16 %v5016
      %v5705 = vunpack.c.h.b16 %v5016
      %v5706 = vunpack.c.l.b16 %v5017
      %v5707 = vunpack.c.h.b16 %v5017
      %v5708 = vunpack.c.l.b16 %v5018
      %v5709 = vunpack.c.l.b16 %v5019
      %v5710 = vunpack.c.h.b16 %v5019
      %v5711 = vunpack.c.l.b16 %v5020
      %v5712 = vunpack.c.h.b16 %v5020
      %v5713 = vunpack.c.l.b16 %v5021
      %v5714 = vunpack.c.h.b16 %v5021
      %v5715 = vunpack.c.l.b16 %v5022
      %v5716 = vunpack.c.l.b16 %v5023
      %v5717 = vunpack.c.h.b16 %v5023
      %v5718 = vunpack.c.l.b16 %v5024
      %v5719 = vunpack.c.h.b16 %v5024
      %v5720 = vunpack.c.l.b16 %v5025
      %v5721 = vunpack.c.h.b16 %v5025
      %v5722 = vunpack.c.l.b16 %v5026
      %v5723 = vunpack.c.l.b16 %v5027
      %v5724 = vunpack.c.h.b16 %v5027
      %v5725 = vunpack.c.l.b16 %v5028
      %v5726 = vunpack.c.h.b16 %v5028
      %v5727 = vunpack.c.l.b16 %v5029
      %v5728 = vunpack.c.h.b16 %v5029
      %v5729 = vunpack.c.l.b16 %v5030
      %v5730 = vunpack.c.l.b16 %v5031
      %v5731 = vunpack.c.h.b16 %v5031
      %v5732 = vunpack.c.l.b16 %v5032
      %v5733 = vunpack.c.h.b16 %v5032
      %v5734 = vunpack.c.l.b16 %v5033
      %v5735 = vunpack.c.h.b16 %v5033
      %v5736 = vunpack.c.l.b16 %v5034
      %v5737 = vunpack.c.l.b16 %v5035
      %v5738 = vunpack.c.h.b16 %v5035
      %v5739 = vunpack.c.l.b16 %v5036
      %v5740 = vunpack.c.h.b16 %v5036
      %v5741 = vunpack.c.l.b16 %v5037
      %v5742 = vunpack.c.h.b16 %v5037
      %v5743 = vunpack.c.l.b16 %v5038
      %v5744 = vunpack.c.l.b16 %v5039
      %v5745 = vunpack.c.h.b16 %v5039
      %v5746 = vunpack.c.l.b16 %v5040
      %v5747 = vunpack.c.h.b16 %v5040
      %v5748 = vunpack.c.l.b16 %v5041
      %v5749 = vunpack.c.h.b16 %v5041
      %v5750 = vunpack.c.l.b16 %v5042
      %v5751 = vunpack.c.l.b16 %v5043
      %v5752 = vunpack.c.h.b16 %v5043
      %v5753 = vunpack.c.l.b16 %v5044
      %v5754 = vunpack.c.h.b16 %v5044
      %v5755 = vunpack.c.l.b16 %v5045
      %v5756 = vunpack.c.h.b16 %v5045
      %v5757 = vunpack.c.l.b16 %v5046
      %v5758 = vunpack.c.l.b16 %v5047
      %v5759 = vunpack.c.h.b16 %v5047
      %v5760 = vunpack.c.l.b16 %v5048
      %v5761 = vunpack.c.h.b16 %v5048
      %v5762 = vunpack.c.l.b16 %v5049
      %v5763 = vunpack.c.h.b16 %v5049
      %v5764 = vunpack.c.l.b16 %v5050
      %v5765 = vunpack.c.l.b16 %v5051
      %v5766 = vunpack.c.h.b16 %v5051
      %v5767 = vunpack.c.l.b16 %v5052
      %v5768 = vunpack.c.h.b16 %v5052
      %v5769 = vunpack.c.l.b16 %v5053
      %v5770 = vunpack.c.h.b16 %v5053
      %v5771 = vunpack.c.l.b16 %v5054
      %v5772 = vunpack.c.l.b16 %v5055
      %v5773 = vunpack.c.h.b16 %v5055
      %v5774 = vunpack.c.l.b16 %v5056
      %v5775 = vunpack.c.h.b16 %v5056
      %v5776 = vunpack.c.l.b16 %v5057
      %v5777 = vunpack.c.h.b16 %v5057
      %v5778 = vunpack.c.l.b16 %v5058
      %v5779 = vpack.c.b16 %v5338, %v5331
      %v5780 = vpack.c.b16 %v5339, %v5332
      %v5781 = vpack.c.b16 %v5340, %v5333
      %v5782 = vpack.c.b16 %v5341, %v5334
      %v5783 = vpack.c.b16 %v5342, %v5335
      %v5784 = vpack.c.b16 %v5343, %v5336
      %v5785 = vpack.c.b16 %v5344, %v5337
      %v5786 = vpack.c.b16 %v5352, %v5345
      %v5787 = vpack.c.b16 %v5353, %v5346
      %v5788 = vpack.c.b16 %v5354, %v5347
      %v5789 = vpack.c.b16 %v5355, %v5348
      %v5790 = vpack.c.b16 %v5356, %v5349
      %v5791 = vpack.c.b16 %v5357, %v5350
      %v5792 = vpack.c.b16 %v5358, %v5351
      %v5793 = vpack.c.b16 %v5366, %v5359
      %v5794 = vpack.c.b16 %v5367, %v5360
      %v5795 = vpack.c.b16 %v5368, %v5361
      %v5796 = vpack.c.b16 %v5369, %v5362
      %v5797 = vpack.c.b16 %v5370, %v5363
      %v5798 = vpack.c.b16 %v5371, %v5364
      %v5799 = vpack.c.b16 %v5372, %v5365
      %v5800 = vpack.c.b16 %v5380, %v5373
      %v5801 = vpack.c.b16 %v5381, %v5374
      %v5802 = vpack.c.b16 %v5382, %v5375
      %v5803 = vpack.c.b16 %v5383, %v5376
      %v5804 = vpack.c.b16 %v5384, %v5377
      %v5805 = vpack.c.b16 %v5385, %v5378
      %v5806 = vpack.c.b16 %v5386, %v5379
      %v5807 = vpack.c.b16 %v5394, %v5387
      %v5808 = vpack.c.b16 %v5395, %v5388
      %v5809 = vpack.c.b16 %v5396, %v5389
      %v5810 = vpack.c.b16 %v5397, %v5390
      %v5811 = vpack.c.b16 %v5398, %v5391
      %v5812 = vpack.c.b16 %v5399, %v5392
      %v5813 = vpack.c.b16 %v5400, %v5393
      %v5814 = vpack.c.b16 %v5408, %v5401
      %v5815 = vpack.c.b16 %v5409, %v5402
      %v5816 = vpack.c.b16 %v5410, %v5403
      %v5817 = vpack.c.b16 %v5411, %v5404
      %v5818 = vpack.c.b16 %v5412, %v5405
      %v5819 = vpack.c.b16 %v5413, %v5406
      %v5820 = vpack.c.b16 %v5414, %v5407
      %v5821 = vpack.c.b16 %v5422, %v5415
      %v5822 = vpack.c.b16 %v5423, %v5416
      %v5823 = vpack.c.b16 %v5424, %v5417
      %v5824 = vpack.c.b16 %v5425, %v5418
      %v5825 = vpack.c.b16 %v5426, %v5419
      %v5826 = vpack.c.b16 %v5427, %v5420
      %v5827 = vpack.c.b16 %v5428, %v5421
      %v5828 = vpack.c.b16 %v5436, %v5429
      %v5829 = vpack.c.b16 %v5437, %v5430
      %v5830 = vpack.c.b16 %v5438, %v5431
      %v5831 = vpack.c.b16 %v5439, %v5432
      %v5832 = vpack.c.b16 %v5440, %v5433
      %v5833 = vpack.c.b16 %v5441, %v5434
      %v5834 = vpack.c.b16 %v5442, %v5435
      %v5835 = vpack.c.b16 %v5450, %v5443
      %v5836 = vpack.c.b16 %v5451, %v5444
      %v5837 = vpack.c.b16 %v5452, %v5445
      %v5838 = vpack.c.b16 %v5453, %v5446
      %v5839 = vpack.c.b16 %v5454, %v5447
      %v5840 = vpack.c.b16 %v5455, %v5448
      %v5841 = vpack.c.b16 %v5456, %v5449
      %v5842 = vpack.c.b16 %v5464, %v5457
      %v5843 = vpack.c.b16 %v5465, %v5458
      %v5844 = vpack.c.b16 %v5466, %v5459
      %v5845 = vpack.c.b16 %v5467, %v5460
      %v5846 = vpack.c.b16 %v5468, %v5461
      %v5847 = vpack.c.b16 %v5469, %v5462
      %v5848 = vpack.c.b16 %v5470, %v5463
      %v5849 = vpack.c.b16 %v5478, %v5471
      %v5850 = vpack.c.b16 %v5479, %v5472
      %v5851 = vpack.c.b16 %v5480, %v5473
      %v5852 = vpack.c.b16 %v5481, %v5474
      %v5853 = vpack.c.b16 %v5482, %v5475
      %v5854 = vpack.c.b16 %v5483, %v5476
      %v5855 = vpack.c.b16 %v5484, %v5477
      %v5856 = vpack.c.b16 %v5492, %v5485
      %v5857 = vpack.c.b16 %v5493, %v5486
      %v5858 = vpack.c.b16 %v5494, %v5487
      %v5859 = vpack.c.b16 %v5495, %v5488
      %v5860 = vpack.c.b16 %v5496, %v5489
      %v5861 = vpack.c.b16 %v5497, %v5490
      %v5862 = vpack.c.b16 %v5498, %v5491
      %v5863 = vpack.c.b16 %v5506, %v5499
      %v5864 = vpack.c.b16 %v5507, %v5500
      %v5865 = vpack.c.b16 %v5508, %v5501
      %v5866 = vpack.c.b16 %v5509, %v5502
      %v5867 = vpack.c.b16 %v5510, %v5503
      %v5868 = vpack.c.b16 %v5511, %v5504
      %v5869 = vpack.c.b16 %v5512, %v5505
      %v5870 = vpack.c.b16 %v5520, %v5513
      %v5871 = vpack.c.b16 %v5521, %v5514
      %v5872 = vpack.c.b16 %v5522, %v5515
      %v5873 = vpack.c.b16 %v5523, %v5516
      %v5874 = vpack.c.b16 %v5524, %v5517
      %v5875 = vpack.c.b16 %v5525, %v5518
      %v5876 = vpack.c.b16 %v5526, %v5519
      %v5877 = vpack.c.b16 %v5534, %v5527
      %v5878 = vpack.c.b16 %v5535, %v5528
      %v5879 = vpack.c.b16 %v5536, %v5529
      %v5880 = vpack.c.b16 %v5537, %v5530
      %v5881 = vpack.c.b16 %v5538, %v5531
      %v5882 = vpack.c.b16 %v5539, %v5532
      %v5883 = vpack.c.b16 %v5540, %v5533
      %v5884 = vpack.c.b16 %v5548, %v5541
      %v5885 = vpack.c.b16 %v5549, %v5542
      %v5886 = vpack.c.b16 %v5550, %v5543
      %v5887 = vpack.c.b16 %v5551, %v5544
      %v5888 = vpack.c.b16 %v5552, %v5545
      %v5889 = vpack.c.b16 %v5553, %v5546
      %v5890 = vpack.c.b16 %v5554, %v5547
      %v5891 = vpack.c.b16 %v5562, %v5555
      %v5892 = vpack.c.b16 %v5563, %v5556
      %v5893 = vpack.c.b16 %v5564, %v5557
      %v5894 = vpack.c.b16 %v5565, %v5558
      %v5895 = vpack.c.b16 %v5566, %v5559
      %v5896 = vpack.c.b16 %v5567, %v5560
      %v5897 = vpack.c.b16 %v5568, %v5561
      %v5898 = vpack.c.b16 %v5576, %v5569
      %v5899 = vpack.c.b16 %v5577, %v5570
      %v5900 = vpack.c.b16 %v5578, %v5571
      %v5901 = vpack.c.b16 %v5579, %v5572
      %v5902 = vpack.c.b16 %v5580, %v5573
      %v5903 = vpack.c.b16 %v5581, %v5574
      %v5904 = vpack.c.b16 %v5582, %v5575
      %v5905 = vpack.c.b16 %v5590, %v5583
      %v5906 = vpack.c.b16 %v5591, %v5584
      %v5907 = vpack.c.b16 %v5592, %v5585
      %v5908 = vpack.c.b16 %v5593, %v5586
      %v5909 = vpack.c.b16 %v5594, %v5587
      %v5910 = vpack.c.b16 %v5595, %v5588
      %v5911 = vpack.c.b16 %v5596, %v5589
      %v5912 = vpack.c.b16 %v5604, %v5597
      %v5913 = vpack.c.b16 %v5605, %v5598
      %v5914 = vpack.c.b16 %v5606, %v5599
      %v5915 = vpack.c.b16 %v5607, %v5600
      %v5916 = vpack.c.b16 %v5608, %v5601
      %v5917 = vpack.c.b16 %v5609, %v5602
      %v5918 = vpack.c.b16 %v5610, %v5603
      %v5919 = vpack.c.b16 %v5618, %v5611
      %v5920 = vpack.c.b16 %v5619, %v5612
      %v5921 = vpack.c.b16 %v5620, %v5613
      %v5922 = vpack.c.b16 %v5621, %v5614
      %v5923 = vpack.c.b16 %v5622, %v5615
      %v5924 = vpack.c.b16 %v5623, %v5616
      %v5925 = vpack.c.b16 %v5624, %v5617
      %v5926 = vpack.c.b16 %v5632, %v5625
      %v5927 = vpack.c.b16 %v5633, %v5626
      %v5928 = vpack.c.b16 %v5634, %v5627
      %v5929 = vpack.c.b16 %v5635, %v5628
      %v5930 = vpack.c.b16 %v5636, %v5629
      %v5931 = vpack.c.b16 %v5637, %v5630
      %v5932 = vpack.c.b16 %v5638, %v5631
      %v5933 = vpack.c.b16 %v5646, %v5639
      %v5934 = vpack.c.b16 %v5647, %v5640
      %v5935 = vpack.c.b16 %v5648, %v5641
      %v5936 = vpack.c.b16 %v5649, %v5642
      %v5937 = vpack.c.b16 %v5650, %v5643
      %v5938 = vpack.c.b16 %v5651, %v5644
      %v5939 = vpack.c.b16 %v5652, %v5645
      %v5940 = vpack.c.b16 %v5660, %v5653
      %v5941 = vpack.c.b16 %v5661, %v5654
      %v5942 = vpack.c.b16 %v5662, %v5655
      %v5943 = vpack.c.b16 %v5663, %v5656
      %v5944 = vpack.c.b16 %v5664, %v5657
      %v5945 = vpack.c.b16 %v5665, %v5658
      %v5946 = vpack.c.b16 %v5666, %v5659
      %v5947 = vpack.c.b16 %v5674, %v5667
      %v5948 = vpack.c.b16 %v5675, %v5668
      %v5949 = vpack.c.b16 %v5676, %v5669
      %v5950 = vpack.c.b16 %v5677, %v5670
      %v5951 = vpack.c.b16 %v5678, %v5671
      %v5952 = vpack.c.b16 %v5679, %v5672
      %v5953 = vpack.c.b16 %v5680, %v5673
      %v5954 = vpack.c.b16 %v5688, %v5681
      %v5955 = vpack.c.b16 %v5689, %v5682
      %v5956 = vpack.c.b16 %v5690, %v5683
      %v5957 = vpack.c.b16 %v5691, %v5684
      %v5958 = vpack.c.b16 %v5692, %v5685
      %v5959 = vpack.c.b16 %v5693, %v5686
      %v5960 = vpack.c.b16 %v5694, %v5687
      %v5961 = vpack.c.b16 %v5702, %v5695
      %v5962 = vpack.c.b16 %v5703, %v5696
      %v5963 = vpack.c.b16 %v5704, %v5697
      %v5964 = vpack.c.b16 %v5705, %v5698
      %v5965 = vpack.c.b16 %v5706, %v5699
      %v5966 = vpack.c.b16 %v5707, %v5700
      %v5967 = vpack.c.b16 %v5708, %v5701
      %v5968 = vpack.c.b16 %v5716, %v5709
      %v5969 = vpack.c.b16 %v5717, %v5710
      %v5970 = vpack.c.b16 %v5718, %v5711
      %v5971 = vpack.c.b16 %v5719, %v5712
      %v5972 = vpack.c.b16 %v5720, %v5713
      %v5973 = vpack.c.b16 %v5721, %v5714
      %v5974 = vpack.c.b16 %v5722, %v5715
      %v5975 = vpack.c.b16 %v5730, %v5723
      %v5976 = vpack.c.b16 %v5731, %v5724
      %v5977 = vpack.c.b16 %v5732, %v5725
      %v5978 = vpack.c.b16 %v5733, %v5726
      %v5979 = vpack.c.b16 %v5734, %v5727
      %v5980 = vpack.c.b16 %v5735, %v5728
      %v5981 = vpack.c.b16 %v5736, %v5729
      %v5982 = vpack.c.b16 %v5744, %v5737
      %v5983 = vpack.c.b16 %v5745, %v5738
      %v5984 = vpack.c.b16 %v5746, %v5739
      %v5985 = vpack.c.b16 %v5747, %v5740
      %v5986 = vpack.c.b16 %v5748, %v5741
      %v5987 = vpack.c.b16 %v5749, %v5742
      %v5988 = vpack.c.b16 %v5750, %v5743
      %v5989 = vpack.c.b16 %v5758, %v5751
      %v5990 = vpack.c.b16 %v5759, %v5752
      %v5991 = vpack.c.b16 %v5760, %v5753
      %v5992 = vpack.c.b16 %v5761, %v5754
      %v5993 = vpack.c.b16 %v5762, %v5755
      %v5994 = vpack.c.b16 %v5763, %v5756
      %v5995 = vpack.c.b16 %v5764, %v5757
      %v5996 = vpack.c.b16 %v5772, %v5765
      %v5997 = vpack.c.b16 %v5773, %v5766
      %v5998 = vpack.c.b16 %v5774, %v5767
      %v5999 = vpack.c.b16 %v5775, %v5768
      %v6000 = vpack.c.b16 %v5776, %v5769
      %v6001 = vpack.c.b16 %v5777, %v5770
      %v6002 = vpack.c.b16 %v5778, %v5771
      %6227 = vmatpush.bf16.msra.mxu0 %v5828
      %6228 = vmatpush.bf16.msra.mxu0 %v5821
      %6229 = vmatpush.bf16.msra.mxu0 %v5814
      %6230 = vmatpush.bf16.msra.mxu0 %v5807
      %6231 = vmatpush.bf16.msra.mxu0 %v5800
      %6232 = vmatpush.bf16.msra.mxu0 %v5793
      %6233 = vmatpush.bf16.msra.mxu0 %v5786
      %6234 = vmatpush.bf16.msra.mxu0 %v5779
      %6235 = vmatmul.bf16.gmra.mxu0 %v4771
      %v6236 = vpop.f32.mrf.mxu0
      %v6237 = vadd.f32 %v5061, %v6236
      %v6238 = vpop.f32.mrf.mxu0
      %v6239 = vadd.f32 %v5061, %v6238
      %6240 = vmatmul.bf16.gmra.mxu0 %v4775
      %v6241 = vpop.f32.mrf.mxu0
      %v6242 = vadd.f32 %v5061, %v6241
      %v6243 = vpop.f32.mrf.mxu0
      %v6244 = vadd.f32 %v5061, %v6243
      %6245 = vmatmul.bf16.gmra.mxu0 %v4779
      %v6246 = vpop.f32.mrf.mxu0
      %v6247 = vadd.f32 %v5061, %v6246
      %v6248 = vpop.f32.mrf.mxu0
      %v6249 = vadd.f32 %v5061, %v6248
      %6250 = vmatmul.bf16.gmra.mxu0 %v4783
      %v6251 = vpop.f32.mrf.mxu0
      %v6252 = vadd.f32 %v5061, %v6251
      %v6253 = vpop.f32.mrf.mxu0
      %v6254 = vadd.f32 %v5061, %v6253
      %6255 = vmatmul.bf16.gmra.mxu0 %v4787
      %v6256 = vpop.f32.mrf.mxu0
      %v6257 = vadd.f32 %v5061, %v6256
      %v6258 = vpop.f32.mrf.mxu0
      %v6259 = vadd.f32 %v5061, %v6258
      %6260 = vmatmul.bf16.gmra.mxu0 %v4791
      %v6261 = vpop.f32.mrf.mxu0
      %v6262 = vadd.f32 %v5061, %v6261
      %v6263 = vpop.f32.mrf.mxu0
      %v6264 = vadd.f32 %v5061, %v6263
      %6265 = vmatmul.bf16.gmra.mxu0 %v4795
      %v6266 = vpop.f32.mrf.mxu0
      %v6267 = vadd.f32 %v5061, %v6266
      %v6268 = vpop.f32.mrf.mxu0
      %v6269 = vadd.f32 %v5061, %v6268
      %6270 = vmatmul.bf16.gmra.mxu0 %v4799
      %v6271 = vpop.f32.mrf.mxu0
      %v6272 = vadd.f32 %v5061, %v6271
      %v6273 = vpop.f32.mrf.mxu0
      %v6274 = vadd.f32 %v5061, %v6273
      %6275 = vdwg.mxu0
      %6276 = vmatpush.bf16.msra.mxu0 %v5884
      %6277 = vmatpush.bf16.msra.mxu0 %v5877
      %6278 = vmatpush.bf16.msra.mxu0 %v5870
      %6279 = vmatpush.bf16.msra.mxu0 %v5863
      %6280 = vmatpush.bf16.msra.mxu0 %v5856
      %6281 = vmatpush.bf16.msra.mxu0 %v5849
      %6282 = vmatpush.bf16.msra.mxu0 %v5842
      %6283 = vmatpush.bf16.msra.mxu0 %v5835
      %6284 = vmatmul.bf16.gmra.mxu0 %v4772
      %v6285 = vpop.f32.mrf.mxu0
      %v6286 = vadd.f32 %v6237, %v6285
      %v6287 = vpop.f32.mrf.mxu0
      %v6288 = vadd.f32 %v6239, %v6287
      %6289 = vmatmul.bf16.gmra.mxu0 %v4776
      %v6290 = vpop.f32.mrf.mxu0
      %v6291 = vadd.f32 %v6242, %v6290
      %v6292 = vpop.f32.mrf.mxu0
      %v6293 = vadd.f32 %v6244, %v6292
      %6294 = vmatmul.bf16.gmra.mxu0 %v4780
      %v6295 = vpop.f32.mrf.mxu0
      %v6296 = vadd.f32 %v6247, %v6295
      %v6297 = vpop.f32.mrf.mxu0
      %v6298 = vadd.f32 %v6249, %v6297
      %6299 = vmatmul.bf16.gmra.mxu0 %v4784
      %v6300 = vpop.f32.mrf.mxu0
      %v6301 = vadd.f32 %v6252, %v6300
      %v6302 = vpop.f32.mrf.mxu0
      %v6303 = vadd.f32 %v6254, %v6302
      %6304 = vmatmul.bf16.gmra.mxu0 %v4788
      %v6305 = vpop.f32.mrf.mxu0
      %v6306 = vadd.f32 %v6257, %v6305
      %v6307 = vpop.f32.mrf.mxu0
      %v6308 = vadd.f32 %v6259, %v6307
      %6309 = vmatmul.bf16.gmra.mxu0 %v4792
      %v6310 = vpop.f32.mrf.mxu0
      %v6311 = vadd.f32 %v6262, %v6310
      %v6312 = vpop.f32.mrf.mxu0
      %v6313 = vadd.f32 %v6264, %v6312
      %6314 = vmatmul.bf16.gmra.mxu0 %v4796
      %v6315 = vpop.f32.mrf.mxu0
      %v6316 = vadd.f32 %v6267, %v6315
      %v6317 = vpop.f32.mrf.mxu0
      %v6318 = vadd.f32 %v6269, %v6317
      %6319 = vmatmul.bf16.gmra.mxu0 %v4800
      %v6320 = vpop.f32.mrf.mxu0
      %v6321 = vadd.f32 %v6272, %v6320
      %v6322 = vpop.f32.mrf.mxu0
      %v6323 = vadd.f32 %v6274, %v6322
      %6324 = vdwg.mxu0
      %6325 = vmatpush.bf16.msra.mxu0 %v5940
      %6326 = vmatpush.bf16.msra.mxu0 %v5933
      %6327 = vmatpush.bf16.msra.mxu0 %v5926
      %6328 = vmatpush.bf16.msra.mxu0 %v5919
      %6329 = vmatpush.bf16.msra.mxu0 %v5912
      %6330 = vmatpush.bf16.msra.mxu0 %v5905
      %6331 = vmatpush.bf16.msra.mxu0 %v5898
      %6332 = vmatpush.bf16.msra.mxu0 %v5891
      %6333 = vmatmul.bf16.gmra.mxu0 %v4773
      %v6334 = vpop.f32.mrf.mxu0
      %v6335 = vadd.f32 %v6286, %v6334
      %v6336 = vpop.f32.mrf.mxu0
      %v6337 = vadd.f32 %v6288, %v6336
      %6338 = vmatmul.bf16.gmra.mxu0 %v4777
      %v6339 = vpop.f32.mrf.mxu0
      %v6340 = vadd.f32 %v6291, %v6339
      %v6341 = vpop.f32.mrf.mxu0
      %v6342 = vadd.f32 %v6293, %v6341
      %6343 = vmatmul.bf16.gmra.mxu0 %v4781
      %v6344 = vpop.f32.mrf.mxu0
      %v6345 = vadd.f32 %v6296, %v6344
      %v6346 = vpop.f32.mrf.mxu0
      %v6347 = vadd.f32 %v6298, %v6346
      %6348 = vmatmul.bf16.gmra.mxu0 %v4785
      %v6349 = vpop.f32.mrf.mxu0
      %v6350 = vadd.f32 %v6301, %v6349
      %v6351 = vpop.f32.mrf.mxu0
      %v6352 = vadd.f32 %v6303, %v6351
      %6353 = vmatmul.bf16.gmra.mxu0 %v4789
      %v6354 = vpop.f32.mrf.mxu0
      %v6355 = vadd.f32 %v6306, %v6354
      %v6356 = vpop.f32.mrf.mxu0
      %v6357 = vadd.f32 %v6308, %v6356
      %6358 = vmatmul.bf16.gmra.mxu0 %v4793
      %v6359 = vpop.f32.mrf.mxu0
      %v6360 = vadd.f32 %v6311, %v6359
      %v6361 = vpop.f32.mrf.mxu0
      %v6362 = vadd.f32 %v6313, %v6361
      %6363 = vmatmul.bf16.gmra.mxu0 %v4797
      %v6364 = vpop.f32.mrf.mxu0
      %v6365 = vadd.f32 %v6316, %v6364
      %v6366 = vpop.f32.mrf.mxu0
      %v6367 = vadd.f32 %v6318, %v6366
      %6368 = vmatmul.bf16.gmra.mxu0 %v4801
      %v6369 = vpop.f32.mrf.mxu0
      %v6370 = vadd.f32 %v6321, %v6369
      %v6371 = vpop.f32.mrf.mxu0
      %v6372 = vadd.f32 %v6323, %v6371
      %6373 = vdwg.mxu0
      %6374 = vmatpush.bf16.msra.mxu0 %v5996
      %6375 = vmatpush.bf16.msra.mxu0 %v5989
      %6376 = vmatpush.bf16.msra.mxu0 %v5982
      %6377 = vmatpush.bf16.msra.mxu0 %v5975
      %6378 = vmatpush.bf16.msra.mxu0 %v5968
      %6379 = vmatpush.bf16.msra.mxu0 %v5961
      %6380 = vmatpush.bf16.msra.mxu0 %v5954
      %6381 = vmatpush.bf16.msra.mxu0 %v5947
      %6382 = vmatmul.bf16.gmra.mxu0 %v4774
      %v6383 = vpop.f32.mrf.mxu0
      %v6384 = vadd.f32 %v6335, %v6383
      %v6385 = vpop.f32.mrf.mxu0
      %v6386 = vadd.f32 %v6337, %v6385
      %6387 = vmatmul.bf16.gmra.mxu0 %v4778
      %v6388 = vpop.f32.mrf.mxu0
      %v6389 = vadd.f32 %v6340, %v6388
      %v6390 = vpop.f32.mrf.mxu0
      %v6391 = vadd.f32 %v6342, %v6390
      %6392 = vmatmul.bf16.gmra.mxu0 %v4782
      %v6393 = vpop.f32.mrf.mxu0
      %v6394 = vadd.f32 %v6345, %v6393
      %v6395 = vpop.f32.mrf.mxu0
      %v6396 = vadd.f32 %v6347, %v6395
      %6397 = vmatmul.bf16.gmra.mxu0 %v4786
      %v6398 = vpop.f32.mrf.mxu0
      %v6399 = vadd.f32 %v6350, %v6398
      %v6400 = vpop.f32.mrf.mxu0
      %v6401 = vadd.f32 %v6352, %v6400
      %6402 = vmatmul.bf16.gmra.mxu0 %v4790
      %v6403 = vpop.f32.mrf.mxu0
      %v6404 = vadd.f32 %v6355, %v6403
      %v6405 = vpop.f32.mrf.mxu0
      %v6406 = vadd.f32 %v6357, %v6405
      %6407 = vmatmul.bf16.gmra.mxu0 %v4794
      %v6408 = vpop.f32.mrf.mxu0
      %v6409 = vadd.f32 %v6360, %v6408
      %v6410 = vpop.f32.mrf.mxu0
      %v6411 = vadd.f32 %v6362, %v6410
      %6412 = vmatmul.bf16.gmra.mxu0 %v4798
      %v6413 = vpop.f32.mrf.mxu0
      %v6414 = vadd.f32 %v6365, %v6413
      %v6415 = vpop.f32.mrf.mxu0
      %v6416 = vadd.f32 %v6367, %v6415
      %6417 = vmatmul.bf16.gmra.mxu0 %v4802
      %v6418 = vpop.f32.mrf.mxu0
      %v6419 = vadd.f32 %v6370, %v6418
      %v6420 = vpop.f32.mrf.mxu0
      %v6421 = vadd.f32 %v6372, %v6420
      %6422 = vdwg.mxu0
      %6423 = vmatpush.bf16.msra.mxu0 %v5829
      %6424 = vmatpush.bf16.msra.mxu0 %v5822
      %6425 = vmatpush.bf16.msra.mxu0 %v5815
      %6426 = vmatpush.bf16.msra.mxu0 %v5808
      %6427 = vmatpush.bf16.msra.mxu0 %v5801
      %6428 = vmatpush.bf16.msra.mxu0 %v5794
      %6429 = vmatpush.bf16.msra.mxu0 %v5787
      %6430 = vmatpush.bf16.msra.mxu0 %v5780
      %6431 = vmatmul.bf16.gmra.mxu0 %v4771
      %v6432 = vpop.f32.mrf.mxu0
      %v6433 = vadd.f32 %v5062, %v6432
      %v6434 = vpop.f32.mrf.mxu0
      %v6435 = vadd.f32 %v5062, %v6434
      %6436 = vmatmul.bf16.gmra.mxu0 %v4775
      %v6437 = vpop.f32.mrf.mxu0
      %v6438 = vadd.f32 %v5062, %v6437
      %v6439 = vpop.f32.mrf.mxu0
      %v6440 = vadd.f32 %v5062, %v6439
      %6441 = vmatmul.bf16.gmra.mxu0 %v4779
      %v6442 = vpop.f32.mrf.mxu0
      %v6443 = vadd.f32 %v5062, %v6442
      %v6444 = vpop.f32.mrf.mxu0
      %v6445 = vadd.f32 %v5062, %v6444
      %6446 = vmatmul.bf16.gmra.mxu0 %v4783
      %v6447 = vpop.f32.mrf.mxu0
      %v6448 = vadd.f32 %v5062, %v6447
      %v6449 = vpop.f32.mrf.mxu0
      %v6450 = vadd.f32 %v5062, %v6449
      %6451 = vmatmul.bf16.gmra.mxu0 %v4787
      %v6452 = vpop.f32.mrf.mxu0
      %v6453 = vadd.f32 %v5062, %v6452
      %v6454 = vpop.f32.mrf.mxu0
      %v6455 = vadd.f32 %v5062, %v6454
      %6456 = vmatmul.bf16.gmra.mxu0 %v4791
      %v6457 = vpop.f32.mrf.mxu0
      %v6458 = vadd.f32 %v5062, %v6457
      %v6459 = vpop.f32.mrf.mxu0
      %v6460 = vadd.f32 %v5062, %v6459
      %6461 = vmatmul.bf16.gmra.mxu0 %v4795
      %v6462 = vpop.f32.mrf.mxu0
      %v6463 = vadd.f32 %v5062, %v6462
      %v6464 = vpop.f32.mrf.mxu0
      %v6465 = vadd.f32 %v5062, %v6464
      %6466 = vmatmul.bf16.gmra.mxu0 %v4799
      %v6467 = vpop.f32.mrf.mxu0
      %v6468 = vadd.f32 %v5062, %v6467
      %v6469 = vpop.f32.mrf.mxu0
      %v6470 = vadd.f32 %v5062, %v6469
      %6471 = vdwg.mxu0
      %6472 = vmatpush.bf16.msra.mxu0 %v5885
      %6473 = vmatpush.bf16.msra.mxu0 %v5878
      %6474 = vmatpush.bf16.msra.mxu0 %v5871
      %6475 = vmatpush.bf16.msra.mxu0 %v5864
      %6476 = vmatpush.bf16.msra.mxu0 %v5857
      %6477 = vmatpush.bf16.msra.mxu0 %v5850
      %6478 = vmatpush.bf16.msra.mxu0 %v5843
      %6479 = vmatpush.bf16.msra.mxu0 %v5836
      %6480 = vmatmul.bf16.gmra.mxu0 %v4772
      %v6481 = vpop.f32.mrf.mxu0
      %v6482 = vadd.f32 %v6433, %v6481
      %v6483 = vpop.f32.mrf.mxu0
      %v6484 = vadd.f32 %v6435, %v6483
      %6485 = vmatmul.bf16.gmra.mxu0 %v4776
      %v6486 = vpop.f32.mrf.mxu0
      %v6487 = vadd.f32 %v6438, %v6486
      %v6488 = vpop.f32.mrf.mxu0
      %v6489 = vadd.f32 %v6440, %v6488
      %6490 = vmatmul.bf16.gmra.mxu0 %v4780
      %v6491 = vpop.f32.mrf.mxu0
      %v6492 = vadd.f32 %v6443, %v6491
      %v6493 = vpop.f32.mrf.mxu0
      %v6494 = vadd.f32 %v6445, %v6493
      %6495 = vmatmul.bf16.gmra.mxu0 %v4784
      %v6496 = vpop.f32.mrf.mxu0
      %v6497 = vadd.f32 %v6448, %v6496
      %v6498 = vpop.f32.mrf.mxu0
      %v6499 = vadd.f32 %v6450, %v6498
      %6500 = vmatmul.bf16.gmra.mxu0 %v4788
      %v6501 = vpop.f32.mrf.mxu0
      %v6502 = vadd.f32 %v6453, %v6501
      %v6503 = vpop.f32.mrf.mxu0
      %v6504 = vadd.f32 %v6455, %v6503
      %6505 = vmatmul.bf16.gmra.mxu0 %v4792
      %v6506 = vpop.f32.mrf.mxu0
      %v6507 = vadd.f32 %v6458, %v6506
      %v6508 = vpop.f32.mrf.mxu0
      %v6509 = vadd.f32 %v6460, %v6508
      %6510 = vmatmul.bf16.gmra.mxu0 %v4796
      %v6511 = vpop.f32.mrf.mxu0
      %v6512 = vadd.f32 %v6463, %v6511
      %v6513 = vpop.f32.mrf.mxu0
      %v6514 = vadd.f32 %v6465, %v6513
      %6515 = vmatmul.bf16.gmra.mxu0 %v4800
      %v6516 = vpop.f32.mrf.mxu0
      %v6517 = vadd.f32 %v6468, %v6516
      %v6518 = vpop.f32.mrf.mxu0
      %v6519 = vadd.f32 %v6470, %v6518
      %6520 = vdwg.mxu0
      %6521 = vmatpush.bf16.msra.mxu0 %v5941
      %6522 = vmatpush.bf16.msra.mxu0 %v5934
      %6523 = vmatpush.bf16.msra.mxu0 %v5927
      %6524 = vmatpush.bf16.msra.mxu0 %v5920
      %6525 = vmatpush.bf16.msra.mxu0 %v5913
      %6526 = vmatpush.bf16.msra.mxu0 %v5906
      %6527 = vmatpush.bf16.msra.mxu0 %v5899
      %6528 = vmatpush.bf16.msra.mxu0 %v5892
      %6529 = vmatmul.bf16.gmra.mxu0 %v4773
      %v6530 = vpop.f32.mrf.mxu0
      %v6531 = vadd.f32 %v6482, %v6530
      %v6532 = vpop.f32.mrf.mxu0
      %v6533 = vadd.f32 %v6484, %v6532
      %6534 = vmatmul.bf16.gmra.mxu0 %v4777
      %v6535 = vpop.f32.mrf.mxu0
      %v6536 = vadd.f32 %v6487, %v6535
      %v6537 = vpop.f32.mrf.mxu0
      %v6538 = vadd.f32 %v6489, %v6537
      %6539 = vmatmul.bf16.gmra.mxu0 %v4781
      %v6540 = vpop.f32.mrf.mxu0
      %v6541 = vadd.f32 %v6492, %v6540
      %v6542 = vpop.f32.mrf.mxu0
      %v6543 = vadd.f32 %v6494, %v6542
      %6544 = vmatmul.bf16.gmra.mxu0 %v4785
      %v6545 = vpop.f32.mrf.mxu0
      %v6546 = vadd.f32 %v6497, %v6545
      %v6547 = vpop.f32.mrf.mxu0
      %v6548 = vadd.f32 %v6499, %v6547
      %6549 = vmatmul.bf16.gmra.mxu0 %v4789
      %v6550 = vpop.f32.mrf.mxu0
      %v6551 = vadd.f32 %v6502, %v6550
      %v6552 = vpop.f32.mrf.mxu0
      %v6553 = vadd.f32 %v6504, %v6552
      %6554 = vmatmul.bf16.gmra.mxu0 %v4793
      %v6555 = vpop.f32.mrf.mxu0
      %v6556 = vadd.f32 %v6507, %v6555
      %v6557 = vpop.f32.mrf.mxu0
      %v6558 = vadd.f32 %v6509, %v6557
      %6559 = vmatmul.bf16.gmra.mxu0 %v4797
      %v6560 = vpop.f32.mrf.mxu0
      %v6561 = vadd.f32 %v6512, %v6560
      %v6562 = vpop.f32.mrf.mxu0
      %v6563 = vadd.f32 %v6514, %v6562
      %6564 = vmatmul.bf16.gmra.mxu0 %v4801
      %v6565 = vpop.f32.mrf.mxu0
      %v6566 = vadd.f32 %v6517, %v6565
      %v6567 = vpop.f32.mrf.mxu0
      %v6568 = vadd.f32 %v6519, %v6567
      %6569 = vdwg.mxu0
      %6570 = vmatpush.bf16.msra.mxu0 %v5997
      %6571 = vmatpush.bf16.msra.mxu0 %v5990
      %6572 = vmatpush.bf16.msra.mxu0 %v5983
      %6573 = vmatpush.bf16.msra.mxu0 %v5976
      %6574 = vmatpush.bf16.msra.mxu0 %v5969
      %6575 = vmatpush.bf16.msra.mxu0 %v5962
      %6576 = vmatpush.bf16.msra.mxu0 %v5955
      %6577 = vmatpush.bf16.msra.mxu0 %v5948
      %6578 = vmatmul.bf16.gmra.mxu0 %v4774
      %v6579 = vpop.f32.mrf.mxu0
      %v6580 = vadd.f32 %v6531, %v6579
      %v6581 = vpop.f32.mrf.mxu0
      %v6582 = vadd.f32 %v6533, %v6581
      %6583 = vmatmul.bf16.gmra.mxu0 %v4778
      %v6584 = vpop.f32.mrf.mxu0
      %v6585 = vadd.f32 %v6536, %v6584
      %v6586 = vpop.f32.mrf.mxu0
      %v6587 = vadd.f32 %v6538, %v6586
      %6588 = vmatmul.bf16.gmra.mxu0 %v4782
      %v6589 = vpop.f32.mrf.mxu0
      %v6590 = vadd.f32 %v6541, %v6589
      %v6591 = vpop.f32.mrf.mxu0
      %v6592 = vadd.f32 %v6543, %v6591
      %6593 = vmatmul.bf16.gmra.mxu0 %v4786
      %v6594 = vpop.f32.mrf.mxu0
      %v6595 = vadd.f32 %v6546, %v6594
      %v6596 = vpop.f32.mrf.mxu0
      %v6597 = vadd.f32 %v6548, %v6596
      %6598 = vmatmul.bf16.gmra.mxu0 %v4790
      %v6599 = vpop.f32.mrf.mxu0
      %v6600 = vadd.f32 %v6551, %v6599
      %v6601 = vpop.f32.mrf.mxu0
      %v6602 = vadd.f32 %v6553, %v6601
      %6603 = vmatmul.bf16.gmra.mxu0 %v4794
      %v6604 = vpop.f32.mrf.mxu0
      %v6605 = vadd.f32 %v6556, %v6604
      %v6606 = vpop.f32.mrf.mxu0
      %v6607 = vadd.f32 %v6558, %v6606
      %6608 = vmatmul.bf16.gmra.mxu0 %v4798
      %v6609 = vpop.f32.mrf.mxu0
      %v6610 = vadd.f32 %v6561, %v6609
      %v6611 = vpop.f32.mrf.mxu0
      %v6612 = vadd.f32 %v6563, %v6611
      %6613 = vmatmul.bf16.gmra.mxu0 %v4802
      %v6614 = vpop.f32.mrf.mxu0
      %v6615 = vadd.f32 %v6566, %v6614
      %v6616 = vpop.f32.mrf.mxu0
      %v6617 = vadd.f32 %v6568, %v6616
      %6618 = vdwg.mxu0
      %6619 = vmatpush.bf16.msra.mxu0 %v5830
      %6620 = vmatpush.bf16.msra.mxu0 %v5823
      %6621 = vmatpush.bf16.msra.mxu0 %v5816
      %6622 = vmatpush.bf16.msra.mxu0 %v5809
      %6623 = vmatpush.bf16.msra.mxu0 %v5802
      %6624 = vmatpush.bf16.msra.mxu0 %v5795
      %6625 = vmatpush.bf16.msra.mxu0 %v5788
      %6626 = vmatpush.bf16.msra.mxu0 %v5781
      %6627 = vmatmul.bf16.gmra.mxu0 %v4771
      %v6628 = vpop.f32.mrf.mxu0
      %v6629 = vadd.f32 %v5063, %v6628
      %v6630 = vpop.f32.mrf.mxu0
      %v6631 = vadd.f32 %v5063, %v6630
      %6632 = vmatmul.bf16.gmra.mxu0 %v4775
      %v6633 = vpop.f32.mrf.mxu0
      %v6634 = vadd.f32 %v5063, %v6633
      %v6635 = vpop.f32.mrf.mxu0
      %v6636 = vadd.f32 %v5063, %v6635
      %6637 = vmatmul.bf16.gmra.mxu0 %v4779
      %v6638 = vpop.f32.mrf.mxu0
      %v6639 = vadd.f32 %v5063, %v6638
      %v6640 = vpop.f32.mrf.mxu0
      %v6641 = vadd.f32 %v5063, %v6640
      %6642 = vmatmul.bf16.gmra.mxu0 %v4783
      %v6643 = vpop.f32.mrf.mxu0
      %v6644 = vadd.f32 %v5063, %v6643
      %v6645 = vpop.f32.mrf.mxu0
      %v6646 = vadd.f32 %v5063, %v6645
      %6647 = vmatmul.bf16.gmra.mxu0 %v4787
      %v6648 = vpop.f32.mrf.mxu0
      %v6649 = vadd.f32 %v5063, %v6648
      %v6650 = vpop.f32.mrf.mxu0
      %v6651 = vadd.f32 %v5063, %v6650
      %6652 = vmatmul.bf16.gmra.mxu0 %v4791
      %v6653 = vpop.f32.mrf.mxu0
      %v6654 = vadd.f32 %v5063, %v6653
      %v6655 = vpop.f32.mrf.mxu0
      %v6656 = vadd.f32 %v5063, %v6655
      %6657 = vmatmul.bf16.gmra.mxu0 %v4795
      %v6658 = vpop.f32.mrf.mxu0
      %v6659 = vadd.f32 %v5063, %v6658
      %v6660 = vpop.f32.mrf.mxu0
      %v6661 = vadd.f32 %v5063, %v6660
      %6662 = vmatmul.bf16.gmra.mxu0 %v4799
      %v6663 = vpop.f32.mrf.mxu0
      %v6664 = vadd.f32 %v5063, %v6663
      %v6665 = vpop.f32.mrf.mxu0
      %v6666 = vadd.f32 %v5063, %v6665
      %6667 = vdwg.mxu0
      %6668 = vmatpush.bf16.msra.mxu0 %v5886
      %6669 = vmatpush.bf16.msra.mxu0 %v5879
      %6670 = vmatpush.bf16.msra.mxu0 %v5872
      %6671 = vmatpush.bf16.msra.mxu0 %v5865
      %6672 = vmatpush.bf16.msra.mxu0 %v5858
      %6673 = vmatpush.bf16.msra.mxu0 %v5851
      %6674 = vmatpush.bf16.msra.mxu0 %v5844
      %6675 = vmatpush.bf16.msra.mxu0 %v5837
      %6676 = vmatmul.bf16.gmra.mxu0 %v4772
      %v6677 = vpop.f32.mrf.mxu0
      %v6678 = vadd.f32 %v6629, %v6677
      %v6679 = vpop.f32.mrf.mxu0
      %v6680 = vadd.f32 %v6631, %v6679
      %6681 = vmatmul.bf16.gmra.mxu0 %v4776
      %v6682 = vpop.f32.mrf.mxu0
      %v6683 = vadd.f32 %v6634, %v6682
      %v6684 = vpop.f32.mrf.mxu0
      %v6685 = vadd.f32 %v6636, %v6684
      %6686 = vmatmul.bf16.gmra.mxu0 %v4780
      %v6687 = vpop.f32.mrf.mxu0
      %v6688 = vadd.f32 %v6639, %v6687
      %v6689 = vpop.f32.mrf.mxu0
      %v6690 = vadd.f32 %v6641, %v6689
      %6691 = vmatmul.bf16.gmra.mxu0 %v4784
      %v6692 = vpop.f32.mrf.mxu0
      %v6693 = vadd.f32 %v6644, %v6692
      %v6694 = vpop.f32.mrf.mxu0
      %v6695 = vadd.f32 %v6646, %v6694
      %6696 = vmatmul.bf16.gmra.mxu0 %v4788
      %v6697 = vpop.f32.mrf.mxu0
      %v6698 = vadd.f32 %v6649, %v6697
      %v6699 = vpop.f32.mrf.mxu0
      %v6700 = vadd.f32 %v6651, %v6699
      %6701 = vmatmul.bf16.gmra.mxu0 %v4792
      %v6702 = vpop.f32.mrf.mxu0
      %v6703 = vadd.f32 %v6654, %v6702
      %v6704 = vpop.f32.mrf.mxu0
      %v6705 = vadd.f32 %v6656, %v6704
      %6706 = vmatmul.bf16.gmra.mxu0 %v4796
      %v6707 = vpop.f32.mrf.mxu0
      %v6708 = vadd.f32 %v6659, %v6707
      %v6709 = vpop.f32.mrf.mxu0
      %v6710 = vadd.f32 %v6661, %v6709
      %6711 = vmatmul.bf16.gmra.mxu0 %v4800
      %v6712 = vpop.f32.mrf.mxu0
      %v6713 = vadd.f32 %v6664, %v6712
      %v6714 = vpop.f32.mrf.mxu0
      %v6715 = vadd.f32 %v6666, %v6714
      %6716 = vdwg.mxu0
      %6717 = vmatpush.bf16.msra.mxu0 %v5942
      %6718 = vmatpush.bf16.msra.mxu0 %v5935
      %6719 = vmatpush.bf16.msra.mxu0 %v5928
      %6720 = vmatpush.bf16.msra.mxu0 %v5921
      %6721 = vmatpush.bf16.msra.mxu0 %v5914
      %6722 = vmatpush.bf16.msra.mxu0 %v5907
      %6723 = vmatpush.bf16.msra.mxu0 %v5900
      %6724 = vmatpush.bf16.msra.mxu0 %v5893
      %6725 = vmatmul.bf16.gmra.mxu0 %v4773
      %v6726 = vpop.f32.mrf.mxu0
      %v6727 = vadd.f32 %v6678, %v6726
      %v6728 = vpop.f32.mrf.mxu0
      %v6729 = vadd.f32 %v6680, %v6728
      %6730 = vmatmul.bf16.gmra.mxu0 %v4777
      %v6731 = vpop.f32.mrf.mxu0
      %v6732 = vadd.f32 %v6683, %v6731
      %v6733 = vpop.f32.mrf.mxu0
      %v6734 = vadd.f32 %v6685, %v6733
      %6735 = vmatmul.bf16.gmra.mxu0 %v4781
      %v6736 = vpop.f32.mrf.mxu0
      %v6737 = vadd.f32 %v6688, %v6736
      %v6738 = vpop.f32.mrf.mxu0
      %v6739 = vadd.f32 %v6690, %v6738
      %6740 = vmatmul.bf16.gmra.mxu0 %v4785
      %v6741 = vpop.f32.mrf.mxu0
      %v6742 = vadd.f32 %v6693, %v6741
      %v6743 = vpop.f32.mrf.mxu0
      %v6744 = vadd.f32 %v6695, %v6743
      %6745 = vmatmul.bf16.gmra.mxu0 %v4789
      %v6746 = vpop.f32.mrf.mxu0
      %v6747 = vadd.f32 %v6698, %v6746
      %v6748 = vpop.f32.mrf.mxu0
      %v6749 = vadd.f32 %v6700, %v6748
      %6750 = vmatmul.bf16.gmra.mxu0 %v4793
      %v6751 = vpop.f32.mrf.mxu0
      %v6752 = vadd.f32 %v6703, %v6751
      %v6753 = vpop.f32.mrf.mxu0
      %v6754 = vadd.f32 %v6705, %v6753
      %6755 = vmatmul.bf16.gmra.mxu0 %v4797
      %v6756 = vpop.f32.mrf.mxu0
      %v6757 = vadd.f32 %v6708, %v6756
      %v6758 = vpop.f32.mrf.mxu0
      %v6759 = vadd.f32 %v6710, %v6758
      %6760 = vmatmul.bf16.gmra.mxu0 %v4801
      %v6761 = vpop.f32.mrf.mxu0
      %v6762 = vadd.f32 %v6713, %v6761
      %v6763 = vpop.f32.mrf.mxu0
      %v6764 = vadd.f32 %v6715, %v6763
      %6765 = vdwg.mxu0
      %6766 = vmatpush.bf16.msra.mxu0 %v5998
      %6767 = vmatpush.bf16.msra.mxu0 %v5991
      %6768 = vmatpush.bf16.msra.mxu0 %v5984
      %6769 = vmatpush.bf16.msra.mxu0 %v5977
      %6770 = vmatpush.bf16.msra.mxu0 %v5970
      %6771 = vmatpush.bf16.msra.mxu0 %v5963
      %6772 = vmatpush.bf16.msra.mxu0 %v5956
      %6773 = vmatpush.bf16.msra.mxu0 %v5949
      %6774 = vmatmul.bf16.gmra.mxu0 %v4774
      %v6775 = vpop.f32.mrf.mxu0
      %v6776 = vadd.f32 %v6727, %v6775
      %v6777 = vpop.f32.mrf.mxu0
      %v6778 = vadd.f32 %v6729, %v6777
      %6779 = vmatmul.bf16.gmra.mxu0 %v4778
      %v6780 = vpop.f32.mrf.mxu0
      %v6781 = vadd.f32 %v6732, %v6780
      %v6782 = vpop.f32.mrf.mxu0
      %v6783 = vadd.f32 %v6734, %v6782
      %6784 = vmatmul.bf16.gmra.mxu0 %v4782
      %v6785 = vpop.f32.mrf.mxu0
      %v6786 = vadd.f32 %v6737, %v6785
      %v6787 = vpop.f32.mrf.mxu0
      %v6788 = vadd.f32 %v6739, %v6787
      %6789 = vmatmul.bf16.gmra.mxu0 %v4786
      %v6790 = vpop.f32.mrf.mxu0
      %v6791 = vadd.f32 %v6742, %v6790
      %v6792 = vpop.f32.mrf.mxu0
      %v6793 = vadd.f32 %v6744, %v6792
      %6794 = vmatmul.bf16.gmra.mxu0 %v4790
      %v6795 = vpop.f32.mrf.mxu0
      %v6796 = vadd.f32 %v6747, %v6795
      %v6797 = vpop.f32.mrf.mxu0
      %v6798 = vadd.f32 %v6749, %v6797
      %6799 = vmatmul.bf16.gmra.mxu0 %v4794
      %v6800 = vpop.f32.mrf.mxu0
      %v6801 = vadd.f32 %v6752, %v6800
      %v6802 = vpop.f32.mrf.mxu0
      %v6803 = vadd.f32 %v6754, %v6802
      %6804 = vmatmul.bf16.gmra.mxu0 %v4798
      %v6805 = vpop.f32.mrf.mxu0
      %v6806 = vadd.f32 %v6757, %v6805
      %v6807 = vpop.f32.mrf.mxu0
      %v6808 = vadd.f32 %v6759, %v6807
      %6809 = vmatmul.bf16.gmra.mxu0 %v4802
      %v6810 = vpop.f32.mrf.mxu0
      %v6811 = vadd.f32 %v6762, %v6810
      %v6812 = vpop.f32.mrf.mxu0
      %v6813 = vadd.f32 %v6764, %v6812
      %6814 = vdwg.mxu0
      %6815 = vmatpush.bf16.msra.mxu0 %v5831
      %6816 = vmatpush.bf16.msra.mxu0 %v5824
      %6817 = vmatpush.bf16.msra.mxu0 %v5817
      %6818 = vmatpush.bf16.msra.mxu0 %v5810
      %6819 = vmatpush.bf16.msra.mxu0 %v5803
      %6820 = vmatpush.bf16.msra.mxu0 %v5796
      %6821 = vmatpush.bf16.msra.mxu0 %v5789
      %6822 = vmatpush.bf16.msra.mxu0 %v5782
      %6823 = vmatmul.bf16.gmra.mxu0 %v4771
      %v6824 = vpop.f32.mrf.mxu0
      %v6825 = vadd.f32 %v5064, %v6824
      %v6826 = vpop.f32.mrf.mxu0
      %v6827 = vadd.f32 %v5064, %v6826
      %6828 = vmatmul.bf16.gmra.mxu0 %v4775
      %v6829 = vpop.f32.mrf.mxu0
      %v6830 = vadd.f32 %v5064, %v6829
      %v6831 = vpop.f32.mrf.mxu0
      %v6832 = vadd.f32 %v5064, %v6831
      %6833 = vmatmul.bf16.gmra.mxu0 %v4779
      %v6834 = vpop.f32.mrf.mxu0
      %v6835 = vadd.f32 %v5064, %v6834
      %v6836 = vpop.f32.mrf.mxu0
      %v6837 = vadd.f32 %v5064, %v6836
      %6838 = vmatmul.bf16.gmra.mxu0 %v4783
      %v6839 = vpop.f32.mrf.mxu0
      %v6840 = vadd.f32 %v5064, %v6839
      %v6841 = vpop.f32.mrf.mxu0
      %v6842 = vadd.f32 %v5064, %v6841
      %6843 = vmatmul.bf16.gmra.mxu0 %v4787
      %v6844 = vpop.f32.mrf.mxu0
      %v6845 = vadd.f32 %v5064, %v6844
      %v6846 = vpop.f32.mrf.mxu0
      %v6847 = vadd.f32 %v5064, %v6846
      %6848 = vmatmul.bf16.gmra.mxu0 %v4791
      %v6849 = vpop.f32.mrf.mxu0
      %v6850 = vadd.f32 %v5064, %v6849
      %v6851 = vpop.f32.mrf.mxu0
      %v6852 = vadd.f32 %v5064, %v6851
      %6853 = vmatmul.bf16.gmra.mxu0 %v4795
      %v6854 = vpop.f32.mrf.mxu0
      %v6855 = vadd.f32 %v5064, %v6854
      %v6856 = vpop.f32.mrf.mxu0
      %v6857 = vadd.f32 %v5064, %v6856
      %6858 = vmatmul.bf16.gmra.mxu0 %v4799
      %v6859 = vpop.f32.mrf.mxu0
      %v6860 = vadd.f32 %v5064, %v6859
      %v6861 = vpop.f32.mrf.mxu0
      %v6862 = vadd.f32 %v5064, %v6861
      %6863 = vdwg.mxu0
      %6864 = vmatpush.bf16.msra.mxu0 %v5887
      %6865 = vmatpush.bf16.msra.mxu0 %v5880
      %6866 = vmatpush.bf16.msra.mxu0 %v5873
      %6867 = vmatpush.bf16.msra.mxu0 %v5866
      %6868 = vmatpush.bf16.msra.mxu0 %v5859
      %6869 = vmatpush.bf16.msra.mxu0 %v5852
      %6870 = vmatpush.bf16.msra.mxu0 %v5845
      %6871 = vmatpush.bf16.msra.mxu0 %v5838
      %6872 = vmatmul.bf16.gmra.mxu0 %v4772
      %v6873 = vpop.f32.mrf.mxu0
      %v6874 = vadd.f32 %v6825, %v6873
      %v6875 = vpop.f32.mrf.mxu0
      %v6876 = vadd.f32 %v6827, %v6875
      %6877 = vmatmul.bf16.gmra.mxu0 %v4776
      %v6878 = vpop.f32.mrf.mxu0
      %v6879 = vadd.f32 %v6830, %v6878
      %v6880 = vpop.f32.mrf.mxu0
      %v6881 = vadd.f32 %v6832, %v6880
      %6882 = vmatmul.bf16.gmra.mxu0 %v4780
      %v6883 = vpop.f32.mrf.mxu0
      %v6884 = vadd.f32 %v6835, %v6883
      %v6885 = vpop.f32.mrf.mxu0
      %v6886 = vadd.f32 %v6837, %v6885
      %6887 = vmatmul.bf16.gmra.mxu0 %v4784
      %v6888 = vpop.f32.mrf.mxu0
      %v6889 = vadd.f32 %v6840, %v6888
      %v6890 = vpop.f32.mrf.mxu0
      %v6891 = vadd.f32 %v6842, %v6890
      %6892 = vmatmul.bf16.gmra.mxu0 %v4788
      %v6893 = vpop.f32.mrf.mxu0
      %v6894 = vadd.f32 %v6845, %v6893
      %v6895 = vpop.f32.mrf.mxu0
      %v6896 = vadd.f32 %v6847, %v6895
      %6897 = vmatmul.bf16.gmra.mxu0 %v4792
      %v6898 = vpop.f32.mrf.mxu0
      %v6899 = vadd.f32 %v6850, %v6898
      %v6900 = vpop.f32.mrf.mxu0
      %v6901 = vadd.f32 %v6852, %v6900
      %6902 = vmatmul.bf16.gmra.mxu0 %v4796
      %v6903 = vpop.f32.mrf.mxu0
      %v6904 = vadd.f32 %v6855, %v6903
      %v6905 = vpop.f32.mrf.mxu0
      %v6906 = vadd.f32 %v6857, %v6905
      %6907 = vmatmul.bf16.gmra.mxu0 %v4800
      %v6908 = vpop.f32.mrf.mxu0
      %v6909 = vadd.f32 %v6860, %v6908
      %v6910 = vpop.f32.mrf.mxu0
      %v6911 = vadd.f32 %v6862, %v6910
      %6912 = vdwg.mxu0
      %6913 = vmatpush.bf16.msra.mxu0 %v5943
      %6914 = vmatpush.bf16.msra.mxu0 %v5936
      %6915 = vmatpush.bf16.msra.mxu0 %v5929
      %6916 = vmatpush.bf16.msra.mxu0 %v5922
      %6917 = vmatpush.bf16.msra.mxu0 %v5915
      %6918 = vmatpush.bf16.msra.mxu0 %v5908
      %6919 = vmatpush.bf16.msra.mxu0 %v5901
      %6920 = vmatpush.bf16.msra.mxu0 %v5894
      %6921 = vmatmul.bf16.gmra.mxu0 %v4773
      %v6922 = vpop.f32.mrf.mxu0
      %v6923 = vadd.f32 %v6874, %v6922
      %v6924 = vpop.f32.mrf.mxu0
      %v6925 = vadd.f32 %v6876, %v6924
      %6926 = vmatmul.bf16.gmra.mxu0 %v4777
      %v6927 = vpop.f32.mrf.mxu0
      %v6928 = vadd.f32 %v6879, %v6927
      %v6929 = vpop.f32.mrf.mxu0
      %v6930 = vadd.f32 %v6881, %v6929
      %6931 = vmatmul.bf16.gmra.mxu0 %v4781
      %v6932 = vpop.f32.mrf.mxu0
      %v6933 = vadd.f32 %v6884, %v6932
      %v6934 = vpop.f32.mrf.mxu0
      %v6935 = vadd.f32 %v6886, %v6934
      %6936 = vmatmul.bf16.gmra.mxu0 %v4785
      %v6937 = vpop.f32.mrf.mxu0
      %v6938 = vadd.f32 %v6889, %v6937
      %v6939 = vpop.f32.mrf.mxu0
      %v6940 = vadd.f32 %v6891, %v6939
      %6941 = vmatmul.bf16.gmra.mxu0 %v4789
      %v6942 = vpop.f32.mrf.mxu0
      %v6943 = vadd.f32 %v6894, %v6942
      %v6944 = vpop.f32.mrf.mxu0
      %v6945 = vadd.f32 %v6896, %v6944
      %6946 = vmatmul.bf16.gmra.mxu0 %v4793
      %v6947 = vpop.f32.mrf.mxu0
      %v6948 = vadd.f32 %v6899, %v6947
      %v6949 = vpop.f32.mrf.mxu0
      %v6950 = vadd.f32 %v6901, %v6949
      %6951 = vmatmul.bf16.gmra.mxu0 %v4797
      %v6952 = vpop.f32.mrf.mxu0
      %v6953 = vadd.f32 %v6904, %v6952
      %v6954 = vpop.f32.mrf.mxu0
      %v6955 = vadd.f32 %v6906, %v6954
      %6956 = vmatmul.bf16.gmra.mxu0 %v4801
      %v6957 = vpop.f32.mrf.mxu0
      %v6958 = vadd.f32 %v6909, %v6957
      %v6959 = vpop.f32.mrf.mxu0
      %v6960 = vadd.f32 %v6911, %v6959
      %6961 = vdwg.mxu0
      %6962 = vmatpush.bf16.msra.mxu0 %v5999
      %6963 = vmatpush.bf16.msra.mxu0 %v5992
      %6964 = vmatpush.bf16.msra.mxu0 %v5985
      %6965 = vmatpush.bf16.msra.mxu0 %v5978
      %6966 = vmatpush.bf16.msra.mxu0 %v5971
      %6967 = vmatpush.bf16.msra.mxu0 %v5964
      %6968 = vmatpush.bf16.msra.mxu0 %v5957
      %6969 = vmatpush.bf16.msra.mxu0 %v5950
      %6970 = vmatmul.bf16.gmra.mxu0 %v4774
      %v6971 = vpop.f32.mrf.mxu0
      %v6972 = vadd.f32 %v6923, %v6971
      %v6973 = vpop.f32.mrf.mxu0
      %v6974 = vadd.f32 %v6925, %v6973
      %6975 = vmatmul.bf16.gmra.mxu0 %v4778
      %v6976 = vpop.f32.mrf.mxu0
      %v6977 = vadd.f32 %v6928, %v6976
      %v6978 = vpop.f32.mrf.mxu0
      %v6979 = vadd.f32 %v6930, %v6978
      %6980 = vmatmul.bf16.gmra.mxu0 %v4782
      %v6981 = vpop.f32.mrf.mxu0
      %v6982 = vadd.f32 %v6933, %v6981
      %v6983 = vpop.f32.mrf.mxu0
      %v6984 = vadd.f32 %v6935, %v6983
      %6985 = vmatmul.bf16.gmra.mxu0 %v4786
      %v6986 = vpop.f32.mrf.mxu0
      %v6987 = vadd.f32 %v6938, %v6986
      %v6988 = vpop.f32.mrf.mxu0
      %v6989 = vadd.f32 %v6940, %v6988
      %6990 = vmatmul.bf16.gmra.mxu0 %v4790
      %v6991 = vpop.f32.mrf.mxu0
      %v6992 = vadd.f32 %v6943, %v6991
      %v6993 = vpop.f32.mrf.mxu0
      %v6994 = vadd.f32 %v6945, %v6993
      %6995 = vmatmul.bf16.gmra.mxu0 %v4794
      %v6996 = vpop.f32.mrf.mxu0
      %v6997 = vadd.f32 %v6948, %v6996
      %v6998 = vpop.f32.mrf.mxu0
      %v6999 = vadd.f32 %v6950, %v6998
      %7000 = vmatmul.bf16.gmra.mxu0 %v4798
      %v7001 = vpop.f32.mrf.mxu0
      %v7002 = vadd.f32 %v6953, %v7001
      %v7003 = vpop.f32.mrf.mxu0
      %v7004 = vadd.f32 %v6955, %v7003
      %7005 = vmatmul.bf16.gmra.mxu0 %v4802
      %v7006 = vpop.f32.mrf.mxu0
      %v7007 = vadd.f32 %v6958, %v7006
      %v7008 = vpop.f32.mrf.mxu0
      %v7009 = vadd.f32 %v6960, %v7008
      %7010 = vdwg.mxu0
      %7011 = vmatpush.bf16.msra.mxu0 %v5832
      %7012 = vmatpush.bf16.msra.mxu0 %v5825
      %7013 = vmatpush.bf16.msra.mxu0 %v5818
      %7014 = vmatpush.bf16.msra.mxu0 %v5811
      %7015 = vmatpush.bf16.msra.mxu0 %v5804
      %7016 = vmatpush.bf16.msra.mxu0 %v5797
      %7017 = vmatpush.bf16.msra.mxu0 %v5790
      %7018 = vmatpush.bf16.msra.mxu0 %v5783
      %7019 = vmatmul.bf16.gmra.mxu0 %v4771
      %v7020 = vpop.f32.mrf.mxu0
      %v7021 = vadd.f32 %v5065, %v7020
      %v7022 = vpop.f32.mrf.mxu0
      %v7023 = vadd.f32 %v5065, %v7022
      %7024 = vmatmul.bf16.gmra.mxu0 %v4775
      %v7025 = vpop.f32.mrf.mxu0
      %v7026 = vadd.f32 %v5065, %v7025
      %v7027 = vpop.f32.mrf.mxu0
      %v7028 = vadd.f32 %v5065, %v7027
      %7029 = vmatmul.bf16.gmra.mxu0 %v4779
      %v7030 = vpop.f32.mrf.mxu0
      %v7031 = vadd.f32 %v5065, %v7030
      %v7032 = vpop.f32.mrf.mxu0
      %v7033 = vadd.f32 %v5065, %v7032
      %7034 = vmatmul.bf16.gmra.mxu0 %v4783
      %v7035 = vpop.f32.mrf.mxu0
      %v7036 = vadd.f32 %v5065, %v7035
      %v7037 = vpop.f32.mrf.mxu0
      %v7038 = vadd.f32 %v5065, %v7037
      %7039 = vmatmul.bf16.gmra.mxu0 %v4787
      %v7040 = vpop.f32.mrf.mxu0
      %v7041 = vadd.f32 %v5065, %v7040
      %v7042 = vpop.f32.mrf.mxu0
      %v7043 = vadd.f32 %v5065, %v7042
      %7044 = vmatmul.bf16.gmra.mxu0 %v4791
      %v7045 = vpop.f32.mrf.mxu0
      %v7046 = vadd.f32 %v5065, %v7045
      %v7047 = vpop.f32.mrf.mxu0
      %v7048 = vadd.f32 %v5065, %v7047
      %7049 = vmatmul.bf16.gmra.mxu0 %v4795
      %v7050 = vpop.f32.mrf.mxu0
      %v7051 = vadd.f32 %v5065, %v7050
      %v7052 = vpop.f32.mrf.mxu0
      %v7053 = vadd.f32 %v5065, %v7052
      %7054 = vmatmul.bf16.gmra.mxu0 %v4799
      %v7055 = vpop.f32.mrf.mxu0
      %v7056 = vadd.f32 %v5065, %v7055
      %v7057 = vpop.f32.mrf.mxu0
      %v7058 = vadd.f32 %v5065, %v7057
      %7059 = vdwg.mxu0
      %7060 = vmatpush.bf16.msra.mxu0 %v5888
      %7061 = vmatpush.bf16.msra.mxu0 %v5881
      %7062 = vmatpush.bf16.msra.mxu0 %v5874
      %7063 = vmatpush.bf16.msra.mxu0 %v5867
      %7064 = vmatpush.bf16.msra.mxu0 %v5860
      %7065 = vmatpush.bf16.msra.mxu0 %v5853
      %7066 = vmatpush.bf16.msra.mxu0 %v5846
      %7067 = vmatpush.bf16.msra.mxu0 %v5839
      %7068 = vmatmul.bf16.gmra.mxu0 %v4772
      %v7069 = vpop.f32.mrf.mxu0
      %v7070 = vadd.f32 %v7021, %v7069
      %v7071 = vpop.f32.mrf.mxu0
      %v7072 = vadd.f32 %v7023, %v7071
      %7073 = vmatmul.bf16.gmra.mxu0 %v4776
      %v7074 = vpop.f32.mrf.mxu0
      %v7075 = vadd.f32 %v7026, %v7074
      %v7076 = vpop.f32.mrf.mxu0
      %v7077 = vadd.f32 %v7028, %v7076
      %7078 = vmatmul.bf16.gmra.mxu0 %v4780
      %v7079 = vpop.f32.mrf.mxu0
      %v7080 = vadd.f32 %v7031, %v7079
      %v7081 = vpop.f32.mrf.mxu0
      %v7082 = vadd.f32 %v7033, %v7081
      %7083 = vmatmul.bf16.gmra.mxu0 %v4784
      %v7084 = vpop.f32.mrf.mxu0
      %v7085 = vadd.f32 %v7036, %v7084
      %v7086 = vpop.f32.mrf.mxu0
      %v7087 = vadd.f32 %v7038, %v7086
      %7088 = vmatmul.bf16.gmra.mxu0 %v4788
      %v7089 = vpop.f32.mrf.mxu0
      %v7090 = vadd.f32 %v7041, %v7089
      %v7091 = vpop.f32.mrf.mxu0
      %v7092 = vadd.f32 %v7043, %v7091
      %7093 = vmatmul.bf16.gmra.mxu0 %v4792
      %v7094 = vpop.f32.mrf.mxu0
      %v7095 = vadd.f32 %v7046, %v7094
      %v7096 = vpop.f32.mrf.mxu0
      %v7097 = vadd.f32 %v7048, %v7096
      %7098 = vmatmul.bf16.gmra.mxu0 %v4796
      %v7099 = vpop.f32.mrf.mxu0
      %v7100 = vadd.f32 %v7051, %v7099
      %v7101 = vpop.f32.mrf.mxu0
      %v7102 = vadd.f32 %v7053, %v7101
      %7103 = vmatmul.bf16.gmra.mxu0 %v4800
      %v7104 = vpop.f32.mrf.mxu0
      %v7105 = vadd.f32 %v7056, %v7104
      %v7106 = vpop.f32.mrf.mxu0
      %v7107 = vadd.f32 %v7058, %v7106
      %7108 = vdwg.mxu0
      %7109 = vmatpush.bf16.msra.mxu0 %v5944
      %7110 = vmatpush.bf16.msra.mxu0 %v5937
      %7111 = vmatpush.bf16.msra.mxu0 %v5930
      %7112 = vmatpush.bf16.msra.mxu0 %v5923
      %7113 = vmatpush.bf16.msra.mxu0 %v5916
      %7114 = vmatpush.bf16.msra.mxu0 %v5909
      %7115 = vmatpush.bf16.msra.mxu0 %v5902
      %7116 = vmatpush.bf16.msra.mxu0 %v5895
      %7117 = vmatmul.bf16.gmra.mxu0 %v4773
      %v7118 = vpop.f32.mrf.mxu0
      %v7119 = vadd.f32 %v7070, %v7118
      %v7120 = vpop.f32.mrf.mxu0
      %v7121 = vadd.f32 %v7072, %v7120
      %7122 = vmatmul.bf16.gmra.mxu0 %v4777
      %v7123 = vpop.f32.mrf.mxu0
      %v7124 = vadd.f32 %v7075, %v7123
      %v7125 = vpop.f32.mrf.mxu0
      %v7126 = vadd.f32 %v7077, %v7125
      %7127 = vmatmul.bf16.gmra.mxu0 %v4781
      %v7128 = vpop.f32.mrf.mxu0
      %v7129 = vadd.f32 %v7080, %v7128
      %v7130 = vpop.f32.mrf.mxu0
      %v7131 = vadd.f32 %v7082, %v7130
      %7132 = vmatmul.bf16.gmra.mxu0 %v4785
      %v7133 = vpop.f32.mrf.mxu0
      %v7134 = vadd.f32 %v7085, %v7133
      %v7135 = vpop.f32.mrf.mxu0
      %v7136 = vadd.f32 %v7087, %v7135
      %7137 = vmatmul.bf16.gmra.mxu0 %v4789
      %v7138 = vpop.f32.mrf.mxu0
      %v7139 = vadd.f32 %v7090, %v7138
      %v7140 = vpop.f32.mrf.mxu0
      %v7141 = vadd.f32 %v7092, %v7140
      %7142 = vmatmul.bf16.gmra.mxu0 %v4793
      %v7143 = vpop.f32.mrf.mxu0
      %v7144 = vadd.f32 %v7095, %v7143
      %v7145 = vpop.f32.mrf.mxu0
      %v7146 = vadd.f32 %v7097, %v7145
      %7147 = vmatmul.bf16.gmra.mxu0 %v4797
      %v7148 = vpop.f32.mrf.mxu0
      %v7149 = vadd.f32 %v7100, %v7148
      %v7150 = vpop.f32.mrf.mxu0
      %v7151 = vadd.f32 %v7102, %v7150
      %7152 = vmatmul.bf16.gmra.mxu0 %v4801
      %v7153 = vpop.f32.mrf.mxu0
      %v7154 = vadd.f32 %v7105, %v7153
      %v7155 = vpop.f32.mrf.mxu0
      %v7156 = vadd.f32 %v7107, %v7155
      %7157 = vdwg.mxu0
      %7158 = vmatpush.bf16.msra.mxu0 %v6000
      %7159 = vmatpush.bf16.msra.mxu0 %v5993
      %7160 = vmatpush.bf16.msra.mxu0 %v5986
      %7161 = vmatpush.bf16.msra.mxu0 %v5979
      %7162 = vmatpush.bf16.msra.mxu0 %v5972
      %7163 = vmatpush.bf16.msra.mxu0 %v5965
      %7164 = vmatpush.bf16.msra.mxu0 %v5958
      %7165 = vmatpush.bf16.msra.mxu0 %v5951
      %7166 = vmatmul.bf16.gmra.mxu0 %v4774
      %v7167 = vpop.f32.mrf.mxu0
      %v7168 = vadd.f32 %v7119, %v7167
      %v7169 = vpop.f32.mrf.mxu0
      %v7170 = vadd.f32 %v7121, %v7169
      %7171 = vmatmul.bf16.gmra.mxu0 %v4778
      %v7172 = vpop.f32.mrf.mxu0
      %v7173 = vadd.f32 %v7124, %v7172
      %v7174 = vpop.f32.mrf.mxu0
      %v7175 = vadd.f32 %v7126, %v7174
      %7176 = vmatmul.bf16.gmra.mxu0 %v4782
      %v7177 = vpop.f32.mrf.mxu0
      %v7178 = vadd.f32 %v7129, %v7177
      %v7179 = vpop.f32.mrf.mxu0
      %v7180 = vadd.f32 %v7131, %v7179
      %7181 = vmatmul.bf16.gmra.mxu0 %v4786
      %v7182 = vpop.f32.mrf.mxu0
      %v7183 = vadd.f32 %v7134, %v7182
      %v7184 = vpop.f32.mrf.mxu0
      %v7185 = vadd.f32 %v7136, %v7184
      %7186 = vmatmul.bf16.gmra.mxu0 %v4790
      %v7187 = vpop.f32.mrf.mxu0
      %v7188 = vadd.f32 %v7139, %v7187
      %v7189 = vpop.f32.mrf.mxu0
      %v7190 = vadd.f32 %v7141, %v7189
      %7191 = vmatmul.bf16.gmra.mxu0 %v4794
      %v7192 = vpop.f32.mrf.mxu0
      %v7193 = vadd.f32 %v7144, %v7192
      %v7194 = vpop.f32.mrf.mxu0
      %v7195 = vadd.f32 %v7146, %v7194
      %7196 = vmatmul.bf16.gmra.mxu0 %v4798
      %v7197 = vpop.f32.mrf.mxu0
      %v7198 = vadd.f32 %v7149, %v7197
      %v7199 = vpop.f32.mrf.mxu0
      %v7200 = vadd.f32 %v7151, %v7199
      %7201 = vmatmul.bf16.gmra.mxu0 %v4802
      %v7202 = vpop.f32.mrf.mxu0
      %v7203 = vadd.f32 %v7154, %v7202
      %v7204 = vpop.f32.mrf.mxu0
      %v7205 = vadd.f32 %v7156, %v7204
      %7206 = vdwg.mxu0
      %7207 = vmatpush.bf16.msra.mxu0 %v5833
      %7208 = vmatpush.bf16.msra.mxu0 %v5826
      %7209 = vmatpush.bf16.msra.mxu0 %v5819
      %7210 = vmatpush.bf16.msra.mxu0 %v5812
      %7211 = vmatpush.bf16.msra.mxu0 %v5805
      %7212 = vmatpush.bf16.msra.mxu0 %v5798
      %7213 = vmatpush.bf16.msra.mxu0 %v5791
      %7214 = vmatpush.bf16.msra.mxu0 %v5784
      %7215 = vmatmul.bf16.gmra.mxu0 %v4771
      %v7216 = vpop.f32.mrf.mxu0
      %v7217 = vadd.f32 %v5066, %v7216
      %v7218 = vpop.f32.mrf.mxu0
      %v7219 = vadd.f32 %v5066, %v7218
      %7220 = vmatmul.bf16.gmra.mxu0 %v4775
      %v7221 = vpop.f32.mrf.mxu0
      %v7222 = vadd.f32 %v5066, %v7221
      %v7223 = vpop.f32.mrf.mxu0
      %v7224 = vadd.f32 %v5066, %v7223
      %7225 = vmatmul.bf16.gmra.mxu0 %v4779
      %v7226 = vpop.f32.mrf.mxu0
      %v7227 = vadd.f32 %v5066, %v7226
      %v7228 = vpop.f32.mrf.mxu0
      %v7229 = vadd.f32 %v5066, %v7228
      %7230 = vmatmul.bf16.gmra.mxu0 %v4783
      %v7231 = vpop.f32.mrf.mxu0
      %v7232 = vadd.f32 %v5066, %v7231
      %v7233 = vpop.f32.mrf.mxu0
      %v7234 = vadd.f32 %v5066, %v7233
      %7235 = vmatmul.bf16.gmra.mxu0 %v4787
      %v7236 = vpop.f32.mrf.mxu0
      %v7237 = vadd.f32 %v5066, %v7236
      %v7238 = vpop.f32.mrf.mxu0
      %v7239 = vadd.f32 %v5066, %v7238
      %7240 = vmatmul.bf16.gmra.mxu0 %v4791
      %v7241 = vpop.f32.mrf.mxu0
      %v7242 = vadd.f32 %v5066, %v7241
      %v7243 = vpop.f32.mrf.mxu0
      %v7244 = vadd.f32 %v5066, %v7243
      %7245 = vmatmul.bf16.gmra.mxu0 %v4795
      %v7246 = vpop.f32.mrf.mxu0
      %v7247 = vadd.f32 %v5066, %v7246
      %v7248 = vpop.f32.mrf.mxu0
      %v7249 = vadd.f32 %v5066, %v7248
      %7250 = vmatmul.bf16.gmra.mxu0 %v4799
      %v7251 = vpop.f32.mrf.mxu0
      %v7252 = vadd.f32 %v5066, %v7251
      %v7253 = vpop.f32.mrf.mxu0
      %v7254 = vadd.f32 %v5066, %v7253
      %7255 = vdwg.mxu0
      %7256 = vmatpush.bf16.msra.mxu0 %v5889
      %7257 = vmatpush.bf16.msra.mxu0 %v5882
      %7258 = vmatpush.bf16.msra.mxu0 %v5875
      %7259 = vmatpush.bf16.msra.mxu0 %v5868
      %7260 = vmatpush.bf16.msra.mxu0 %v5861
      %7261 = vmatpush.bf16.msra.mxu0 %v5854
      %7262 = vmatpush.bf16.msra.mxu0 %v5847
      %7263 = vmatpush.bf16.msra.mxu0 %v5840
      %7264 = vmatmul.bf16.gmra.mxu0 %v4772
      %v7265 = vpop.f32.mrf.mxu0
      %v7266 = vadd.f32 %v7217, %v7265
      %v7267 = vpop.f32.mrf.mxu0
      %v7268 = vadd.f32 %v7219, %v7267
      %7269 = vmatmul.bf16.gmra.mxu0 %v4776
      %v7270 = vpop.f32.mrf.mxu0
      %v7271 = vadd.f32 %v7222, %v7270
      %v7272 = vpop.f32.mrf.mxu0
      %v7273 = vadd.f32 %v7224, %v7272
      %7274 = vmatmul.bf16.gmra.mxu0 %v4780
      %v7275 = vpop.f32.mrf.mxu0
      %v7276 = vadd.f32 %v7227, %v7275
      %v7277 = vpop.f32.mrf.mxu0
      %v7278 = vadd.f32 %v7229, %v7277
      %7279 = vmatmul.bf16.gmra.mxu0 %v4784
      %v7280 = vpop.f32.mrf.mxu0
      %v7281 = vadd.f32 %v7232, %v7280
      %v7282 = vpop.f32.mrf.mxu0
      %v7283 = vadd.f32 %v7234, %v7282
      %7284 = vmatmul.bf16.gmra.mxu0 %v4788
      %v7285 = vpop.f32.mrf.mxu0
      %v7286 = vadd.f32 %v7237, %v7285
      %v7287 = vpop.f32.mrf.mxu0
      %v7288 = vadd.f32 %v7239, %v7287
      %7289 = vmatmul.bf16.gmra.mxu0 %v4792
      %v7290 = vpop.f32.mrf.mxu0
      %v7291 = vadd.f32 %v7242, %v7290
      %v7292 = vpop.f32.mrf.mxu0
      %v7293 = vadd.f32 %v7244, %v7292
      %7294 = vmatmul.bf16.gmra.mxu0 %v4796
      %v7295 = vpop.f32.mrf.mxu0
      %v7296 = vadd.f32 %v7247, %v7295
      %v7297 = vpop.f32.mrf.mxu0
      %v7298 = vadd.f32 %v7249, %v7297
      %7299 = vmatmul.bf16.gmra.mxu0 %v4800
      %v7300 = vpop.f32.mrf.mxu0
      %v7301 = vadd.f32 %v7252, %v7300
      %v7302 = vpop.f32.mrf.mxu0
      %v7303 = vadd.f32 %v7254, %v7302
      %7304 = vdwg.mxu0
      %7305 = vmatpush.bf16.msra.mxu0 %v5945
      %7306 = vmatpush.bf16.msra.mxu0 %v5938
      %7307 = vmatpush.bf16.msra.mxu0 %v5931
      %7308 = vmatpush.bf16.msra.mxu0 %v5924
      %7309 = vmatpush.bf16.msra.mxu0 %v5917
      %7310 = vmatpush.bf16.msra.mxu0 %v5910
      %7311 = vmatpush.bf16.msra.mxu0 %v5903
      %7312 = vmatpush.bf16.msra.mxu0 %v5896
      %7313 = vmatmul.bf16.gmra.mxu0 %v4773
      %v7314 = vpop.f32.mrf.mxu0
      %v7315 = vadd.f32 %v7266, %v7314
      %v7316 = vpop.f32.mrf.mxu0
      %v7317 = vadd.f32 %v7268, %v7316
      %7318 = vmatmul.bf16.gmra.mxu0 %v4777
      %v7319 = vpop.f32.mrf.mxu0
      %v7320 = vadd.f32 %v7271, %v7319
      %v7321 = vpop.f32.mrf.mxu0
      %v7322 = vadd.f32 %v7273, %v7321
      %7323 = vmatmul.bf16.gmra.mxu0 %v4781
      %v7324 = vpop.f32.mrf.mxu0
      %v7325 = vadd.f32 %v7276, %v7324
      %v7326 = vpop.f32.mrf.mxu0
      %v7327 = vadd.f32 %v7278, %v7326
      %7328 = vmatmul.bf16.gmra.mxu0 %v4785
      %v7329 = vpop.f32.mrf.mxu0
      %v7330 = vadd.f32 %v7281, %v7329
      %v7331 = vpop.f32.mrf.mxu0
      %v7332 = vadd.f32 %v7283, %v7331
      %7333 = vmatmul.bf16.gmra.mxu0 %v4789
      %v7334 = vpop.f32.mrf.mxu0
      %v7335 = vadd.f32 %v7286, %v7334
      %v7336 = vpop.f32.mrf.mxu0
      %v7337 = vadd.f32 %v7288, %v7336
      %7338 = vmatmul.bf16.gmra.mxu0 %v4793
      %v7339 = vpop.f32.mrf.mxu0
      %v7340 = vadd.f32 %v7291, %v7339
      %v7341 = vpop.f32.mrf.mxu0
      %v7342 = vadd.f32 %v7293, %v7341
      %7343 = vmatmul.bf16.gmra.mxu0 %v4797
      %v7344 = vpop.f32.mrf.mxu0
      %v7345 = vadd.f32 %v7296, %v7344
      %v7346 = vpop.f32.mrf.mxu0
      %v7347 = vadd.f32 %v7298, %v7346
      %7348 = vmatmul.bf16.gmra.mxu0 %v4801
      %v7349 = vpop.f32.mrf.mxu0
      %v7350 = vadd.f32 %v7301, %v7349
      %v7351 = vpop.f32.mrf.mxu0
      %v7352 = vadd.f32 %v7303, %v7351
      %7353 = vdwg.mxu0
      %7354 = vmatpush.bf16.msra.mxu0 %v6001
      %7355 = vmatpush.bf16.msra.mxu0 %v5994
      %7356 = vmatpush.bf16.msra.mxu0 %v5987
      %7357 = vmatpush.bf16.msra.mxu0 %v5980
      %7358 = vmatpush.bf16.msra.mxu0 %v5973
      %7359 = vmatpush.bf16.msra.mxu0 %v5966
      %7360 = vmatpush.bf16.msra.mxu0 %v5959
      %7361 = vmatpush.bf16.msra.mxu0 %v5952
      %7362 = vmatmul.bf16.gmra.mxu0 %v4774
      %v7363 = vpop.f32.mrf.mxu0
      %v7364 = vadd.f32 %v7315, %v7363
      %v7365 = vpop.f32.mrf.mxu0
      %v7366 = vadd.f32 %v7317, %v7365
      %7367 = vmatmul.bf16.gmra.mxu0 %v4778
      %v7368 = vpop.f32.mrf.mxu0
      %v7369 = vadd.f32 %v7320, %v7368
      %v7370 = vpop.f32.mrf.mxu0
      %v7371 = vadd.f32 %v7322, %v7370
      %7372 = vmatmul.bf16.gmra.mxu0 %v4782
      %v7373 = vpop.f32.mrf.mxu0
      %v7374 = vadd.f32 %v7325, %v7373
      %v7375 = vpop.f32.mrf.mxu0
      %v7376 = vadd.f32 %v7327, %v7375
      %7377 = vmatmul.bf16.gmra.mxu0 %v4786
      %v7378 = vpop.f32.mrf.mxu0
      %v7379 = vadd.f32 %v7330, %v7378
      %v7380 = vpop.f32.mrf.mxu0
      %v7381 = vadd.f32 %v7332, %v7380
      %7382 = vmatmul.bf16.gmra.mxu0 %v4790
      %v7383 = vpop.f32.mrf.mxu0
      %v7384 = vadd.f32 %v7335, %v7383
      %v7385 = vpop.f32.mrf.mxu0
      %v7386 = vadd.f32 %v7337, %v7385
      %7387 = vmatmul.bf16.gmra.mxu0 %v4794
      %v7388 = vpop.f32.mrf.mxu0
      %v7389 = vadd.f32 %v7340, %v7388
      %v7390 = vpop.f32.mrf.mxu0
      %v7391 = vadd.f32 %v7342, %v7390
      %7392 = vmatmul.bf16.gmra.mxu0 %v4798
      %v7393 = vpop.f32.mrf.mxu0
      %v7394 = vadd.f32 %v7345, %v7393
      %v7395 = vpop.f32.mrf.mxu0
      %v7396 = vadd.f32 %v7347, %v7395
      %7397 = vmatmul.bf16.gmra.mxu0 %v4802
      %v7398 = vpop.f32.mrf.mxu0
      %v7399 = vadd.f32 %v7350, %v7398
      %v7400 = vpop.f32.mrf.mxu0
      %v7401 = vadd.f32 %v7352, %v7400
      %7402 = vdwg.mxu0
      %7403 = vmatpush.bf16.msra.mxu0 %v5834
      %7404 = vmatpush.bf16.msra.mxu0 %v5827
      %7405 = vmatpush.bf16.msra.mxu0 %v5820
      %7406 = vmatpush.bf16.msra.mxu0 %v5813
      %7407 = vmatpush.bf16.msra.mxu0 %v5806
      %7408 = vmatpush.bf16.msra.mxu0 %v5799
      %7409 = vmatpush.bf16.msra.mxu0 %v5792
      %7410 = vmatpush.bf16.msra.mxu0 %v5785
      %7411 = vmatmul.bf16.gmra.mxu0 %v4771
      %v7412 = vpop.f32.mrf.mxu0
      %v7413 = vadd.f32 %v5067, %v7412
      %v7414 = vpop.f32.mrf.mxu0
      %v7415 = vadd.f32 %v5067, %v7414
      %7416 = vmatmul.bf16.gmra.mxu0 %v4775
      %v7417 = vpop.f32.mrf.mxu0
      %v7418 = vadd.f32 %v5067, %v7417
      %v7419 = vpop.f32.mrf.mxu0
      %v7420 = vadd.f32 %v5067, %v7419
      %7421 = vmatmul.bf16.gmra.mxu0 %v4779
      %v7422 = vpop.f32.mrf.mxu0
      %v7423 = vadd.f32 %v5067, %v7422
      %v7424 = vpop.f32.mrf.mxu0
      %v7425 = vadd.f32 %v5067, %v7424
      %7426 = vmatmul.bf16.gmra.mxu0 %v4783
      %v7427 = vpop.f32.mrf.mxu0
      %v7428 = vadd.f32 %v5067, %v7427
      %v7429 = vpop.f32.mrf.mxu0
      %v7430 = vadd.f32 %v5067, %v7429
      %7431 = vmatmul.bf16.gmra.mxu0 %v4787
      %v7432 = vpop.f32.mrf.mxu0
      %v7433 = vadd.f32 %v5067, %v7432
      %v7434 = vpop.f32.mrf.mxu0
      %v7435 = vadd.f32 %v5067, %v7434
      %7436 = vmatmul.bf16.gmra.mxu0 %v4791
      %v7437 = vpop.f32.mrf.mxu0
      %v7438 = vadd.f32 %v5067, %v7437
      %v7439 = vpop.f32.mrf.mxu0
      %v7440 = vadd.f32 %v5067, %v7439
      %7441 = vmatmul.bf16.gmra.mxu0 %v4795
      %v7442 = vpop.f32.mrf.mxu0
      %v7443 = vadd.f32 %v5067, %v7442
      %v7444 = vpop.f32.mrf.mxu0
      %v7445 = vadd.f32 %v5067, %v7444
      %7446 = vmatmul.bf16.gmra.mxu0 %v4799
      %v7447 = vpop.f32.mrf.mxu0
      %v7448 = vadd.f32 %v5067, %v7447
      %v7449 = vpop.f32.mrf.mxu0
      %v7450 = vadd.f32 %v5067, %v7449
      %7451 = vdwg.mxu0
      %7452 = vmatpush.bf16.msra.mxu0 %v5890
      %7453 = vmatpush.bf16.msra.mxu0 %v5883
      %7454 = vmatpush.bf16.msra.mxu0 %v5876
      %7455 = vmatpush.bf16.msra.mxu0 %v5869
      %7456 = vmatpush.bf16.msra.mxu0 %v5862
      %7457 = vmatpush.bf16.msra.mxu0 %v5855
      %7458 = vmatpush.bf16.msra.mxu0 %v5848
      %7459 = vmatpush.bf16.msra.mxu0 %v5841
      %7460 = vmatmul.bf16.gmra.mxu0 %v4772
      %v7461 = vpop.f32.mrf.mxu0
      %v7462 = vadd.f32 %v7413, %v7461
      %v7463 = vpop.f32.mrf.mxu0
      %v7464 = vadd.f32 %v7415, %v7463
      %7465 = vmatmul.bf16.gmra.mxu0 %v4776
      %v7466 = vpop.f32.mrf.mxu0
      %v7467 = vadd.f32 %v7418, %v7466
      %v7468 = vpop.f32.mrf.mxu0
      %v7469 = vadd.f32 %v7420, %v7468
      %7470 = vmatmul.bf16.gmra.mxu0 %v4780
      %v7471 = vpop.f32.mrf.mxu0
      %v7472 = vadd.f32 %v7423, %v7471
      %v7473 = vpop.f32.mrf.mxu0
      %v7474 = vadd.f32 %v7425, %v7473
      %7475 = vmatmul.bf16.gmra.mxu0 %v4784
      %v7476 = vpop.f32.mrf.mxu0
      %v7477 = vadd.f32 %v7428, %v7476
      %v7478 = vpop.f32.mrf.mxu0
      %v7479 = vadd.f32 %v7430, %v7478
      %7480 = vmatmul.bf16.gmra.mxu0 %v4788
      %v7481 = vpop.f32.mrf.mxu0
      %v7482 = vadd.f32 %v7433, %v7481
      %v7483 = vpop.f32.mrf.mxu0
      %v7484 = vadd.f32 %v7435, %v7483
      %7485 = vmatmul.bf16.gmra.mxu0 %v4792
      %v7486 = vpop.f32.mrf.mxu0
      %v7487 = vadd.f32 %v7438, %v7486
      %v7488 = vpop.f32.mrf.mxu0
      %v7489 = vadd.f32 %v7440, %v7488
      %7490 = vmatmul.bf16.gmra.mxu0 %v4796
      %v7491 = vpop.f32.mrf.mxu0
      %v7492 = vadd.f32 %v7443, %v7491
      %v7493 = vpop.f32.mrf.mxu0
      %v7494 = vadd.f32 %v7445, %v7493
      %7495 = vmatmul.bf16.gmra.mxu0 %v4800
      %v7496 = vpop.f32.mrf.mxu0
      %v7497 = vadd.f32 %v7448, %v7496
      %v7498 = vpop.f32.mrf.mxu0
      %v7499 = vadd.f32 %v7450, %v7498
      %7500 = vdwg.mxu0
      %7501 = vmatpush.bf16.msra.mxu0 %v5946
      %7502 = vmatpush.bf16.msra.mxu0 %v5939
      %7503 = vmatpush.bf16.msra.mxu0 %v5932
      %7504 = vmatpush.bf16.msra.mxu0 %v5925
      %7505 = vmatpush.bf16.msra.mxu0 %v5918
      %7506 = vmatpush.bf16.msra.mxu0 %v5911
      %7507 = vmatpush.bf16.msra.mxu0 %v5904
      %7508 = vmatpush.bf16.msra.mxu0 %v5897
      %7509 = vmatmul.bf16.gmra.mxu0 %v4773
      %v7510 = vpop.f32.mrf.mxu0
      %v7511 = vadd.f32 %v7462, %v7510
      %v7512 = vpop.f32.mrf.mxu0
      %v7513 = vadd.f32 %v7464, %v7512
      %7514 = vmatmul.bf16.gmra.mxu0 %v4777
      %v7515 = vpop.f32.mrf.mxu0
      %v7516 = vadd.f32 %v7467, %v7515
      %v7517 = vpop.f32.mrf.mxu0
      %v7518 = vadd.f32 %v7469, %v7517
      %7519 = vmatmul.bf16.gmra.mxu0 %v4781
      %v7520 = vpop.f32.mrf.mxu0
      %v7521 = vadd.f32 %v7472, %v7520
      %v7522 = vpop.f32.mrf.mxu0
      %v7523 = vadd.f32 %v7474, %v7522
      %7524 = vmatmul.bf16.gmra.mxu0 %v4785
      %v7525 = vpop.f32.mrf.mxu0
      %v7526 = vadd.f32 %v7477, %v7525
      %v7527 = vpop.f32.mrf.mxu0
      %v7528 = vadd.f32 %v7479, %v7527
      %7529 = vmatmul.bf16.gmra.mxu0 %v4789
      %v7530 = vpop.f32.mrf.mxu0
      %v7531 = vadd.f32 %v7482, %v7530
      %v7532 = vpop.f32.mrf.mxu0
      %v7533 = vadd.f32 %v7484, %v7532
      %7534 = vmatmul.bf16.gmra.mxu0 %v4793
      %v7535 = vpop.f32.mrf.mxu0
      %v7536 = vadd.f32 %v7487, %v7535
      %v7537 = vpop.f32.mrf.mxu0
      %v7538 = vadd.f32 %v7489, %v7537
      %7539 = vmatmul.bf16.gmra.mxu0 %v4797
      %v7540 = vpop.f32.mrf.mxu0
      %v7541 = vadd.f32 %v7492, %v7540
      %v7542 = vpop.f32.mrf.mxu0
      %v7543 = vadd.f32 %v7494, %v7542
      %7544 = vmatmul.bf16.gmra.mxu0 %v4801
      %v7545 = vpop.f32.mrf.mxu0
      %v7546 = vadd.f32 %v7497, %v7545
      %v7547 = vpop.f32.mrf.mxu0
      %v7548 = vadd.f32 %v7499, %v7547
      %7549 = vdwg.mxu0
      %7550 = vmatpush.bf16.msra.mxu0 %v6002
      %7551 = vmatpush.bf16.msra.mxu0 %v5995
      %7552 = vmatpush.bf16.msra.mxu0 %v5988
      %7553 = vmatpush.bf16.msra.mxu0 %v5981
      %7554 = vmatpush.bf16.msra.mxu0 %v5974
      %7555 = vmatpush.bf16.msra.mxu0 %v5967
      %7556 = vmatpush.bf16.msra.mxu0 %v5960
      %7557 = vmatpush.bf16.msra.mxu0 %v5953
      %7558 = vmatmul.bf16.gmra.mxu0 %v4774
      %v7559 = vpop.f32.mrf.mxu0
      %v7560 = vadd.f32 %v7511, %v7559
      %v7561 = vpop.f32.mrf.mxu0
      %v7562 = vadd.f32 %v7513, %v7561
      %7563 = vmatmul.bf16.gmra.mxu0 %v4778
      %v7564 = vpop.f32.mrf.mxu0
      %v7565 = vadd.f32 %v7516, %v7564
      %v7566 = vpop.f32.mrf.mxu0
      %v7567 = vadd.f32 %v7518, %v7566
      %7568 = vmatmul.bf16.gmra.mxu0 %v4782
      %v7569 = vpop.f32.mrf.mxu0
      %v7570 = vadd.f32 %v7521, %v7569
      %v7571 = vpop.f32.mrf.mxu0
      %v7572 = vadd.f32 %v7523, %v7571
      %7573 = vmatmul.bf16.gmra.mxu0 %v4786
      %v7574 = vpop.f32.mrf.mxu0
      %v7575 = vadd.f32 %v7526, %v7574
      %v7576 = vpop.f32.mrf.mxu0
      %v7577 = vadd.f32 %v7528, %v7576
      %7578 = vmatmul.bf16.gmra.mxu0 %v4790
      %v7579 = vpop.f32.mrf.mxu0
      %v7580 = vadd.f32 %v7531, %v7579
      %v7581 = vpop.f32.mrf.mxu0
      %v7582 = vadd.f32 %v7533, %v7581
      %7583 = vmatmul.bf16.gmra.mxu0 %v4794
      %v7584 = vpop.f32.mrf.mxu0
      %v7585 = vadd.f32 %v7536, %v7584
      %v7586 = vpop.f32.mrf.mxu0
      %v7587 = vadd.f32 %v7538, %v7586
      %7588 = vmatmul.bf16.gmra.mxu0 %v4798
      %v7589 = vpop.f32.mrf.mxu0
      %v7590 = vadd.f32 %v7541, %v7589
      %v7591 = vpop.f32.mrf.mxu0
      %v7592 = vadd.f32 %v7543, %v7591
      %7593 = vmatmul.bf16.gmra.mxu0 %v4802
      %v7594 = vpop.f32.mrf.mxu0
      %v7595 = vadd.f32 %v7546, %v7594
      %v7596 = vpop.f32.mrf.mxu0
      %v7597 = vadd.f32 %v7548, %v7596
      %7598 = vdwg.mxu0
      %v7599 = vxor.u32 %v6384, 2147483648
      %v7600 = vxor.u32 %v6580, 2147483648
      %v7601 = vxor.u32 %v6776, 2147483648
      %v7602 = vxor.u32 %v6972, 2147483648
      %v7603 = vxor.u32 %v7168, 2147483648
      %v7604 = vxor.u32 %v7364, 2147483648
      %v7605 = vxor.u32 %v7560, 2147483648
      %v7606 = vxor.u32 %v6386, 2147483648
      %v7607 = vxor.u32 %v6582, 2147483648
      %v7608 = vxor.u32 %v6778, 2147483648
      %v7609 = vxor.u32 %v6974, 2147483648
      %v7610 = vxor.u32 %v7170, 2147483648
      %v7611 = vxor.u32 %v7366, 2147483648
      %v7612 = vxor.u32 %v7562, 2147483648
      %v7613 = vxor.u32 %v6389, 2147483648
      %v7614 = vxor.u32 %v6585, 2147483648
      %v7615 = vxor.u32 %v6781, 2147483648
      %v7616 = vxor.u32 %v6977, 2147483648
      %v7617 = vxor.u32 %v7173, 2147483648
      %v7618 = vxor.u32 %v7369, 2147483648
      %v7619 = vxor.u32 %v7565, 2147483648
      %v7620 = vxor.u32 %v6391, 2147483648
      %v7621 = vxor.u32 %v6587, 2147483648
      %v7622 = vxor.u32 %v6783, 2147483648
      %v7623 = vxor.u32 %v6979, 2147483648
      %v7624 = vxor.u32 %v7175, 2147483648
      %v7625 = vxor.u32 %v7371, 2147483648
      %v7626 = vxor.u32 %v7567, 2147483648
      %v7627 = vxor.u32 %v6394, 2147483648
      %v7628 = vxor.u32 %v6590, 2147483648
      %v7629 = vxor.u32 %v6786, 2147483648
      %v7630 = vxor.u32 %v6982, 2147483648
      %v7631 = vxor.u32 %v7178, 2147483648
      %v7632 = vxor.u32 %v7374, 2147483648
      %v7633 = vxor.u32 %v7570, 2147483648
      %v7634 = vxor.u32 %v6396, 2147483648
      %v7635 = vxor.u32 %v6592, 2147483648
      %v7636 = vxor.u32 %v6788, 2147483648
      %v7637 = vxor.u32 %v6984, 2147483648
      %v7638 = vxor.u32 %v7180, 2147483648
      %v7639 = vxor.u32 %v7376, 2147483648
      %v7640 = vxor.u32 %v7572, 2147483648
      %v7641 = vxor.u32 %v6399, 2147483648
      %v7642 = vxor.u32 %v6595, 2147483648
      %v7643 = vxor.u32 %v6791, 2147483648
      %v7644 = vxor.u32 %v6987, 2147483648
      %v7645 = vxor.u32 %v7183, 2147483648
      %v7646 = vxor.u32 %v7379, 2147483648
      %v7647 = vxor.u32 %v7575, 2147483648
      %v7648 = vxor.u32 %v6401, 2147483648
      %v7649 = vxor.u32 %v6597, 2147483648
      %v7650 = vxor.u32 %v6793, 2147483648
      %v7651 = vxor.u32 %v6989, 2147483648
      %v7652 = vxor.u32 %v7185, 2147483648
      %v7653 = vxor.u32 %v7381, 2147483648
      %v7654 = vxor.u32 %v7577, 2147483648
      %v7655 = vxor.u32 %v6404, 2147483648
      %v7656 = vxor.u32 %v6600, 2147483648
      %v7657 = vxor.u32 %v6796, 2147483648
      %v7658 = vxor.u32 %v6992, 2147483648
      %v7659 = vxor.u32 %v7188, 2147483648
      %v7660 = vxor.u32 %v7384, 2147483648
      %v7661 = vxor.u32 %v7580, 2147483648
      %v7662 = vxor.u32 %v6406, 2147483648
      %v7663 = vxor.u32 %v6602, 2147483648
      %v7664 = vxor.u32 %v6798, 2147483648
      %v7665 = vxor.u32 %v6994, 2147483648
      %v7666 = vxor.u32 %v7190, 2147483648
      %v7667 = vxor.u32 %v7386, 2147483648
      %v7668 = vxor.u32 %v7582, 2147483648
      %v7669 = vxor.u32 %v6409, 2147483648
      %v7670 = vxor.u32 %v6605, 2147483648
      %v7671 = vxor.u32 %v6801, 2147483648
      %v7672 = vxor.u32 %v6997, 2147483648
      %v7673 = vxor.u32 %v7193, 2147483648
      %v7674 = vxor.u32 %v7389, 2147483648
      %v7675 = vxor.u32 %v7585, 2147483648
      %v7676 = vxor.u32 %v6411, 2147483648
      %v7677 = vxor.u32 %v6607, 2147483648
      %v7678 = vxor.u32 %v6803, 2147483648
      %v7679 = vxor.u32 %v6999, 2147483648
      %v7680 = vxor.u32 %v7195, 2147483648
      %v7681 = vxor.u32 %v7391, 2147483648
      %v7682 = vxor.u32 %v7587, 2147483648
      %v7683 = vxor.u32 %v6414, 2147483648
      %v7684 = vxor.u32 %v6610, 2147483648
      %v7685 = vxor.u32 %v6806, 2147483648
      %v7686 = vxor.u32 %v7002, 2147483648
      %v7687 = vxor.u32 %v7198, 2147483648
      %v7688 = vxor.u32 %v7394, 2147483648
      %v7689 = vxor.u32 %v7590, 2147483648
      %v7690 = vxor.u32 %v6416, 2147483648
      %v7691 = vxor.u32 %v6612, 2147483648
      %v7692 = vxor.u32 %v6808, 2147483648
      %v7693 = vxor.u32 %v7004, 2147483648
      %v7694 = vxor.u32 %v7200, 2147483648
      %v7695 = vxor.u32 %v7396, 2147483648
      %v7696 = vxor.u32 %v7592, 2147483648
      %v7697 = vxor.u32 %v6419, 2147483648
      %v7698 = vxor.u32 %v6615, 2147483648
      %v7699 = vxor.u32 %v6811, 2147483648
      %v7700 = vxor.u32 %v7007, 2147483648
      %v7701 = vxor.u32 %v7203, 2147483648
      %v7702 = vxor.u32 %v7399, 2147483648
      %v7703 = vxor.u32 %v7595, 2147483648
      %v7704 = vxor.u32 %v6421, 2147483648
      %v7705 = vxor.u32 %v6617, 2147483648
      %v7706 = vxor.u32 %v6813, 2147483648
      %v7707 = vxor.u32 %v7009, 2147483648
      %v7708 = vxor.u32 %v7205, 2147483648
      %v7709 = vxor.u32 %v7401, 2147483648
      %v7710 = vxor.u32 %v7597, 2147483648
      %v7711 = vmul.f32 %v7599, 1.442695
      %v7712 = vpow.pop %v7711
      %v7713 = vmul.f32 %v7600, 1.442695
      %v7714 = vpow.pop %v7713
      %v7715 = vmul.f32 %v7601, 1.442695
      %v7716 = vpow.pop %v7715
      %v7717 = vmul.f32 %v7602, 1.442695
      %v7718 = vpow.pop %v7717
      %v7719 = vmul.f32 %v7603, 1.442695
      %v7720 = vpow.pop %v7719
      %v7721 = vmul.f32 %v7604, 1.442695
      %v7722 = vpow.pop %v7721
      %v7723 = vmul.f32 %v7605, 1.442695
      %v7724 = vpow.pop %v7723
      %v7725 = vmul.f32 %v7606, 1.442695
      %v7726 = vpow.pop %v7725
      %v7727 = vmul.f32 %v7607, 1.442695
      %v7728 = vpow.pop %v7727
      %v7729 = vmul.f32 %v7608, 1.442695
      %v7730 = vpow.pop %v7729
      %v7731 = vmul.f32 %v7609, 1.442695
      %v7732 = vpow.pop %v7731
      %v7733 = vmul.f32 %v7610, 1.442695
      %v7734 = vpow.pop %v7733
      %v7735 = vmul.f32 %v7611, 1.442695
      %v7736 = vpow.pop %v7735
      %v7737 = vmul.f32 %v7612, 1.442695
      %v7738 = vpow.pop %v7737
      %v7739 = vmul.f32 %v7613, 1.442695
      %v7740 = vpow.pop %v7739
      %v7741 = vmul.f32 %v7614, 1.442695
      %v7742 = vpow.pop %v7741
      %v7743 = vmul.f32 %v7615, 1.442695
      %v7744 = vpow.pop %v7743
      %v7745 = vmul.f32 %v7616, 1.442695
      %v7746 = vpow.pop %v7745
      %v7747 = vmul.f32 %v7617, 1.442695
      %v7748 = vpow.pop %v7747
      %v7749 = vmul.f32 %v7618, 1.442695
      %v7750 = vpow.pop %v7749
      %v7751 = vmul.f32 %v7619, 1.442695
      %v7752 = vpow.pop %v7751
      %v7753 = vmul.f32 %v7620, 1.442695
      %v7754 = vpow.pop %v7753
      %v7755 = vmul.f32 %v7621, 1.442695
      %v7756 = vpow.pop %v7755
      %v7757 = vmul.f32 %v7622, 1.442695
      %v7758 = vpow.pop %v7757
      %v7759 = vmul.f32 %v7623, 1.442695
      %v7760 = vpow.pop %v7759
      %v7761 = vmul.f32 %v7624, 1.442695
      %v7762 = vpow.pop %v7761
      %v7763 = vmul.f32 %v7625, 1.442695
      %v7764 = vpow.pop %v7763
      %v7765 = vmul.f32 %v7626, 1.442695
      %v7766 = vpow.pop %v7765
      %v7767 = vmul.f32 %v7627, 1.442695
      %v7768 = vpow.pop %v7767
      %v7769 = vmul.f32 %v7628, 1.442695
      %v7770 = vpow.pop %v7769
      %v7771 = vmul.f32 %v7629, 1.442695
      %v7772 = vpow.pop %v7771
      %v7773 = vmul.f32 %v7630, 1.442695
      %v7774 = vpow.pop %v7773
      %v7775 = vmul.f32 %v7631, 1.442695
      %v7776 = vpow.pop %v7775
      %v7777 = vmul.f32 %v7632, 1.442695
      %v7778 = vpow.pop %v7777
      %v7779 = vmul.f32 %v7633, 1.442695
      %v7780 = vpow.pop %v7779
      %v7781 = vmul.f32 %v7634, 1.442695
      %v7782 = vpow.pop %v7781
      %v7783 = vmul.f32 %v7635, 1.442695
      %v7784 = vpow.pop %v7783
      %v7785 = vmul.f32 %v7636, 1.442695
      %v7786 = vpow.pop %v7785
      %v7787 = vmul.f32 %v7637, 1.442695
      %v7788 = vpow.pop %v7787
      %v7789 = vmul.f32 %v7638, 1.442695
      %v7790 = vpow.pop %v7789
      %v7791 = vmul.f32 %v7639, 1.442695
      %v7792 = vpow.pop %v7791
      %v7793 = vmul.f32 %v7640, 1.442695
      %v7794 = vpow.pop %v7793
      %v7795 = vmul.f32 %v7641, 1.442695
      %v7796 = vpow.pop %v7795
      %v7797 = vmul.f32 %v7642, 1.442695
      %v7798 = vpow.pop %v7797
      %v7799 = vmul.f32 %v7643, 1.442695
      %v7800 = vpow.pop %v7799
      %v7801 = vmul.f32 %v7644, 1.442695
      %v7802 = vpow.pop %v7801
      %v7803 = vmul.f32 %v7645, 1.442695
      %v7804 = vpow.pop %v7803
      %v7805 = vmul.f32 %v7646, 1.442695
      %v7806 = vpow.pop %v7805
      %v7807 = vmul.f32 %v7647, 1.442695
      %v7808 = vpow.pop %v7807
      %v7809 = vmul.f32 %v7648, 1.442695
      %v7810 = vpow.pop %v7809
      %v7811 = vmul.f32 %v7649, 1.442695
      %v7812 = vpow.pop %v7811
      %v7813 = vmul.f32 %v7650, 1.442695
      %v7814 = vpow.pop %v7813
      %v7815 = vmul.f32 %v7651, 1.442695
      %v7816 = vpow.pop %v7815
      %v7817 = vmul.f32 %v7652, 1.442695
      %v7818 = vpow.pop %v7817
      %v7819 = vmul.f32 %v7653, 1.442695
      %v7820 = vpow.pop %v7819
      %v7821 = vmul.f32 %v7654, 1.442695
      %v7822 = vpow.pop %v7821
      %v7823 = vmul.f32 %v7655, 1.442695
      %v7824 = vpow.pop %v7823
      %v7825 = vmul.f32 %v7656, 1.442695
      %v7826 = vpow.pop %v7825
      %v7827 = vmul.f32 %v7657, 1.442695
      %v7828 = vpow.pop %v7827
      %v7829 = vmul.f32 %v7658, 1.442695
      %v7830 = vpow.pop %v7829
      %v7831 = vmul.f32 %v7659, 1.442695
      %v7832 = vpow.pop %v7831
      %v7833 = vmul.f32 %v7660, 1.442695
      %v7834 = vpow.pop %v7833
      %v7835 = vmul.f32 %v7661, 1.442695
      %v7836 = vpow.pop %v7835
      %v7837 = vmul.f32 %v7662, 1.442695
      %v7838 = vpow.pop %v7837
      %v7839 = vmul.f32 %v7663, 1.442695
      %v7840 = vpow.pop %v7839
      %v7841 = vmul.f32 %v7664, 1.442695
      %v7842 = vpow.pop %v7841
      %v7843 = vmul.f32 %v7665, 1.442695
      %v7844 = vpow.pop %v7843
      %v7845 = vmul.f32 %v7666, 1.442695
      %v7846 = vpow.pop %v7845
      %v7847 = vmul.f32 %v7667, 1.442695
      %v7848 = vpow.pop %v7847
      %v7849 = vmul.f32 %v7668, 1.442695
      %v7850 = vpow.pop %v7849
      %v7851 = vmul.f32 %v7669, 1.442695
      %v7852 = vpow.pop %v7851
      %v7853 = vmul.f32 %v7670, 1.442695
      %v7854 = vpow.pop %v7853
      %v7855 = vmul.f32 %v7671, 1.442695
      %v7856 = vpow.pop %v7855
      %v7857 = vmul.f32 %v7672, 1.442695
      %v7858 = vpow.pop %v7857
      %v7859 = vmul.f32 %v7673, 1.442695
      %v7860 = vpow.pop %v7859
      %v7861 = vmul.f32 %v7674, 1.442695
      %v7862 = vpow.pop %v7861
      %v7863 = vmul.f32 %v7675, 1.442695
      %v7864 = vpow.pop %v7863
      %v7865 = vmul.f32 %v7676, 1.442695
      %v7866 = vpow.pop %v7865
      %v7867 = vmul.f32 %v7677, 1.442695
      %v7868 = vpow.pop %v7867
      %v7869 = vmul.f32 %v7678, 1.442695
      %v7870 = vpow.pop %v7869
      %v7871 = vmul.f32 %v7679, 1.442695
      %v7872 = vpow.pop %v7871
      %v7873 = vmul.f32 %v7680, 1.442695
      %v7874 = vpow.pop %v7873
      %v7875 = vmul.f32 %v7681, 1.442695
      %v7876 = vpow.pop %v7875
      %v7877 = vmul.f32 %v7682, 1.442695
      %v7878 = vpow.pop %v7877
      %v7879 = vmul.f32 %v7683, 1.442695
      %v7880 = vpow.pop %v7879
      %v7881 = vmul.f32 %v7684, 1.442695
      %v7882 = vpow.pop %v7881
      %v7883 = vmul.f32 %v7685, 1.442695
      %v7884 = vpow.pop %v7883
      %v7885 = vmul.f32 %v7686, 1.442695
      %v7886 = vpow.pop %v7885
      %v7887 = vmul.f32 %v7687, 1.442695
      %v7888 = vpow.pop %v7887
      %v7889 = vmul.f32 %v7688, 1.442695
      %v7890 = vpow.pop %v7889
      %v7891 = vmul.f32 %v7689, 1.442695
      %v7892 = vpow.pop %v7891
      %v7893 = vmul.f32 %v7690, 1.442695
      %v7894 = vpow.pop %v7893
      %v7895 = vmul.f32 %v7691, 1.442695
      %v7896 = vpow.pop %v7895
      %v7897 = vmul.f32 %v7692, 1.442695
      %v7898 = vpow.pop %v7897
      %v7899 = vmul.f32 %v7693, 1.442695
      %v7900 = vpow.pop %v7899
      %v7901 = vmul.f32 %v7694, 1.442695
      %v7902 = vpow.pop %v7901
      %v7903 = vmul.f32 %v7695, 1.442695
      %v7904 = vpow.pop %v7903
      %v7905 = vmul.f32 %v7696, 1.442695
      %v7906 = vpow.pop %v7905
      %v7907 = vmul.f32 %v7697, 1.442695
      %v7908 = vpow.pop %v7907
      %v7909 = vmul.f32 %v7698, 1.442695
      %v7910 = vpow.pop %v7909
      %v7911 = vmul.f32 %v7699, 1.442695
      %v7912 = vpow.pop %v7911
      %v7913 = vmul.f32 %v7700, 1.442695
      %v7914 = vpow.pop %v7913
      %v7915 = vmul.f32 %v7701, 1.442695
      %v7916 = vpow.pop %v7915
      %v7917 = vmul.f32 %v7702, 1.442695
      %v7918 = vpow.pop %v7917
      %v7919 = vmul.f32 %v7703, 1.442695
      %v7920 = vpow.pop %v7919
      %v7921 = vmul.f32 %v7704, 1.442695
      %v7922 = vpow.pop %v7921
      %v7923 = vmul.f32 %v7705, 1.442695
      %v7924 = vpow.pop %v7923
      %v7925 = vmul.f32 %v7706, 1.442695
      %v7926 = vpow.pop %v7925
      %v7927 = vmul.f32 %v7707, 1.442695
      %v7928 = vpow.pop %v7927
      %v7929 = vmul.f32 %v7708, 1.442695
      %v7930 = vpow.pop %v7929
      %v7931 = vmul.f32 %v7709, 1.442695
      %v7932 = vpow.pop %v7931
      %v7933 = vmul.f32 %v7710, 1.442695
      %v7934 = vpow.pop %v7933
      %v7935 = vadd.f32 %v7712, 1.0
      %v7936 = vadd.f32 %v7714, 1.0
      %v7937 = vadd.f32 %v7716, 1.0
      %v7938 = vadd.f32 %v7718, 1.0
      %v7939 = vadd.f32 %v7720, 1.0
      %v7940 = vadd.f32 %v7722, 1.0
      %v7941 = vadd.f32 %v7724, 1.0
      %v7942 = vadd.f32 %v7726, 1.0
      %v7943 = vadd.f32 %v7728, 1.0
      %v7944 = vadd.f32 %v7730, 1.0
      %v7945 = vadd.f32 %v7732, 1.0
      %v7946 = vadd.f32 %v7734, 1.0
      %v7947 = vadd.f32 %v7736, 1.0
      %v7948 = vadd.f32 %v7738, 1.0
      %v7949 = vadd.f32 %v7740, 1.0
      %v7950 = vadd.f32 %v7742, 1.0
      %v7951 = vadd.f32 %v7744, 1.0
      %v7952 = vadd.f32 %v7746, 1.0
      %v7953 = vadd.f32 %v7748, 1.0
      %v7954 = vadd.f32 %v7750, 1.0
      %v7955 = vadd.f32 %v7752, 1.0
      %v7956 = vadd.f32 %v7754, 1.0
      %v7957 = vadd.f32 %v7756, 1.0
      %v7958 = vadd.f32 %v7758, 1.0
      %v7959 = vadd.f32 %v7760, 1.0
      %v7960 = vadd.f32 %v7762, 1.0
      %v7961 = vadd.f32 %v7764, 1.0
      %v7962 = vadd.f32 %v7766, 1.0
      %v7963 = vadd.f32 %v7768, 1.0
      %v7964 = vadd.f32 %v7770, 1.0
      %v7965 = vadd.f32 %v7772, 1.0
      %v7966 = vadd.f32 %v7774, 1.0
      %v7967 = vadd.f32 %v7776, 1.0
      %v7968 = vadd.f32 %v7778, 1.0
      %v7969 = vadd.f32 %v7780, 1.0
      %v7970 = vadd.f32 %v7782, 1.0
      %v7971 = vadd.f32 %v7784, 1.0
      %v7972 = vadd.f32 %v7786, 1.0
      %v7973 = vadd.f32 %v7788, 1.0
      %v7974 = vadd.f32 %v7790, 1.0
      %v7975 = vadd.f32 %v7792, 1.0
      %v7976 = vadd.f32 %v7794, 1.0
      %v7977 = vadd.f32 %v7796, 1.0
      %v7978 = vadd.f32 %v7798, 1.0
      %v7979 = vadd.f32 %v7800, 1.0
      %v7980 = vadd.f32 %v7802, 1.0
      %v7981 = vadd.f32 %v7804, 1.0
      %v7982 = vadd.f32 %v7806, 1.0
      %v7983 = vadd.f32 %v7808, 1.0
      %v7984 = vadd.f32 %v7810, 1.0
      %v7985 = vadd.f32 %v7812, 1.0
      %v7986 = vadd.f32 %v7814, 1.0
      %v7987 = vadd.f32 %v7816, 1.0
      %v7988 = vadd.f32 %v7818, 1.0
      %v7989 = vadd.f32 %v7820, 1.0
      %v7990 = vadd.f32 %v7822, 1.0
      %v7991 = vadd.f32 %v7824, 1.0
      %v7992 = vadd.f32 %v7826, 1.0
      %v7993 = vadd.f32 %v7828, 1.0
      %v7994 = vadd.f32 %v7830, 1.0
      %v7995 = vadd.f32 %v7832, 1.0
      %v7996 = vadd.f32 %v7834, 1.0
      %v7997 = vadd.f32 %v7836, 1.0
      %v7998 = vadd.f32 %v7838, 1.0
      %v7999 = vadd.f32 %v7840, 1.0
      %v8000 = vadd.f32 %v7842, 1.0
      %v8001 = vadd.f32 %v7844, 1.0
      %v8002 = vadd.f32 %v7846, 1.0
      %v8003 = vadd.f32 %v7848, 1.0
      %v8004 = vadd.f32 %v7850, 1.0
      %v8005 = vadd.f32 %v7852, 1.0
      %v8006 = vadd.f32 %v7854, 1.0
      %v8007 = vadd.f32 %v7856, 1.0
      %v8008 = vadd.f32 %v7858, 1.0
      %v8009 = vadd.f32 %v7860, 1.0
      %v8010 = vadd.f32 %v7862, 1.0
      %v8011 = vadd.f32 %v7864, 1.0
      %v8012 = vadd.f32 %v7866, 1.0
      %v8013 = vadd.f32 %v7868, 1.0
      %v8014 = vadd.f32 %v7870, 1.0
      %v8015 = vadd.f32 %v7872, 1.0
      %v8016 = vadd.f32 %v7874, 1.0
      %v8017 = vadd.f32 %v7876, 1.0
      %v8018 = vadd.f32 %v7878, 1.0
      %v8019 = vadd.f32 %v7880, 1.0
      %v8020 = vadd.f32 %v7882, 1.0
      %v8021 = vadd.f32 %v7884, 1.0
      %v8022 = vadd.f32 %v7886, 1.0
      %v8023 = vadd.f32 %v7888, 1.0
      %v8024 = vadd.f32 %v7890, 1.0
      %v8025 = vadd.f32 %v7892, 1.0
      %v8026 = vadd.f32 %v7894, 1.0
      %v8027 = vadd.f32 %v7896, 1.0
      %v8028 = vadd.f32 %v7898, 1.0
      %v8029 = vadd.f32 %v7900, 1.0
      %v8030 = vadd.f32 %v7902, 1.0
      %v8031 = vadd.f32 %v7904, 1.0
      %v8032 = vadd.f32 %v7906, 1.0
      %v8033 = vadd.f32 %v7908, 1.0
      %v8034 = vadd.f32 %v7910, 1.0
      %v8035 = vadd.f32 %v7912, 1.0
      %v8036 = vadd.f32 %v7914, 1.0
      %v8037 = vadd.f32 %v7916, 1.0
      %v8038 = vadd.f32 %v7918, 1.0
      %v8039 = vadd.f32 %v7920, 1.0
      %v8040 = vadd.f32 %v7922, 1.0
      %v8041 = vadd.f32 %v7924, 1.0
      %v8042 = vadd.f32 %v7926, 1.0
      %v8043 = vadd.f32 %v7928, 1.0
      %v8044 = vadd.f32 %v7930, 1.0
      %v8045 = vadd.f32 %v7932, 1.0
      %v8046 = vadd.f32 %v7934, 1.0
      %v8047 = vrcp.pop %v7935
      %v8048 = vmul.f32 %v7935, %v8047
      %v8049 = vsub.f32 1.0, %v8048
      %v8050 = vmul.f32 %v8047, %v8049
      %v8051 = vadd.f32 %v8047, %v8050
      %vm8052 = vweird.f32 %v7935
      %vm8053 = vweird.f32 %v8047
      %vm8054 = vmor %vm8052, %vm8053
      %v8055 = vsel %vm8054, %v8047, %v8051
      %v8056 = vand.u32 2147483647, %v7935
      %vm8057 = vcmp.eq.f32.partialorder %v8056, 8.507059e+37
      %v8058 = vand.u32 %v7935, 2147483648
      %v8059 = vor.u32 1.1754944e-38, %v8058
      %v8060 = vsel %vm8057, %v8059, %v8055
      %v8061 = vmul.f32 1.0, %v8060
      %v8062 = vrcp.pop %v7936
      %v8063 = vmul.f32 %v7936, %v8062
      %v8064 = vsub.f32 1.0, %v8063
      %v8065 = vmul.f32 %v8062, %v8064
      %v8066 = vadd.f32 %v8062, %v8065
      %vm8067 = vweird.f32 %v7936
      %vm8068 = vweird.f32 %v8062
      %vm8069 = vmor %vm8067, %vm8068
      %v8070 = vsel %vm8069, %v8062, %v8066
      %v8071 = vand.u32 2147483647, %v7936
      %vm8072 = vcmp.eq.f32.partialorder %v8071, 8.507059e+37
      %v8073 = vand.u32 %v7936, 2147483648
      %v8074 = vor.u32 1.1754944e-38, %v8073
      %v8075 = vsel %vm8072, %v8074, %v8070
      %v8076 = vmul.f32 1.0, %v8075
      %v8077 = vrcp.pop %v7937
      %v8078 = vmul.f32 %v7937, %v8077
      %v8079 = vsub.f32 1.0, %v8078
      %v8080 = vmul.f32 %v8077, %v8079
      %v8081 = vadd.f32 %v8077, %v8080
      %vm8082 = vweird.f32 %v7937
      %vm8083 = vweird.f32 %v8077
      %vm8084 = vmor %vm8082, %vm8083
      %v8085 = vsel %vm8084, %v8077, %v8081
      %v8086 = vand.u32 2147483647, %v7937
      %vm8087 = vcmp.eq.f32.partialorder %v8086, 8.507059e+37
      %v8088 = vand.u32 %v7937, 2147483648
      %v8089 = vor.u32 1.1754944e-38, %v8088
      %v8090 = vsel %vm8087, %v8089, %v8085
      %v8091 = vmul.f32 1.0, %v8090
      %v8092 = vrcp.pop %v7938
      %v8093 = vmul.f32 %v7938, %v8092
      %v8094 = vsub.f32 1.0, %v8093
      %v8095 = vmul.f32 %v8092, %v8094
      %v8096 = vadd.f32 %v8092, %v8095
      %vm8097 = vweird.f32 %v7938
      %vm8098 = vweird.f32 %v8092
      %vm8099 = vmor %vm8097, %vm8098
      %v8100 = vsel %vm8099, %v8092, %v8096
      %v8101 = vand.u32 2147483647, %v7938
      %vm8102 = vcmp.eq.f32.partialorder %v8101, 8.507059e+37
      %v8103 = vand.u32 %v7938, 2147483648
      %v8104 = vor.u32 1.1754944e-38, %v8103
      %v8105 = vsel %vm8102, %v8104, %v8100
      %v8106 = vmul.f32 1.0, %v8105
      %v8107 = vrcp.pop %v7939
      %v8108 = vmul.f32 %v7939, %v8107
      %v8109 = vsub.f32 1.0, %v8108
      %v8110 = vmul.f32 %v8107, %v8109
      %v8111 = vadd.f32 %v8107, %v8110
      %vm8112 = vweird.f32 %v7939
      %vm8113 = vweird.f32 %v8107
      %vm8114 = vmor %vm8112, %vm8113
      %v8115 = vsel %vm8114, %v8107, %v8111
      %v8116 = vand.u32 2147483647, %v7939
      %vm8117 = vcmp.eq.f32.partialorder %v8116, 8.507059e+37
      %v8118 = vand.u32 %v7939, 2147483648
      %v8119 = vor.u32 1.1754944e-38, %v8118
      %v8120 = vsel %vm8117, %v8119, %v8115
      %v8121 = vmul.f32 1.0, %v8120
      %v8122 = vrcp.pop %v7940
      %v8123 = vmul.f32 %v7940, %v8122
      %v8124 = vsub.f32 1.0, %v8123
      %v8125 = vmul.f32 %v8122, %v8124
      %v8126 = vadd.f32 %v8122, %v8125
      %vm8127 = vweird.f32 %v7940
      %vm8128 = vweird.f32 %v8122
      %vm8129 = vmor %vm8127, %vm8128
      %v8130 = vsel %vm8129, %v8122, %v8126
      %v8131 = vand.u32 2147483647, %v7940
      %vm8132 = vcmp.eq.f32.partialorder %v8131, 8.507059e+37
      %v8133 = vand.u32 %v7940, 2147483648
      %v8134 = vor.u32 1.1754944e-38, %v8133
      %v8135 = vsel %vm8132, %v8134, %v8130
      %v8136 = vmul.f32 1.0, %v8135
      %v8137 = vrcp.pop %v7941
      %v8138 = vmul.f32 %v7941, %v8137
      %v8139 = vsub.f32 1.0, %v8138
      %v8140 = vmul.f32 %v8137, %v8139
      %v8141 = vadd.f32 %v8137, %v8140
      %vm8142 = vweird.f32 %v7941
      %vm8143 = vweird.f32 %v8137
      %vm8144 = vmor %vm8142, %vm8143
      %v8145 = vsel %vm8144, %v8137, %v8141
      %v8146 = vand.u32 2147483647, %v7941
      %vm8147 = vcmp.eq.f32.partialorder %v8146, 8.507059e+37
      %v8148 = vand.u32 %v7941, 2147483648
      %v8149 = vor.u32 1.1754944e-38, %v8148
      %v8150 = vsel %vm8147, %v8149, %v8145
      %v8151 = vmul.f32 1.0, %v8150
      %v8152 = vrcp.pop %v7942
      %v8153 = vmul.f32 %v7942, %v8152
      %v8154 = vsub.f32 1.0, %v8153
      %v8155 = vmul.f32 %v8152, %v8154
      %v8156 = vadd.f32 %v8152, %v8155
      %vm8157 = vweird.f32 %v7942
      %vm8158 = vweird.f32 %v8152
      %vm8159 = vmor %vm8157, %vm8158
      %v8160 = vsel %vm8159, %v8152, %v8156
      %v8161 = vand.u32 2147483647, %v7942
      %vm8162 = vcmp.eq.f32.partialorder %v8161, 8.507059e+37
      %v8163 = vand.u32 %v7942, 2147483648
      %v8164 = vor.u32 1.1754944e-38, %v8163
      %v8165 = vsel %vm8162, %v8164, %v8160
      %v8166 = vmul.f32 1.0, %v8165
      %v8167 = vrcp.pop %v7943
      %v8168 = vmul.f32 %v7943, %v8167
      %v8169 = vsub.f32 1.0, %v8168
      %v8170 = vmul.f32 %v8167, %v8169
      %v8171 = vadd.f32 %v8167, %v8170
      %vm8172 = vweird.f32 %v7943
      %vm8173 = vweird.f32 %v8167
      %vm8174 = vmor %vm8172, %vm8173
      %v8175 = vsel %vm8174, %v8167, %v8171
      %v8176 = vand.u32 2147483647, %v7943
      %vm8177 = vcmp.eq.f32.partialorder %v8176, 8.507059e+37
      %v8178 = vand.u32 %v7943, 2147483648
      %v8179 = vor.u32 1.1754944e-38, %v8178
      %v8180 = vsel %vm8177, %v8179, %v8175
      %v8181 = vmul.f32 1.0, %v8180
      %v8182 = vrcp.pop %v7944
      %v8183 = vmul.f32 %v7944, %v8182
      %v8184 = vsub.f32 1.0, %v8183
      %v8185 = vmul.f32 %v8182, %v8184
      %v8186 = vadd.f32 %v8182, %v8185
      %vm8187 = vweird.f32 %v7944
      %vm8188 = vweird.f32 %v8182
      %vm8189 = vmor %vm8187, %vm8188
      %v8190 = vsel %vm8189, %v8182, %v8186
      %v8191 = vand.u32 2147483647, %v7944
      %vm8192 = vcmp.eq.f32.partialorder %v8191, 8.507059e+37
      %v8193 = vand.u32 %v7944, 2147483648
      %v8194 = vor.u32 1.1754944e-38, %v8193
      %v8195 = vsel %vm8192, %v8194, %v8190
      %v8196 = vmul.f32 1.0, %v8195
      %v8197 = vrcp.pop %v7945
      %v8198 = vmul.f32 %v7945, %v8197
      %v8199 = vsub.f32 1.0, %v8198
      %v8200 = vmul.f32 %v8197, %v8199
      %v8201 = vadd.f32 %v8197, %v8200
      %vm8202 = vweird.f32 %v7945
      %vm8203 = vweird.f32 %v8197
      %vm8204 = vmor %vm8202, %vm8203
      %v8205 = vsel %vm8204, %v8197, %v8201
      %v8206 = vand.u32 2147483647, %v7945
      %vm8207 = vcmp.eq.f32.partialorder %v8206, 8.507059e+37
      %v8208 = vand.u32 %v7945, 2147483648
      %v8209 = vor.u32 1.1754944e-38, %v8208
      %v8210 = vsel %vm8207, %v8209, %v8205
      %v8211 = vmul.f32 1.0, %v8210
      %v8212 = vrcp.pop %v7946
      %v8213 = vmul.f32 %v7946, %v8212
      %v8214 = vsub.f32 1.0, %v8213
      %v8215 = vmul.f32 %v8212, %v8214
      %v8216 = vadd.f32 %v8212, %v8215
      %vm8217 = vweird.f32 %v7946
      %vm8218 = vweird.f32 %v8212
      %vm8219 = vmor %vm8217, %vm8218
      %v8220 = vsel %vm8219, %v8212, %v8216
      %v8221 = vand.u32 2147483647, %v7946
      %vm8222 = vcmp.eq.f32.partialorder %v8221, 8.507059e+37
      %v8223 = vand.u32 %v7946, 2147483648
      %v8224 = vor.u32 1.1754944e-38, %v8223
      %v8225 = vsel %vm8222, %v8224, %v8220
      %v8226 = vmul.f32 1.0, %v8225
      %v8227 = vrcp.pop %v7947
      %v8228 = vmul.f32 %v7947, %v8227
      %v8229 = vsub.f32 1.0, %v8228
      %v8230 = vmul.f32 %v8227, %v8229
      %v8231 = vadd.f32 %v8227, %v8230
      %vm8232 = vweird.f32 %v7947
      %vm8233 = vweird.f32 %v8227
      %vm8234 = vmor %vm8232, %vm8233
      %v8235 = vsel %vm8234, %v8227, %v8231
      %v8236 = vand.u32 2147483647, %v7947
      %vm8237 = vcmp.eq.f32.partialorder %v8236, 8.507059e+37
      %v8238 = vand.u32 %v7947, 2147483648
      %v8239 = vor.u32 1.1754944e-38, %v8238
      %v8240 = vsel %vm8237, %v8239, %v8235
      %v8241 = vmul.f32 1.0, %v8240
      %v8242 = vrcp.pop %v7948
      %v8243 = vmul.f32 %v7948, %v8242
      %v8244 = vsub.f32 1.0, %v8243
      %v8245 = vmul.f32 %v8242, %v8244
      %v8246 = vadd.f32 %v8242, %v8245
      %vm8247 = vweird.f32 %v7948
      %vm8248 = vweird.f32 %v8242
      %vm8249 = vmor %vm8247, %vm8248
      %v8250 = vsel %vm8249, %v8242, %v8246
      %v8251 = vand.u32 2147483647, %v7948
      %vm8252 = vcmp.eq.f32.partialorder %v8251, 8.507059e+37
      %v8253 = vand.u32 %v7948, 2147483648
      %v8254 = vor.u32 1.1754944e-38, %v8253
      %v8255 = vsel %vm8252, %v8254, %v8250
      %v8256 = vmul.f32 1.0, %v8255
      %v8257 = vrcp.pop %v7949
      %v8258 = vmul.f32 %v7949, %v8257
      %v8259 = vsub.f32 1.0, %v8258
      %v8260 = vmul.f32 %v8257, %v8259
      %v8261 = vadd.f32 %v8257, %v8260
      %vm8262 = vweird.f32 %v7949
      %vm8263 = vweird.f32 %v8257
      %vm8264 = vmor %vm8262, %vm8263
      %v8265 = vsel %vm8264, %v8257, %v8261
      %v8266 = vand.u32 2147483647, %v7949
      %vm8267 = vcmp.eq.f32.partialorder %v8266, 8.507059e+37
      %v8268 = vand.u32 %v7949, 2147483648
      %v8269 = vor.u32 1.1754944e-38, %v8268
      %v8270 = vsel %vm8267, %v8269, %v8265
      %v8271 = vmul.f32 1.0, %v8270
      %v8272 = vrcp.pop %v7950
      %v8273 = vmul.f32 %v7950, %v8272
      %v8274 = vsub.f32 1.0, %v8273
      %v8275 = vmul.f32 %v8272, %v8274
      %v8276 = vadd.f32 %v8272, %v8275
      %vm8277 = vweird.f32 %v7950
      %vm8278 = vweird.f32 %v8272
      %vm8279 = vmor %vm8277, %vm8278
      %v8280 = vsel %vm8279, %v8272, %v8276
      %v8281 = vand.u32 2147483647, %v7950
      %vm8282 = vcmp.eq.f32.partialorder %v8281, 8.507059e+37
      %v8283 = vand.u32 %v7950, 2147483648
      %v8284 = vor.u32 1.1754944e-38, %v8283
      %v8285 = vsel %vm8282, %v8284, %v8280
      %v8286 = vmul.f32 1.0, %v8285
      %v8287 = vrcp.pop %v7951
      %v8288 = vmul.f32 %v7951, %v8287
      %v8289 = vsub.f32 1.0, %v8288
      %v8290 = vmul.f32 %v8287, %v8289
      %v8291 = vadd.f32 %v8287, %v8290
      %vm8292 = vweird.f32 %v7951
      %vm8293 = vweird.f32 %v8287
      %vm8294 = vmor %vm8292, %vm8293
      %v8295 = vsel %vm8294, %v8287, %v8291
      %v8296 = vand.u32 2147483647, %v7951
      %vm8297 = vcmp.eq.f32.partialorder %v8296, 8.507059e+37
      %v8298 = vand.u32 %v7951, 2147483648
      %v8299 = vor.u32 1.1754944e-38, %v8298
      %v8300 = vsel %vm8297, %v8299, %v8295
      %v8301 = vmul.f32 1.0, %v8300
      %v8302 = vrcp.pop %v7952
      %v8303 = vmul.f32 %v7952, %v8302
      %v8304 = vsub.f32 1.0, %v8303
      %v8305 = vmul.f32 %v8302, %v8304
      %v8306 = vadd.f32 %v8302, %v8305
      %vm8307 = vweird.f32 %v7952
      %vm8308 = vweird.f32 %v8302
      %vm8309 = vmor %vm8307, %vm8308
      %v8310 = vsel %vm8309, %v8302, %v8306
      %v8311 = vand.u32 2147483647, %v7952
      %vm8312 = vcmp.eq.f32.partialorder %v8311, 8.507059e+37
      %v8313 = vand.u32 %v7952, 2147483648
      %v8314 = vor.u32 1.1754944e-38, %v8313
      %v8315 = vsel %vm8312, %v8314, %v8310
      %v8316 = vmul.f32 1.0, %v8315
      %v8317 = vrcp.pop %v7953
      %v8318 = vmul.f32 %v7953, %v8317
      %v8319 = vsub.f32 1.0, %v8318
      %v8320 = vmul.f32 %v8317, %v8319
      %v8321 = vadd.f32 %v8317, %v8320
      %vm8322 = vweird.f32 %v7953
      %vm8323 = vweird.f32 %v8317
      %vm8324 = vmor %vm8322, %vm8323
      %v8325 = vsel %vm8324, %v8317, %v8321
      %v8326 = vand.u32 2147483647, %v7953
      %vm8327 = vcmp.eq.f32.partialorder %v8326, 8.507059e+37
      %v8328 = vand.u32 %v7953, 2147483648
      %v8329 = vor.u32 1.1754944e-38, %v8328
      %v8330 = vsel %vm8327, %v8329, %v8325
      %v8331 = vmul.f32 1.0, %v8330
      %v8332 = vrcp.pop %v7954
      %v8333 = vmul.f32 %v7954, %v8332
      %v8334 = vsub.f32 1.0, %v8333
      %v8335 = vmul.f32 %v8332, %v8334
      %v8336 = vadd.f32 %v8332, %v8335
      %vm8337 = vweird.f32 %v7954
      %vm8338 = vweird.f32 %v8332
      %vm8339 = vmor %vm8337, %vm8338
      %v8340 = vsel %vm8339, %v8332, %v8336
      %v8341 = vand.u32 2147483647, %v7954
      %vm8342 = vcmp.eq.f32.partialorder %v8341, 8.507059e+37
      %v8343 = vand.u32 %v7954, 2147483648
      %v8344 = vor.u32 1.1754944e-38, %v8343
      %v8345 = vsel %vm8342, %v8344, %v8340
      %v8346 = vmul.f32 1.0, %v8345
      %v8347 = vrcp.pop %v7955
      %v8348 = vmul.f32 %v7955, %v8347
      %v8349 = vsub.f32 1.0, %v8348
      %v8350 = vmul.f32 %v8347, %v8349
      %v8351 = vadd.f32 %v8347, %v8350
      %vm8352 = vweird.f32 %v7955
      %vm8353 = vweird.f32 %v8347
      %vm8354 = vmor %vm8352, %vm8353
      %v8355 = vsel %vm8354, %v8347, %v8351
      %v8356 = vand.u32 2147483647, %v7955
      %vm8357 = vcmp.eq.f32.partialorder %v8356, 8.507059e+37
      %v8358 = vand.u32 %v7955, 2147483648
      %v8359 = vor.u32 1.1754944e-38, %v8358
      %v8360 = vsel %vm8357, %v8359, %v8355
      %v8361 = vmul.f32 1.0, %v8360
      %v8362 = vrcp.pop %v7956
      %v8363 = vmul.f32 %v7956, %v8362
      %v8364 = vsub.f32 1.0, %v8363
      %v8365 = vmul.f32 %v8362, %v8364
      %v8366 = vadd.f32 %v8362, %v8365
      %vm8367 = vweird.f32 %v7956
      %vm8368 = vweird.f32 %v8362
      %vm8369 = vmor %vm8367, %vm8368
      %v8370 = vsel %vm8369, %v8362, %v8366
      %v8371 = vand.u32 2147483647, %v7956
      %vm8372 = vcmp.eq.f32.partialorder %v8371, 8.507059e+37
      %v8373 = vand.u32 %v7956, 2147483648
      %v8374 = vor.u32 1.1754944e-38, %v8373
      %v8375 = vsel %vm8372, %v8374, %v8370
      %v8376 = vmul.f32 1.0, %v8375
      %v8377 = vrcp.pop %v7957
      %v8378 = vmul.f32 %v7957, %v8377
      %v8379 = vsub.f32 1.0, %v8378
      %v8380 = vmul.f32 %v8377, %v8379
      %v8381 = vadd.f32 %v8377, %v8380
      %vm8382 = vweird.f32 %v7957
      %vm8383 = vweird.f32 %v8377
      %vm8384 = vmor %vm8382, %vm8383
      %v8385 = vsel %vm8384, %v8377, %v8381
      %v8386 = vand.u32 2147483647, %v7957
      %vm8387 = vcmp.eq.f32.partialorder %v8386, 8.507059e+37
      %v8388 = vand.u32 %v7957, 2147483648
      %v8389 = vor.u32 1.1754944e-38, %v8388
      %v8390 = vsel %vm8387, %v8389, %v8385
      %v8391 = vmul.f32 1.0, %v8390
      %v8392 = vrcp.pop %v7958
      %v8393 = vmul.f32 %v7958, %v8392
      %v8394 = vsub.f32 1.0, %v8393
      %v8395 = vmul.f32 %v8392, %v8394
      %v8396 = vadd.f32 %v8392, %v8395
      %vm8397 = vweird.f32 %v7958
      %vm8398 = vweird.f32 %v8392
      %vm8399 = vmor %vm8397, %vm8398
      %v8400 = vsel %vm8399, %v8392, %v8396
      %v8401 = vand.u32 2147483647, %v7958
      %vm8402 = vcmp.eq.f32.partialorder %v8401, 8.507059e+37
      %v8403 = vand.u32 %v7958, 2147483648
      %v8404 = vor.u32 1.1754944e-38, %v8403
      %v8405 = vsel %vm8402, %v8404, %v8400
      %v8406 = vmul.f32 1.0, %v8405
      %v8407 = vrcp.pop %v7959
      %v8408 = vmul.f32 %v7959, %v8407
      %v8409 = vsub.f32 1.0, %v8408
      %v8410 = vmul.f32 %v8407, %v8409
      %v8411 = vadd.f32 %v8407, %v8410
      %vm8412 = vweird.f32 %v7959
      %vm8413 = vweird.f32 %v8407
      %vm8414 = vmor %vm8412, %vm8413
      %v8415 = vsel %vm8414, %v8407, %v8411
      %v8416 = vand.u32 2147483647, %v7959
      %vm8417 = vcmp.eq.f32.partialorder %v8416, 8.507059e+37
      %v8418 = vand.u32 %v7959, 2147483648
      %v8419 = vor.u32 1.1754944e-38, %v8418
      %v8420 = vsel %vm8417, %v8419, %v8415
      %v8421 = vmul.f32 1.0, %v8420
      %v8422 = vrcp.pop %v7960
      %v8423 = vmul.f32 %v7960, %v8422
      %v8424 = vsub.f32 1.0, %v8423
      %v8425 = vmul.f32 %v8422, %v8424
      %v8426 = vadd.f32 %v8422, %v8425
      %vm8427 = vweird.f32 %v7960
      %vm8428 = vweird.f32 %v8422
      %vm8429 = vmor %vm8427, %vm8428
      %v8430 = vsel %vm8429, %v8422, %v8426
      %v8431 = vand.u32 2147483647, %v7960
      %vm8432 = vcmp.eq.f32.partialorder %v8431, 8.507059e+37
      %v8433 = vand.u32 %v7960, 2147483648
      %v8434 = vor.u32 1.1754944e-38, %v8433
      %v8435 = vsel %vm8432, %v8434, %v8430
      %v8436 = vmul.f32 1.0, %v8435
      %v8437 = vrcp.pop %v7961
      %v8438 = vmul.f32 %v7961, %v8437
      %v8439 = vsub.f32 1.0, %v8438
      %v8440 = vmul.f32 %v8437, %v8439
      %v8441 = vadd.f32 %v8437, %v8440
      %vm8442 = vweird.f32 %v7961
      %vm8443 = vweird.f32 %v8437
      %vm8444 = vmor %vm8442, %vm8443
      %v8445 = vsel %vm8444, %v8437, %v8441
      %v8446 = vand.u32 2147483647, %v7961
      %vm8447 = vcmp.eq.f32.partialorder %v8446, 8.507059e+37
      %v8448 = vand.u32 %v7961, 2147483648
      %v8449 = vor.u32 1.1754944e-38, %v8448
      %v8450 = vsel %vm8447, %v8449, %v8445
      %v8451 = vmul.f32 1.0, %v8450
      %v8452 = vrcp.pop %v7962
      %v8453 = vmul.f32 %v7962, %v8452
      %v8454 = vsub.f32 1.0, %v8453
      %v8455 = vmul.f32 %v8452, %v8454
      %v8456 = vadd.f32 %v8452, %v8455
      %vm8457 = vweird.f32 %v7962
      %vm8458 = vweird.f32 %v8452
      %vm8459 = vmor %vm8457, %vm8458
      %v8460 = vsel %vm8459, %v8452, %v8456
      %v8461 = vand.u32 2147483647, %v7962
      %vm8462 = vcmp.eq.f32.partialorder %v8461, 8.507059e+37
      %v8463 = vand.u32 %v7962, 2147483648
      %v8464 = vor.u32 1.1754944e-38, %v8463
      %v8465 = vsel %vm8462, %v8464, %v8460
      %v8466 = vmul.f32 1.0, %v8465
      %v8467 = vrcp.pop %v7963
      %v8468 = vmul.f32 %v7963, %v8467
      %v8469 = vsub.f32 1.0, %v8468
      %v8470 = vmul.f32 %v8467, %v8469
      %v8471 = vadd.f32 %v8467, %v8470
      %vm8472 = vweird.f32 %v7963
      %vm8473 = vweird.f32 %v8467
      %vm8474 = vmor %vm8472, %vm8473
      %v8475 = vsel %vm8474, %v8467, %v8471
      %v8476 = vand.u32 2147483647, %v7963
      %vm8477 = vcmp.eq.f32.partialorder %v8476, 8.507059e+37
      %v8478 = vand.u32 %v7963, 2147483648
      %v8479 = vor.u32 1.1754944e-38, %v8478
      %v8480 = vsel %vm8477, %v8479, %v8475
      %v8481 = vmul.f32 1.0, %v8480
      %v8482 = vrcp.pop %v7964
      %v8483 = vmul.f32 %v7964, %v8482
      %v8484 = vsub.f32 1.0, %v8483
      %v8485 = vmul.f32 %v8482, %v8484
      %v8486 = vadd.f32 %v8482, %v8485
      %vm8487 = vweird.f32 %v7964
      %vm8488 = vweird.f32 %v8482
      %vm8489 = vmor %vm8487, %vm8488
      %v8490 = vsel %vm8489, %v8482, %v8486
      %v8491 = vand.u32 2147483647, %v7964
      %vm8492 = vcmp.eq.f32.partialorder %v8491, 8.507059e+37
      %v8493 = vand.u32 %v7964, 2147483648
      %v8494 = vor.u32 1.1754944e-38, %v8493
      %v8495 = vsel %vm8492, %v8494, %v8490
      %v8496 = vmul.f32 1.0, %v8495
      %v8497 = vrcp.pop %v7965
      %v8498 = vmul.f32 %v7965, %v8497
      %v8499 = vsub.f32 1.0, %v8498
      %v8500 = vmul.f32 %v8497, %v8499
      %v8501 = vadd.f32 %v8497, %v8500
      %vm8502 = vweird.f32 %v7965
      %vm8503 = vweird.f32 %v8497
      %vm8504 = vmor %vm8502, %vm8503
      %v8505 = vsel %vm8504, %v8497, %v8501
      %v8506 = vand.u32 2147483647, %v7965
      %vm8507 = vcmp.eq.f32.partialorder %v8506, 8.507059e+37
      %v8508 = vand.u32 %v7965, 2147483648
      %v8509 = vor.u32 1.1754944e-38, %v8508
      %v8510 = vsel %vm8507, %v8509, %v8505
      %v8511 = vmul.f32 1.0, %v8510
      %v8512 = vrcp.pop %v7966
      %v8513 = vmul.f32 %v7966, %v8512
      %v8514 = vsub.f32 1.0, %v8513
      %v8515 = vmul.f32 %v8512, %v8514
      %v8516 = vadd.f32 %v8512, %v8515
      %vm8517 = vweird.f32 %v7966
      %vm8518 = vweird.f32 %v8512
      %vm8519 = vmor %vm8517, %vm8518
      %v8520 = vsel %vm8519, %v8512, %v8516
      %v8521 = vand.u32 2147483647, %v7966
      %vm8522 = vcmp.eq.f32.partialorder %v8521, 8.507059e+37
      %v8523 = vand.u32 %v7966, 2147483648
      %v8524 = vor.u32 1.1754944e-38, %v8523
      %v8525 = vsel %vm8522, %v8524, %v8520
      %v8526 = vmul.f32 1.0, %v8525
      %v8527 = vrcp.pop %v7967
      %v8528 = vmul.f32 %v7967, %v8527
      %v8529 = vsub.f32 1.0, %v8528
      %v8530 = vmul.f32 %v8527, %v8529
      %v8531 = vadd.f32 %v8527, %v8530
      %vm8532 = vweird.f32 %v7967
      %vm8533 = vweird.f32 %v8527
      %vm8534 = vmor %vm8532, %vm8533
      %v8535 = vsel %vm8534, %v8527, %v8531
      %v8536 = vand.u32 2147483647, %v7967
      %vm8537 = vcmp.eq.f32.partialorder %v8536, 8.507059e+37
      %v8538 = vand.u32 %v7967, 2147483648
      %v8539 = vor.u32 1.1754944e-38, %v8538
      %v8540 = vsel %vm8537, %v8539, %v8535
      %v8541 = vmul.f32 1.0, %v8540
      %v8542 = vrcp.pop %v7968
      %v8543 = vmul.f32 %v7968, %v8542
      %v8544 = vsub.f32 1.0, %v8543
      %v8545 = vmul.f32 %v8542, %v8544
      %v8546 = vadd.f32 %v8542, %v8545
      %vm8547 = vweird.f32 %v7968
      %vm8548 = vweird.f32 %v8542
      %vm8549 = vmor %vm8547, %vm8548
      %v8550 = vsel %vm8549, %v8542, %v8546
      %v8551 = vand.u32 2147483647, %v7968
      %vm8552 = vcmp.eq.f32.partialorder %v8551, 8.507059e+37
      %v8553 = vand.u32 %v7968, 2147483648
      %v8554 = vor.u32 1.1754944e-38, %v8553
      %v8555 = vsel %vm8552, %v8554, %v8550
      %v8556 = vmul.f32 1.0, %v8555
      %v8557 = vrcp.pop %v7969
      %v8558 = vmul.f32 %v7969, %v8557
      %v8559 = vsub.f32 1.0, %v8558
      %v8560 = vmul.f32 %v8557, %v8559
      %v8561 = vadd.f32 %v8557, %v8560
      %vm8562 = vweird.f32 %v7969
      %vm8563 = vweird.f32 %v8557
      %vm8564 = vmor %vm8562, %vm8563
      %v8565 = vsel %vm8564, %v8557, %v8561
      %v8566 = vand.u32 2147483647, %v7969
      %vm8567 = vcmp.eq.f32.partialorder %v8566, 8.507059e+37
      %v8568 = vand.u32 %v7969, 2147483648
      %v8569 = vor.u32 1.1754944e-38, %v8568
      %v8570 = vsel %vm8567, %v8569, %v8565
      %v8571 = vmul.f32 1.0, %v8570
      %v8572 = vrcp.pop %v7970
      %v8573 = vmul.f32 %v7970, %v8572
      %v8574 = vsub.f32 1.0, %v8573
      %v8575 = vmul.f32 %v8572, %v8574
      %v8576 = vadd.f32 %v8572, %v8575
      %vm8577 = vweird.f32 %v7970
      %vm8578 = vweird.f32 %v8572
      %vm8579 = vmor %vm8577, %vm8578
      %v8580 = vsel %vm8579, %v8572, %v8576
      %v8581 = vand.u32 2147483647, %v7970
      %vm8582 = vcmp.eq.f32.partialorder %v8581, 8.507059e+37
      %v8583 = vand.u32 %v7970, 2147483648
      %v8584 = vor.u32 1.1754944e-38, %v8583
      %v8585 = vsel %vm8582, %v8584, %v8580
      %v8586 = vmul.f32 1.0, %v8585
      %v8587 = vrcp.pop %v7971
      %v8588 = vmul.f32 %v7971, %v8587
      %v8589 = vsub.f32 1.0, %v8588
      %v8590 = vmul.f32 %v8587, %v8589
      %v8591 = vadd.f32 %v8587, %v8590
      %vm8592 = vweird.f32 %v7971
      %vm8593 = vweird.f32 %v8587
      %vm8594 = vmor %vm8592, %vm8593
      %v8595 = vsel %vm8594, %v8587, %v8591
      %v8596 = vand.u32 2147483647, %v7971
      %vm8597 = vcmp.eq.f32.partialorder %v8596, 8.507059e+37
      %v8598 = vand.u32 %v7971, 2147483648
      %v8599 = vor.u32 1.1754944e-38, %v8598
      %v8600 = vsel %vm8597, %v8599, %v8595
      %v8601 = vmul.f32 1.0, %v8600
      %v8602 = vrcp.pop %v7972
      %v8603 = vmul.f32 %v7972, %v8602
      %v8604 = vsub.f32 1.0, %v8603
      %v8605 = vmul.f32 %v8602, %v8604
      %v8606 = vadd.f32 %v8602, %v8605
      %vm8607 = vweird.f32 %v7972
      %vm8608 = vweird.f32 %v8602
      %vm8609 = vmor %vm8607, %vm8608
      %v8610 = vsel %vm8609, %v8602, %v8606
      %v8611 = vand.u32 2147483647, %v7972
      %vm8612 = vcmp.eq.f32.partialorder %v8611, 8.507059e+37
      %v8613 = vand.u32 %v7972, 2147483648
      %v8614 = vor.u32 1.1754944e-38, %v8613
      %v8615 = vsel %vm8612, %v8614, %v8610
      %v8616 = vmul.f32 1.0, %v8615
      %v8617 = vrcp.pop %v7973
      %v8618 = vmul.f32 %v7973, %v8617
      %v8619 = vsub.f32 1.0, %v8618
      %v8620 = vmul.f32 %v8617, %v8619
      %v8621 = vadd.f32 %v8617, %v8620
      %vm8622 = vweird.f32 %v7973
      %vm8623 = vweird.f32 %v8617
      %vm8624 = vmor %vm8622, %vm8623
      %v8625 = vsel %vm8624, %v8617, %v8621
      %v8626 = vand.u32 2147483647, %v7973
      %vm8627 = vcmp.eq.f32.partialorder %v8626, 8.507059e+37
      %v8628 = vand.u32 %v7973, 2147483648
      %v8629 = vor.u32 1.1754944e-38, %v8628
      %v8630 = vsel %vm8627, %v8629, %v8625
      %v8631 = vmul.f32 1.0, %v8630
      %v8632 = vrcp.pop %v7974
      %v8633 = vmul.f32 %v7974, %v8632
      %v8634 = vsub.f32 1.0, %v8633
      %v8635 = vmul.f32 %v8632, %v8634
      %v8636 = vadd.f32 %v8632, %v8635
      %vm8637 = vweird.f32 %v7974
      %vm8638 = vweird.f32 %v8632
      %vm8639 = vmor %vm8637, %vm8638
      %v8640 = vsel %vm8639, %v8632, %v8636
      %v8641 = vand.u32 2147483647, %v7974
      %vm8642 = vcmp.eq.f32.partialorder %v8641, 8.507059e+37
      %v8643 = vand.u32 %v7974, 2147483648
      %v8644 = vor.u32 1.1754944e-38, %v8643
      %v8645 = vsel %vm8642, %v8644, %v8640
      %v8646 = vmul.f32 1.0, %v8645
      %v8647 = vrcp.pop %v7975
      %v8648 = vmul.f32 %v7975, %v8647
      %v8649 = vsub.f32 1.0, %v8648
      %v8650 = vmul.f32 %v8647, %v8649
      %v8651 = vadd.f32 %v8647, %v8650
      %vm8652 = vweird.f32 %v7975
      %vm8653 = vweird.f32 %v8647
      %vm8654 = vmor %vm8652, %vm8653
      %v8655 = vsel %vm8654, %v8647, %v8651
      %v8656 = vand.u32 2147483647, %v7975
      %vm8657 = vcmp.eq.f32.partialorder %v8656, 8.507059e+37
      %v8658 = vand.u32 %v7975, 2147483648
      %v8659 = vor.u32 1.1754944e-38, %v8658
      %v8660 = vsel %vm8657, %v8659, %v8655
      %v8661 = vmul.f32 1.0, %v8660
      %v8662 = vrcp.pop %v7976
      %v8663 = vmul.f32 %v7976, %v8662
      %v8664 = vsub.f32 1.0, %v8663
      %v8665 = vmul.f32 %v8662, %v8664
      %v8666 = vadd.f32 %v8662, %v8665
      %vm8667 = vweird.f32 %v7976
      %vm8668 = vweird.f32 %v8662
      %vm8669 = vmor %vm8667, %vm8668
      %v8670 = vsel %vm8669, %v8662, %v8666
      %v8671 = vand.u32 2147483647, %v7976
      %vm8672 = vcmp.eq.f32.partialorder %v8671, 8.507059e+37
      %v8673 = vand.u32 %v7976, 2147483648
      %v8674 = vor.u32 1.1754944e-38, %v8673
      %v8675 = vsel %vm8672, %v8674, %v8670
      %v8676 = vmul.f32 1.0, %v8675
      %v8677 = vrcp.pop %v7977
      %v8678 = vmul.f32 %v7977, %v8677
      %v8679 = vsub.f32 1.0, %v8678
      %v8680 = vmul.f32 %v8677, %v8679
      %v8681 = vadd.f32 %v8677, %v8680
      %vm8682 = vweird.f32 %v7977
      %vm8683 = vweird.f32 %v8677
      %vm8684 = vmor %vm8682, %vm8683
      %v8685 = vsel %vm8684, %v8677, %v8681
      %v8686 = vand.u32 2147483647, %v7977
      %vm8687 = vcmp.eq.f32.partialorder %v8686, 8.507059e+37
      %v8688 = vand.u32 %v7977, 2147483648
      %v8689 = vor.u32 1.1754944e-38, %v8688
      %v8690 = vsel %vm8687, %v8689, %v8685
      %v8691 = vmul.f32 1.0, %v8690
      %v8692 = vrcp.pop %v7978
      %v8693 = vmul.f32 %v7978, %v8692
      %v8694 = vsub.f32 1.0, %v8693
      %v8695 = vmul.f32 %v8692, %v8694
      %v8696 = vadd.f32 %v8692, %v8695
      %vm8697 = vweird.f32 %v7978
      %vm8698 = vweird.f32 %v8692
      %vm8699 = vmor %vm8697, %vm8698
      %v8700 = vsel %vm8699, %v8692, %v8696
      %v8701 = vand.u32 2147483647, %v7978
      %vm8702 = vcmp.eq.f32.partialorder %v8701, 8.507059e+37
      %v8703 = vand.u32 %v7978, 2147483648
      %v8704 = vor.u32 1.1754944e-38, %v8703
      %v8705 = vsel %vm8702, %v8704, %v8700
      %v8706 = vmul.f32 1.0, %v8705
      %v8707 = vrcp.pop %v7979
      %v8708 = vmul.f32 %v7979, %v8707
      %v8709 = vsub.f32 1.0, %v8708
      %v8710 = vmul.f32 %v8707, %v8709
      %v8711 = vadd.f32 %v8707, %v8710
      %vm8712 = vweird.f32 %v7979
      %vm8713 = vweird.f32 %v8707
      %vm8714 = vmor %vm8712, %vm8713
      %v8715 = vsel %vm8714, %v8707, %v8711
      %v8716 = vand.u32 2147483647, %v7979
      %vm8717 = vcmp.eq.f32.partialorder %v8716, 8.507059e+37
      %v8718 = vand.u32 %v7979, 2147483648
      %v8719 = vor.u32 1.1754944e-38, %v8718
      %v8720 = vsel %vm8717, %v8719, %v8715
      %v8721 = vmul.f32 1.0, %v8720
      %v8722 = vrcp.pop %v7980
      %v8723 = vmul.f32 %v7980, %v8722
      %v8724 = vsub.f32 1.0, %v8723
      %v8725 = vmul.f32 %v8722, %v8724
      %v8726 = vadd.f32 %v8722, %v8725
      %vm8727 = vweird.f32 %v7980
      %vm8728 = vweird.f32 %v8722
      %vm8729 = vmor %vm8727, %vm8728
      %v8730 = vsel %vm8729, %v8722, %v8726
      %v8731 = vand.u32 2147483647, %v7980
      %vm8732 = vcmp.eq.f32.partialorder %v8731, 8.507059e+37
      %v8733 = vand.u32 %v7980, 2147483648
      %v8734 = vor.u32 1.1754944e-38, %v8733
      %v8735 = vsel %vm8732, %v8734, %v8730
      %v8736 = vmul.f32 1.0, %v8735
      %v8737 = vrcp.pop %v7981
      %v8738 = vmul.f32 %v7981, %v8737
      %v8739 = vsub.f32 1.0, %v8738
      %v8740 = vmul.f32 %v8737, %v8739
      %v8741 = vadd.f32 %v8737, %v8740
      %vm8742 = vweird.f32 %v7981
      %vm8743 = vweird.f32 %v8737
      %vm8744 = vmor %vm8742, %vm8743
      %v8745 = vsel %vm8744, %v8737, %v8741
      %v8746 = vand.u32 2147483647, %v7981
      %vm8747 = vcmp.eq.f32.partialorder %v8746, 8.507059e+37
      %v8748 = vand.u32 %v7981, 2147483648
      %v8749 = vor.u32 1.1754944e-38, %v8748
      %v8750 = vsel %vm8747, %v8749, %v8745
      %v8751 = vmul.f32 1.0, %v8750
      %v8752 = vrcp.pop %v7982
      %v8753 = vmul.f32 %v7982, %v8752
      %v8754 = vsub.f32 1.0, %v8753
      %v8755 = vmul.f32 %v8752, %v8754
      %v8756 = vadd.f32 %v8752, %v8755
      %vm8757 = vweird.f32 %v7982
      %vm8758 = vweird.f32 %v8752
      %vm8759 = vmor %vm8757, %vm8758
      %v8760 = vsel %vm8759, %v8752, %v8756
      %v8761 = vand.u32 2147483647, %v7982
      %vm8762 = vcmp.eq.f32.partialorder %v8761, 8.507059e+37
      %v8763 = vand.u32 %v7982, 2147483648
      %v8764 = vor.u32 1.1754944e-38, %v8763
      %v8765 = vsel %vm8762, %v8764, %v8760
      %v8766 = vmul.f32 1.0, %v8765
      %v8767 = vrcp.pop %v7983
      %v8768 = vmul.f32 %v7983, %v8767
      %v8769 = vsub.f32 1.0, %v8768
      %v8770 = vmul.f32 %v8767, %v8769
      %v8771 = vadd.f32 %v8767, %v8770
      %vm8772 = vweird.f32 %v7983
      %vm8773 = vweird.f32 %v8767
      %vm8774 = vmor %vm8772, %vm8773
      %v8775 = vsel %vm8774, %v8767, %v8771
      %v8776 = vand.u32 2147483647, %v7983
      %vm8777 = vcmp.eq.f32.partialorder %v8776, 8.507059e+37
      %v8778 = vand.u32 %v7983, 2147483648
      %v8779 = vor.u32 1.1754944e-38, %v8778
      %v8780 = vsel %vm8777, %v8779, %v8775
      %v8781 = vmul.f32 1.0, %v8780
      %v8782 = vrcp.pop %v7984
      %v8783 = vmul.f32 %v7984, %v8782
      %v8784 = vsub.f32 1.0, %v8783
      %v8785 = vmul.f32 %v8782, %v8784
      %v8786 = vadd.f32 %v8782, %v8785
      %vm8787 = vweird.f32 %v7984
      %vm8788 = vweird.f32 %v8782
      %vm8789 = vmor %vm8787, %vm8788
      %v8790 = vsel %vm8789, %v8782, %v8786
      %v8791 = vand.u32 2147483647, %v7984
      %vm8792 = vcmp.eq.f32.partialorder %v8791, 8.507059e+37
      %v8793 = vand.u32 %v7984, 2147483648
      %v8794 = vor.u32 1.1754944e-38, %v8793
      %v8795 = vsel %vm8792, %v8794, %v8790
      %v8796 = vmul.f32 1.0, %v8795
      %v8797 = vrcp.pop %v7985
      %v8798 = vmul.f32 %v7985, %v8797
      %v8799 = vsub.f32 1.0, %v8798
      %v8800 = vmul.f32 %v8797, %v8799
      %v8801 = vadd.f32 %v8797, %v8800
      %vm8802 = vweird.f32 %v7985
      %vm8803 = vweird.f32 %v8797
      %vm8804 = vmor %vm8802, %vm8803
      %v8805 = vsel %vm8804, %v8797, %v8801
      %v8806 = vand.u32 2147483647, %v7985
      %vm8807 = vcmp.eq.f32.partialorder %v8806, 8.507059e+37
      %v8808 = vand.u32 %v7985, 2147483648
      %v8809 = vor.u32 1.1754944e-38, %v8808
      %v8810 = vsel %vm8807, %v8809, %v8805
      %v8811 = vmul.f32 1.0, %v8810
      %v8812 = vrcp.pop %v7986
      %v8813 = vmul.f32 %v7986, %v8812
      %v8814 = vsub.f32 1.0, %v8813
      %v8815 = vmul.f32 %v8812, %v8814
      %v8816 = vadd.f32 %v8812, %v8815
      %vm8817 = vweird.f32 %v7986
      %vm8818 = vweird.f32 %v8812
      %vm8819 = vmor %vm8817, %vm8818
      %v8820 = vsel %vm8819, %v8812, %v8816
      %v8821 = vand.u32 2147483647, %v7986
      %vm8822 = vcmp.eq.f32.partialorder %v8821, 8.507059e+37
      %v8823 = vand.u32 %v7986, 2147483648
      %v8824 = vor.u32 1.1754944e-38, %v8823
      %v8825 = vsel %vm8822, %v8824, %v8820
      %v8826 = vmul.f32 1.0, %v8825
      %v8827 = vrcp.pop %v7987
      %v8828 = vmul.f32 %v7987, %v8827
      %v8829 = vsub.f32 1.0, %v8828
      %v8830 = vmul.f32 %v8827, %v8829
      %v8831 = vadd.f32 %v8827, %v8830
      %vm8832 = vweird.f32 %v7987
      %vm8833 = vweird.f32 %v8827
      %vm8834 = vmor %vm8832, %vm8833
      %v8835 = vsel %vm8834, %v8827, %v8831
      %v8836 = vand.u32 2147483647, %v7987
      %vm8837 = vcmp.eq.f32.partialorder %v8836, 8.507059e+37
      %v8838 = vand.u32 %v7987, 2147483648
      %v8839 = vor.u32 1.1754944e-38, %v8838
      %v8840 = vsel %vm8837, %v8839, %v8835
      %v8841 = vmul.f32 1.0, %v8840
      %v8842 = vrcp.pop %v7988
      %v8843 = vmul.f32 %v7988, %v8842
      %v8844 = vsub.f32 1.0, %v8843
      %v8845 = vmul.f32 %v8842, %v8844
      %v8846 = vadd.f32 %v8842, %v8845
      %vm8847 = vweird.f32 %v7988
      %vm8848 = vweird.f32 %v8842
      %vm8849 = vmor %vm8847, %vm8848
      %v8850 = vsel %vm8849, %v8842, %v8846
      %v8851 = vand.u32 2147483647, %v7988
      %vm8852 = vcmp.eq.f32.partialorder %v8851, 8.507059e+37
      %v8853 = vand.u32 %v7988, 2147483648
      %v8854 = vor.u32 1.1754944e-38, %v8853
      %v8855 = vsel %vm8852, %v8854, %v8850
      %v8856 = vmul.f32 1.0, %v8855
      %v8857 = vrcp.pop %v7989
      %v8858 = vmul.f32 %v7989, %v8857
      %v8859 = vsub.f32 1.0, %v8858
      %v8860 = vmul.f32 %v8857, %v8859
      %v8861 = vadd.f32 %v8857, %v8860
      %vm8862 = vweird.f32 %v7989
      %vm8863 = vweird.f32 %v8857
      %vm8864 = vmor %vm8862, %vm8863
      %v8865 = vsel %vm8864, %v8857, %v8861
      %v8866 = vand.u32 2147483647, %v7989
      %vm8867 = vcmp.eq.f32.partialorder %v8866, 8.507059e+37
      %v8868 = vand.u32 %v7989, 2147483648
      %v8869 = vor.u32 1.1754944e-38, %v8868
      %v8870 = vsel %vm8867, %v8869, %v8865
      %v8871 = vmul.f32 1.0, %v8870
      %v8872 = vrcp.pop %v7990
      %v8873 = vmul.f32 %v7990, %v8872
      %v8874 = vsub.f32 1.0, %v8873
      %v8875 = vmul.f32 %v8872, %v8874
      %v8876 = vadd.f32 %v8872, %v8875
      %vm8877 = vweird.f32 %v7990
      %vm8878 = vweird.f32 %v8872
      %vm8879 = vmor %vm8877, %vm8878
      %v8880 = vsel %vm8879, %v8872, %v8876
      %v8881 = vand.u32 2147483647, %v7990
      %vm8882 = vcmp.eq.f32.partialorder %v8881, 8.507059e+37
      %v8883 = vand.u32 %v7990, 2147483648
      %v8884 = vor.u32 1.1754944e-38, %v8883
      %v8885 = vsel %vm8882, %v8884, %v8880
      %v8886 = vmul.f32 1.0, %v8885
      %v8887 = vrcp.pop %v7991
      %v8888 = vmul.f32 %v7991, %v8887
      %v8889 = vsub.f32 1.0, %v8888
      %v8890 = vmul.f32 %v8887, %v8889
      %v8891 = vadd.f32 %v8887, %v8890
      %vm8892 = vweird.f32 %v7991
      %vm8893 = vweird.f32 %v8887
      %vm8894 = vmor %vm8892, %vm8893
      %v8895 = vsel %vm8894, %v8887, %v8891
      %v8896 = vand.u32 2147483647, %v7991
      %vm8897 = vcmp.eq.f32.partialorder %v8896, 8.507059e+37
      %v8898 = vand.u32 %v7991, 2147483648
      %v8899 = vor.u32 1.1754944e-38, %v8898
      %v8900 = vsel %vm8897, %v8899, %v8895
      %v8901 = vmul.f32 1.0, %v8900
      %v8902 = vrcp.pop %v7992
      %v8903 = vmul.f32 %v7992, %v8902
      %v8904 = vsub.f32 1.0, %v8903
      %v8905 = vmul.f32 %v8902, %v8904
      %v8906 = vadd.f32 %v8902, %v8905
      %vm8907 = vweird.f32 %v7992
      %vm8908 = vweird.f32 %v8902
      %vm8909 = vmor %vm8907, %vm8908
      %v8910 = vsel %vm8909, %v8902, %v8906
      %v8911 = vand.u32 2147483647, %v7992
      %vm8912 = vcmp.eq.f32.partialorder %v8911, 8.507059e+37
      %v8913 = vand.u32 %v7992, 2147483648
      %v8914 = vor.u32 1.1754944e-38, %v8913
      %v8915 = vsel %vm8912, %v8914, %v8910
      %v8916 = vmul.f32 1.0, %v8915
      %v8917 = vrcp.pop %v7993
      %v8918 = vmul.f32 %v7993, %v8917
      %v8919 = vsub.f32 1.0, %v8918
      %v8920 = vmul.f32 %v8917, %v8919
      %v8921 = vadd.f32 %v8917, %v8920
      %vm8922 = vweird.f32 %v7993
      %vm8923 = vweird.f32 %v8917
      %vm8924 = vmor %vm8922, %vm8923
      %v8925 = vsel %vm8924, %v8917, %v8921
      %v8926 = vand.u32 2147483647, %v7993
      %vm8927 = vcmp.eq.f32.partialorder %v8926, 8.507059e+37
      %v8928 = vand.u32 %v7993, 2147483648
      %v8929 = vor.u32 1.1754944e-38, %v8928
      %v8930 = vsel %vm8927, %v8929, %v8925
      %v8931 = vmul.f32 1.0, %v8930
      %v8932 = vrcp.pop %v7994
      %v8933 = vmul.f32 %v7994, %v8932
      %v8934 = vsub.f32 1.0, %v8933
      %v8935 = vmul.f32 %v8932, %v8934
      %v8936 = vadd.f32 %v8932, %v8935
      %vm8937 = vweird.f32 %v7994
      %vm8938 = vweird.f32 %v8932
      %vm8939 = vmor %vm8937, %vm8938
      %v8940 = vsel %vm8939, %v8932, %v8936
      %v8941 = vand.u32 2147483647, %v7994
      %vm8942 = vcmp.eq.f32.partialorder %v8941, 8.507059e+37
      %v8943 = vand.u32 %v7994, 2147483648
      %v8944 = vor.u32 1.1754944e-38, %v8943
      %v8945 = vsel %vm8942, %v8944, %v8940
      %v8946 = vmul.f32 1.0, %v8945
      %v8947 = vrcp.pop %v7995
      %v8948 = vmul.f32 %v7995, %v8947
      %v8949 = vsub.f32 1.0, %v8948
      %v8950 = vmul.f32 %v8947, %v8949
      %v8951 = vadd.f32 %v8947, %v8950
      %vm8952 = vweird.f32 %v7995
      %vm8953 = vweird.f32 %v8947
      %vm8954 = vmor %vm8952, %vm8953
      %v8955 = vsel %vm8954, %v8947, %v8951
      %v8956 = vand.u32 2147483647, %v7995
      %vm8957 = vcmp.eq.f32.partialorder %v8956, 8.507059e+37
      %v8958 = vand.u32 %v7995, 2147483648
      %v8959 = vor.u32 1.1754944e-38, %v8958
      %v8960 = vsel %vm8957, %v8959, %v8955
      %v8961 = vmul.f32 1.0, %v8960
      %v8962 = vrcp.pop %v7996
      %v8963 = vmul.f32 %v7996, %v8962
      %v8964 = vsub.f32 1.0, %v8963
      %v8965 = vmul.f32 %v8962, %v8964
      %v8966 = vadd.f32 %v8962, %v8965
      %vm8967 = vweird.f32 %v7996
      %vm8968 = vweird.f32 %v8962
      %vm8969 = vmor %vm8967, %vm8968
      %v8970 = vsel %vm8969, %v8962, %v8966
      %v8971 = vand.u32 2147483647, %v7996
      %vm8972 = vcmp.eq.f32.partialorder %v8971, 8.507059e+37
      %v8973 = vand.u32 %v7996, 2147483648
      %v8974 = vor.u32 1.1754944e-38, %v8973
      %v8975 = vsel %vm8972, %v8974, %v8970
      %v8976 = vmul.f32 1.0, %v8975
      %v8977 = vrcp.pop %v7997
      %v8978 = vmul.f32 %v7997, %v8977
      %v8979 = vsub.f32 1.0, %v8978
      %v8980 = vmul.f32 %v8977, %v8979
      %v8981 = vadd.f32 %v8977, %v8980
      %vm8982 = vweird.f32 %v7997
      %vm8983 = vweird.f32 %v8977
      %vm8984 = vmor %vm8982, %vm8983
      %v8985 = vsel %vm8984, %v8977, %v8981
      %v8986 = vand.u32 2147483647, %v7997
      %vm8987 = vcmp.eq.f32.partialorder %v8986, 8.507059e+37
      %v8988 = vand.u32 %v7997, 2147483648
      %v8989 = vor.u32 1.1754944e-38, %v8988
      %v8990 = vsel %vm8987, %v8989, %v8985
      %v8991 = vmul.f32 1.0, %v8990
      %v8992 = vrcp.pop %v7998
      %v8993 = vmul.f32 %v7998, %v8992
      %v8994 = vsub.f32 1.0, %v8993
      %v8995 = vmul.f32 %v8992, %v8994
      %v8996 = vadd.f32 %v8992, %v8995
      %vm8997 = vweird.f32 %v7998
      %vm8998 = vweird.f32 %v8992
      %vm8999 = vmor %vm8997, %vm8998
      %v9000 = vsel %vm8999, %v8992, %v8996
      %v9001 = vand.u32 2147483647, %v7998
      %vm9002 = vcmp.eq.f32.partialorder %v9001, 8.507059e+37
      %v9003 = vand.u32 %v7998, 2147483648
      %v9004 = vor.u32 1.1754944e-38, %v9003
      %v9005 = vsel %vm9002, %v9004, %v9000
      %v9006 = vmul.f32 1.0, %v9005
      %v9007 = vrcp.pop %v7999
      %v9008 = vmul.f32 %v7999, %v9007
      %v9009 = vsub.f32 1.0, %v9008
      %v9010 = vmul.f32 %v9007, %v9009
      %v9011 = vadd.f32 %v9007, %v9010
      %vm9012 = vweird.f32 %v7999
      %vm9013 = vweird.f32 %v9007
      %vm9014 = vmor %vm9012, %vm9013
      %v9015 = vsel %vm9014, %v9007, %v9011
      %v9016 = vand.u32 2147483647, %v7999
      %vm9017 = vcmp.eq.f32.partialorder %v9016, 8.507059e+37
      %v9018 = vand.u32 %v7999, 2147483648
      %v9019 = vor.u32 1.1754944e-38, %v9018
      %v9020 = vsel %vm9017, %v9019, %v9015
      %v9021 = vmul.f32 1.0, %v9020
      %v9022 = vrcp.pop %v8000
      %v9023 = vmul.f32 %v8000, %v9022
      %v9024 = vsub.f32 1.0, %v9023
      %v9025 = vmul.f32 %v9022, %v9024
      %v9026 = vadd.f32 %v9022, %v9025
      %vm9027 = vweird.f32 %v8000
      %vm9028 = vweird.f32 %v9022
      %vm9029 = vmor %vm9027, %vm9028
      %v9030 = vsel %vm9029, %v9022, %v9026
      %v9031 = vand.u32 2147483647, %v8000
      %vm9032 = vcmp.eq.f32.partialorder %v9031, 8.507059e+37
      %v9033 = vand.u32 %v8000, 2147483648
      %v9034 = vor.u32 1.1754944e-38, %v9033
      %v9035 = vsel %vm9032, %v9034, %v9030
      %v9036 = vmul.f32 1.0, %v9035
      %v9037 = vrcp.pop %v8001
      %v9038 = vmul.f32 %v8001, %v9037
      %v9039 = vsub.f32 1.0, %v9038
      %v9040 = vmul.f32 %v9037, %v9039
      %v9041 = vadd.f32 %v9037, %v9040
      %vm9042 = vweird.f32 %v8001
      %vm9043 = vweird.f32 %v9037
      %vm9044 = vmor %vm9042, %vm9043
      %v9045 = vsel %vm9044, %v9037, %v9041
      %v9046 = vand.u32 2147483647, %v8001
      %vm9047 = vcmp.eq.f32.partialorder %v9046, 8.507059e+37
      %v9048 = vand.u32 %v8001, 2147483648
      %v9049 = vor.u32 1.1754944e-38, %v9048
      %v9050 = vsel %vm9047, %v9049, %v9045
      %v9051 = vmul.f32 1.0, %v9050
      %v9052 = vrcp.pop %v8002
      %v9053 = vmul.f32 %v8002, %v9052
      %v9054 = vsub.f32 1.0, %v9053
      %v9055 = vmul.f32 %v9052, %v9054
      %v9056 = vadd.f32 %v9052, %v9055
      %vm9057 = vweird.f32 %v8002
      %vm9058 = vweird.f32 %v9052
      %vm9059 = vmor %vm9057, %vm9058
      %v9060 = vsel %vm9059, %v9052, %v9056
      %v9061 = vand.u32 2147483647, %v8002
      %vm9062 = vcmp.eq.f32.partialorder %v9061, 8.507059e+37
      %v9063 = vand.u32 %v8002, 2147483648
      %v9064 = vor.u32 1.1754944e-38, %v9063
      %v9065 = vsel %vm9062, %v9064, %v9060
      %v9066 = vmul.f32 1.0, %v9065
      %v9067 = vrcp.pop %v8003
      %v9068 = vmul.f32 %v8003, %v9067
      %v9069 = vsub.f32 1.0, %v9068
      %v9070 = vmul.f32 %v9067, %v9069
      %v9071 = vadd.f32 %v9067, %v9070
      %vm9072 = vweird.f32 %v8003
      %vm9073 = vweird.f32 %v9067
      %vm9074 = vmor %vm9072, %vm9073
      %v9075 = vsel %vm9074, %v9067, %v9071
      %v9076 = vand.u32 2147483647, %v8003
      %vm9077 = vcmp.eq.f32.partialorder %v9076, 8.507059e+37
      %v9078 = vand.u32 %v8003, 2147483648
      %v9079 = vor.u32 1.1754944e-38, %v9078
      %v9080 = vsel %vm9077, %v9079, %v9075
      %v9081 = vmul.f32 1.0, %v9080
      %v9082 = vrcp.pop %v8004
      %v9083 = vmul.f32 %v8004, %v9082
      %v9084 = vsub.f32 1.0, %v9083
      %v9085 = vmul.f32 %v9082, %v9084
      %v9086 = vadd.f32 %v9082, %v9085
      %vm9087 = vweird.f32 %v8004
      %vm9088 = vweird.f32 %v9082
      %vm9089 = vmor %vm9087, %vm9088
      %v9090 = vsel %vm9089, %v9082, %v9086
      %v9091 = vand.u32 2147483647, %v8004
      %vm9092 = vcmp.eq.f32.partialorder %v9091, 8.507059e+37
      %v9093 = vand.u32 %v8004, 2147483648
      %v9094 = vor.u32 1.1754944e-38, %v9093
      %v9095 = vsel %vm9092, %v9094, %v9090
      %v9096 = vmul.f32 1.0, %v9095
      %v9097 = vrcp.pop %v8005
      %v9098 = vmul.f32 %v8005, %v9097
      %v9099 = vsub.f32 1.0, %v9098
      %v9100 = vmul.f32 %v9097, %v9099
      %v9101 = vadd.f32 %v9097, %v9100
      %vm9102 = vweird.f32 %v8005
      %vm9103 = vweird.f32 %v9097
      %vm9104 = vmor %vm9102, %vm9103
      %v9105 = vsel %vm9104, %v9097, %v9101
      %v9106 = vand.u32 2147483647, %v8005
      %vm9107 = vcmp.eq.f32.partialorder %v9106, 8.507059e+37
      %v9108 = vand.u32 %v8005, 2147483648
      %v9109 = vor.u32 1.1754944e-38, %v9108
      %v9110 = vsel %vm9107, %v9109, %v9105
      %v9111 = vmul.f32 1.0, %v9110
      %v9112 = vrcp.pop %v8006
      %v9113 = vmul.f32 %v8006, %v9112
      %v9114 = vsub.f32 1.0, %v9113
      %v9115 = vmul.f32 %v9112, %v9114
      %v9116 = vadd.f32 %v9112, %v9115
      %vm9117 = vweird.f32 %v8006
      %vm9118 = vweird.f32 %v9112
      %vm9119 = vmor %vm9117, %vm9118
      %v9120 = vsel %vm9119, %v9112, %v9116
      %v9121 = vand.u32 2147483647, %v8006
      %vm9122 = vcmp.eq.f32.partialorder %v9121, 8.507059e+37
      %v9123 = vand.u32 %v8006, 2147483648
      %v9124 = vor.u32 1.1754944e-38, %v9123
      %v9125 = vsel %vm9122, %v9124, %v9120
      %v9126 = vmul.f32 1.0, %v9125
      %v9127 = vrcp.pop %v8007
      %v9128 = vmul.f32 %v8007, %v9127
      %v9129 = vsub.f32 1.0, %v9128
      %v9130 = vmul.f32 %v9127, %v9129
      %v9131 = vadd.f32 %v9127, %v9130
      %vm9132 = vweird.f32 %v8007
      %vm9133 = vweird.f32 %v9127
      %vm9134 = vmor %vm9132, %vm9133
      %v9135 = vsel %vm9134, %v9127, %v9131
      %v9136 = vand.u32 2147483647, %v8007
      %vm9137 = vcmp.eq.f32.partialorder %v9136, 8.507059e+37
      %v9138 = vand.u32 %v8007, 2147483648
      %v9139 = vor.u32 1.1754944e-38, %v9138
      %v9140 = vsel %vm9137, %v9139, %v9135
      %v9141 = vmul.f32 1.0, %v9140
      %v9142 = vrcp.pop %v8008
      %v9143 = vmul.f32 %v8008, %v9142
      %v9144 = vsub.f32 1.0, %v9143
      %v9145 = vmul.f32 %v9142, %v9144
      %v9146 = vadd.f32 %v9142, %v9145
      %vm9147 = vweird.f32 %v8008
      %vm9148 = vweird.f32 %v9142
      %vm9149 = vmor %vm9147, %vm9148
      %v9150 = vsel %vm9149, %v9142, %v9146
      %v9151 = vand.u32 2147483647, %v8008
      %vm9152 = vcmp.eq.f32.partialorder %v9151, 8.507059e+37
      %v9153 = vand.u32 %v8008, 2147483648
      %v9154 = vor.u32 1.1754944e-38, %v9153
      %v9155 = vsel %vm9152, %v9154, %v9150
      %v9156 = vmul.f32 1.0, %v9155
      %v9157 = vrcp.pop %v8009
      %v9158 = vmul.f32 %v8009, %v9157
      %v9159 = vsub.f32 1.0, %v9158
      %v9160 = vmul.f32 %v9157, %v9159
      %v9161 = vadd.f32 %v9157, %v9160
      %vm9162 = vweird.f32 %v8009
      %vm9163 = vweird.f32 %v9157
      %vm9164 = vmor %vm9162, %vm9163
      %v9165 = vsel %vm9164, %v9157, %v9161
      %v9166 = vand.u32 2147483647, %v8009
      %vm9167 = vcmp.eq.f32.partialorder %v9166, 8.507059e+37
      %v9168 = vand.u32 %v8009, 2147483648
      %v9169 = vor.u32 1.1754944e-38, %v9168
      %v9170 = vsel %vm9167, %v9169, %v9165
      %v9171 = vmul.f32 1.0, %v9170
      %v9172 = vrcp.pop %v8010
      %v9173 = vmul.f32 %v8010, %v9172
      %v9174 = vsub.f32 1.0, %v9173
      %v9175 = vmul.f32 %v9172, %v9174
      %v9176 = vadd.f32 %v9172, %v9175
      %vm9177 = vweird.f32 %v8010
      %vm9178 = vweird.f32 %v9172
      %vm9179 = vmor %vm9177, %vm9178
      %v9180 = vsel %vm9179, %v9172, %v9176
      %v9181 = vand.u32 2147483647, %v8010
      %vm9182 = vcmp.eq.f32.partialorder %v9181, 8.507059e+37
      %v9183 = vand.u32 %v8010, 2147483648
      %v9184 = vor.u32 1.1754944e-38, %v9183
      %v9185 = vsel %vm9182, %v9184, %v9180
      %v9186 = vmul.f32 1.0, %v9185
      %v9187 = vrcp.pop %v8011
      %v9188 = vmul.f32 %v8011, %v9187
      %v9189 = vsub.f32 1.0, %v9188
      %v9190 = vmul.f32 %v9187, %v9189
      %v9191 = vadd.f32 %v9187, %v9190
      %vm9192 = vweird.f32 %v8011
      %vm9193 = vweird.f32 %v9187
      %vm9194 = vmor %vm9192, %vm9193
      %v9195 = vsel %vm9194, %v9187, %v9191
      %v9196 = vand.u32 2147483647, %v8011
      %vm9197 = vcmp.eq.f32.partialorder %v9196, 8.507059e+37
      %v9198 = vand.u32 %v8011, 2147483648
      %v9199 = vor.u32 1.1754944e-38, %v9198
      %v9200 = vsel %vm9197, %v9199, %v9195
      %v9201 = vmul.f32 1.0, %v9200
      %v9202 = vrcp.pop %v8012
      %v9203 = vmul.f32 %v8012, %v9202
      %v9204 = vsub.f32 1.0, %v9203
      %v9205 = vmul.f32 %v9202, %v9204
      %v9206 = vadd.f32 %v9202, %v9205
      %vm9207 = vweird.f32 %v8012
      %vm9208 = vweird.f32 %v9202
      %vm9209 = vmor %vm9207, %vm9208
      %v9210 = vsel %vm9209, %v9202, %v9206
      %v9211 = vand.u32 2147483647, %v8012
      %vm9212 = vcmp.eq.f32.partialorder %v9211, 8.507059e+37
      %v9213 = vand.u32 %v8012, 2147483648
      %v9214 = vor.u32 1.1754944e-38, %v9213
      %v9215 = vsel %vm9212, %v9214, %v9210
      %v9216 = vmul.f32 1.0, %v9215
      %v9217 = vrcp.pop %v8013
      %v9218 = vmul.f32 %v8013, %v9217
      %v9219 = vsub.f32 1.0, %v9218
      %v9220 = vmul.f32 %v9217, %v9219
      %v9221 = vadd.f32 %v9217, %v9220
      %vm9222 = vweird.f32 %v8013
      %vm9223 = vweird.f32 %v9217
      %vm9224 = vmor %vm9222, %vm9223
      %v9225 = vsel %vm9224, %v9217, %v9221
      %v9226 = vand.u32 2147483647, %v8013
      %vm9227 = vcmp.eq.f32.partialorder %v9226, 8.507059e+37
      %v9228 = vand.u32 %v8013, 2147483648
      %v9229 = vor.u32 1.1754944e-38, %v9228
      %v9230 = vsel %vm9227, %v9229, %v9225
      %v9231 = vmul.f32 1.0, %v9230
      %v9232 = vrcp.pop %v8014
      %v9233 = vmul.f32 %v8014, %v9232
      %v9234 = vsub.f32 1.0, %v9233
      %v9235 = vmul.f32 %v9232, %v9234
      %v9236 = vadd.f32 %v9232, %v9235
      %vm9237 = vweird.f32 %v8014
      %vm9238 = vweird.f32 %v9232
      %vm9239 = vmor %vm9237, %vm9238
      %v9240 = vsel %vm9239, %v9232, %v9236
      %v9241 = vand.u32 2147483647, %v8014
      %vm9242 = vcmp.eq.f32.partialorder %v9241, 8.507059e+37
      %v9243 = vand.u32 %v8014, 2147483648
      %v9244 = vor.u32 1.1754944e-38, %v9243
      %v9245 = vsel %vm9242, %v9244, %v9240
      %v9246 = vmul.f32 1.0, %v9245
      %v9247 = vrcp.pop %v8015
      %v9248 = vmul.f32 %v8015, %v9247
      %v9249 = vsub.f32 1.0, %v9248
      %v9250 = vmul.f32 %v9247, %v9249
      %v9251 = vadd.f32 %v9247, %v9250
      %vm9252 = vweird.f32 %v8015
      %vm9253 = vweird.f32 %v9247
      %vm9254 = vmor %vm9252, %vm9253
      %v9255 = vsel %vm9254, %v9247, %v9251
      %v9256 = vand.u32 2147483647, %v8015
      %vm9257 = vcmp.eq.f32.partialorder %v9256, 8.507059e+37
      %v9258 = vand.u32 %v8015, 2147483648
      %v9259 = vor.u32 1.1754944e-38, %v9258
      %v9260 = vsel %vm9257, %v9259, %v9255
      %v9261 = vmul.f32 1.0, %v9260
      %v9262 = vrcp.pop %v8016
      %v9263 = vmul.f32 %v8016, %v9262
      %v9264 = vsub.f32 1.0, %v9263
      %v9265 = vmul.f32 %v9262, %v9264
      %v9266 = vadd.f32 %v9262, %v9265
      %vm9267 = vweird.f32 %v8016
      %vm9268 = vweird.f32 %v9262
      %vm9269 = vmor %vm9267, %vm9268
      %v9270 = vsel %vm9269, %v9262, %v9266
      %v9271 = vand.u32 2147483647, %v8016
      %vm9272 = vcmp.eq.f32.partialorder %v9271, 8.507059e+37
      %v9273 = vand.u32 %v8016, 2147483648
      %v9274 = vor.u32 1.1754944e-38, %v9273
      %v9275 = vsel %vm9272, %v9274, %v9270
      %v9276 = vmul.f32 1.0, %v9275
      %v9277 = vrcp.pop %v8017
      %v9278 = vmul.f32 %v8017, %v9277
      %v9279 = vsub.f32 1.0, %v9278
      %v9280 = vmul.f32 %v9277, %v9279
      %v9281 = vadd.f32 %v9277, %v9280
      %vm9282 = vweird.f32 %v8017
      %vm9283 = vweird.f32 %v9277
      %vm9284 = vmor %vm9282, %vm9283
      %v9285 = vsel %vm9284, %v9277, %v9281
      %v9286 = vand.u32 2147483647, %v8017
      %vm9287 = vcmp.eq.f32.partialorder %v9286, 8.507059e+37
      %v9288 = vand.u32 %v8017, 2147483648
      %v9289 = vor.u32 1.1754944e-38, %v9288
      %v9290 = vsel %vm9287, %v9289, %v9285
      %v9291 = vmul.f32 1.0, %v9290
      %v9292 = vrcp.pop %v8018
      %v9293 = vmul.f32 %v8018, %v9292
      %v9294 = vsub.f32 1.0, %v9293
      %v9295 = vmul.f32 %v9292, %v9294
      %v9296 = vadd.f32 %v9292, %v9295
      %vm9297 = vweird.f32 %v8018
      %vm9298 = vweird.f32 %v9292
      %vm9299 = vmor %vm9297, %vm9298
      %v9300 = vsel %vm9299, %v9292, %v9296
      %v9301 = vand.u32 2147483647, %v8018
      %vm9302 = vcmp.eq.f32.partialorder %v9301, 8.507059e+37
      %v9303 = vand.u32 %v8018, 2147483648
      %v9304 = vor.u32 1.1754944e-38, %v9303
      %v9305 = vsel %vm9302, %v9304, %v9300
      %v9306 = vmul.f32 1.0, %v9305
      %v9307 = vrcp.pop %v8019
      %v9308 = vmul.f32 %v8019, %v9307
      %v9309 = vsub.f32 1.0, %v9308
      %v9310 = vmul.f32 %v9307, %v9309
      %v9311 = vadd.f32 %v9307, %v9310
      %vm9312 = vweird.f32 %v8019
      %vm9313 = vweird.f32 %v9307
      %vm9314 = vmor %vm9312, %vm9313
      %v9315 = vsel %vm9314, %v9307, %v9311
      %v9316 = vand.u32 2147483647, %v8019
      %vm9317 = vcmp.eq.f32.partialorder %v9316, 8.507059e+37
      %v9318 = vand.u32 %v8019, 2147483648
      %v9319 = vor.u32 1.1754944e-38, %v9318
      %v9320 = vsel %vm9317, %v9319, %v9315
      %v9321 = vmul.f32 1.0, %v9320
      %v9322 = vrcp.pop %v8020
      %v9323 = vmul.f32 %v8020, %v9322
      %v9324 = vsub.f32 1.0, %v9323
      %v9325 = vmul.f32 %v9322, %v9324
      %v9326 = vadd.f32 %v9322, %v9325
      %vm9327 = vweird.f32 %v8020
      %vm9328 = vweird.f32 %v9322
      %vm9329 = vmor %vm9327, %vm9328
      %v9330 = vsel %vm9329, %v9322, %v9326
      %v9331 = vand.u32 2147483647, %v8020
      %vm9332 = vcmp.eq.f32.partialorder %v9331, 8.507059e+37
      %v9333 = vand.u32 %v8020, 2147483648
      %v9334 = vor.u32 1.1754944e-38, %v9333
      %v9335 = vsel %vm9332, %v9334, %v9330
      %v9336 = vmul.f32 1.0, %v9335
      %v9337 = vrcp.pop %v8021
      %v9338 = vmul.f32 %v8021, %v9337
      %v9339 = vsub.f32 1.0, %v9338
      %v9340 = vmul.f32 %v9337, %v9339
      %v9341 = vadd.f32 %v9337, %v9340
      %vm9342 = vweird.f32 %v8021
      %vm9343 = vweird.f32 %v9337
      %vm9344 = vmor %vm9342, %vm9343
      %v9345 = vsel %vm9344, %v9337, %v9341
      %v9346 = vand.u32 2147483647, %v8021
      %vm9347 = vcmp.eq.f32.partialorder %v9346, 8.507059e+37
      %v9348 = vand.u32 %v8021, 2147483648
      %v9349 = vor.u32 1.1754944e-38, %v9348
      %v9350 = vsel %vm9347, %v9349, %v9345
      %v9351 = vmul.f32 1.0, %v9350
      %v9352 = vrcp.pop %v8022
      %v9353 = vmul.f32 %v8022, %v9352
      %v9354 = vsub.f32 1.0, %v9353
      %v9355 = vmul.f32 %v9352, %v9354
      %v9356 = vadd.f32 %v9352, %v9355
      %vm9357 = vweird.f32 %v8022
      %vm9358 = vweird.f32 %v9352
      %vm9359 = vmor %vm9357, %vm9358
      %v9360 = vsel %vm9359, %v9352, %v9356
      %v9361 = vand.u32 2147483647, %v8022
      %vm9362 = vcmp.eq.f32.partialorder %v9361, 8.507059e+37
      %v9363 = vand.u32 %v8022, 2147483648
      %v9364 = vor.u32 1.1754944e-38, %v9363
      %v9365 = vsel %vm9362, %v9364, %v9360
      %v9366 = vmul.f32 1.0, %v9365
      %v9367 = vrcp.pop %v8023
      %v9368 = vmul.f32 %v8023, %v9367
      %v9369 = vsub.f32 1.0, %v9368
      %v9370 = vmul.f32 %v9367, %v9369
      %v9371 = vadd.f32 %v9367, %v9370
      %vm9372 = vweird.f32 %v8023
      %vm9373 = vweird.f32 %v9367
      %vm9374 = vmor %vm9372, %vm9373
      %v9375 = vsel %vm9374, %v9367, %v9371
      %v9376 = vand.u32 2147483647, %v8023
      %vm9377 = vcmp.eq.f32.partialorder %v9376, 8.507059e+37
      %v9378 = vand.u32 %v8023, 2147483648
      %v9379 = vor.u32 1.1754944e-38, %v9378
      %v9380 = vsel %vm9377, %v9379, %v9375
      %v9381 = vmul.f32 1.0, %v9380
      %v9382 = vrcp.pop %v8024
      %v9383 = vmul.f32 %v8024, %v9382
      %v9384 = vsub.f32 1.0, %v9383
      %v9385 = vmul.f32 %v9382, %v9384
      %v9386 = vadd.f32 %v9382, %v9385
      %vm9387 = vweird.f32 %v8024
      %vm9388 = vweird.f32 %v9382
      %vm9389 = vmor %vm9387, %vm9388
      %v9390 = vsel %vm9389, %v9382, %v9386
      %v9391 = vand.u32 2147483647, %v8024
      %vm9392 = vcmp.eq.f32.partialorder %v9391, 8.507059e+37
      %v9393 = vand.u32 %v8024, 2147483648
      %v9394 = vor.u32 1.1754944e-38, %v9393
      %v9395 = vsel %vm9392, %v9394, %v9390
      %v9396 = vmul.f32 1.0, %v9395
      %v9397 = vrcp.pop %v8025
      %v9398 = vmul.f32 %v8025, %v9397
      %v9399 = vsub.f32 1.0, %v9398
      %v9400 = vmul.f32 %v9397, %v9399
      %v9401 = vadd.f32 %v9397, %v9400
      %vm9402 = vweird.f32 %v8025
      %vm9403 = vweird.f32 %v9397
      %vm9404 = vmor %vm9402, %vm9403
      %v9405 = vsel %vm9404, %v9397, %v9401
      %v9406 = vand.u32 2147483647, %v8025
      %vm9407 = vcmp.eq.f32.partialorder %v9406, 8.507059e+37
      %v9408 = vand.u32 %v8025, 2147483648
      %v9409 = vor.u32 1.1754944e-38, %v9408
      %v9410 = vsel %vm9407, %v9409, %v9405
      %v9411 = vmul.f32 1.0, %v9410
      %v9412 = vrcp.pop %v8026
      %v9413 = vmul.f32 %v8026, %v9412
      %v9414 = vsub.f32 1.0, %v9413
      %v9415 = vmul.f32 %v9412, %v9414
      %v9416 = vadd.f32 %v9412, %v9415
      %vm9417 = vweird.f32 %v8026
      %vm9418 = vweird.f32 %v9412
      %vm9419 = vmor %vm9417, %vm9418
      %v9420 = vsel %vm9419, %v9412, %v9416
      %v9421 = vand.u32 2147483647, %v8026
      %vm9422 = vcmp.eq.f32.partialorder %v9421, 8.507059e+37
      %v9423 = vand.u32 %v8026, 2147483648
      %v9424 = vor.u32 1.1754944e-38, %v9423
      %v9425 = vsel %vm9422, %v9424, %v9420
      %v9426 = vmul.f32 1.0, %v9425
      %v9427 = vrcp.pop %v8027
      %v9428 = vmul.f32 %v8027, %v9427
      %v9429 = vsub.f32 1.0, %v9428
      %v9430 = vmul.f32 %v9427, %v9429
      %v9431 = vadd.f32 %v9427, %v9430
      %vm9432 = vweird.f32 %v8027
      %vm9433 = vweird.f32 %v9427
      %vm9434 = vmor %vm9432, %vm9433
      %v9435 = vsel %vm9434, %v9427, %v9431
      %v9436 = vand.u32 2147483647, %v8027
      %vm9437 = vcmp.eq.f32.partialorder %v9436, 8.507059e+37
      %v9438 = vand.u32 %v8027, 2147483648
      %v9439 = vor.u32 1.1754944e-38, %v9438
      %v9440 = vsel %vm9437, %v9439, %v9435
      %v9441 = vmul.f32 1.0, %v9440
      %v9442 = vrcp.pop %v8028
      %v9443 = vmul.f32 %v8028, %v9442
      %v9444 = vsub.f32 1.0, %v9443
      %v9445 = vmul.f32 %v9442, %v9444
      %v9446 = vadd.f32 %v9442, %v9445
      %vm9447 = vweird.f32 %v8028
      %vm9448 = vweird.f32 %v9442
      %vm9449 = vmor %vm9447, %vm9448
      %v9450 = vsel %vm9449, %v9442, %v9446
      %v9451 = vand.u32 2147483647, %v8028
      %vm9452 = vcmp.eq.f32.partialorder %v9451, 8.507059e+37
      %v9453 = vand.u32 %v8028, 2147483648
      %v9454 = vor.u32 1.1754944e-38, %v9453
      %v9455 = vsel %vm9452, %v9454, %v9450
      %v9456 = vmul.f32 1.0, %v9455
      %v9457 = vrcp.pop %v8029
      %v9458 = vmul.f32 %v8029, %v9457
      %v9459 = vsub.f32 1.0, %v9458
      %v9460 = vmul.f32 %v9457, %v9459
      %v9461 = vadd.f32 %v9457, %v9460
      %vm9462 = vweird.f32 %v8029
      %vm9463 = vweird.f32 %v9457
      %vm9464 = vmor %vm9462, %vm9463
      %v9465 = vsel %vm9464, %v9457, %v9461
      %v9466 = vand.u32 2147483647, %v8029
      %vm9467 = vcmp.eq.f32.partialorder %v9466, 8.507059e+37
      %v9468 = vand.u32 %v8029, 2147483648
      %v9469 = vor.u32 1.1754944e-38, %v9468
      %v9470 = vsel %vm9467, %v9469, %v9465
      %v9471 = vmul.f32 1.0, %v9470
      %v9472 = vrcp.pop %v8030
      %v9473 = vmul.f32 %v8030, %v9472
      %v9474 = vsub.f32 1.0, %v9473
      %v9475 = vmul.f32 %v9472, %v9474
      %v9476 = vadd.f32 %v9472, %v9475
      %vm9477 = vweird.f32 %v8030
      %vm9478 = vweird.f32 %v9472
      %vm9479 = vmor %vm9477, %vm9478
      %v9480 = vsel %vm9479, %v9472, %v9476
      %v9481 = vand.u32 2147483647, %v8030
      %vm9482 = vcmp.eq.f32.partialorder %v9481, 8.507059e+37
      %v9483 = vand.u32 %v8030, 2147483648
      %v9484 = vor.u32 1.1754944e-38, %v9483
      %v9485 = vsel %vm9482, %v9484, %v9480
      %v9486 = vmul.f32 1.0, %v9485
      %v9487 = vrcp.pop %v8031
      %v9488 = vmul.f32 %v8031, %v9487
      %v9489 = vsub.f32 1.0, %v9488
      %v9490 = vmul.f32 %v9487, %v9489
      %v9491 = vadd.f32 %v9487, %v9490
      %vm9492 = vweird.f32 %v8031
      %vm9493 = vweird.f32 %v9487
      %vm9494 = vmor %vm9492, %vm9493
      %v9495 = vsel %vm9494, %v9487, %v9491
      %v9496 = vand.u32 2147483647, %v8031
      %vm9497 = vcmp.eq.f32.partialorder %v9496, 8.507059e+37
      %v9498 = vand.u32 %v8031, 2147483648
      %v9499 = vor.u32 1.1754944e-38, %v9498
      %v9500 = vsel %vm9497, %v9499, %v9495
      %v9501 = vmul.f32 1.0, %v9500
      %v9502 = vrcp.pop %v8032
      %v9503 = vmul.f32 %v8032, %v9502
      %v9504 = vsub.f32 1.0, %v9503
      %v9505 = vmul.f32 %v9502, %v9504
      %v9506 = vadd.f32 %v9502, %v9505
      %vm9507 = vweird.f32 %v8032
      %vm9508 = vweird.f32 %v9502
      %vm9509 = vmor %vm9507, %vm9508
      %v9510 = vsel %vm9509, %v9502, %v9506
      %v9511 = vand.u32 2147483647, %v8032
      %vm9512 = vcmp.eq.f32.partialorder %v9511, 8.507059e+37
      %v9513 = vand.u32 %v8032, 2147483648
      %v9514 = vor.u32 1.1754944e-38, %v9513
      %v9515 = vsel %vm9512, %v9514, %v9510
      %v9516 = vmul.f32 1.0, %v9515
      %v9517 = vrcp.pop %v8033
      %v9518 = vmul.f32 %v8033, %v9517
      %v9519 = vsub.f32 1.0, %v9518
      %v9520 = vmul.f32 %v9517, %v9519
      %v9521 = vadd.f32 %v9517, %v9520
      %vm9522 = vweird.f32 %v8033
      %vm9523 = vweird.f32 %v9517
      %vm9524 = vmor %vm9522, %vm9523
      %v9525 = vsel %vm9524, %v9517, %v9521
      %v9526 = vand.u32 2147483647, %v8033
      %vm9527 = vcmp.eq.f32.partialorder %v9526, 8.507059e+37
      %v9528 = vand.u32 %v8033, 2147483648
      %v9529 = vor.u32 1.1754944e-38, %v9528
      %v9530 = vsel %vm9527, %v9529, %v9525
      %v9531 = vmul.f32 1.0, %v9530
      %v9532 = vrcp.pop %v8034
      %v9533 = vmul.f32 %v8034, %v9532
      %v9534 = vsub.f32 1.0, %v9533
      %v9535 = vmul.f32 %v9532, %v9534
      %v9536 = vadd.f32 %v9532, %v9535
      %vm9537 = vweird.f32 %v8034
      %vm9538 = vweird.f32 %v9532
      %vm9539 = vmor %vm9537, %vm9538
      %v9540 = vsel %vm9539, %v9532, %v9536
      %v9541 = vand.u32 2147483647, %v8034
      %vm9542 = vcmp.eq.f32.partialorder %v9541, 8.507059e+37
      %v9543 = vand.u32 %v8034, 2147483648
      %v9544 = vor.u32 1.1754944e-38, %v9543
      %v9545 = vsel %vm9542, %v9544, %v9540
      %v9546 = vmul.f32 1.0, %v9545
      %v9547 = vrcp.pop %v8035
      %v9548 = vmul.f32 %v8035, %v9547
      %v9549 = vsub.f32 1.0, %v9548
      %v9550 = vmul.f32 %v9547, %v9549
      %v9551 = vadd.f32 %v9547, %v9550
      %vm9552 = vweird.f32 %v8035
      %vm9553 = vweird.f32 %v9547
      %vm9554 = vmor %vm9552, %vm9553
      %v9555 = vsel %vm9554, %v9547, %v9551
      %v9556 = vand.u32 2147483647, %v8035
      %vm9557 = vcmp.eq.f32.partialorder %v9556, 8.507059e+37
      %v9558 = vand.u32 %v8035, 2147483648
      %v9559 = vor.u32 1.1754944e-38, %v9558
      %v9560 = vsel %vm9557, %v9559, %v9555
      %v9561 = vmul.f32 1.0, %v9560
      %v9562 = vrcp.pop %v8036
      %v9563 = vmul.f32 %v8036, %v9562
      %v9564 = vsub.f32 1.0, %v9563
      %v9565 = vmul.f32 %v9562, %v9564
      %v9566 = vadd.f32 %v9562, %v9565
      %vm9567 = vweird.f32 %v8036
      %vm9568 = vweird.f32 %v9562
      %vm9569 = vmor %vm9567, %vm9568
      %v9570 = vsel %vm9569, %v9562, %v9566
      %v9571 = vand.u32 2147483647, %v8036
      %vm9572 = vcmp.eq.f32.partialorder %v9571, 8.507059e+37
      %v9573 = vand.u32 %v8036, 2147483648
      %v9574 = vor.u32 1.1754944e-38, %v9573
      %v9575 = vsel %vm9572, %v9574, %v9570
      %v9576 = vmul.f32 1.0, %v9575
      %v9577 = vrcp.pop %v8037
      %v9578 = vmul.f32 %v8037, %v9577
      %v9579 = vsub.f32 1.0, %v9578
      %v9580 = vmul.f32 %v9577, %v9579
      %v9581 = vadd.f32 %v9577, %v9580
      %vm9582 = vweird.f32 %v8037
      %vm9583 = vweird.f32 %v9577
      %vm9584 = vmor %vm9582, %vm9583
      %v9585 = vsel %vm9584, %v9577, %v9581
      %v9586 = vand.u32 2147483647, %v8037
      %vm9587 = vcmp.eq.f32.partialorder %v9586, 8.507059e+37
      %v9588 = vand.u32 %v8037, 2147483648
      %v9589 = vor.u32 1.1754944e-38, %v9588
      %v9590 = vsel %vm9587, %v9589, %v9585
      %v9591 = vmul.f32 1.0, %v9590
      %v9592 = vrcp.pop %v8038
      %v9593 = vmul.f32 %v8038, %v9592
      %v9594 = vsub.f32 1.0, %v9593
      %v9595 = vmul.f32 %v9592, %v9594
      %v9596 = vadd.f32 %v9592, %v9595
      %vm9597 = vweird.f32 %v8038
      %vm9598 = vweird.f32 %v9592
      %vm9599 = vmor %vm9597, %vm9598
      %v9600 = vsel %vm9599, %v9592, %v9596
      %v9601 = vand.u32 2147483647, %v8038
      %vm9602 = vcmp.eq.f32.partialorder %v9601, 8.507059e+37
      %v9603 = vand.u32 %v8038, 2147483648
      %v9604 = vor.u32 1.1754944e-38, %v9603
      %v9605 = vsel %vm9602, %v9604, %v9600
      %v9606 = vmul.f32 1.0, %v9605
      %v9607 = vrcp.pop %v8039
      %v9608 = vmul.f32 %v8039, %v9607
      %v9609 = vsub.f32 1.0, %v9608
      %v9610 = vmul.f32 %v9607, %v9609
      %v9611 = vadd.f32 %v9607, %v9610
      %vm9612 = vweird.f32 %v8039
      %vm9613 = vweird.f32 %v9607
      %vm9614 = vmor %vm9612, %vm9613
      %v9615 = vsel %vm9614, %v9607, %v9611
      %v9616 = vand.u32 2147483647, %v8039
      %vm9617 = vcmp.eq.f32.partialorder %v9616, 8.507059e+37
      %v9618 = vand.u32 %v8039, 2147483648
      %v9619 = vor.u32 1.1754944e-38, %v9618
      %v9620 = vsel %vm9617, %v9619, %v9615
      %v9621 = vmul.f32 1.0, %v9620
      %v9622 = vrcp.pop %v8040
      %v9623 = vmul.f32 %v8040, %v9622
      %v9624 = vsub.f32 1.0, %v9623
      %v9625 = vmul.f32 %v9622, %v9624
      %v9626 = vadd.f32 %v9622, %v9625
      %vm9627 = vweird.f32 %v8040
      %vm9628 = vweird.f32 %v9622
      %vm9629 = vmor %vm9627, %vm9628
      %v9630 = vsel %vm9629, %v9622, %v9626
      %v9631 = vand.u32 2147483647, %v8040
      %vm9632 = vcmp.eq.f32.partialorder %v9631, 8.507059e+37
      %v9633 = vand.u32 %v8040, 2147483648
      %v9634 = vor.u32 1.1754944e-38, %v9633
      %v9635 = vsel %vm9632, %v9634, %v9630
      %v9636 = vmul.f32 1.0, %v9635
      %v9637 = vrcp.pop %v8041
      %v9638 = vmul.f32 %v8041, %v9637
      %v9639 = vsub.f32 1.0, %v9638
      %v9640 = vmul.f32 %v9637, %v9639
      %v9641 = vadd.f32 %v9637, %v9640
      %vm9642 = vweird.f32 %v8041
      %vm9643 = vweird.f32 %v9637
      %vm9644 = vmor %vm9642, %vm9643
      %v9645 = vsel %vm9644, %v9637, %v9641
      %v9646 = vand.u32 2147483647, %v8041
      %vm9647 = vcmp.eq.f32.partialorder %v9646, 8.507059e+37
      %v9648 = vand.u32 %v8041, 2147483648
      %v9649 = vor.u32 1.1754944e-38, %v9648
      %v9650 = vsel %vm9647, %v9649, %v9645
      %v9651 = vmul.f32 1.0, %v9650
      %v9652 = vrcp.pop %v8042
      %v9653 = vmul.f32 %v8042, %v9652
      %v9654 = vsub.f32 1.0, %v9653
      %v9655 = vmul.f32 %v9652, %v9654
      %v9656 = vadd.f32 %v9652, %v9655
      %vm9657 = vweird.f32 %v8042
      %vm9658 = vweird.f32 %v9652
      %vm9659 = vmor %vm9657, %vm9658
      %v9660 = vsel %vm9659, %v9652, %v9656
      %v9661 = vand.u32 2147483647, %v8042
      %vm9662 = vcmp.eq.f32.partialorder %v9661, 8.507059e+37
      %v9663 = vand.u32 %v8042, 2147483648
      %v9664 = vor.u32 1.1754944e-38, %v9663
      %v9665 = vsel %vm9662, %v9664, %v9660
      %v9666 = vmul.f32 1.0, %v9665
      %v9667 = vrcp.pop %v8043
      %v9668 = vmul.f32 %v8043, %v9667
      %v9669 = vsub.f32 1.0, %v9668
      %v9670 = vmul.f32 %v9667, %v9669
      %v9671 = vadd.f32 %v9667, %v9670
      %vm9672 = vweird.f32 %v8043
      %vm9673 = vweird.f32 %v9667
      %vm9674 = vmor %vm9672, %vm9673
      %v9675 = vsel %vm9674, %v9667, %v9671
      %v9676 = vand.u32 2147483647, %v8043
      %vm9677 = vcmp.eq.f32.partialorder %v9676, 8.507059e+37
      %v9678 = vand.u32 %v8043, 2147483648
      %v9679 = vor.u32 1.1754944e-38, %v9678
      %v9680 = vsel %vm9677, %v9679, %v9675
      %v9681 = vmul.f32 1.0, %v9680
      %v9682 = vrcp.pop %v8044
      %v9683 = vmul.f32 %v8044, %v9682
      %v9684 = vsub.f32 1.0, %v9683
      %v9685 = vmul.f32 %v9682, %v9684
      %v9686 = vadd.f32 %v9682, %v9685
      %vm9687 = vweird.f32 %v8044
      %vm9688 = vweird.f32 %v9682
      %vm9689 = vmor %vm9687, %vm9688
      %v9690 = vsel %vm9689, %v9682, %v9686
      %v9691 = vand.u32 2147483647, %v8044
      %vm9692 = vcmp.eq.f32.partialorder %v9691, 8.507059e+37
      %v9693 = vand.u32 %v8044, 2147483648
      %v9694 = vor.u32 1.1754944e-38, %v9693
      %v9695 = vsel %vm9692, %v9694, %v9690
      %v9696 = vmul.f32 1.0, %v9695
      %v9697 = vrcp.pop %v8045
      %v9698 = vmul.f32 %v8045, %v9697
      %v9699 = vsub.f32 1.0, %v9698
      %v9700 = vmul.f32 %v9697, %v9699
      %v9701 = vadd.f32 %v9697, %v9700
      %vm9702 = vweird.f32 %v8045
      %vm9703 = vweird.f32 %v9697
      %vm9704 = vmor %vm9702, %vm9703
      %v9705 = vsel %vm9704, %v9697, %v9701
      %v9706 = vand.u32 2147483647, %v8045
      %vm9707 = vcmp.eq.f32.partialorder %v9706, 8.507059e+37
      %v9708 = vand.u32 %v8045, 2147483648
      %v9709 = vor.u32 1.1754944e-38, %v9708
      %v9710 = vsel %vm9707, %v9709, %v9705
      %v9711 = vmul.f32 1.0, %v9710
      %v9712 = vrcp.pop %v8046
      %v9713 = vmul.f32 %v8046, %v9712
      %v9714 = vsub.f32 1.0, %v9713
      %v9715 = vmul.f32 %v9712, %v9714
      %v9716 = vadd.f32 %v9712, %v9715
      %vm9717 = vweird.f32 %v8046
      %vm9718 = vweird.f32 %v9712
      %vm9719 = vmor %vm9717, %vm9718
      %v9720 = vsel %vm9719, %v9712, %v9716
      %v9721 = vand.u32 2147483647, %v8046
      %vm9722 = vcmp.eq.f32.partialorder %v9721, 8.507059e+37
      %v9723 = vand.u32 %v8046, 2147483648
      %v9724 = vor.u32 1.1754944e-38, %v9723
      %v9725 = vsel %vm9722, %v9724, %v9720
      %v9726 = vmul.f32 1.0, %v9725
      %9727 = vst [vmem:[%s424] sm:$0xff] %v8061
      %9728 = vst [vmem:[%s424 + $0x8] sm:$0xff] %v8076
      %9729 = vst [vmem:[%s424 + $0x10] sm:$0xff] %v8091
      %9730 = vst [vmem:[%s424 + $0x18] sm:$0xff] %v8106
      %9731 = vst [vmem:[%s424 + $0x20] sm:$0xff] %v8121
      %9732 = vst [vmem:[%s424 + $0x28] sm:$0xff] %v8136
      %9733 = vst [vmem:[%s424 + $0x30] sm:$0xff] %v8151
      %9734 = vst [vmem:[%s424 + $0x38] sm:$0xff] %v8166
      %9735 = vst [vmem:[%s424 + $0x40] sm:$0xff] %v8181
      %9736 = vst [vmem:[%s424 + $0x48] sm:$0xff] %v8196
      %9737 = vst [vmem:[%s424 + $0x50] sm:$0xff] %v8211
      %9738 = vst [vmem:[%s424 + $0x58] sm:$0xff] %v8226
      %9739 = vst [vmem:[%s424 + $0x60] sm:$0xff] %v8241
      %9740 = vst [vmem:[%s424 + $0x68] sm:$0xff] %v8256
      %9741 = vst [vmem:[%s424 + $0x70] sm:$0xff] %v8271
      %9742 = vst [vmem:[%s424 + $0x78] sm:$0xff] %v8286
      %9743 = vst [vmem:[%s424 + $0x80] sm:$0xff] %v8301
      %9744 = vst [vmem:[%s424 + $0x88] sm:$0xff] %v8316
      %9745 = vst [vmem:[%s424 + $0x90] sm:$0xff] %v8331
      %9746 = vst [vmem:[%s424 + $0x98] sm:$0xff] %v8346
      %9747 = vst [vmem:[%s424 + $0xa0] sm:$0xff] %v8361
      %9748 = vst [vmem:[%s424 + $0xa8] sm:$0xff] %v8376
      %9749 = vst [vmem:[%s424 + $0xb0] sm:$0xff] %v8391
      %9750 = vst [vmem:[%s424 + $0xb8] sm:$0xff] %v8406
      %9751 = vst [vmem:[%s424 + $0xc0] sm:$0xff] %v8421
      %9752 = vst [vmem:[%s424 + $0xc8] sm:$0xff] %v8436
      %9753 = vst [vmem:[%s424 + $0xd0] sm:$0xff] %v8451
      %9754 = vst [vmem:[%s424 + $0xd8] sm:$0xff] %v8466
      %9755 = vst [vmem:[%s424 + $0xe0] sm:$0xff] %v8481
      %9756 = vst [vmem:[%s424 + $0xe8] sm:$0xff] %v8496
      %9757 = vst [vmem:[%s424 + $0xf0] sm:$0xff] %v8511
      %9758 = vst [vmem:[%s424 + $0xf8] sm:$0xff] %v8526
      %9759 = vst [vmem:[%s424 + $0x100] sm:$0xff] %v8541
      %9760 = vst [vmem:[%s424 + $0x108] sm:$0xff] %v8556
      %9761 = vst [vmem:[%s424 + $0x110] sm:$0xff] %v8571
      %9762 = vst [vmem:[%s424 + $0x118] sm:$0xff] %v8586
      %9763 = vst [vmem:[%s424 + $0x120] sm:$0xff] %v8601
      %9764 = vst [vmem:[%s424 + $0x128] sm:$0xff] %v8616
      %9765 = vst [vmem:[%s424 + $0x130] sm:$0xff] %v8631
      %9766 = vst [vmem:[%s424 + $0x138] sm:$0xff] %v8646
      %9767 = vst [vmem:[%s424 + $0x140] sm:$0xff] %v8661
      %9768 = vst [vmem:[%s424 + $0x148] sm:$0xff] %v8676
      %9769 = vst [vmem:[%s424 + $0x150] sm:$0xff] %v8691
      %9770 = vst [vmem:[%s424 + $0x158] sm:$0xff] %v8706
      %9771 = vst [vmem:[%s424 + $0x160] sm:$0xff] %v8721
      %9772 = vst [vmem:[%s424 + $0x168] sm:$0xff] %v8736
      %9773 = vst [vmem:[%s424 + $0x170] sm:$0xff] %v8751
      %9774 = vst [vmem:[%s424 + $0x178] sm:$0xff] %v8766
      %9775 = vst [vmem:[%s424 + $0x180] sm:$0xff] %v8781
      %9776 = vst [vmem:[%s424 + $0x188] sm:$0xff] %v8796
      %9777 = vst [vmem:[%s424 + $0x190] sm:$0xff] %v8811
      %9778 = vst [vmem:[%s424 + $0x198] sm:$0xff] %v8826
      %9779 = vst [vmem:[%s424 + $0x1a0] sm:$0xff] %v8841
      %9780 = vst [vmem:[%s424 + $0x1a8] sm:$0xff] %v8856
      %9781 = vst [vmem:[%s424 + $0x1b0] sm:$0xff] %v8871
      %9782 = vst [vmem:[%s424 + $0x1b8] sm:$0xff] %v8886
      %9783 = vst [vmem:[%s424 + $0x1c0] sm:$0xff] %v8901
      %9784 = vst [vmem:[%s424 + $0x1c8] sm:$0xff] %v8916
      %9785 = vst [vmem:[%s424 + $0x1d0] sm:$0xff] %v8931
      %9786 = vst [vmem:[%s424 + $0x1d8] sm:$0xff] %v8946
      %9787 = vst [vmem:[%s424 + $0x1e0] sm:$0xff] %v8961
      %9788 = vst [vmem:[%s424 + $0x1e8] sm:$0xff] %v8976
      %9789 = vst [vmem:[%s424 + $0x1f0] sm:$0xff] %v8991
      %9790 = vst [vmem:[%s424 + $0x1f8] sm:$0xff] %v9006
      %9791 = vst [vmem:[%s424 + $0x200] sm:$0xff] %v9021
      %9792 = vst [vmem:[%s424 + $0x208] sm:$0xff] %v9036
      %9793 = vst [vmem:[%s424 + $0x210] sm:$0xff] %v9051
      %9794 = vst [vmem:[%s424 + $0x218] sm:$0xff] %v9066
      %9795 = vst [vmem:[%s424 + $0x220] sm:$0xff] %v9081
      %9796 = vst [vmem:[%s424 + $0x228] sm:$0xff] %v9096
      %9797 = vst [vmem:[%s424 + $0x230] sm:$0xff] %v9111
      %9798 = vst [vmem:[%s424 + $0x238] sm:$0xff] %v9126
      %9799 = vst [vmem:[%s424 + $0x240] sm:$0xff] %v9141
      %9800 = vst [vmem:[%s424 + $0x248] sm:$0xff] %v9156
      %9801 = vst [vmem:[%s424 + $0x250] sm:$0xff] %v9171
      %9802 = vst [vmem:[%s424 + $0x258] sm:$0xff] %v9186
      %9803 = vst [vmem:[%s424 + $0x260] sm:$0xff] %v9201
      %9804 = vst [vmem:[%s424 + $0x268] sm:$0xff] %v9216
      %9805 = vst [vmem:[%s424 + $0x270] sm:$0xff] %v9231
      %9806 = vst [vmem:[%s424 + $0x278] sm:$0xff] %v9246
      %9807 = vst [vmem:[%s424 + $0x280] sm:$0xff] %v9261
      %9808 = vst [vmem:[%s424 + $0x288] sm:$0xff] %v9276
      %9809 = vst [vmem:[%s424 + $0x290] sm:$0xff] %v9291
      %9810 = vst [vmem:[%s424 + $0x298] sm:$0xff] %v9306
      %9811 = vst [vmem:[%s424 + $0x2a0] sm:$0xff] %v9321
      %9812 = vst [vmem:[%s424 + $0x2a8] sm:$0xff] %v9336
      %9813 = vst [vmem:[%s424 + $0x2b0] sm:$0xff] %v9351
      %9814 = vst [vmem:[%s424 + $0x2b8] sm:$0xff] %v9366
      %9815 = vst [vmem:[%s424 + $0x2c0] sm:$0xff] %v9381
      %9816 = vst [vmem:[%s424 + $0x2c8] sm:$0xff] %v9396
      %9817 = vst [vmem:[%s424 + $0x2d0] sm:$0xff] %v9411
      %9818 = vst [vmem:[%s424 + $0x2d8] sm:$0xff] %v9426
      %9819 = vst [vmem:[%s424 + $0x2e0] sm:$0xff] %v9441
      %9820 = vst [vmem:[%s424 + $0x2e8] sm:$0xff] %v9456
      %9821 = vst [vmem:[%s424 + $0x2f0] sm:$0xff] %v9471
      %9822 = vst [vmem:[%s424 + $0x2f8] sm:$0xff] %v9486
      %9823 = vst [vmem:[%s424 + $0x300] sm:$0xff] %v9501
      %9824 = vst [vmem:[%s424 + $0x308] sm:$0xff] %v9516
      %9825 = vst [vmem:[%s424 + $0x310] sm:$0xff] %v9531
      %9826 = vst [vmem:[%s424 + $0x318] sm:$0xff] %v9546
      %9827 = vst [vmem:[%s424 + $0x320] sm:$0xff] %v9561
      %9828 = vst [vmem:[%s424 + $0x328] sm:$0xff] %v9576
      %9829 = vst [vmem:[%s424 + $0x330] sm:$0xff] %v9591
      %9830 = vst [vmem:[%s424 + $0x338] sm:$0xff] %v9606
      %9831 = vst [vmem:[%s424 + $0x340] sm:$0xff] %v9621
      %9832 = vst [vmem:[%s424 + $0x348] sm:$0xff] %v9636
      %9833 = vst [vmem:[%s424 + $0x350] sm:$0xff] %v9651
      %9834 = vst [vmem:[%s424 + $0x358] sm:$0xff] %v9666
      %9835 = vst [vmem:[%s424 + $0x360] sm:$0xff] %v9681
      %9836 = vst [vmem:[%s424 + $0x368] sm:$0xff] %v9696
      %9837 = vst [vmem:[%s424 + $0x370] sm:$0xff] %v9711
      %9838 = vst [vmem:[%s424 + $0x378] sm:$0xff] %v9726
      %9839 = vst [vmem:[%s431] sm:$0xff] %v3986
      %9840 = vst [vmem:[%s431 + $0x8] sm:$0xff] %v4182
      %9841 = vst [vmem:[%s431 + $0x10] sm:$0xff] %v3988
      %9842 = vst [vmem:[%s431 + $0x18] sm:$0xff] %v4184
      %9843 = vst [vmem:[%s431 + $0x20] sm:$0xff] %v3991
      %9844 = vst [vmem:[%s431 + $0x28] sm:$0xff] %v4187
      %9845 = vst [vmem:[%s431 + $0x30] sm:$0xff] %v3993
      %9846 = vst [vmem:[%s431 + $0x38] sm:$0xff] %v4189
      %9847 = vst [vmem:[%s431 + $0x40] sm:$0xff] %v3996
      %9848 = vst [vmem:[%s431 + $0x48] sm:$0xff] %v4192
      %9849 = vst [vmem:[%s431 + $0x50] sm:$0xff] %v3998
      %9850 = vst [vmem:[%s431 + $0x58] sm:$0xff] %v4194
      %9851 = vst [vmem:[%s431 + $0x60] sm:$0xff] %v4001
      %9852 = vst [vmem:[%s431 + $0x68] sm:$0xff] %v4197
      %9853 = vst [vmem:[%s431 + $0x70] sm:$0xff] %v4003
      %9854 = vst [vmem:[%s431 + $0x78] sm:$0xff] %v4199
      %9855 = vst [vmem:[%s431 + $0x80] sm:$0xff] %v4006
      %9856 = vst [vmem:[%s431 + $0x88] sm:$0xff] %v4202
      %9857 = vst [vmem:[%s431 + $0x90] sm:$0xff] %v4008
      %9858 = vst [vmem:[%s431 + $0x98] sm:$0xff] %v4204
      %9859 = vst [vmem:[%s431 + $0xa0] sm:$0xff] %v4011
      %9860 = vst [vmem:[%s431 + $0xa8] sm:$0xff] %v4207
      %9861 = vst [vmem:[%s431 + $0xb0] sm:$0xff] %v4013
      %9862 = vst [vmem:[%s431 + $0xb8] sm:$0xff] %v4209
      %9863 = vst [vmem:[%s431 + $0xc0] sm:$0xff] %v4016
      %9864 = vst [vmem:[%s431 + $0xc8] sm:$0xff] %v4212
      %9865 = vst [vmem:[%s431 + $0xd0] sm:$0xff] %v4018
      %9866 = vst [vmem:[%s431 + $0xd8] sm:$0xff] %v4214
      %9867 = vst [vmem:[%s431 + $0xe0] sm:$0xff] %v4021
      %9868 = vst [vmem:[%s431 + $0xe8] sm:$0xff] %v4217
      %9869 = vst [vmem:[%s431 + $0xf0] sm:$0xff] %v4023
      %9870 = vst [vmem:[%s431 + $0xf8] sm:$0xff] %v4219
      %s9871 = smul.u32 16, %s23
      %p9872 = scmp.lt.s32.totalorder %s9871, 31
      %s9873 = scalar_select %p9872, %s9871, 31
      %s9874 = smul.addr %s9873, 7
      %s9875 = smul.addr %s9874, 8
      %s9876 = scalar_lea.vmem %s10, %s9875
      %s9877 = smul.u32 16, %s23
      %p9878 = scmp.lt.s32.totalorder %s9877, 31
      %s9879 = scalar_select %p9878, %s9877, 31
      %s9880 = smul.addr %s9879, 2
      %s9881 = smul.addr %s9880, 8
      %s9882 = scalar_lea.vmem %s11, %s9881
      // Predicated region
      $region61: #{vae_forward.1} parent=59 // pred_check
        %p9883 = pneg %p261
      $region62: #{vae_forward.1} parent=59 // pred_check_branch
        %9885 = sbr.rel (%p9883) target = $region64
      $region63: #{vae_forward.1} parent=59 // pred_region
        %s9886 = smul.u32 16, %s23
      $region64: #{vae_forward.1} parent=59 // pred_fallthru
        _
      // Predicated region
      $region65: #{vae_forward.1} parent=59 // pred_check
        %p9887 = pneg %p287
      $region66: #{vae_forward.1} parent=59 // pred_check_branch
        %9889 = sbr.rel (%p9887) target = $region68
      $region67: #{vae_forward.1} parent=59 // pred_region
        %s9890 = smul.u32 16, %s23
      $region68: #{vae_forward.1} parent=59 // pred_fallthru
        _
    $region60: #{vae_forward.1} parent=5 // pred_fallthru
      _
    %p9891 = scmp.le.s32.totalorder 2, %s18
    // Predicated region
    $region69: #{vae_forward.1} parent=5 // pred_check
      %p9892 = pneg %p9891
    $region70: #{vae_forward.1} parent=5 // pred_check_branch
      %9894 = sbr.rel (%p9892) target = $region72
    $region71: #{vae_forward.1} parent=5 // pred_region
      %s9895 = ssub.s32 %s18, 2
      // Predicated region
      $region73: #{vae_forward.1} parent=71 // pred_check
        %p9896 = pneg %p267
      $region74: #{vae_forward.1} parent=71 // pred_check_branch
        %9898 = sbr.rel (%p9896) target = $region76
      $region75: #{vae_forward.1} parent=71 // pred_region
        %s9899 = smul.u32 16, %s24
        %p9900 = scmp.lt.s32.totalorder %s9899, 31
        %s9901 = scalar_select %p9900, %s9899, 31
        %s9902 = smul.addr %s9901, 7
        %s9903 = smul.addr %s9902, 8
        %s9904 = scalar_lea.vmem %s10, %s9903
      $region76: #{vae_forward.1} parent=71 // pred_fallthru
        _
      // Predicated region
      $region77: #{vae_forward.1} parent=71 // pred_check
        %p9905 = pneg %p293
      $region78: #{vae_forward.1} parent=71 // pred_check_branch
        %9907 = sbr.rel (%p9905) target = $region80
      $region79: #{vae_forward.1} parent=71 // pred_region
        %s9908 = smul.u32 16, %s24
        %p9909 = scmp.lt.s32.totalorder %s9908, 31
        %s9910 = scalar_select %p9909, %s9908, 31
        %s9911 = smul.addr %s9910, 2
        %s9912 = smul.addr %s9911, 8
        %s9913 = scalar_lea.vmem %s11, %s9912
      $region80: #{vae_forward.1} parent=71 // pred_fallthru
        _
    $region72: #{vae_forward.1} parent=5 // pred_fallthru
      _
  $region6: #{vae_forward.1} parent=0 // loop_footer
    %s22 = sadd.s32 1, %s18
  $region7: #{vae_forward.1} parent=0 // loop_footer_branch
    %17 = sbr.rel target = $region3
  $region8: #{vae_forward.1} parent=0 // loop_exit
    _

</llo_original>
